<compile_context>
chip_gen: v5e
topology: v5e:2x2
jax: 0.10.0
libtpu: 0.0.40
codegen_flags: <defaults>
</compile_context>

<pallas_src>
import jax
import jax.numpy as jnp
from jax.experimental import pallas as pl
from jax.experimental.pallas import tpu as pltpu


def _leaky_relu(x, slope=0.2):
    return jnp.where(x > 0, x, slope * x)


def _round_up(n, m):
    return ((n + m - 1) // m) * m


def generator_kernel(x_ref,
                     w1_ref, b1_ref,
                     w2_ref, b2_ref,
                     w3_ref, b3_ref,
                     w4_ref, b4_ref,
                     o_ref):
    # 4 MXU matmuls (bf16 operands, f32 accumulate) + bias + leaky_relu / tanh.
    # Intermediates are materialized once, in bf16, directly feeding the next dot.
    h = x_ref[...].astype(jnp.bfloat16)

    h = _leaky_relu(jnp.dot(h, w1_ref[...], preferred_element_type=jnp.float32)
                    + b1_ref[...]).astype(jnp.bfloat16)
    h = _leaky_relu(jnp.dot(h, w2_ref[...], preferred_element_type=jnp.float32)
                    + b2_ref[...]).astype(jnp.bfloat16)
    h = _leaky_relu(jnp.dot(h, w3_ref[...], preferred_element_type=jnp.float32)
                    + b3_ref[...]).astype(jnp.bfloat16)

    h4 = jnp.dot(h, w4_ref[...], preferred_element_type=jnp.float32) + b4_ref[...]
    o_ref[...] = jnp.tanh(h4).astype(o_ref.dtype)


def _pick_batch_tile(B):
    """Batch-tile policy (perf review):
       - B < 512: single grid step; splitting below 256 rows is pure overhead.
       - B >= 512: largest of (1024, 512, 256) that divides B and leaves >= 2 grid
         steps, so the stream is software-pipelined and each v7x TC gets >= 256 rows.
    """
    if B < 512:
        return B
    for t in (1024, 512, 256):
        if B % t == 0 and B // t >= 2:
            return t
    return B


def generator_forward(x, params, *, batch_tile=None):
    """GeneratorModel forward pass as one fused pallas_call.

    x:      (B, gen_inp_dim) float32
    params: dict with w1..w4 stored (in, out) in bfloat16 and b1..b4 (1, out) float32
    Returns (B, gen_out_dim) float32.
    """
    B, inp_dim = x.shape
    out_dim = params["w4"].shape[1]

    # --- wrapper-side padding for lane / sublane density ----------------------------
    out_pad = max(_round_up(out_dim, 128), 128)
    w4, b4 = params["w4"], params["b4"]
    if out_pad != out_dim:
        w4 = jnp.pad(w4, ((0, 0), (0, out_pad - out_dim)))
        b4 = jnp.pad(b4, ((0, 0), (0, out_pad - out_dim)))

    B_pad = max(_round_up(B, 8), 8)
    x_p = jnp.pad(x, ((0, B_pad - B), (0, 0))) if B_pad != B else x

    if batch_tile is None:
        batch_tile = _pick_batch_tile(B_pad)
    if B_pad % batch_tile != 0:
        batch_tile = B_pad  # fall back to a single full-batch step

    weights = [params["w1"], params["w2"], params["w3"], w4]
    biases = [params["b1"], params["b2"], params["b3"], b4]
    args = [x_p]
    for w, b in zip(weights, biases):
        args += [w, b]

    flops = 2 * B_pad * sum(w.shape[0] * w.shape[1] for w in weights)
    param_bytes = sum(a.size * a.dtype.itemsize for a in args[1:])
    cost = pl.CostEstimate(
        flops=flops,
        transcendentals=B_pad * out_pad,  # final tanh
        bytes_accessed=(x_p.size * x_p.dtype.itemsize
                        + B_pad * out_pad * 4
                        + param_bytes),
    )

    def run(single_buffer_params):
        def param_spec(arr):
            # Grid-invariant index_map: fetched into VMEM once, resident across all
            # grid steps. Single-buffered (the block never changes, so the default
            # second pipeline buffer is dead VMEM).
            kwargs = {}
            if single_buffer_params:
                kwargs["pipeline_mode"] = pl.Buffered(1)
            return pl.BlockSpec(arr.shape, lambda i: (0,) * arr.ndim, **kwargs)

        in_specs = [pl.BlockSpec((batch_tile, inp_dim), lambda i: (i, 0))]
        for w, b in zip(weights, biases):
            in_specs += [param_spec(w), param_spec(b)]

        return pl.pallas_call(
            generator_kernel,
            out_shape=jax.ShapeDtypeStruct((B_pad, out_pad), jnp.float32),
            grid_spec=pltpu.PrefetchScalarGridSpec(
                num_scalar_prefetch=0,
                grid=(B_pad // batch_tile,),
                in_specs=in_specs,
                out_specs=pl.BlockSpec((batch_tile, out_pad), lambda i: (i, 0)),
            ),
            compiler_params=pltpu.CompilerParams(
                dimension_semantics=("parallel",),
                vmem_limit_bytes=32 * 1024 * 1024,
            ),
            cost_estimate=cost,
        )(*args)

    try:
        out = run(single_buffer_params=True)
    except Exception:
        # pl.Buffered(1) rejected on this jax/libtpu build -> keep default buffering.
        out = run(single_buffer_params=False)

    return out[:B, :out_dim]


def init_params(key, gen_inp_dim, gen_out_dim):
    """Deterministic synthetic init mirroring the nn.Linear layer shapes.

    Weights are stored (in, out) in bfloat16 (MXU-friendly); biases stay f32.
    """
    dims = [gen_inp_dim, 256, 512, 1024, gen_out_dim]
    params = {}
    for li in range(4):
        d_in, d_out = dims[li], dims[li + 1]
        key, kw, kb = jax.random.split(key, 3)
        bound = 1.0 / jnp.sqrt(d_in)
        w = jax.random.uniform(kw, (d_in, d_out), jnp.float32, -bound, bound)
        b = jax.random.uniform(kb, (1, d_out), jnp.float32, -bound, bound)
        params[f"w{li + 1}"] = w.astype(jnp.bfloat16)
        params[f"b{li + 1}"] = b
    return params


def reference_forward(x, params):
    """Pure-JAX reference with the same bf16-operand / f32-accumulate recipe."""
    h = x.astype(jnp.bfloat16)
    for li in range(1, 5):
        y = jnp.dot(h, params[f"w{li}"],
                    preferred_element_type=jnp.float32) + params[f"b{li}"]
        if li < 4:
            h = _leaky_relu(y).astype(jnp.bfloat16)
        else:
            return jnp.tanh(y)


if __name__ == "__main__":
    key = jax.random.PRNGKey(0)
    # Small test shapes; out_dim deliberately NOT a multiple of 128 and batch NOT a
    # multiple of 8 so the lane/sublane padding path is exercised.
    gen_inp_dim, gen_out_dim = 64, 100
    batch = 30

    kx, kp = jax.random.split(key)
    x = jax.random.normal(kx, (batch, gen_inp_dim), jnp.float32)
    params = init_params(kp, gen_inp_dim, gen_out_dim)

    out = jax.block_until_ready(generator_forward(x, params))

    ref = reference_forward(x, params)
    assert out.shape == (batch, gen_out_dim), out.shape
    max_err = float(jnp.max(jnp.abs(out - ref)))
    assert jnp.allclose(out, ref, atol=1e-2, rtol=1e-2), \
        f"mismatch vs reference, max_err={max_err}"

    print("KERNEL_OK")
</pallas_src>

<mosaic_0001>
module attributes {stable_mosaic.version = 11 : i64} {
  func.func @generator_kernel(%arg0: i32, %arg1: memref<32x64xf32, #tpu.memory_space<vmem>>, %arg2: memref<64x256xbf16, #tpu.memory_space<vmem>>, %arg3: memref<1x256xf32, #tpu.memory_space<vmem>>, %arg4: memref<256x512xbf16, #tpu.memory_space<vmem>>, %arg5: memref<1x512xf32, #tpu.memory_space<vmem>>, %arg6: memref<512x1024xbf16, #tpu.memory_space<vmem>>, %arg7: memref<1x1024xf32, #tpu.memory_space<vmem>>, %arg8: memref<1024x128xbf16, #tpu.memory_space<vmem>>, %arg9: memref<1x128xf32, #tpu.memory_space<vmem>>, %arg10: memref<32x128xf32, #tpu.memory_space<vmem>>) attributes {dimension_semantics = [#tpu.dimension_semantics<parallel>], iteration_bounds = array<i64: 1>, scalar_prefetch = 0 : i64, scratch_operands = 0 : i64, tpu.core_type = #tpu.core_type<tc>, window_params = [{transform_indices = @transform_0, window_bounds = array<i64: 32, 64>}, {pipeline_mode = #tpu.pipeline_mode<synchronous>, transform_indices = @transform_1, window_bounds = array<i64: 64, 256>}, {pipeline_mode = #tpu.pipeline_mode<synchronous>, transform_indices = @transform_2, window_bounds = array<i64: 1, 256>}, {pipeline_mode = #tpu.pipeline_mode<synchronous>, transform_indices = @transform_3, window_bounds = array<i64: 256, 512>}, {pipeline_mode = #tpu.pipeline_mode<synchronous>, transform_indices = @transform_4, window_bounds = array<i64: 1, 512>}, {pipeline_mode = #tpu.pipeline_mode<synchronous>, transform_indices = @transform_5, window_bounds = array<i64: 512, 1024>}, {pipeline_mode = #tpu.pipeline_mode<synchronous>, transform_indices = @transform_6, window_bounds = array<i64: 1, 1024>}, {pipeline_mode = #tpu.pipeline_mode<synchronous>, transform_indices = @transform_7, window_bounds = array<i64: 1024, 128>}, {pipeline_mode = #tpu.pipeline_mode<synchronous>, transform_indices = @transform_8, window_bounds = array<i64: 1, 128>}, {transform_indices = @transform_9, window_bounds = array<i64: 32, 128>}]} {
    %c0 = arith.constant 0 : index
    %c0_0 = arith.constant 0 : index
    %0 = vector.load %arg1[%c0, %c0_0] : memref<32x64xf32, #tpu.memory_space<vmem>>, vector<32x64xf32>
    %1 = arith.truncf %0 : vector<32x64xf32> to vector<32x64xbf16>
    %c0_1 = arith.constant 0 : index
    %c0_2 = arith.constant 0 : index
    %2 = vector.load %arg2[%c0_1, %c0_2] : memref<64x256xbf16, #tpu.memory_space<vmem>>, vector<64x256xbf16>
    %cst = arith.constant dense<0.000000e+00> : vector<32x256xf32>
    %3 = tpu.matmul %1, %2, %cst {dimension_numbers = #tpu.dot_dimension_numbers<[1], [0], [0], [1], [0, 0, 1, 1], [], []>} : vector<32x64xbf16>, vector<64x256xbf16>, vector<32x256xf32> -> vector<32x256xf32>
    %c0_3 = arith.constant 0 : index
    %c0_4 = arith.constant 0 : index
    %4 = vector.load %arg3[%c0_3, %c0_4] : memref<1x256xf32, #tpu.memory_space<vmem>>, vector<1x256xf32>
    %5 = vector.broadcast %4 : vector<1x256xf32> to vector<32x256xf32>
    %6 = arith.addf %3, %5 : vector<32x256xf32>
    %cst_5 = arith.constant 0.000000e+00 : f32
    %7 = vector.broadcast %cst_5 : f32 to vector<32x256xf32>
    %8 = arith.cmpf ogt, %6, %7 : vector<32x256xf32>
    %cst_6 = arith.constant 2.000000e-01 : f32
    %9 = vector.broadcast %cst_6 : f32 to vector<32x256xf32>
    %10 = arith.mulf %9, %6 : vector<32x256xf32>
    %11 = arith.select %8, %6, %10 : vector<32x256xi1>, vector<32x256xf32>
    %12 = arith.truncf %11 : vector<32x256xf32> to vector<32x256xbf16>
    %c0_7 = arith.constant 0 : index
    %c0_8 = arith.constant 0 : index
    %13 = vector.load %arg4[%c0_7, %c0_8] : memref<256x512xbf16, #tpu.memory_space<vmem>>, vector<256x512xbf16>
    %cst_9 = arith.constant dense<0.000000e+00> : vector<32x512xf32>
    %14 = tpu.matmul %12, %13, %cst_9 {dimension_numbers = #tpu.dot_dimension_numbers<[1], [0], [0], [1], [0, 0, 1, 1], [], []>} : vector<32x256xbf16>, vector<256x512xbf16>, vector<32x512xf32> -> vector<32x512xf32>
    %c0_10 = arith.constant 0 : index
    %c0_11 = arith.constant 0 : index
    %15 = vector.load %arg5[%c0_10, %c0_11] : memref<1x512xf32, #tpu.memory_space<vmem>>, vector<1x512xf32>
    %16 = vector.broadcast %15 : vector<1x512xf32> to vector<32x512xf32>
    %17 = arith.addf %14, %16 : vector<32x512xf32>
    %cst_12 = arith.constant 0.000000e+00 : f32
    %18 = vector.broadcast %cst_12 : f32 to vector<32x512xf32>
    %19 = arith.cmpf ogt, %17, %18 : vector<32x512xf32>
    %cst_13 = arith.constant 2.000000e-01 : f32
    %20 = vector.broadcast %cst_13 : f32 to vector<32x512xf32>
    %21 = arith.mulf %20, %17 : vector<32x512xf32>
    %22 = arith.select %19, %17, %21 : vector<32x512xi1>, vector<32x512xf32>
    %23 = arith.truncf %22 : vector<32x512xf32> to vector<32x512xbf16>
    %c0_14 = arith.constant 0 : index
    %c0_15 = arith.constant 0 : index
    %24 = vector.load %arg6[%c0_14, %c0_15] : memref<512x1024xbf16, #tpu.memory_space<vmem>>, vector<512x1024xbf16>
    %cst_16 = arith.constant dense<0.000000e+00> : vector<32x1024xf32>
    %25 = tpu.matmul %23, %24, %cst_16 {dimension_numbers = #tpu.dot_dimension_numbers<[1], [0], [0], [1], [0, 0, 1, 1], [], []>} : vector<32x512xbf16>, vector<512x1024xbf16>, vector<32x1024xf32> -> vector<32x1024xf32>
    %c0_17 = arith.constant 0 : index
    %c0_18 = arith.constant 0 : index
    %26 = vector.load %arg7[%c0_17, %c0_18] : memref<1x1024xf32, #tpu.memory_space<vmem>>, vector<1x1024xf32>
    %27 = vector.broadcast %26 : vector<1x1024xf32> to vector<32x1024xf32>
    %28 = arith.addf %25, %27 : vector<32x1024xf32>
    %cst_19 = arith.constant 0.000000e+00 : f32
    %29 = vector.broadcast %cst_19 : f32 to vector<32x1024xf32>
    %30 = arith.cmpf ogt, %28, %29 : vector<32x1024xf32>
    %cst_20 = arith.constant 2.000000e-01 : f32
    %31 = vector.broadcast %cst_20 : f32 to vector<32x1024xf32>
    %32 = arith.mulf %31, %28 : vector<32x1024xf32>
    %33 = arith.select %30, %28, %32 : vector<32x1024xi1>, vector<32x1024xf32>
    %34 = arith.truncf %33 : vector<32x1024xf32> to vector<32x1024xbf16>
    %c0_21 = arith.constant 0 : index
    %c0_22 = arith.constant 0 : index
    %35 = vector.load %arg8[%c0_21, %c0_22] : memref<1024x128xbf16, #tpu.memory_space<vmem>>, vector<1024x128xbf16>
    %cst_23 = arith.constant dense<0.000000e+00> : vector<32x128xf32>
    %36 = tpu.matmul %34, %35, %cst_23 {dimension_numbers = #tpu.dot_dimension_numbers<[1], [0], [0], [1], [0, 0, 1, 1], [], []>} : vector<32x1024xbf16>, vector<1024x128xbf16>, vector<32x128xf32> -> vector<32x128xf32>
    %c0_24 = arith.constant 0 : index
    %c0_25 = arith.constant 0 : index
    %37 = vector.load %arg9[%c0_24, %c0_25] : memref<1x128xf32, #tpu.memory_space<vmem>>, vector<1x128xf32>
    %38 = vector.broadcast %37 : vector<1x128xf32> to vector<32x128xf32>
    %39 = arith.addf %36, %38 : vector<32x128xf32>
    %40 = math.tanh %39 : vector<32x128xf32>
    %c0_26 = arith.constant 0 : index
    %c0_27 = arith.constant 0 : index
    %41 = vector.load %arg10[%c0_26, %c0_27] : memref<32x128xf32, #tpu.memory_space<vmem>>, vector<32x128xf32>
    tpu.vector_store %arg10[%c0_26, %c0_27], %40 {strides = array<i32>} : memref<32x128xf32, #tpu.memory_space<vmem>>, vector<32x128xf32>,
    return
  }
  func.func @transform_0(%arg0: i32) -> (i32, i32) {
    %c0_i32 = arith.constant 0 : i32
    %c0_i32_0 = arith.constant 0 : i32
    return %arg0, %c0_i32 : i32, i32
  }
  func.func @transform_1(%arg0: i32) -> (i32, i32) {
    %c0_i32 = arith.constant 0 : i32
    %c0_i32_0 = arith.constant 0 : i32
    %c0_i32_1 = arith.constant 0 : i32
    return %c0_i32, %c0_i32_0 : i32, i32
  }
  func.func @transform_2(%arg0: i32) -> (i32, i32) {
    %c0_i32 = arith.constant 0 : i32
    %c0_i32_0 = arith.constant 0 : i32
    %c0_i32_1 = arith.constant 0 : i32
    return %c0_i32, %c0_i32_0 : i32, i32
  }
  func.func @transform_3(%arg0: i32) -> (i32, i32) {
    %c0_i32 = arith.constant 0 : i32
    %c0_i32_0 = arith.constant 0 : i32
    %c0_i32_1 = arith.constant 0 : i32
    return %c0_i32, %c0_i32_0 : i32, i32
  }
  func.func @transform_4(%arg0: i32) -> (i32, i32) {
    %c0_i32 = arith.constant 0 : i32
    %c0_i32_0 = arith.constant 0 : i32
    %c0_i32_1 = arith.constant 0 : i32
    return %c0_i32, %c0_i32_0 : i32, i32
  }
  func.func @transform_5(%arg0: i32) -> (i32, i32) {
    %c0_i32 = arith.constant 0 : i32
    %c0_i32_0 = arith.constant 0 : i32
    %c0_i32_1 = arith.constant 0 : i32
    return %c0_i32, %c0_i32_0 : i32, i32
  }
  func.func @transform_6(%arg0: i32) -> (i32, i32) {
    %c0_i32 = arith.constant 0 : i32
    %c0_i32_0 = arith.constant 0 : i32
    %c0_i32_1 = arith.constant 0 : i32
    return %c0_i32, %c0_i32_0 : i32, i32
  }
  func.func @transform_7(%arg0: i32) -> (i32, i32) {
    %c0_i32 = arith.constant 0 : i32
    %c0_i32_0 = arith.constant 0 : i32
    %c0_i32_1 = arith.constant 0 : i32
    return %c0_i32, %c0_i32_0 : i32, i32
  }
  func.func @transform_8(%arg0: i32) -> (i32, i32) {
    %c0_i32 = arith.constant 0 : i32
    %c0_i32_0 = arith.constant 0 : i32
    %c0_i32_1 = arith.constant 0 : i32
    return %c0_i32, %c0_i32_0 : i32, i32
  }
  func.func @transform_9(%arg0: i32) -> (i32, i32) {
    %c0_i32 = arith.constant 0 : i32
    %c0_i32_0 = arith.constant 0 : i32
    return %arg0, %c0_i32 : i32, i32
  }
}

module attributes {stable_mosaic.version = 11 : i64} {
  func.func @generator_kernel(%arg0: i32, %arg1: memref<32x64xf32, #tpu.memory_space<vmem>>, %arg2: memref<64x256xbf16, #tpu.memory_space<vmem>>, %arg3: memref<1x256xf32, #tpu.memory_space<vmem>>, %arg4: memref<256x512xbf16, #tpu.memory_space<vmem>>, %arg5: memref<1x512xf32, #tpu.memory_space<vmem>>, %arg6: memref<512x1024xbf16, #tpu.memory_space<vmem>>, %arg7: memref<1x1024xf32, #tpu.memory_space<vmem>>, %arg8: memref<1024x128xbf16, #tpu.memory_space<vmem>>, %arg9: memref<1x128xf32, #tpu.memory_space<vmem>>, %arg10: memref<32x128xf32, #tpu.memory_space<vmem>>) attributes {dimension_semantics = [#tpu.dimension_semantics<parallel>], iteration_bounds = array<i64: 1>, scalar_prefetch = 0 : i64, scratch_operands = 0 : i64, tpu.core_type = #tpu.core_type<tc>, window_params = [{transform_indices = @transform_0, window_bounds = array<i64: 32, 64>}, {pipeline_mode = #tpu.pipeline_mode<synchronous>, transform_indices = @transform_1, window_bounds = array<i64: 64, 256>}, {pipeline_mode = #tpu.pipeline_mode<synchronous>, transform_indices = @transform_2, window_bounds = array<i64: 1, 256>}, {pipeline_mode = #tpu.pipeline_mode<synchronous>, transform_indices = @transform_3, window_bounds = array<i64: 256, 512>}, {pipeline_mode = #tpu.pipeline_mode<synchronous>, transform_indices = @transform_4, window_bounds = array<i64: 1, 512>}, {pipeline_mode = #tpu.pipeline_mode<synchronous>, transform_indices = @transform_5, window_bounds = array<i64: 512, 1024>}, {pipeline_mode = #tpu.pipeline_mode<synchronous>, transform_indices = @transform_6, window_bounds = array<i64: 1, 1024>}, {pipeline_mode = #tpu.pipeline_mode<synchronous>, transform_indices = @transform_7, window_bounds = array<i64: 1024, 128>}, {pipeline_mode = #tpu.pipeline_mode<synchronous>, transform_indices = @transform_8, window_bounds = array<i64: 1, 128>}, {transform_indices = @transform_9, window_bounds = array<i64: 32, 128>}]} {
    %c0 = arith.constant 0 : index
    %c0_0 = arith.constant 0 : index
    %0 = vector.load %arg1[%c0, %c0_0] : memref<32x64xf32, #tpu.memory_space<vmem>>, vector<32x64xf32>
    %1 = arith.truncf %0 : vector<32x64xf32> to vector<32x64xbf16>
    %c0_1 = arith.constant 0 : index
    %c0_2 = arith.constant 0 : index
    %2 = vector.load %arg2[%c0_1, %c0_2] : memref<64x256xbf16, #tpu.memory_space<vmem>>, vector<64x256xbf16>
    %cst = arith.constant dense<0.000000e+00> : vector<32x256xf32>
    %3 = tpu.matmul %1, %2, %cst {dimension_numbers = #tpu.dot_dimension_numbers<[1], [0], [0], [1], [0, 0, 1, 1], [], []>} : vector<32x64xbf16>, vector<64x256xbf16>, vector<32x256xf32> -> vector<32x256xf32>
    %c0_3 = arith.constant 0 : index
    %c0_4 = arith.constant 0 : index
    %4 = vector.load %arg3[%c0_3, %c0_4] : memref<1x256xf32, #tpu.memory_space<vmem>>, vector<1x256xf32>
    %5 = vector.broadcast %4 : vector<1x256xf32> to vector<32x256xf32>
    %6 = arith.addf %3, %5 : vector<32x256xf32>
    %cst_5 = arith.constant 0.000000e+00 : f32
    %7 = vector.broadcast %cst_5 : f32 to vector<32x256xf32>
    %8 = arith.cmpf ogt, %6, %7 : vector<32x256xf32>
    %cst_6 = arith.constant 2.000000e-01 : f32
    %9 = vector.broadcast %cst_6 : f32 to vector<32x256xf32>
    %10 = arith.mulf %9, %6 : vector<32x256xf32>
    %11 = arith.select %8, %6, %10 : vector<32x256xi1>, vector<32x256xf32>
    %12 = arith.truncf %11 : vector<32x256xf32> to vector<32x256xbf16>
    %c0_7 = arith.constant 0 : index
    %c0_8 = arith.constant 0 : index
    %13 = vector.load %arg4[%c0_7, %c0_8] : memref<256x512xbf16, #tpu.memory_space<vmem>>, vector<256x512xbf16>
    %cst_9 = arith.constant dense<0.000000e+00> : vector<32x512xf32>
    %14 = tpu.matmul %12, %13, %cst_9 {dimension_numbers = #tpu.dot_dimension_numbers<[1], [0], [0], [1], [0, 0, 1, 1], [], []>} : vector<32x256xbf16>, vector<256x512xbf16>, vector<32x512xf32> -> vector<32x512xf32>
    %c0_10 = arith.constant 0 : index
    %c0_11 = arith.constant 0 : index
    %15 = vector.load %arg5[%c0_10, %c0_11] : memref<1x512xf32, #tpu.memory_space<vmem>>, vector<1x512xf32>
    %16 = vector.broadcast %15 : vector<1x512xf32> to vector<32x512xf32>
    %17 = arith.addf %14, %16 : vector<32x512xf32>
    %cst_12 = arith.constant 0.000000e+00 : f32
    %18 = vector.broadcast %cst_12 : f32 to vector<32x512xf32>
    %19 = arith.cmpf ogt, %17, %18 : vector<32x512xf32>
    %cst_13 = arith.constant 2.000000e-01 : f32
    %20 = vector.broadcast %cst_13 : f32 to vector<32x512xf32>
    %21 = arith.mulf %20, %17 : vector<32x512xf32>
    %22 = arith.select %19, %17, %21 : vector<32x512xi1>, vector<32x512xf32>
    %23 = arith.truncf %22 : vector<32x512xf32> to vector<32x512xbf16>
    %c0_14 = arith.constant 0 : index
    %c0_15 = arith.constant 0 : index
    %24 = vector.load %arg6[%c0_14, %c0_15] : memref<512x1024xbf16, #tpu.memory_space<vmem>>, vector<512x1024xbf16>
    %cst_16 = arith.constant dense<0.000000e+00> : vector<32x1024xf32>
    %25 = tpu.matmul %23, %24, %cst_16 {dimension_numbers = #tpu.dot_dimension_numbers<[1], [0], [0], [1], [0, 0, 1, 1], [], []>} : vector<32x512xbf16>, vector<512x1024xbf16>, vector<32x1024xf32> -> vector<32x1024xf32>
    %c0_17 = arith.constant 0 : index
    %c0_18 = arith.constant 0 : index
    %26 = vector.load %arg7[%c0_17, %c0_18] : memref<1x1024xf32, #tpu.memory_space<vmem>>, vector<1x1024xf32>
    %27 = vector.broadcast %26 : vector<1x1024xf32> to vector<32x1024xf32>
    %28 = arith.addf %25, %27 : vector<32x1024xf32>
    %cst_19 = arith.constant 0.000000e+00 : f32
    %29 = vector.broadcast %cst_19 : f32 to vector<32x1024xf32>
    %30 = arith.cmpf ogt, %28, %29 : vector<32x1024xf32>
    %cst_20 = arith.constant 2.000000e-01 : f32
    %31 = vector.broadcast %cst_20 : f32 to vector<32x1024xf32>
    %32 = arith.mulf %31, %28 : vector<32x1024xf32>
    %33 = arith.select %30, %28, %32 : vector<32x1024xi1>, vector<32x1024xf32>
    %34 = arith.truncf %33 : vector<32x1024xf32> to vector<32x1024xbf16>
    %c0_21 = arith.constant 0 : index
    %c0_22 = arith.constant 0 : index
    %35 = vector.load %arg8[%c0_21, %c0_22] : memref<1024x128xbf16, #tpu.memory_space<vmem>>, vector<1024x128xbf16>
    %cst_23 = arith.constant dense<0.000000e+00> : vector<32x128xf32>
    %36 = tpu.matmul %34, %35, %cst_23 {dimension_numbers = #tpu.dot_dimension_numbers<[1], [0], [0], [1], [0, 0, 1, 1], [], []>} : vector<32x1024xbf16>, vector<1024x128xbf16>, vector<32x128xf32> -> vector<32x128xf32>
    %c0_24 = arith.constant 0 : index
    %c0_25 = arith.constant 0 : index
    %37 = vector.load %arg9[%c0_24, %c0_25] : memref<1x128xf32, #tpu.memory_space<vmem>>, vector<1x128xf32>
    %38 = vector.broadcast %37 : vector<1x128xf32> to vector<32x128xf32>
    %39 = arith.addf %36, %38 : vector<32x128xf32>
    %40 = math.tanh %39 : vector<32x128xf32>
    %c0_26 = arith.constant 0 : index
    %c0_27 = arith.constant 0 : index
    %41 = vector.load %arg10[%c0_26, %c0_27] : memref<32x128xf32, #tpu.memory_space<vmem>>, vector<32x128xf32>
    tpu.vector_store %arg10[%c0_26, %c0_27], %40 {strides = array<i32>} : memref<32x128xf32, #tpu.memory_space<vmem>>, vector<32x128xf32>,
    return
  }
  func.func @transform_0(%arg0: i32) -> (i32, i32) {
    %c0_i32 = arith.constant 0 : i32
    %c0_i32_0 = arith.constant 0 : i32
    return %arg0, %c0_i32 : i32, i32
  }
  func.func @transform_1(%arg0: i32) -> (i32, i32) {
    %c0_i32 = arith.constant 0 : i32
    %c0_i32_0 = arith.constant 0 : i32
    %c0_i32_1 = arith.constant 0 : i32
    return %c0_i32, %c0_i32_0 : i32, i32
  }
  func.func @transform_2(%arg0: i32) -> (i32, i32) {
    %c0_i32 = arith.constant 0 : i32
    %c0_i32_0 = arith.constant 0 : i32
    %c0_i32_1 = arith.constant 0 : i32
    return %c0_i32, %c0_i32_0 : i32, i32
  }
  func.func @transform_3(%arg0: i32) -> (i32, i32) {
    %c0_i32 = arith.constant 0 : i32
    %c0_i32_0 = arith.constant 0 : i32
    %c0_i32_1 = arith.constant 0 : i32
    return %c0_i32, %c0_i32_0 : i32, i32
  }
  func.func @transform_4(%arg0: i32) -> (i32, i32) {
    %c0_i32 = arith.constant 0 : i32
    %c0_i32_0 = arith.constant 0 : i32
    %c0_i32_1 = arith.constant 0 : i32
    return %c0_i32, %c0_i32_0 : i32, i32
  }
  func.func @transform_5(%arg0: i32) -> (i32, i32) {
    %c0_i32 = arith.constant 0 : i32
    %c0_i32_0 = arith.constant 0 : i32
    %c0_i32_1 = arith.constant 0 : i32
    return %c0_i32, %c0_i32_0 : i32, i32
  }
  func.func @transform_6(%arg0: i32) -> (i32, i32) {
    %c0_i32 = arith.constant 0 : i32
    %c0_i32_0 = arith.constant 0 : i32
    %c0_i32_1 = arith.constant 0 : i32
    return %c0_i32, %c0_i32_0 : i32, i32
  }
  func.func @transform_7(%arg0: i32) -> (i32, i32) {
    %c0_i32 = arith.constant 0 : i32
    %c0_i32_0 = arith.constant 0 : i32
    %c0_i32_1 = arith.constant 0 : i32
    return %c0_i32, %c0_i32_0 : i32, i32
  }
  func.func @transform_8(%arg0: i32) -> (i32, i32) {
    %c0_i32 = arith.constant 0 : i32
    %c0_i32_0 = arith.constant 0 : i32
    %c0_i32_1 = arith.constant 0 : i32
    return %c0_i32, %c0_i32_0 : i32, i32
  }
  func.func @transform_9(%arg0: i32) -> (i32, i32) {
    %c0_i32 = arith.constant 0 : i32
    %c0_i32_0 = arith.constant 0 : i32
    return %arg0, %c0_i32 : i32, i32
  }
}

</mosaic_0001>

<llo_original>
// kernel: tpu_custom_call.1
$region0: #{tpu_custom_call.1}
  #allocation0 [shape = 'u32[]', space=smem, size = 0x4, offset = 0x4, fixed_abs, tag = 'smem constant byte address 0x4 - core index']
  #allocation1 [shape = 'u32[72,128]{1,0:T(1,128)}', space=vmem, size = 0x9000, scoped, tag = 'internal scratch']
  %s0 = inlined_call_operand.hbm [shape: f32[32,64], index: 0, kind: input, shape index: {}]
  %s1 = inlined_call_operand.hbm [shape: bf16[64,256], index: 1, kind: input, shape index: {}]
  %s2 = inlined_call_operand.hbm [shape: f32[1,256], index: 2, kind: input, shape index: {}]
  %s3 = inlined_call_operand.hbm [shape: bf16[256,512], index: 3, kind: input, shape index: {}]
  %s4 = inlined_call_operand.hbm [shape: f32[1,512], index: 4, kind: input, shape index: {}]
  %s5 = inlined_call_operand.hbm [shape: bf16[512,1024], index: 5, kind: input, shape index: {}]
  %s6 = inlined_call_operand.hbm [shape: f32[1,1024], index: 6, kind: input, shape index: {}]
  %s7 = inlined_call_operand.hbm [shape: bf16[1024,128], index: 7, kind: input, shape index: {}]
  %s8 = inlined_call_operand.vmem [shape: f32[1,128], index: 8, kind: input, shape index: {}]
  %s9 = inlined_call_operand.hbm [shape: f32[32,128], index: 9, kind: output, shape index: {}]
  %s10 = sld [smem:[#allocation0]]
  $region78: #{tpu_custom_call.1} parent=0
    _
  %s12 = ssub.s32 1, %s10
  %s13 = scalar_select 0, %s12, %s10
  $region1: #{tpu_custom_call.1} parent=0
    #allocation2 [shape = 'u8[16384]{0}', space=vmem, size = 0x4000, scoped, tag = 'input window, operand 0, single buffered']
    #allocation3 [shape = 's32[1]{0}', space=sflag, size = 0x4, scoped, tag = 'scoped memory for tpu_custom_call.1']
    #allocation4 [shape = 's32[1]{0}', space=sflag, size = 0x4, scoped, tag = 'scoped memory for tpu_custom_call.1']
    #allocation5 [shape = 'u8[32768]{0}', space=vmem, size = 0x8000, scoped, tag = 'input window, operand 1, single buffered']
    #allocation6 [shape = 's32[1]{0}', space=sflag, size = 0x4, scoped, tag = 'scoped memory for tpu_custom_call.1']
    #allocation7 [shape = 'u8[1024]{0}', space=vmem, size = 0x400, scoped, tag = 'input window, operand 2, single buffered']
    #allocation8 [shape = 'u8[262144]{0}', space=vmem, size = 0x40000, scoped, tag = 'input window, operand 3, single buffered']
    #allocation9 [shape = 's32[1]{0}', space=sflag, size = 0x4, scoped, tag = 'scoped memory for tpu_custom_call.1']
    #allocation10 [shape = 'u8[2048]{0}', space=vmem, size = 0x800, scoped, tag = 'input window, operand 4, single buffered']
    #allocation11 [shape = 'u8[1048576]{0}', space=vmem, size = 0x100000, scoped, tag = 'input window, operand 5, single buffered']
    #allocation12 [shape = 's32[1]{0}', space=sflag, size = 0x4, scoped, tag = 'scoped memory for tpu_custom_call.1']
    #allocation13 [shape = 'u8[4096]{0}', space=vmem, size = 0x1000, scoped, tag = 'input window, operand 6, single buffered']
    #allocation14 [shape = 'u8[262144]{0}', space=vmem, size = 0x40000, scoped, tag = 'input window, operand 7, single buffered']
    #allocation15 [shape = 's32[1]{0}', space=sflag, size = 0x4, scoped, tag = 'scoped memory for tpu_custom_call.1']
    #allocation16 [shape = 'u8[16384]{0}', space=vmem, size = 0x4000, scoped, tag = 'output window, operand 0, single buffered']
    %14 = vsyncpa [#allocation3], 0
    %15 = vsyncpa [#allocation6], 0
    %16 = vsyncpa [#allocation9], 0
    %17 = vsyncpa [#allocation12], 0
    %18 = vsyncpa [#allocation15], 0
    %19 = vsyncpa [#allocation4], 0
    // Predicated region
    $region2: #{tpu_custom_call.1} parent=1 // pred_check
      _
    $region3: #{tpu_custom_call.1} parent=1 // pred_check_branch
      %21 = sbr.rel (0) target = $region5
    $region4: #{tpu_custom_call.1} parent=1 // pred_region
      %23 = vsyncadd [#allocation3], 0
      %s24 = sshll.u32 %s0, 4
      %s25 = int_to_ptr.hbm [resolvable:$true] %s24
      %s26 = sshll.u32 [#allocation2], 4
      %s27 = int_to_ptr.vmem [resolvable:$true] %s26
      %32 = dma.hbm_to_vmem [thread:$0]  %s25, 512, %s27, [#allocation3], 128, 128, 8
    $region5: #{tpu_custom_call.1} parent=1 // pred_fallthru
      _
    // Predicated region
    $region6: #{tpu_custom_call.1} parent=1 // pred_check
      _
    $region7: #{tpu_custom_call.1} parent=1 // pred_check_branch
      %34 = sbr.rel (0) target = $region9
    $region8: #{tpu_custom_call.1} parent=1 // pred_region
      %36 = vsyncadd [#allocation6], 0
      %s37 = sshll.u32 %s1, 4
      %s38 = int_to_ptr.hbm [resolvable:$true] %s37
      %s39 = sshll.u32 [#allocation5], 4
      %s40 = int_to_ptr.vmem [resolvable:$true] %s39
      %45 = dma.hbm_to_vmem [thread:$0]  %s38, 1024, %s40, [#allocation6], 128, 128, 8
    $region9: #{tpu_custom_call.1} parent=1 // pred_fallthru
      _
    // Predicated region
    $region10: #{tpu_custom_call.1} parent=1 // pred_check
      _
    $region11: #{tpu_custom_call.1} parent=1 // pred_check_branch
      %47 = sbr.rel (0) target = $region13
    $region12: #{tpu_custom_call.1} parent=1 // pred_region
      %49 = vsyncadd [#allocation6], 0
      %s51 = sshll.u32 %s2, 4
      %s52 = int_to_ptr.hbm [resolvable:$true] %s51
      %s53 = sshll.u32 [#allocation7], 4
      %s54 = int_to_ptr.vmem [resolvable:$true] %s53
      %56 = dma.hbm_to_vmem [thread:$0]  %s52, 32, %s54, [#allocation6]
    $region13: #{tpu_custom_call.1} parent=1 // pred_fallthru
      _
    // Predicated region
    $region14: #{tpu_custom_call.1} parent=1 // pred_check
      _
    $region15: #{tpu_custom_call.1} parent=1 // pred_check_branch
      %58 = sbr.rel (0) target = $region17
    $region16: #{tpu_custom_call.1} parent=1 // pred_region
      %60 = vsyncadd [#allocation9], 0
      %s61 = sshll.u32 %s3, 4
      %s62 = int_to_ptr.hbm [resolvable:$true] %s61
      %s63 = sshll.u32 [#allocation8], 4
      %s64 = int_to_ptr.vmem [resolvable:$true] %s63
      %69 = dma.hbm_to_vmem [thread:$0]  %s62, 8192, %s64, [#allocation9], 256, 256, 16
    $region17: #{tpu_custom_call.1} parent=1 // pred_fallthru
      _
    // Predicated region
    $region18: #{tpu_custom_call.1} parent=1 // pred_check
      _
    $region19: #{tpu_custom_call.1} parent=1 // pred_check_branch
      %71 = sbr.rel (0) target = $region21
    $region20: #{tpu_custom_call.1} parent=1 // pred_region
      %73 = vsyncadd [#allocation9], 0
      %s75 = sshll.u32 %s4, 4
      %s76 = int_to_ptr.hbm [resolvable:$true] %s75
      %s77 = sshll.u32 [#allocation10], 4
      %s78 = int_to_ptr.vmem [resolvable:$true] %s77
      %80 = dma.hbm_to_vmem [thread:$0]  %s76, 64, %s78, [#allocation9]
    $region21: #{tpu_custom_call.1} parent=1 // pred_fallthru
      _
    // Predicated region
    $region22: #{tpu_custom_call.1} parent=1 // pred_check
      _
    $region23: #{tpu_custom_call.1} parent=1 // pred_check_branch
      %82 = sbr.rel (0) target = $region25
    $region24: #{tpu_custom_call.1} parent=1 // pred_region
      %84 = vsyncadd [#allocation12], 0
      %s85 = sshll.u32 %s5, 4
      %s86 = int_to_ptr.hbm [resolvable:$true] %s85
      %s87 = sshll.u32 [#allocation11], 4
      %s88 = int_to_ptr.vmem [resolvable:$true] %s87
      %93 = dma.hbm_to_vmem [thread:$0]  %s86, 32768, %s88, [#allocation12], 512, 512, 32
    $region25: #{tpu_custom_call.1} parent=1 // pred_fallthru
      _
    // Predicated region
    $region26: #{tpu_custom_call.1} parent=1 // pred_check
      _
    $region27: #{tpu_custom_call.1} parent=1 // pred_check_branch
      %95 = sbr.rel (0) target = $region29
    $region28: #{tpu_custom_call.1} parent=1 // pred_region
      %97 = vsyncadd [#allocation12], 0
      %s99 = sshll.u32 %s6, 4
      %s100 = int_to_ptr.hbm [resolvable:$true] %s99
      %s101 = sshll.u32 [#allocation13], 4
      %s102 = int_to_ptr.vmem [resolvable:$true] %s101
      %104 = dma.hbm_to_vmem [thread:$0]  %s100, 128, %s102, [#allocation12]
    $region29: #{tpu_custom_call.1} parent=1 // pred_fallthru
      _
    // Predicated region
    $region30: #{tpu_custom_call.1} parent=1 // pred_check
      _
    $region31: #{tpu_custom_call.1} parent=1 // pred_check_branch
      %106 = sbr.rel (0) target = $region33
    $region32: #{tpu_custom_call.1} parent=1 // pred_region
      %108 = vsyncadd [#allocation15], 0
      %s109 = sshll.u32 %s7, 4
      %s110 = int_to_ptr.hbm [resolvable:$true] %s109
      %s111 = sshll.u32 [#allocation14], 4
      %s112 = int_to_ptr.vmem [resolvable:$true] %s111
      %117 = dma.hbm_to_vmem [thread:$0]  %s110, 8192, %s112, [#allocation15], 64, 64, 4
    $region33: #{tpu_custom_call.1} parent=1 // pred_fallthru
      _
    // Predicated region
    $region34: #{tpu_custom_call.1} parent=1 // pred_check
      _
    $region35: #{tpu_custom_call.1} parent=1 // pred_check_branch
      %119 = sbr.rel (0) target = $region37
    $region36: #{tpu_custom_call.1} parent=1 // pred_region
      _
    $region37: #{tpu_custom_call.1} parent=1 // pred_fallthru
      _
    // Predicated region
    $region38: #{tpu_custom_call.1} parent=1 // pred_check
      _
    $region39: #{tpu_custom_call.1} parent=1 // pred_check_branch
      %121 = sbr.rel (0) target = $region41
    $region40: #{tpu_custom_call.1} parent=1 // pred_region
      %123 = dma.done [#allocation3], 512
    $region41: #{tpu_custom_call.1} parent=1 // pred_fallthru
      _
    // Predicated region
    $region42: #{tpu_custom_call.1} parent=1 // pred_check
      _
    $region43: #{tpu_custom_call.1} parent=1 // pred_check_branch
      %125 = sbr.rel (0) target = $region45
    $region44: #{tpu_custom_call.1} parent=1 // pred_region
      %127 = dma.done [#allocation6], 1024
    $region45: #{tpu_custom_call.1} parent=1 // pred_fallthru
      _
    // Predicated region
    $region46: #{tpu_custom_call.1} parent=1 // pred_check
      _
    $region47: #{tpu_custom_call.1} parent=1 // pred_check_branch
      %129 = sbr.rel (0) target = $region49
    $region48: #{tpu_custom_call.1} parent=1 // pred_region
      %131 = dma.done [#allocation6], 32
    $region49: #{tpu_custom_call.1} parent=1 // pred_fallthru
      _
    // Predicated region
    $region50: #{tpu_custom_call.1} parent=1 // pred_check
      _
    $region51: #{tpu_custom_call.1} parent=1 // pred_check_branch
      %133 = sbr.rel (0) target = $region53
    $region52: #{tpu_custom_call.1} parent=1 // pred_region
      %135 = dma.done [#allocation9], 8192
    $region53: #{tpu_custom_call.1} parent=1 // pred_fallthru
      _
    // Predicated region
    $region54: #{tpu_custom_call.1} parent=1 // pred_check
      _
    $region55: #{tpu_custom_call.1} parent=1 // pred_check_branch
      %137 = sbr.rel (0) target = $region57
    $region56: #{tpu_custom_call.1} parent=1 // pred_region
      %139 = dma.done [#allocation9], 64
    $region57: #{tpu_custom_call.1} parent=1 // pred_fallthru
      _
    // Predicated region
    $region58: #{tpu_custom_call.1} parent=1 // pred_check
      _
    $region59: #{tpu_custom_call.1} parent=1 // pred_check_branch
      %141 = sbr.rel (0) target = $region61
    $region60: #{tpu_custom_call.1} parent=1 // pred_region
      %143 = dma.done [#allocation12], 32768
    $region61: #{tpu_custom_call.1} parent=1 // pred_fallthru
      _
    // Predicated region
    $region62: #{tpu_custom_call.1} parent=1 // pred_check
      _
    $region63: #{tpu_custom_call.1} parent=1 // pred_check_branch
      %145 = sbr.rel (0) target = $region65
    $region64: #{tpu_custom_call.1} parent=1 // pred_region
      %147 = dma.done [#allocation12], 128
    $region65: #{tpu_custom_call.1} parent=1 // pred_fallthru
      _
    // Predicated region
    $region66: #{tpu_custom_call.1} parent=1 // pred_check
      _
    $region67: #{tpu_custom_call.1} parent=1 // pred_check_branch
      %149 = sbr.rel (0) target = $region69
    $region68: #{tpu_custom_call.1} parent=1 // pred_region
      %151 = dma.done [#allocation15], 8192
    $region69: #{tpu_custom_call.1} parent=1 // pred_fallthru
      _
    %v153 = vld [vmem:[#allocation2] sm:$0xff]
    %v154 = vld [vmem:[#allocation2 + $0x8] sm:$0xff]
    %v155 = vld [vmem:[#allocation2 + $0x10] sm:$0xff]
    %v156 = vld [vmem:[#allocation2 + $0x18] sm:$0xff]
    %v157 = vpack.c.bf16 %v154, %v153
    %v158 = vpack.c.bf16 %v156, %v155
    %v159 = vld [vmem:[#allocation5] sm:$0xff]
    %v160 = vld [vmem:[#allocation5 + $0x8] sm:$0xff]
    %v161 = vld [vmem:[#allocation5 + $0x10] sm:$0xff]
    %v162 = vld [vmem:[#allocation5 + $0x18] sm:$0xff]
    %v163 = vld [vmem:[#allocation5 + $0x20] sm:$0xff]
    %v164 = vld [vmem:[#allocation5 + $0x28] sm:$0xff]
    %v165 = vld [vmem:[#allocation5 + $0x30] sm:$0xff]
    %v166 = vld [vmem:[#allocation5 + $0x38] sm:$0xff]
    %v167 = vld [vmem:[#allocation7] sm:$0x3]
    %v169 = vperm.slane %v167, 0
    %v170 = vperm.slane %v167, 1
    %v181 = vunpack.c.l.b16 %v159
    %v182 = vunpack.c.h.b16 %v159
    %v183 = vunpack.c.l.b16 %v160
    %v184 = vunpack.c.h.b16 %v160
    %v185 = vunpack.c.l.b16 %v161
    %v186 = vunpack.c.h.b16 %v161
    %v187 = vunpack.c.l.b16 %v162
    %v188 = vunpack.c.h.b16 %v162
    %v189 = vunpack.c.l.b16 %v163
    %v190 = vunpack.c.h.b16 %v163
    %v191 = vunpack.c.l.b16 %v164
    %v192 = vunpack.c.h.b16 %v164
    %v193 = vunpack.c.l.b16 %v165
    %v194 = vunpack.c.h.b16 %v165
    %v195 = vunpack.c.l.b16 %v166
    %v196 = vunpack.c.h.b16 %v166
    %v197 = vpack.c.b16 %v183, %v181
    %v198 = vpack.c.b16 %v184, %v182
    %v199 = vpack.c.b16 %v187, %v185
    %v200 = vpack.c.b16 %v188, %v186
    %v201 = vpack.c.b16 %v191, %v189
    %v202 = vpack.c.b16 %v192, %v190
    %v203 = vpack.c.b16 %v195, %v193
    %v204 = vpack.c.b16 %v196, %v194
    %vm213 = vcmask 523264
    %v215 = vsel %vm213, %v157, 0
    %v218 = vsel %vm213, %v158, 0
    %220 = vmatpush.bf16.msra.mxu0 0
    %221 = vmatpush.bf16.msra.mxu0 0
    %222 = vmatpush.bf16.msra.mxu0 0
    %223 = vmatpush.bf16.msra.mxu0 0
    %224 = vmatpush.bf16.msra.mxu0 %v203
    %225 = vmatpush.bf16.msra.mxu0 %v201
    %226 = vmatpush.bf16.msra.mxu0 %v199
    %227 = vmatpush.bf16.msra.mxu0 %v197
    %228 = vmatmul.bf16.gmra.mxu0 %v215
    %v229 = vpop.f32.mrf.mxu0
    %v230 = vadd.f32 %v169, %v229
    %v231 = vpop.f32.mrf.mxu0
    %v232 = vadd.f32 %v169, %v231
    %233 = vmatmul.bf16.gmra.mxu0 %v218
    %v234 = vpop.f32.mrf.mxu0
    %v235 = vadd.f32 %v169, %v234
    %v236 = vpop.f32.mrf.mxu0
    %v237 = vadd.f32 %v169, %v236
    %238 = vdwg.mxu0
    %239 = vmatpush.bf16.msra.mxu0 0
    %240 = vmatpush.bf16.msra.mxu0 0
    %241 = vmatpush.bf16.msra.mxu0 0
    %242 = vmatpush.bf16.msra.mxu0 0
    %243 = vmatpush.bf16.msra.mxu0 %v204
    %244 = vmatpush.bf16.msra.mxu0 %v202
    %245 = vmatpush.bf16.msra.mxu0 %v200
    %246 = vmatpush.bf16.msra.mxu0 %v198
    %247 = vmatmul.bf16.gmra.mxu0 %v215
    %v248 = vpop.f32.mrf.mxu0
    %v249 = vadd.f32 %v170, %v248
    %v250 = vpop.f32.mrf.mxu0
    %v251 = vadd.f32 %v170, %v250
    %252 = vmatmul.bf16.gmra.mxu0 %v218
    %v253 = vpop.f32.mrf.mxu0
    %v254 = vadd.f32 %v170, %v253
    %v255 = vpop.f32.mrf.mxu0
    %v256 = vadd.f32 %v170, %v255
    %257 = vdwg.mxu0
    %vm258 = vcmp.gt.f32.partialorder %v230, 0.0
    %vm259 = vcmp.gt.f32.partialorder %v249, 0.0
    %vm260 = vcmp.gt.f32.partialorder %v232, 0.0
    %vm261 = vcmp.gt.f32.partialorder %v251, 0.0
    %vm262 = vcmp.gt.f32.partialorder %v235, 0.0
    %vm263 = vcmp.gt.f32.partialorder %v254, 0.0
    %vm264 = vcmp.gt.f32.partialorder %v237, 0.0
    %vm265 = vcmp.gt.f32.partialorder %v256, 0.0
    %v266 = vmul.f32 %v230, 0.2
    %v267 = vmul.f32 %v249, 0.2
    %v268 = vmul.f32 %v232, 0.2
    %v269 = vmul.f32 %v251, 0.2
    %v270 = vmul.f32 %v235, 0.2
    %v271 = vmul.f32 %v254, 0.2
    %v272 = vmul.f32 %v237, 0.2
    %v273 = vmul.f32 %v256, 0.2
    %v274 = vsel %vm258, %v230, %v266
    %v275 = vsel %vm259, %v249, %v267
    %v276 = vsel %vm260, %v232, %v268
    %v277 = vsel %vm261, %v251, %v269
    %v278 = vsel %vm262, %v235, %v270
    %v279 = vsel %vm263, %v254, %v271
    %v280 = vsel %vm264, %v237, %v272
    %v281 = vsel %vm265, %v256, %v273
    %v282 = vpack.c.bf16 %v276, %v274
    %v283 = vpack.c.bf16 %v277, %v275
    %v284 = vpack.c.bf16 %v280, %v278
    %v285 = vpack.c.bf16 %v281, %v279
    %v286 = vld [vmem:[#allocation8] sm:$0xff]
    %v287 = vld [vmem:[#allocation8 + $0x8] sm:$0xff]
    %v288 = vld [vmem:[#allocation8 + $0x10] sm:$0xff]
    %v289 = vld [vmem:[#allocation8 + $0x18] sm:$0xff]
    %v290 = vld [vmem:[#allocation8 + $0x20] sm:$0xff]
    %v291 = vld [vmem:[#allocation8 + $0x28] sm:$0xff]
    %v292 = vld [vmem:[#allocation8 + $0x30] sm:$0xff]
    %v293 = vld [vmem:[#allocation8 + $0x38] sm:$0xff]
    %v294 = vld [vmem:[#allocation8 + $0x40] sm:$0xff]
    %v295 = vld [vmem:[#allocation8 + $0x48] sm:$0xff]
    %v296 = vld [vmem:[#allocation8 + $0x50] sm:$0xff]
    %v297 = vld [vmem:[#allocation8 + $0x58] sm:$0xff]
    %v298 = vld [vmem:[#allocation8 + $0x60] sm:$0xff]
    %v299 = vld [vmem:[#allocation8 + $0x68] sm:$0xff]
    %v300 = vld [vmem:[#allocation8 + $0x70] sm:$0xff]
    %v301 = vld [vmem:[#allocation8 + $0x78] sm:$0xff]
    %v302 = vld [vmem:[#allocation8 + $0x80] sm:$0xff]
    %v303 = vld [vmem:[#allocation8 + $0x88] sm:$0xff]
    %v304 = vld [vmem:[#allocation8 + $0x90] sm:$0xff]
    %v305 = vld [vmem:[#allocation8 + $0x98] sm:$0xff]
    %v306 = vld [vmem:[#allocation8 + $0xa0] sm:$0xff]
    %v307 = vld [vmem:[#allocation8 + $0xa8] sm:$0xff]
    %v308 = vld [vmem:[#allocation8 + $0xb0] sm:$0xff]
    %v309 = vld [vmem:[#allocation8 + $0xb8] sm:$0xff]
    %v310 = vld [vmem:[#allocation8 + $0xc0] sm:$0xff]
    %v311 = vld [vmem:[#allocation8 + $0xc8] sm:$0xff]
    %v312 = vld [vmem:[#allocation8 + $0xd0] sm:$0xff]
    %v313 = vld [vmem:[#allocation8 + $0xd8] sm:$0xff]
    %v314 = vld [vmem:[#allocation8 + $0xe0] sm:$0xff]
    %v315 = vld [vmem:[#allocation8 + $0xe8] sm:$0xff]
    %v316 = vld [vmem:[#allocation8 + $0xf0] sm:$0xff]
    %v317 = vld [vmem:[#allocation8 + $0xf8] sm:$0xff]
    %v318 = vld [vmem:[#allocation8 + $0x100] sm:$0xff]
    %v319 = vld [vmem:[#allocation8 + $0x108] sm:$0xff]
    %v320 = vld [vmem:[#allocation8 + $0x110] sm:$0xff]
    %v321 = vld [vmem:[#allocation8 + $0x118] sm:$0xff]
    %v322 = vld [vmem:[#allocation8 + $0x120] sm:$0xff]
    %v323 = vld [vmem:[#allocation8 + $0x128] sm:$0xff]
    %v324 = vld [vmem:[#allocation8 + $0x130] sm:$0xff]
    %v325 = vld [vmem:[#allocation8 + $0x138] sm:$0xff]
    %v326 = vld [vmem:[#allocation8 + $0x140] sm:$0xff]
    %v327 = vld [vmem:[#allocation8 + $0x148] sm:$0xff]
    %v328 = vld [vmem:[#allocation8 + $0x150] sm:$0xff]
    %v329 = vld [vmem:[#allocation8 + $0x158] sm:$0xff]
    %v330 = vld [vmem:[#allocation8 + $0x160] sm:$0xff]
    %v331 = vld [vmem:[#allocation8 + $0x168] sm:$0xff]
    %v332 = vld [vmem:[#allocation8 + $0x170] sm:$0xff]
    %v333 = vld [vmem:[#allocation8 + $0x178] sm:$0xff]
    %v334 = vld [vmem:[#allocation8 + $0x180] sm:$0xff]
    %v335 = vld [vmem:[#allocation8 + $0x188] sm:$0xff]
    %v336 = vld [vmem:[#allocation8 + $0x190] sm:$0xff]
    %v337 = vld [vmem:[#allocation8 + $0x198] sm:$0xff]
    %v338 = vld [vmem:[#allocation8 + $0x1a0] sm:$0xff]
    %v339 = vld [vmem:[#allocation8 + $0x1a8] sm:$0xff]
    %v340 = vld [vmem:[#allocation8 + $0x1b0] sm:$0xff]
    %v341 = vld [vmem:[#allocation8 + $0x1b8] sm:$0xff]
    %v342 = vld [vmem:[#allocation8 + $0x1c0] sm:$0xff]
    %v343 = vld [vmem:[#allocation8 + $0x1c8] sm:$0xff]
    %v344 = vld [vmem:[#allocation8 + $0x1d0] sm:$0xff]
    %v345 = vld [vmem:[#allocation8 + $0x1d8] sm:$0xff]
    %v346 = vld [vmem:[#allocation8 + $0x1e0] sm:$0xff]
    %v347 = vld [vmem:[#allocation8 + $0x1e8] sm:$0xff]
    %v348 = vld [vmem:[#allocation8 + $0x1f0] sm:$0xff]
    %v349 = vld [vmem:[#allocation8 + $0x1f8] sm:$0xff]
    %v350 = vld [vmem:[#allocation10] sm:$0xf]
    %v352 = vperm.slane %v350, 0
    %v353 = vperm.slane %v350, 1
    %v354 = vperm.slane %v350, 2
    %v355 = vperm.slane %v350, 3
    %v424 = vunpack.c.l.b16 %v286
    %v425 = vunpack.c.h.b16 %v286
    %v426 = vunpack.c.l.b16 %v287
    %v427 = vunpack.c.h.b16 %v287
    %v428 = vunpack.c.l.b16 %v288
    %v429 = vunpack.c.h.b16 %v288
    %v430 = vunpack.c.l.b16 %v289
    %v431 = vunpack.c.h.b16 %v289
    %v432 = vunpack.c.l.b16 %v290
    %v433 = vunpack.c.h.b16 %v290
    %v434 = vunpack.c.l.b16 %v291
    %v435 = vunpack.c.h.b16 %v291
    %v436 = vunpack.c.l.b16 %v292
    %v437 = vunpack.c.h.b16 %v292
    %v438 = vunpack.c.l.b16 %v293
    %v439 = vunpack.c.h.b16 %v293
    %v440 = vunpack.c.l.b16 %v294
    %v441 = vunpack.c.h.b16 %v294
    %v442 = vunpack.c.l.b16 %v295
    %v443 = vunpack.c.h.b16 %v295
    %v444 = vunpack.c.l.b16 %v296
    %v445 = vunpack.c.h.b16 %v296
    %v446 = vunpack.c.l.b16 %v297
    %v447 = vunpack.c.h.b16 %v297
    %v448 = vunpack.c.l.b16 %v298
    %v449 = vunpack.c.h.b16 %v298
    %v450 = vunpack.c.l.b16 %v299
    %v451 = vunpack.c.h.b16 %v299
    %v452 = vunpack.c.l.b16 %v300
    %v453 = vunpack.c.h.b16 %v300
    %v454 = vunpack.c.l.b16 %v301
    %v455 = vunpack.c.h.b16 %v301
    %v456 = vunpack.c.l.b16 %v302
    %v457 = vunpack.c.h.b16 %v302
    %v458 = vunpack.c.l.b16 %v303
    %v459 = vunpack.c.h.b16 %v303
    %v460 = vunpack.c.l.b16 %v304
    %v461 = vunpack.c.h.b16 %v304
    %v462 = vunpack.c.l.b16 %v305
    %v463 = vunpack.c.h.b16 %v305
    %v464 = vunpack.c.l.b16 %v306
    %v465 = vunpack.c.h.b16 %v306
    %v466 = vunpack.c.l.b16 %v307
    %v467 = vunpack.c.h.b16 %v307
    %v468 = vunpack.c.l.b16 %v308
    %v469 = vunpack.c.h.b16 %v308
    %v470 = vunpack.c.l.b16 %v309
    %v471 = vunpack.c.h.b16 %v309
    %v472 = vunpack.c.l.b16 %v310
    %v473 = vunpack.c.h.b16 %v310
    %v474 = vunpack.c.l.b16 %v311
    %v475 = vunpack.c.h.b16 %v311
    %v476 = vunpack.c.l.b16 %v312
    %v477 = vunpack.c.h.b16 %v312
    %v478 = vunpack.c.l.b16 %v313
    %v479 = vunpack.c.h.b16 %v313
    %v480 = vunpack.c.l.b16 %v314
    %v481 = vunpack.c.h.b16 %v314
    %v482 = vunpack.c.l.b16 %v315
    %v483 = vunpack.c.h.b16 %v315
    %v484 = vunpack.c.l.b16 %v316
    %v485 = vunpack.c.h.b16 %v316
    %v486 = vunpack.c.l.b16 %v317
    %v487 = vunpack.c.h.b16 %v317
    %v488 = vunpack.c.l.b16 %v318
    %v489 = vunpack.c.h.b16 %v318
    %v490 = vunpack.c.l.b16 %v319
    %v491 = vunpack.c.h.b16 %v319
    %v492 = vunpack.c.l.b16 %v320
    %v493 = vunpack.c.h.b16 %v320
    %v494 = vunpack.c.l.b16 %v321
    %v495 = vunpack.c.h.b16 %v321
    %v496 = vunpack.c.l.b16 %v322
    %v497 = vunpack.c.h.b16 %v322
    %v498 = vunpack.c.l.b16 %v323
    %v499 = vunpack.c.h.b16 %v323
    %v500 = vunpack.c.l.b16 %v324
    %v501 = vunpack.c.h.b16 %v324
    %v502 = vunpack.c.l.b16 %v325
    %v503 = vunpack.c.h.b16 %v325
    %v504 = vunpack.c.l.b16 %v326
    %v505 = vunpack.c.h.b16 %v326
    %v506 = vunpack.c.l.b16 %v327
    %v507 = vunpack.c.h.b16 %v327
    %v508 = vunpack.c.l.b16 %v328
    %v509 = vunpack.c.h.b16 %v328
    %v510 = vunpack.c.l.b16 %v329
    %v511 = vunpack.c.h.b16 %v329
    %v512 = vunpack.c.l.b16 %v330
    %v513 = vunpack.c.h.b16 %v330
    %v514 = vunpack.c.l.b16 %v331
    %v515 = vunpack.c.h.b16 %v331
    %v516 = vunpack.c.l.b16 %v332
    %v517 = vunpack.c.h.b16 %v332
    %v518 = vunpack.c.l.b16 %v333
    %v519 = vunpack.c.h.b16 %v333
    %v520 = vunpack.c.l.b16 %v334
    %v521 = vunpack.c.h.b16 %v334
    %v522 = vunpack.c.l.b16 %v335
    %v523 = vunpack.c.h.b16 %v335
    %v524 = vunpack.c.l.b16 %v336
    %v525 = vunpack.c.h.b16 %v336
    %v526 = vunpack.c.l.b16 %v337
    %v527 = vunpack.c.h.b16 %v337
    %v528 = vunpack.c.l.b16 %v338
    %v529 = vunpack.c.h.b16 %v338
    %v530 = vunpack.c.l.b16 %v339
    %v531 = vunpack.c.h.b16 %v339
    %v532 = vunpack.c.l.b16 %v340
    %v533 = vunpack.c.h.b16 %v340
    %v534 = vunpack.c.l.b16 %v341
    %v535 = vunpack.c.h.b16 %v341
    %v536 = vunpack.c.l.b16 %v342
    %v537 = vunpack.c.h.b16 %v342
    %v538 = vunpack.c.l.b16 %v343
    %v539 = vunpack.c.h.b16 %v343
    %v540 = vunpack.c.l.b16 %v344
    %v541 = vunpack.c.h.b16 %v344
    %v542 = vunpack.c.l.b16 %v345
    %v543 = vunpack.c.h.b16 %v345
    %v544 = vunpack.c.l.b16 %v346
    %v545 = vunpack.c.h.b16 %v346
    %v546 = vunpack.c.l.b16 %v347
    %v547 = vunpack.c.h.b16 %v347
    %v548 = vunpack.c.l.b16 %v348
    %v549 = vunpack.c.h.b16 %v348
    %v550 = vunpack.c.l.b16 %v349
    %v551 = vunpack.c.h.b16 %v349
    %v552 = vpack.c.b16 %v428, %v424
    %v553 = vpack.c.b16 %v429, %v425
    %v554 = vpack.c.b16 %v430, %v426
    %v555 = vpack.c.b16 %v431, %v427
    %v556 = vpack.c.b16 %v436, %v432
    %v557 = vpack.c.b16 %v437, %v433
    %v558 = vpack.c.b16 %v438, %v434
    %v559 = vpack.c.b16 %v439, %v435
    %v560 = vpack.c.b16 %v444, %v440
    %v561 = vpack.c.b16 %v445, %v441
    %v562 = vpack.c.b16 %v446, %v442
    %v563 = vpack.c.b16 %v447, %v443
    %v564 = vpack.c.b16 %v452, %v448
    %v565 = vpack.c.b16 %v453, %v449
    %v566 = vpack.c.b16 %v454, %v450
    %v567 = vpack.c.b16 %v455, %v451
    %v568 = vpack.c.b16 %v460, %v456
    %v569 = vpack.c.b16 %v461, %v457
    %v570 = vpack.c.b16 %v462, %v458
    %v571 = vpack.c.b16 %v463, %v459
    %v572 = vpack.c.b16 %v468, %v464
    %v573 = vpack.c.b16 %v469, %v465
    %v574 = vpack.c.b16 %v470, %v466
    %v575 = vpack.c.b16 %v471, %v467
    %v576 = vpack.c.b16 %v476, %v472
    %v577 = vpack.c.b16 %v477, %v473
    %v578 = vpack.c.b16 %v478, %v474
    %v579 = vpack.c.b16 %v479, %v475
    %v580 = vpack.c.b16 %v484, %v480
    %v581 = vpack.c.b16 %v485, %v481
    %v582 = vpack.c.b16 %v486, %v482
    %v583 = vpack.c.b16 %v487, %v483
    %v584 = vpack.c.b16 %v492, %v488
    %v585 = vpack.c.b16 %v493, %v489
    %v586 = vpack.c.b16 %v494, %v490
    %v587 = vpack.c.b16 %v495, %v491
    %v588 = vpack.c.b16 %v500, %v496
    %v589 = vpack.c.b16 %v501, %v497
    %v590 = vpack.c.b16 %v502, %v498
    %v591 = vpack.c.b16 %v503, %v499
    %v592 = vpack.c.b16 %v508, %v504
    %v593 = vpack.c.b16 %v509, %v505
    %v594 = vpack.c.b16 %v510, %v506
    %v595 = vpack.c.b16 %v511, %v507
    %v596 = vpack.c.b16 %v516, %v512
    %v597 = vpack.c.b16 %v517, %v513
    %v598 = vpack.c.b16 %v518, %v514
    %v599 = vpack.c.b16 %v519, %v515
    %v600 = vpack.c.b16 %v524, %v520
    %v601 = vpack.c.b16 %v525, %v521
    %v602 = vpack.c.b16 %v526, %v522
    %v603 = vpack.c.b16 %v527, %v523
    %v604 = vpack.c.b16 %v532, %v528
    %v605 = vpack.c.b16 %v533, %v529
    %v606 = vpack.c.b16 %v534, %v530
    %v607 = vpack.c.b16 %v535, %v531
    %v608 = vpack.c.b16 %v540, %v536
    %v609 = vpack.c.b16 %v541, %v537
    %v610 = vpack.c.b16 %v542, %v538
    %v611 = vpack.c.b16 %v543, %v539
    %v612 = vpack.c.b16 %v548, %v544
    %v613 = vpack.c.b16 %v549, %v545
    %v614 = vpack.c.b16 %v550, %v546
    %v615 = vpack.c.b16 %v551, %v547
    %680 = vmatpush.bf16.msra.mxu0 %v580
    %681 = vmatpush.bf16.msra.mxu0 %v576
    %682 = vmatpush.bf16.msra.mxu0 %v572
    %683 = vmatpush.bf16.msra.mxu0 %v568
    %684 = vmatpush.bf16.msra.mxu0 %v564
    %685 = vmatpush.bf16.msra.mxu0 %v560
    %686 = vmatpush.bf16.msra.mxu0 %v556
    %687 = vmatpush.bf16.msra.mxu0 %v552
    %688 = vmatmul.bf16.gmra.mxu0 %v282
    %v689 = vpop.f32.mrf.mxu0
    %v690 = vadd.f32 %v352, %v689
    %v691 = vpop.f32.mrf.mxu0
    %v692 = vadd.f32 %v352, %v691
    %693 = vmatmul.bf16.gmra.mxu0 %v284
    %v694 = vpop.f32.mrf.mxu0
    %v695 = vadd.f32 %v352, %v694
    %v696 = vpop.f32.mrf.mxu0
    %v697 = vadd.f32 %v352, %v696
    %698 = vdwg.mxu0
    %699 = vmatpush.bf16.msra.mxu0 %v612
    %700 = vmatpush.bf16.msra.mxu0 %v608
    %701 = vmatpush.bf16.msra.mxu0 %v604
    %702 = vmatpush.bf16.msra.mxu0 %v600
    %703 = vmatpush.bf16.msra.mxu0 %v596
    %704 = vmatpush.bf16.msra.mxu0 %v592
    %705 = vmatpush.bf16.msra.mxu0 %v588
    %706 = vmatpush.bf16.msra.mxu0 %v584
    %707 = vmatmul.bf16.gmra.mxu0 %v283
    %v708 = vpop.f32.mrf.mxu0
    %v709 = vadd.f32 %v690, %v708
    %v710 = vpop.f32.mrf.mxu0
    %v711 = vadd.f32 %v692, %v710
    %712 = vmatmul.bf16.gmra.mxu0 %v285
    %v713 = vpop.f32.mrf.mxu0
    %v714 = vadd.f32 %v695, %v713
    %v715 = vpop.f32.mrf.mxu0
    %v716 = vadd.f32 %v697, %v715
    %717 = vdwg.mxu0
    %718 = vmatpush.bf16.msra.mxu0 %v581
    %719 = vmatpush.bf16.msra.mxu0 %v577
    %720 = vmatpush.bf16.msra.mxu0 %v573
    %721 = vmatpush.bf16.msra.mxu0 %v569
    %722 = vmatpush.bf16.msra.mxu0 %v565
    %723 = vmatpush.bf16.msra.mxu0 %v561
    %724 = vmatpush.bf16.msra.mxu0 %v557
    %725 = vmatpush.bf16.msra.mxu0 %v553
    %726 = vmatmul.bf16.gmra.mxu0 %v282
    %v727 = vpop.f32.mrf.mxu0
    %v728 = vadd.f32 %v353, %v727
    %v729 = vpop.f32.mrf.mxu0
    %v730 = vadd.f32 %v353, %v729
    %731 = vmatmul.bf16.gmra.mxu0 %v284
    %v732 = vpop.f32.mrf.mxu0
    %v733 = vadd.f32 %v353, %v732
    %v734 = vpop.f32.mrf.mxu0
    %v735 = vadd.f32 %v353, %v734
    %736 = vdwg.mxu0
    %737 = vmatpush.bf16.msra.mxu0 %v613
    %738 = vmatpush.bf16.msra.mxu0 %v609
    %739 = vmatpush.bf16.msra.mxu0 %v605
    %740 = vmatpush.bf16.msra.mxu0 %v601
    %741 = vmatpush.bf16.msra.mxu0 %v597
    %742 = vmatpush.bf16.msra.mxu0 %v593
    %743 = vmatpush.bf16.msra.mxu0 %v589
    %744 = vmatpush.bf16.msra.mxu0 %v585
    %745 = vmatmul.bf16.gmra.mxu0 %v283
    %v746 = vpop.f32.mrf.mxu0
    %v747 = vadd.f32 %v728, %v746
    %v748 = vpop.f32.mrf.mxu0
    %v749 = vadd.f32 %v730, %v748
    %750 = vmatmul.bf16.gmra.mxu0 %v285
    %v751 = vpop.f32.mrf.mxu0
    %v752 = vadd.f32 %v733, %v751
    %v753 = vpop.f32.mrf.mxu0
    %v754 = vadd.f32 %v735, %v753
    %755 = vdwg.mxu0
    %756 = vmatpush.bf16.msra.mxu0 %v582
    %757 = vmatpush.bf16.msra.mxu0 %v578
    %758 = vmatpush.bf16.msra.mxu0 %v574
    %759 = vmatpush.bf16.msra.mxu0 %v570
    %760 = vmatpush.bf16.msra.mxu0 %v566
    %761 = vmatpush.bf16.msra.mxu0 %v562
    %762 = vmatpush.bf16.msra.mxu0 %v558
    %763 = vmatpush.bf16.msra.mxu0 %v554
    %764 = vmatmul.bf16.gmra.mxu0 %v282
    %v765 = vpop.f32.mrf.mxu0
    %v766 = vadd.f32 %v354, %v765
    %v767 = vpop.f32.mrf.mxu0
    %v768 = vadd.f32 %v354, %v767
    %769 = vmatmul.bf16.gmra.mxu0 %v284
    %v770 = vpop.f32.mrf.mxu0
    %v771 = vadd.f32 %v354, %v770
    %v772 = vpop.f32.mrf.mxu0
    %v773 = vadd.f32 %v354, %v772
    %774 = vdwg.mxu0
    %775 = vmatpush.bf16.msra.mxu0 %v614
    %776 = vmatpush.bf16.msra.mxu0 %v610
    %777 = vmatpush.bf16.msra.mxu0 %v606
    %778 = vmatpush.bf16.msra.mxu0 %v602
    %779 = vmatpush.bf16.msra.mxu0 %v598
    %780 = vmatpush.bf16.msra.mxu0 %v594
    %781 = vmatpush.bf16.msra.mxu0 %v590
    %782 = vmatpush.bf16.msra.mxu0 %v586
    %783 = vmatmul.bf16.gmra.mxu0 %v283
    %v784 = vpop.f32.mrf.mxu0
    %v785 = vadd.f32 %v766, %v784
    %v786 = vpop.f32.mrf.mxu0
    %v787 = vadd.f32 %v768, %v786
    %788 = vmatmul.bf16.gmra.mxu0 %v285
    %v789 = vpop.f32.mrf.mxu0
    %v790 = vadd.f32 %v771, %v789
    %v791 = vpop.f32.mrf.mxu0
    %v792 = vadd.f32 %v773, %v791
    %793 = vdwg.mxu0
    %794 = vmatpush.bf16.msra.mxu0 %v583
    %795 = vmatpush.bf16.msra.mxu0 %v579
    %796 = vmatpush.bf16.msra.mxu0 %v575
    %797 = vmatpush.bf16.msra.mxu0 %v571
    %798 = vmatpush.bf16.msra.mxu0 %v567
    %799 = vmatpush.bf16.msra.mxu0 %v563
    %800 = vmatpush.bf16.msra.mxu0 %v559
    %801 = vmatpush.bf16.msra.mxu0 %v555
    %802 = vmatmul.bf16.gmra.mxu0 %v282
    %v803 = vpop.f32.mrf.mxu0
    %v804 = vadd.f32 %v355, %v803
    %v805 = vpop.f32.mrf.mxu0
    %v806 = vadd.f32 %v355, %v805
    %807 = vmatmul.bf16.gmra.mxu0 %v284
    %v808 = vpop.f32.mrf.mxu0
    %v809 = vadd.f32 %v355, %v808
    %v810 = vpop.f32.mrf.mxu0
    %v811 = vadd.f32 %v355, %v810
    %812 = vdwg.mxu0
    %813 = vmatpush.bf16.msra.mxu0 %v615
    %814 = vmatpush.bf16.msra.mxu0 %v611
    %815 = vmatpush.bf16.msra.mxu0 %v607
    %816 = vmatpush.bf16.msra.mxu0 %v603
    %817 = vmatpush.bf16.msra.mxu0 %v599
    %818 = vmatpush.bf16.msra.mxu0 %v595
    %819 = vmatpush.bf16.msra.mxu0 %v591
    %820 = vmatpush.bf16.msra.mxu0 %v587
    %821 = vmatmul.bf16.gmra.mxu0 %v283
    %v822 = vpop.f32.mrf.mxu0
    %v823 = vadd.f32 %v804, %v822
    %v824 = vpop.f32.mrf.mxu0
    %v825 = vadd.f32 %v806, %v824
    %826 = vmatmul.bf16.gmra.mxu0 %v285
    %v827 = vpop.f32.mrf.mxu0
    %v828 = vadd.f32 %v809, %v827
    %v829 = vpop.f32.mrf.mxu0
    %v830 = vadd.f32 %v811, %v829
    %831 = vdwg.mxu0
    %vm832 = vcmp.gt.f32.partialorder %v709, 0.0
    %vm833 = vcmp.gt.f32.partialorder %v747, 0.0
    %vm834 = vcmp.gt.f32.partialorder %v785, 0.0
    %vm835 = vcmp.gt.f32.partialorder %v823, 0.0
    %vm836 = vcmp.gt.f32.partialorder %v711, 0.0
    %vm837 = vcmp.gt.f32.partialorder %v749, 0.0
    %vm838 = vcmp.gt.f32.partialorder %v787, 0.0
    %vm839 = vcmp.gt.f32.partialorder %v825, 0.0
    %vm840 = vcmp.gt.f32.partialorder %v714, 0.0
    %vm841 = vcmp.gt.f32.partialorder %v752, 0.0
    %vm842 = vcmp.gt.f32.partialorder %v790, 0.0
    %vm843 = vcmp.gt.f32.partialorder %v828, 0.0
    %vm844 = vcmp.gt.f32.partialorder %v716, 0.0
    %vm845 = vcmp.gt.f32.partialorder %v754, 0.0
    %vm846 = vcmp.gt.f32.partialorder %v792, 0.0
    %vm847 = vcmp.gt.f32.partialorder %v830, 0.0
    %v848 = vmul.f32 %v709, 0.2
    %v849 = vmul.f32 %v747, 0.2
    %v850 = vmul.f32 %v785, 0.2
    %v851 = vmul.f32 %v823, 0.2
    %v852 = vmul.f32 %v711, 0.2
    %v853 = vmul.f32 %v749, 0.2
    %v854 = vmul.f32 %v787, 0.2
    %v855 = vmul.f32 %v825, 0.2
    %v856 = vmul.f32 %v714, 0.2
    %v857 = vmul.f32 %v752, 0.2
    %v858 = vmul.f32 %v790, 0.2
    %v859 = vmul.f32 %v828, 0.2
    %v860 = vmul.f32 %v716, 0.2
    %v861 = vmul.f32 %v754, 0.2
    %v862 = vmul.f32 %v792, 0.2
    %v863 = vmul.f32 %v830, 0.2
    %v864 = vsel %vm832, %v709, %v848
    %v865 = vsel %vm833, %v747, %v849
    %v866 = vsel %vm834, %v785, %v850
    %v867 = vsel %vm835, %v823, %v851
    %v868 = vsel %vm836, %v711, %v852
    %v869 = vsel %vm837, %v749, %v853
    %v870 = vsel %vm838, %v787, %v854
    %v871 = vsel %vm839, %v825, %v855
    %v872 = vsel %vm840, %v714, %v856
    %v873 = vsel %vm841, %v752, %v857
    %v874 = vsel %vm842, %v790, %v858
    %v875 = vsel %vm843, %v828, %v859
    %v876 = vsel %vm844, %v716, %v860
    %v877 = vsel %vm845, %v754, %v861
    %v878 = vsel %vm846, %v792, %v862
    %v879 = vsel %vm847, %v830, %v863
    %v880 = vpack.c.bf16 %v868, %v864
    %v881 = vpack.c.bf16 %v869, %v865
    %v882 = vpack.c.bf16 %v870, %v866
    %v883 = vpack.c.bf16 %v871, %v867
    %v884 = vpack.c.bf16 %v876, %v872
    %v885 = vpack.c.bf16 %v877, %v873
    %v886 = vpack.c.bf16 %v878, %v874
    %v887 = vpack.c.bf16 %v879, %v875
    %v888 = vld [vmem:[#allocation11] sm:$0xff]
    %v889 = vld [vmem:[#allocation11 + $0x8] sm:$0xff]
    %v890 = vld [vmem:[#allocation11 + $0x10] sm:$0xff]
    %v891 = vld [vmem:[#allocation11 + $0x18] sm:$0xff]
    %v892 = vld [vmem:[#allocation11 + $0x20] sm:$0xff]
    %v893 = vld [vmem:[#allocation11 + $0x28] sm:$0xff]
    %v894 = vld [vmem:[#allocation11 + $0x30] sm:$0xff]
    %v895 = vld [vmem:[#allocation11 + $0x38] sm:$0xff]
    %v896 = vld [vmem:[#allocation11 + $0x40] sm:$0xff]
    %v897 = vld [vmem:[#allocation11 + $0x48] sm:$0xff]
    %v898 = vld [vmem:[#allocation11 + $0x50] sm:$0xff]
    %v899 = vld [vmem:[#allocation11 + $0x58] sm:$0xff]
    %v900 = vld [vmem:[#allocation11 + $0x60] sm:$0xff]
    %v901 = vld [vmem:[#allocation11 + $0x68] sm:$0xff]
    %v902 = vld [vmem:[#allocation11 + $0x70] sm:$0xff]
    %v903 = vld [vmem:[#allocation11 + $0x78] sm:$0xff]
    %v904 = vld [vmem:[#allocation11 + $0x80] sm:$0xff]
    %v905 = vld [vmem:[#allocation11 + $0x88] sm:$0xff]
    %v906 = vld [vmem:[#allocation11 + $0x90] sm:$0xff]
    %v907 = vld [vmem:[#allocation11 + $0x98] sm:$0xff]
    %v908 = vld [vmem:[#allocation11 + $0xa0] sm:$0xff]
    %v909 = vld [vmem:[#allocation11 + $0xa8] sm:$0xff]
    %v910 = vld [vmem:[#allocation11 + $0xb0] sm:$0xff]
    %v911 = vld [vmem:[#allocation11 + $0xb8] sm:$0xff]
    %v912 = vld [vmem:[#allocation11 + $0xc0] sm:$0xff]
    %v913 = vld [vmem:[#allocation11 + $0xc8] sm:$0xff]
    %v914 = vld [vmem:[#allocation11 + $0xd0] sm:$0xff]
    %v915 = vld [vmem:[#allocation11 + $0xd8] sm:$0xff]
    %v916 = vld [vmem:[#allocation11 + $0xe0] sm:$0xff]
    %v917 = vld [vmem:[#allocation11 + $0xe8] sm:$0xff]
    %v918 = vld [vmem:[#allocation11 + $0xf0] sm:$0xff]
    %v919 = vld [vmem:[#allocation11 + $0xf8] sm:$0xff]
    %v920 = vld [vmem:[#allocation11 + $0x100] sm:$0xff]
    %v921 = vld [vmem:[#allocation11 + $0x108] sm:$0xff]
    %v922 = vld [vmem:[#allocation11 + $0x110] sm:$0xff]
    %v923 = vld [vmem:[#allocation11 + $0x118] sm:$0xff]
    %v924 = vld [vmem:[#allocation11 + $0x120] sm:$0xff]
    %v925 = vld [vmem:[#allocation11 + $0x128] sm:$0xff]
    %v926 = vld [vmem:[#allocation11 + $0x130] sm:$0xff]
    %v927 = vld [vmem:[#allocation11 + $0x138] sm:$0xff]
    %v928 = vld [vmem:[#allocation11 + $0x140] sm:$0xff]
    %v929 = vld [vmem:[#allocation11 + $0x148] sm:$0xff]
    %v930 = vld [vmem:[#allocation11 + $0x150] sm:$0xff]
    %v931 = vld [vmem:[#allocation11 + $0x158] sm:$0xff]
    %v932 = vld [vmem:[#allocation11 + $0x160] sm:$0xff]
    %v933 = vld [vmem:[#allocation11 + $0x168] sm:$0xff]
    %v934 = vld [vmem:[#allocation11 + $0x170] sm:$0xff]
    %v935 = vld [vmem:[#allocation11 + $0x178] sm:$0xff]
    %v936 = vld [vmem:[#allocation11 + $0x180] sm:$0xff]
    %v937 = vld [vmem:[#allocation11 + $0x188] sm:$0xff]
    %v938 = vld [vmem:[#allocation11 + $0x190] sm:$0xff]
    %v939 = vld [vmem:[#allocation11 + $0x198] sm:$0xff]
    %v940 = vld [vmem:[#allocation11 + $0x1a0] sm:$0xff]
    %v941 = vld [vmem:[#allocation11 + $0x1a8] sm:$0xff]
    %v942 = vld [vmem:[#allocation11 + $0x1b0] sm:$0xff]
    %v943 = vld [vmem:[#allocation11 + $0x1b8] sm:$0xff]
    %v944 = vld [vmem:[#allocation11 + $0x1c0] sm:$0xff]
    %v945 = vld [vmem:[#allocation11 + $0x1c8] sm:$0xff]
    %v946 = vld [vmem:[#allocation11 + $0x1d0] sm:$0xff]
    %v947 = vld [vmem:[#allocation11 + $0x1d8] sm:$0xff]
    %v948 = vld [vmem:[#allocation11 + $0x1e0] sm:$0xff]
    %v949 = vld [vmem:[#allocation11 + $0x1e8] sm:$0xff]
    %v950 = vld [vmem:[#allocation11 + $0x1f0] sm:$0xff]
    %v951 = vld [vmem:[#allocation11 + $0x1f8] sm:$0xff]
    %v952 = vld [vmem:[#allocation11 + $0x200] sm:$0xff]
    %v953 = vld [vmem:[#allocation11 + $0x208] sm:$0xff]
    %v954 = vld [vmem:[#allocation11 + $0x210] sm:$0xff]
    %v955 = vld [vmem:[#allocation11 + $0x218] sm:$0xff]
    %v956 = vld [vmem:[#allocation11 + $0x220] sm:$0xff]
    %v957 = vld [vmem:[#allocation11 + $0x228] sm:$0xff]
    %v958 = vld [vmem:[#allocation11 + $0x230] sm:$0xff]
    %v959 = vld [vmem:[#allocation11 + $0x238] sm:$0xff]
    %v960 = vld [vmem:[#allocation11 + $0x240] sm:$0xff]
    %v961 = vld [vmem:[#allocation11 + $0x248] sm:$0xff]
    %v962 = vld [vmem:[#allocation11 + $0x250] sm:$0xff]
    %v963 = vld [vmem:[#allocation11 + $0x258] sm:$0xff]
    %v964 = vld [vmem:[#allocation11 + $0x260] sm:$0xff]
    %v965 = vld [vmem:[#allocation11 + $0x268] sm:$0xff]
    %v966 = vld [vmem:[#allocation11 + $0x270] sm:$0xff]
    %v967 = vld [vmem:[#allocation11 + $0x278] sm:$0xff]
    %v968 = vld [vmem:[#allocation11 + $0x280] sm:$0xff]
    %v969 = vld [vmem:[#allocation11 + $0x288] sm:$0xff]
    %v970 = vld [vmem:[#allocation11 + $0x290] sm:$0xff]
    %v971 = vld [vmem:[#allocation11 + $0x298] sm:$0xff]
    %v972 = vld [vmem:[#allocation11 + $0x2a0] sm:$0xff]
    %v973 = vld [vmem:[#allocation11 + $0x2a8] sm:$0xff]
    %v974 = vld [vmem:[#allocation11 + $0x2b0] sm:$0xff]
    %v975 = vld [vmem:[#allocation11 + $0x2b8] sm:$0xff]
    %v976 = vld [vmem:[#allocation11 + $0x2c0] sm:$0xff]
    %v977 = vld [vmem:[#allocation11 + $0x2c8] sm:$0xff]
    %v978 = vld [vmem:[#allocation11 + $0x2d0] sm:$0xff]
    %v979 = vld [vmem:[#allocation11 + $0x2d8] sm:$0xff]
    %v980 = vld [vmem:[#allocation11 + $0x2e0] sm:$0xff]
    %v981 = vld [vmem:[#allocation11 + $0x2e8] sm:$0xff]
    %v982 = vld [vmem:[#allocation11 + $0x2f0] sm:$0xff]
    %v983 = vld [vmem:[#allocation11 + $0x2f8] sm:$0xff]
    %v984 = vld [vmem:[#allocation11 + $0x300] sm:$0xff]
    %v985 = vld [vmem:[#allocation11 + $0x308] sm:$0xff]
    %v986 = vld [vmem:[#allocation11 + $0x310] sm:$0xff]
    %v987 = vld [vmem:[#allocation11 + $0x318] sm:$0xff]
    %v988 = vld [vmem:[#allocation11 + $0x320] sm:$0xff]
    %v989 = vld [vmem:[#allocation11 + $0x328] sm:$0xff]
    %v990 = vld [vmem:[#allocation11 + $0x330] sm:$0xff]
    %v991 = vld [vmem:[#allocation11 + $0x338] sm:$0xff]
    %v992 = vld [vmem:[#allocation11 + $0x340] sm:$0xff]
    %v993 = vld [vmem:[#allocation11 + $0x348] sm:$0xff]
    %v994 = vld [vmem:[#allocation11 + $0x350] sm:$0xff]
    %v995 = vld [vmem:[#allocation11 + $0x358] sm:$0xff]
    %v996 = vld [vmem:[#allocation11 + $0x360] sm:$0xff]
    %v997 = vld [vmem:[#allocation11 + $0x368] sm:$0xff]
    %v998 = vld [vmem:[#allocation11 + $0x370] sm:$0xff]
    %v999 = vld [vmem:[#allocation11 + $0x378] sm:$0xff]
    %v1000 = vld [vmem:[#allocation11 + $0x380] sm:$0xff]
    %v1001 = vld [vmem:[#allocation11 + $0x388] sm:$0xff]
    %v1002 = vld [vmem:[#allocation11 + $0x390] sm:$0xff]
    %v1003 = vld [vmem:[#allocation11 + $0x398] sm:$0xff]
    %v1004 = vld [vmem:[#allocation11 + $0x3a0] sm:$0xff]
    %v1005 = vld [vmem:[#allocation11 + $0x3a8] sm:$0xff]
    %v1006 = vld [vmem:[#allocation11 + $0x3b0] sm:$0xff]
    %v1007 = vld [vmem:[#allocation11 + $0x3b8] sm:$0xff]
    %v1008 = vld [vmem:[#allocation11 + $0x3c0] sm:$0xff]
    %v1009 = vld [vmem:[#allocation11 + $0x3c8] sm:$0xff]
    %v1010 = vld [vmem:[#allocation11 + $0x3d0] sm:$0xff]
    %v1011 = vld [vmem:[#allocation11 + $0x3d8] sm:$0xff]
    %v1012 = vld [vmem:[#allocation11 + $0x3e0] sm:$0xff]
    %v1013 = vld [vmem:[#allocation11 + $0x3e8] sm:$0xff]
    %v1014 = vld [vmem:[#allocation11 + $0x3f0] sm:$0xff]
    %v1015 = vld [vmem:[#allocation11 + $0x3f8] sm:$0xff]
    %v1016 = vld [vmem:[#allocation11 + $0x400] sm:$0xff]
    %v1017 = vld [vmem:[#allocation11 + $0x408] sm:$0xff]
    %v1018 = vld [vmem:[#allocation11 + $0x410] sm:$0xff]
    %v1019 = vld [vmem:[#allocation11 + $0x418] sm:$0xff]
    %v1020 = vld [vmem:[#allocation11 + $0x420] sm:$0xff]
    %v1021 = vld [vmem:[#allocation11 + $0x428] sm:$0xff]
    %v1022 = vld [vmem:[#allocation11 + $0x430] sm:$0xff]
    %v1023 = vld [vmem:[#allocation11 + $0x438] sm:$0xff]
    %v1024 = vld [vmem:[#allocation11 + $0x440] sm:$0xff]
    %v1025 = vld [vmem:[#allocation11 + $0x448] sm:$0xff]
    %v1026 = vld [vmem:[#allocation11 + $0x450] sm:$0xff]
    %v1027 = vld [vmem:[#allocation11 + $0x458] sm:$0xff]
    %v1028 = vld [vmem:[#allocation11 + $0x460] sm:$0xff]
    %v1029 = vld [vmem:[#allocation11 + $0x468] sm:$0xff]
    %v1030 = vld [vmem:[#allocation11 + $0x470] sm:$0xff]
    %v1031 = vld [vmem:[#allocation11 + $0x478] sm:$0xff]
    %v1032 = vld [vmem:[#allocation11 + $0x480] sm:$0xff]
    %v1033 = vld [vmem:[#allocation11 + $0x488] sm:$0xff]
    %v1034 = vld [vmem:[#allocation11 + $0x490] sm:$0xff]
    %v1035 = vld [vmem:[#allocation11 + $0x498] sm:$0xff]
    %v1036 = vld [vmem:[#allocation11 + $0x4a0] sm:$0xff]
    %v1037 = vld [vmem:[#allocation11 + $0x4a8] sm:$0xff]
    %v1038 = vld [vmem:[#allocation11 + $0x4b0] sm:$0xff]
    %v1039 = vld [vmem:[#allocation11 + $0x4b8] sm:$0xff]
    %v1040 = vld [vmem:[#allocation11 + $0x4c0] sm:$0xff]
    %v1041 = vld [vmem:[#allocation11 + $0x4c8] sm:$0xff]
    %v1042 = vld [vmem:[#allocation11 + $0x4d0] sm:$0xff]
    %v1043 = vld [vmem:[#allocation11 + $0x4d8] sm:$0xff]
    %v1044 = vld [vmem:[#allocation11 + $0x4e0] sm:$0xff]
    %v1045 = vld [vmem:[#allocation11 + $0x4e8] sm:$0xff]
    %v1046 = vld [vmem:[#allocation11 + $0x4f0] sm:$0xff]
    %v1047 = vld [vmem:[#allocation11 + $0x4f8] sm:$0xff]
    %v1048 = vld [vmem:[#allocation11 + $0x500] sm:$0xff]
    %v1049 = vld [vmem:[#allocation11 + $0x508] sm:$0xff]
    %v1050 = vld [vmem:[#allocation11 + $0x510] sm:$0xff]
    %v1051 = vld [vmem:[#allocation11 + $0x518] sm:$0xff]
    %v1052 = vld [vmem:[#allocation11 + $0x520] sm:$0xff]
    %v1053 = vld [vmem:[#allocation11 + $0x528] sm:$0xff]
    %v1054 = vld [vmem:[#allocation11 + $0x530] sm:$0xff]
    %v1055 = vld [vmem:[#allocation11 + $0x538] sm:$0xff]
    %v1056 = vld [vmem:[#allocation11 + $0x540] sm:$0xff]
    %v1057 = vld [vmem:[#allocation11 + $0x548] sm:$0xff]
    %v1058 = vld [vmem:[#allocation11 + $0x550] sm:$0xff]
    %v1059 = vld [vmem:[#allocation11 + $0x558] sm:$0xff]
    %v1060 = vld [vmem:[#allocation11 + $0x560] sm:$0xff]
    %v1061 = vld [vmem:[#allocation11 + $0x568] sm:$0xff]
    %v1062 = vld [vmem:[#allocation11 + $0x570] sm:$0xff]
    %v1063 = vld [vmem:[#allocation11 + $0x578] sm:$0xff]
    %v1064 = vld [vmem:[#allocation11 + $0x580] sm:$0xff]
    %v1065 = vld [vmem:[#allocation11 + $0x588] sm:$0xff]
    %v1066 = vld [vmem:[#allocation11 + $0x590] sm:$0xff]
    %v1067 = vld [vmem:[#allocation11 + $0x598] sm:$0xff]
    %v1068 = vld [vmem:[#allocation11 + $0x5a0] sm:$0xff]
    %v1069 = vld [vmem:[#allocation11 + $0x5a8] sm:$0xff]
    %v1070 = vld [vmem:[#allocation11 + $0x5b0] sm:$0xff]
    %v1071 = vld [vmem:[#allocation11 + $0x5b8] sm:$0xff]
    %v1072 = vld [vmem:[#allocation11 + $0x5c0] sm:$0xff]
    %v1073 = vld [vmem:[#allocation11 + $0x5c8] sm:$0xff]
    %v1074 = vld [vmem:[#allocation11 + $0x5d0] sm:$0xff]
    %v1075 = vld [vmem:[#allocation11 + $0x5d8] sm:$0xff]
    %v1076 = vld [vmem:[#allocation11 + $0x5e0] sm:$0xff]
    %v1077 = vld [vmem:[#allocation11 + $0x5e8] sm:$0xff]
    %v1078 = vld [vmem:[#allocation11 + $0x5f0] sm:$0xff]
    %v1079 = vld [vmem:[#allocation11 + $0x5f8] sm:$0xff]
    %v1080 = vld [vmem:[#allocation11 + $0x600] sm:$0xff]
    %v1081 = vld [vmem:[#allocation11 + $0x608] sm:$0xff]
    %v1082 = vld [vmem:[#allocation11 + $0x610] sm:$0xff]
    %v1083 = vld [vmem:[#allocation11 + $0x618] sm:$0xff]
    %v1084 = vld [vmem:[#allocation11 + $0x620] sm:$0xff]
    %v1085 = vld [vmem:[#allocation11 + $0x628] sm:$0xff]
    %v1086 = vld [vmem:[#allocation11 + $0x630] sm:$0xff]
    %v1087 = vld [vmem:[#allocation11 + $0x638] sm:$0xff]
    %v1088 = vld [vmem:[#allocation11 + $0x640] sm:$0xff]
    %v1089 = vld [vmem:[#allocation11 + $0x648] sm:$0xff]
    %v1090 = vld [vmem:[#allocation11 + $0x650] sm:$0xff]
    %v1091 = vld [vmem:[#allocation11 + $0x658] sm:$0xff]
    %v1092 = vld [vmem:[#allocation11 + $0x660] sm:$0xff]
    %v1093 = vld [vmem:[#allocation11 + $0x668] sm:$0xff]
    %v1094 = vld [vmem:[#allocation11 + $0x670] sm:$0xff]
    %v1095 = vld [vmem:[#allocation11 + $0x678] sm:$0xff]
    %v1096 = vld [vmem:[#allocation11 + $0x680] sm:$0xff]
    %v1097 = vld [vmem:[#allocation11 + $0x688] sm:$0xff]
    %v1098 = vld [vmem:[#allocation11 + $0x690] sm:$0xff]
    %v1099 = vld [vmem:[#allocation11 + $0x698] sm:$0xff]
    %v1100 = vld [vmem:[#allocation11 + $0x6a0] sm:$0xff]
    %v1101 = vld [vmem:[#allocation11 + $0x6a8] sm:$0xff]
    %v1102 = vld [vmem:[#allocation11 + $0x6b0] sm:$0xff]
    %v1103 = vld [vmem:[#allocation11 + $0x6b8] sm:$0xff]
    %v1104 = vld [vmem:[#allocation11 + $0x6c0] sm:$0xff]
    %v1105 = vld [vmem:[#allocation11 + $0x6c8] sm:$0xff]
    %v1106 = vld [vmem:[#allocation11 + $0x6d0] sm:$0xff]
    %v1107 = vld [vmem:[#allocation11 + $0x6d8] sm:$0xff]
    %v1108 = vld [vmem:[#allocation11 + $0x6e0] sm:$0xff]
    %v1109 = vld [vmem:[#allocation11 + $0x6e8] sm:$0xff]
    %v1110 = vld [vmem:[#allocation11 + $0x6f0] sm:$0xff]
    %v1111 = vld [vmem:[#allocation11 + $0x6f8] sm:$0xff]
    %v1112 = vld [vmem:[#allocation11 + $0x700] sm:$0xff]
    %v1113 = vld [vmem:[#allocation11 + $0x708] sm:$0xff]
    %v1114 = vld [vmem:[#allocation11 + $0x710] sm:$0xff]
    %v1115 = vld [vmem:[#allocation11 + $0x718] sm:$0xff]
    %v1116 = vld [vmem:[#allocation11 + $0x720] sm:$0xff]
    %v1117 = vld [vmem:[#allocation11 + $0x728] sm:$0xff]
    %v1118 = vld [vmem:[#allocation11 + $0x730] sm:$0xff]
    %v1119 = vld [vmem:[#allocation11 + $0x738] sm:$0xff]
    %v1120 = vld [vmem:[#allocation11 + $0x740] sm:$0xff]
    %v1121 = vld [vmem:[#allocation11 + $0x748] sm:$0xff]
    %v1122 = vld [vmem:[#allocation11 + $0x750] sm:$0xff]
    %v1123 = vld [vmem:[#allocation11 + $0x758] sm:$0xff]
    %v1124 = vld [vmem:[#allocation11 + $0x760] sm:$0xff]
    %v1125 = vld [vmem:[#allocation11 + $0x768] sm:$0xff]
    %v1126 = vld [vmem:[#allocation11 + $0x770] sm:$0xff]
    %v1127 = vld [vmem:[#allocation11 + $0x778] sm:$0xff]
    %v1128 = vld [vmem:[#allocation11 + $0x780] sm:$0xff]
    %v1129 = vld [vmem:[#allocation11 + $0x788] sm:$0xff]
    %v1130 = vld [vmem:[#allocation11 + $0x790] sm:$0xff]
    %v1131 = vld [vmem:[#allocation11 + $0x798] sm:$0xff]
    %v1132 = vld [vmem:[#allocation11 + $0x7a0] sm:$0xff]
    %v1133 = vld [vmem:[#allocation11 + $0x7a8] sm:$0xff]
    %v1134 = vld [vmem:[#allocation11 + $0x7b0] sm:$0xff]
    %v1135 = vld [vmem:[#allocation11 + $0x7b8] sm:$0xff]
    %v1136 = vld [vmem:[#allocation11 + $0x7c0] sm:$0xff]
    %v1137 = vld [vmem:[#allocation11 + $0x7c8] sm:$0xff]
    %v1138 = vld [vmem:[#allocation11 + $0x7d0] sm:$0xff]
    %v1139 = vld [vmem:[#allocation11 + $0x7d8] sm:$0xff]
    %v1140 = vld [vmem:[#allocation11 + $0x7e0] sm:$0xff]
    %v1141 = vld [vmem:[#allocation11 + $0x7e8] sm:$0xff]
    %v1142 = vld [vmem:[#allocation11 + $0x7f0] sm:$0xff]
    %v1143 = vld [vmem:[#allocation11 + $0x7f8] sm:$0xff]
    %v1144 = vld [vmem:[#allocation13] sm:$0xff]
    %v1146 = vperm.slane %v1144, 0
    %v1147 = vperm.slane %v1144, 1
    %v1148 = vperm.slane %v1144, 2
    %v1149 = vperm.slane %v1144, 3
    %v1150 = vperm.slane %v1144, 4
    %v1151 = vperm.slane %v1144, 5
    %v1152 = vperm.slane %v1144, 6
    %v1153 = vperm.slane %v1144, 7
    %v1418 = vunpack.c.l.b16 %v888
    %v1419 = vunpack.c.h.b16 %v888
    %v1420 = vunpack.c.l.b16 %v889
    %v1421 = vunpack.c.h.b16 %v889
    %v1422 = vunpack.c.l.b16 %v890
    %v1423 = vunpack.c.h.b16 %v890
    %v1424 = vunpack.c.l.b16 %v891
    %v1425 = vunpack.c.h.b16 %v891
    %v1426 = vunpack.c.l.b16 %v892
    %v1427 = vunpack.c.h.b16 %v892
    %v1428 = vunpack.c.l.b16 %v893
    %v1429 = vunpack.c.h.b16 %v893
    %v1430 = vunpack.c.l.b16 %v894
    %v1431 = vunpack.c.h.b16 %v894
    %v1432 = vunpack.c.l.b16 %v895
    %v1433 = vunpack.c.h.b16 %v895
    %v1434 = vunpack.c.l.b16 %v896
    %v1435 = vunpack.c.h.b16 %v896
    %v1436 = vunpack.c.l.b16 %v897
    %v1437 = vunpack.c.h.b16 %v897
    %v1438 = vunpack.c.l.b16 %v898
    %v1439 = vunpack.c.h.b16 %v898
    %v1440 = vunpack.c.l.b16 %v899
    %v1441 = vunpack.c.h.b16 %v899
    %v1442 = vunpack.c.l.b16 %v900
    %v1443 = vunpack.c.h.b16 %v900
    %v1444 = vunpack.c.l.b16 %v901
    %v1445 = vunpack.c.h.b16 %v901
    %v1446 = vunpack.c.l.b16 %v902
    %v1447 = vunpack.c.h.b16 %v902
    %v1448 = vunpack.c.l.b16 %v903
    %v1449 = vunpack.c.h.b16 %v903
    %v1450 = vunpack.c.l.b16 %v904
    %v1451 = vunpack.c.h.b16 %v904
    %v1452 = vunpack.c.l.b16 %v905
    %v1453 = vunpack.c.h.b16 %v905
    %v1454 = vunpack.c.l.b16 %v906
    %v1455 = vunpack.c.h.b16 %v906
    %v1456 = vunpack.c.l.b16 %v907
    %v1457 = vunpack.c.h.b16 %v907
    %v1458 = vunpack.c.l.b16 %v908
    %v1459 = vunpack.c.h.b16 %v908
    %v1460 = vunpack.c.l.b16 %v909
    %v1461 = vunpack.c.h.b16 %v909
    %v1462 = vunpack.c.l.b16 %v910
    %v1463 = vunpack.c.h.b16 %v910
    %v1464 = vunpack.c.l.b16 %v911
    %v1465 = vunpack.c.h.b16 %v911
    %v1466 = vunpack.c.l.b16 %v912
    %v1467 = vunpack.c.h.b16 %v912
    %v1468 = vunpack.c.l.b16 %v913
    %v1469 = vunpack.c.h.b16 %v913
    %v1470 = vunpack.c.l.b16 %v914
    %v1471 = vunpack.c.h.b16 %v914
    %v1472 = vunpack.c.l.b16 %v915
    %v1473 = vunpack.c.h.b16 %v915
    %v1474 = vunpack.c.l.b16 %v916
    %v1475 = vunpack.c.h.b16 %v916
    %v1476 = vunpack.c.l.b16 %v917
    %v1477 = vunpack.c.h.b16 %v917
    %v1478 = vunpack.c.l.b16 %v918
    %v1479 = vunpack.c.h.b16 %v918
    %v1480 = vunpack.c.l.b16 %v919
    %v1481 = vunpack.c.h.b16 %v919
    %v1482 = vunpack.c.l.b16 %v920
    %v1483 = vunpack.c.h.b16 %v920
    %v1484 = vunpack.c.l.b16 %v921
    %v1485 = vunpack.c.h.b16 %v921
    %v1486 = vunpack.c.l.b16 %v922
    %v1487 = vunpack.c.h.b16 %v922
    %v1488 = vunpack.c.l.b16 %v923
    %v1489 = vunpack.c.h.b16 %v923
    %v1490 = vunpack.c.l.b16 %v924
    %v1491 = vunpack.c.h.b16 %v924
    %v1492 = vunpack.c.l.b16 %v925
    %v1493 = vunpack.c.h.b16 %v925
    %v1494 = vunpack.c.l.b16 %v926
    %v1495 = vunpack.c.h.b16 %v926
    %v1496 = vunpack.c.l.b16 %v927
    %v1497 = vunpack.c.h.b16 %v927
    %v1498 = vunpack.c.l.b16 %v928
    %v1499 = vunpack.c.h.b16 %v928
    %v1500 = vunpack.c.l.b16 %v929
    %v1501 = vunpack.c.h.b16 %v929
    %v1502 = vunpack.c.l.b16 %v930
    %v1503 = vunpack.c.h.b16 %v930
    %v1504 = vunpack.c.l.b16 %v931
    %v1505 = vunpack.c.h.b16 %v931
    %v1506 = vunpack.c.l.b16 %v932
    %v1507 = vunpack.c.h.b16 %v932
    %v1508 = vunpack.c.l.b16 %v933
    %v1509 = vunpack.c.h.b16 %v933
    %v1510 = vunpack.c.l.b16 %v934
    %v1511 = vunpack.c.h.b16 %v934
    %v1512 = vunpack.c.l.b16 %v935
    %v1513 = vunpack.c.h.b16 %v935
    %v1514 = vunpack.c.l.b16 %v936
    %v1515 = vunpack.c.h.b16 %v936
    %v1516 = vunpack.c.l.b16 %v937
    %v1517 = vunpack.c.h.b16 %v937
    %v1518 = vunpack.c.l.b16 %v938
    %v1519 = vunpack.c.h.b16 %v938
    %v1520 = vunpack.c.l.b16 %v939
    %v1521 = vunpack.c.h.b16 %v939
    %v1522 = vunpack.c.l.b16 %v940
    %v1523 = vunpack.c.h.b16 %v940
    %v1524 = vunpack.c.l.b16 %v941
    %v1525 = vunpack.c.h.b16 %v941
    %v1526 = vunpack.c.l.b16 %v942
    %v1527 = vunpack.c.h.b16 %v942
    %v1528 = vunpack.c.l.b16 %v943
    %v1529 = vunpack.c.h.b16 %v943
    %v1530 = vunpack.c.l.b16 %v944
    %v1531 = vunpack.c.h.b16 %v944
    %v1532 = vunpack.c.l.b16 %v945
    %v1533 = vunpack.c.h.b16 %v945
    %v1534 = vunpack.c.l.b16 %v946
    %v1535 = vunpack.c.h.b16 %v946
    %v1536 = vunpack.c.l.b16 %v947
    %v1537 = vunpack.c.h.b16 %v947
    %v1538 = vunpack.c.l.b16 %v948
    %v1539 = vunpack.c.h.b16 %v948
    %v1540 = vunpack.c.l.b16 %v949
    %v1541 = vunpack.c.h.b16 %v949
    %v1542 = vunpack.c.l.b16 %v950
    %v1543 = vunpack.c.h.b16 %v950
    %v1544 = vunpack.c.l.b16 %v951
    %v1545 = vunpack.c.h.b16 %v951
    %v1546 = vunpack.c.l.b16 %v952
    %v1547 = vunpack.c.h.b16 %v952
    %v1548 = vunpack.c.l.b16 %v953
    %v1549 = vunpack.c.h.b16 %v953
    %v1550 = vunpack.c.l.b16 %v954
    %v1551 = vunpack.c.h.b16 %v954
    %v1552 = vunpack.c.l.b16 %v955
    %v1553 = vunpack.c.h.b16 %v955
    %v1554 = vunpack.c.l.b16 %v956
    %v1555 = vunpack.c.h.b16 %v956
    %v1556 = vunpack.c.l.b16 %v957
    %v1557 = vunpack.c.h.b16 %v957
    %v1558 = vunpack.c.l.b16 %v958
    %v1559 = vunpack.c.h.b16 %v958
    %v1560 = vunpack.c.l.b16 %v959
    %v1561 = vunpack.c.h.b16 %v959
    %v1562 = vunpack.c.l.b16 %v960
    %v1563 = vunpack.c.h.b16 %v960
    %v1564 = vunpack.c.l.b16 %v961
    %v1565 = vunpack.c.h.b16 %v961
    %v1566 = vunpack.c.l.b16 %v962
    %v1567 = vunpack.c.h.b16 %v962
    %v1568 = vunpack.c.l.b16 %v963
    %v1569 = vunpack.c.h.b16 %v963
    %v1570 = vunpack.c.l.b16 %v964
    %v1571 = vunpack.c.h.b16 %v964
    %v1572 = vunpack.c.l.b16 %v965
    %v1573 = vunpack.c.h.b16 %v965
    %v1574 = vunpack.c.l.b16 %v966
    %v1575 = vunpack.c.h.b16 %v966
    %v1576 = vunpack.c.l.b16 %v967
    %v1577 = vunpack.c.h.b16 %v967
    %v1578 = vunpack.c.l.b16 %v968
    %v1579 = vunpack.c.h.b16 %v968
    %v1580 = vunpack.c.l.b16 %v969
    %v1581 = vunpack.c.h.b16 %v969
    %v1582 = vunpack.c.l.b16 %v970
    %v1583 = vunpack.c.h.b16 %v970
    %v1584 = vunpack.c.l.b16 %v971
    %v1585 = vunpack.c.h.b16 %v971
    %v1586 = vunpack.c.l.b16 %v972
    %v1587 = vunpack.c.h.b16 %v972
    %v1588 = vunpack.c.l.b16 %v973
    %v1589 = vunpack.c.h.b16 %v973
    %v1590 = vunpack.c.l.b16 %v974
    %v1591 = vunpack.c.h.b16 %v974
    %v1592 = vunpack.c.l.b16 %v975
    %v1593 = vunpack.c.h.b16 %v975
    %v1594 = vunpack.c.l.b16 %v976
    %v1595 = vunpack.c.h.b16 %v976
    %v1596 = vunpack.c.l.b16 %v977
    %v1597 = vunpack.c.h.b16 %v977
    %v1598 = vunpack.c.l.b16 %v978
    %v1599 = vunpack.c.h.b16 %v978
    %v1600 = vunpack.c.l.b16 %v979
    %v1601 = vunpack.c.h.b16 %v979
    %v1602 = vunpack.c.l.b16 %v980
    %v1603 = vunpack.c.h.b16 %v980
    %v1604 = vunpack.c.l.b16 %v981
    %v1605 = vunpack.c.h.b16 %v981
    %v1606 = vunpack.c.l.b16 %v982
    %v1607 = vunpack.c.h.b16 %v982
    %v1608 = vunpack.c.l.b16 %v983
    %v1609 = vunpack.c.h.b16 %v983
    %v1610 = vunpack.c.l.b16 %v984
    %v1611 = vunpack.c.h.b16 %v984
    %v1612 = vunpack.c.l.b16 %v985
    %v1613 = vunpack.c.h.b16 %v985
    %v1614 = vunpack.c.l.b16 %v986
    %v1615 = vunpack.c.h.b16 %v986
    %v1616 = vunpack.c.l.b16 %v987
    %v1617 = vunpack.c.h.b16 %v987
    %v1618 = vunpack.c.l.b16 %v988
    %v1619 = vunpack.c.h.b16 %v988
    %v1620 = vunpack.c.l.b16 %v989
    %v1621 = vunpack.c.h.b16 %v989
    %v1622 = vunpack.c.l.b16 %v990
    %v1623 = vunpack.c.h.b16 %v990
    %v1624 = vunpack.c.l.b16 %v991
    %v1625 = vunpack.c.h.b16 %v991
    %v1626 = vunpack.c.l.b16 %v992
    %v1627 = vunpack.c.h.b16 %v992
    %v1628 = vunpack.c.l.b16 %v993
    %v1629 = vunpack.c.h.b16 %v993
    %v1630 = vunpack.c.l.b16 %v994
    %v1631 = vunpack.c.h.b16 %v994
    %v1632 = vunpack.c.l.b16 %v995
    %v1633 = vunpack.c.h.b16 %v995
    %v1634 = vunpack.c.l.b16 %v996
    %v1635 = vunpack.c.h.b16 %v996
    %v1636 = vunpack.c.l.b16 %v997
    %v1637 = vunpack.c.h.b16 %v997
    %v1638 = vunpack.c.l.b16 %v998
    %v1639 = vunpack.c.h.b16 %v998
    %v1640 = vunpack.c.l.b16 %v999
    %v1641 = vunpack.c.h.b16 %v999
    %v1642 = vunpack.c.l.b16 %v1000
    %v1643 = vunpack.c.h.b16 %v1000
    %v1644 = vunpack.c.l.b16 %v1001
    %v1645 = vunpack.c.h.b16 %v1001
    %v1646 = vunpack.c.l.b16 %v1002
    %v1647 = vunpack.c.h.b16 %v1002
    %v1648 = vunpack.c.l.b16 %v1003
    %v1649 = vunpack.c.h.b16 %v1003
    %v1650 = vunpack.c.l.b16 %v1004
    %v1651 = vunpack.c.h.b16 %v1004
    %v1652 = vunpack.c.l.b16 %v1005
    %v1653 = vunpack.c.h.b16 %v1005
    %v1654 = vunpack.c.l.b16 %v1006
    %v1655 = vunpack.c.h.b16 %v1006
    %v1656 = vunpack.c.l.b16 %v1007
    %v1657 = vunpack.c.h.b16 %v1007
    %v1658 = vunpack.c.l.b16 %v1008
    %v1659 = vunpack.c.h.b16 %v1008
    %v1660 = vunpack.c.l.b16 %v1009
    %v1661 = vunpack.c.h.b16 %v1009
    %v1662 = vunpack.c.l.b16 %v1010
    %v1663 = vunpack.c.h.b16 %v1010
    %v1664 = vunpack.c.l.b16 %v1011
    %v1665 = vunpack.c.h.b16 %v1011
    %v1666 = vunpack.c.l.b16 %v1012
    %v1667 = vunpack.c.h.b16 %v1012
    %v1668 = vunpack.c.l.b16 %v1013
    %v1669 = vunpack.c.h.b16 %v1013
    %v1670 = vunpack.c.l.b16 %v1014
    %v1671 = vunpack.c.h.b16 %v1014
    %v1672 = vunpack.c.l.b16 %v1015
    %v1673 = vunpack.c.h.b16 %v1015
    %v1674 = vunpack.c.l.b16 %v1016
    %v1675 = vunpack.c.h.b16 %v1016
    %v1676 = vunpack.c.l.b16 %v1017
    %v1677 = vunpack.c.h.b16 %v1017
    %v1678 = vunpack.c.l.b16 %v1018
    %v1679 = vunpack.c.h.b16 %v1018
    %v1680 = vunpack.c.l.b16 %v1019
    %v1681 = vunpack.c.h.b16 %v1019
    %v1682 = vunpack.c.l.b16 %v1020
    %v1683 = vunpack.c.h.b16 %v1020
    %v1684 = vunpack.c.l.b16 %v1021
    %v1685 = vunpack.c.h.b16 %v1021
    %v1686 = vunpack.c.l.b16 %v1022
    %v1687 = vunpack.c.h.b16 %v1022
    %v1688 = vunpack.c.l.b16 %v1023
    %v1689 = vunpack.c.h.b16 %v1023
    %v1690 = vunpack.c.l.b16 %v1024
    %v1691 = vunpack.c.h.b16 %v1024
    %v1692 = vunpack.c.l.b16 %v1025
    %v1693 = vunpack.c.h.b16 %v1025
    %v1694 = vunpack.c.l.b16 %v1026
    %v1695 = vunpack.c.h.b16 %v1026
    %v1696 = vunpack.c.l.b16 %v1027
    %v1697 = vunpack.c.h.b16 %v1027
    %v1698 = vunpack.c.l.b16 %v1028
    %v1699 = vunpack.c.h.b16 %v1028
    %v1700 = vunpack.c.l.b16 %v1029
    %v1701 = vunpack.c.h.b16 %v1029
    %v1702 = vunpack.c.l.b16 %v1030
    %v1703 = vunpack.c.h.b16 %v1030
    %v1704 = vunpack.c.l.b16 %v1031
    %v1705 = vunpack.c.h.b16 %v1031
    %v1706 = vunpack.c.l.b16 %v1032
    %v1707 = vunpack.c.h.b16 %v1032
    %v1708 = vunpack.c.l.b16 %v1033
    %v1709 = vunpack.c.h.b16 %v1033
    %v1710 = vunpack.c.l.b16 %v1034
    %v1711 = vunpack.c.h.b16 %v1034
    %v1712 = vunpack.c.l.b16 %v1035
    %v1713 = vunpack.c.h.b16 %v1035
    %v1714 = vunpack.c.l.b16 %v1036
    %v1715 = vunpack.c.h.b16 %v1036
    %v1716 = vunpack.c.l.b16 %v1037
    %v1717 = vunpack.c.h.b16 %v1037
    %v1718 = vunpack.c.l.b16 %v1038
    %v1719 = vunpack.c.h.b16 %v1038
    %v1720 = vunpack.c.l.b16 %v1039
    %v1721 = vunpack.c.h.b16 %v1039
    %v1722 = vunpack.c.l.b16 %v1040
    %v1723 = vunpack.c.h.b16 %v1040
    %v1724 = vunpack.c.l.b16 %v1041
    %v1725 = vunpack.c.h.b16 %v1041
    %v1726 = vunpack.c.l.b16 %v1042
    %v1727 = vunpack.c.h.b16 %v1042
    %v1728 = vunpack.c.l.b16 %v1043
    %v1729 = vunpack.c.h.b16 %v1043
    %v1730 = vunpack.c.l.b16 %v1044
    %v1731 = vunpack.c.h.b16 %v1044
    %v1732 = vunpack.c.l.b16 %v1045
    %v1733 = vunpack.c.h.b16 %v1045
    %v1734 = vunpack.c.l.b16 %v1046
    %v1735 = vunpack.c.h.b16 %v1046
    %v1736 = vunpack.c.l.b16 %v1047
    %v1737 = vunpack.c.h.b16 %v1047
    %v1738 = vunpack.c.l.b16 %v1048
    %v1739 = vunpack.c.h.b16 %v1048
    %v1740 = vunpack.c.l.b16 %v1049
    %v1741 = vunpack.c.h.b16 %v1049
    %v1742 = vunpack.c.l.b16 %v1050
    %v1743 = vunpack.c.h.b16 %v1050
    %v1744 = vunpack.c.l.b16 %v1051
    %v1745 = vunpack.c.h.b16 %v1051
    %v1746 = vunpack.c.l.b16 %v1052
    %v1747 = vunpack.c.h.b16 %v1052
    %v1748 = vunpack.c.l.b16 %v1053
    %v1749 = vunpack.c.h.b16 %v1053
    %v1750 = vunpack.c.l.b16 %v1054
    %v1751 = vunpack.c.h.b16 %v1054
    %v1752 = vunpack.c.l.b16 %v1055
    %v1753 = vunpack.c.h.b16 %v1055
    %v1754 = vunpack.c.l.b16 %v1056
    %v1755 = vunpack.c.h.b16 %v1056
    %v1756 = vunpack.c.l.b16 %v1057
    %v1757 = vunpack.c.h.b16 %v1057
    %v1758 = vunpack.c.l.b16 %v1058
    %v1759 = vunpack.c.h.b16 %v1058
    %v1760 = vunpack.c.l.b16 %v1059
    %v1761 = vunpack.c.h.b16 %v1059
    %v1762 = vunpack.c.l.b16 %v1060
    %v1763 = vunpack.c.h.b16 %v1060
    %v1764 = vunpack.c.l.b16 %v1061
    %v1765 = vunpack.c.h.b16 %v1061
    %v1766 = vunpack.c.l.b16 %v1062
    %v1767 = vunpack.c.h.b16 %v1062
    %v1768 = vunpack.c.l.b16 %v1063
    %v1769 = vunpack.c.h.b16 %v1063
    %v1770 = vunpack.c.l.b16 %v1064
    %v1771 = vunpack.c.h.b16 %v1064
    %v1772 = vunpack.c.l.b16 %v1065
    %v1773 = vunpack.c.h.b16 %v1065
    %v1774 = vunpack.c.l.b16 %v1066
    %v1775 = vunpack.c.h.b16 %v1066
    %v1776 = vunpack.c.l.b16 %v1067
    %v1777 = vunpack.c.h.b16 %v1067
    %v1778 = vunpack.c.l.b16 %v1068
    %v1779 = vunpack.c.h.b16 %v1068
    %v1780 = vunpack.c.l.b16 %v1069
    %v1781 = vunpack.c.h.b16 %v1069
    %v1782 = vunpack.c.l.b16 %v1070
    %v1783 = vunpack.c.h.b16 %v1070
    %v1784 = vunpack.c.l.b16 %v1071
    %v1785 = vunpack.c.h.b16 %v1071
    %v1786 = vunpack.c.l.b16 %v1072
    %v1787 = vunpack.c.h.b16 %v1072
    %v1788 = vunpack.c.l.b16 %v1073
    %v1789 = vunpack.c.h.b16 %v1073
    %v1790 = vunpack.c.l.b16 %v1074
    %v1791 = vunpack.c.h.b16 %v1074
    %v1792 = vunpack.c.l.b16 %v1075
    %v1793 = vunpack.c.h.b16 %v1075
    %v1794 = vunpack.c.l.b16 %v1076
    %v1795 = vunpack.c.h.b16 %v1076
    %v1796 = vunpack.c.l.b16 %v1077
    %v1797 = vunpack.c.h.b16 %v1077
    %v1798 = vunpack.c.l.b16 %v1078
    %v1799 = vunpack.c.h.b16 %v1078
    %v1800 = vunpack.c.l.b16 %v1079
    %v1801 = vunpack.c.h.b16 %v1079
    %v1802 = vunpack.c.l.b16 %v1080
    %v1803 = vunpack.c.h.b16 %v1080
    %v1804 = vunpack.c.l.b16 %v1081
    %v1805 = vunpack.c.h.b16 %v1081
    %v1806 = vunpack.c.l.b16 %v1082
    %v1807 = vunpack.c.h.b16 %v1082
    %v1808 = vunpack.c.l.b16 %v1083
    %v1809 = vunpack.c.h.b16 %v1083
    %v1810 = vunpack.c.l.b16 %v1084
    %v1811 = vunpack.c.h.b16 %v1084
    %v1812 = vunpack.c.l.b16 %v1085
    %v1813 = vunpack.c.h.b16 %v1085
    %v1814 = vunpack.c.l.b16 %v1086
    %v1815 = vunpack.c.h.b16 %v1086
    %v1816 = vunpack.c.l.b16 %v1087
    %v1817 = vunpack.c.h.b16 %v1087
    %v1818 = vunpack.c.l.b16 %v1088
    %v1819 = vunpack.c.h.b16 %v1088
    %v1820 = vunpack.c.l.b16 %v1089
    %v1821 = vunpack.c.h.b16 %v1089
    %v1822 = vunpack.c.l.b16 %v1090
    %v1823 = vunpack.c.h.b16 %v1090
    %v1824 = vunpack.c.l.b16 %v1091
    %v1825 = vunpack.c.h.b16 %v1091
    %v1826 = vunpack.c.l.b16 %v1092
    %v1827 = vunpack.c.h.b16 %v1092
    %v1828 = vunpack.c.l.b16 %v1093
    %v1829 = vunpack.c.h.b16 %v1093
    %v1830 = vunpack.c.l.b16 %v1094
    %v1831 = vunpack.c.h.b16 %v1094
    %v1832 = vunpack.c.l.b16 %v1095
    %v1833 = vunpack.c.h.b16 %v1095
    %v1834 = vunpack.c.l.b16 %v1096
    %v1835 = vunpack.c.h.b16 %v1096
    %v1836 = vunpack.c.l.b16 %v1097
    %v1837 = vunpack.c.h.b16 %v1097
    %v1838 = vunpack.c.l.b16 %v1098
    %v1839 = vunpack.c.h.b16 %v1098
    %v1840 = vunpack.c.l.b16 %v1099
    %v1841 = vunpack.c.h.b16 %v1099
    %v1842 = vunpack.c.l.b16 %v1100
    %v1843 = vunpack.c.h.b16 %v1100
    %v1844 = vunpack.c.l.b16 %v1101
    %v1845 = vunpack.c.h.b16 %v1101
    %v1846 = vunpack.c.l.b16 %v1102
    %v1847 = vunpack.c.h.b16 %v1102
    %v1848 = vunpack.c.l.b16 %v1103
    %v1849 = vunpack.c.h.b16 %v1103
    %v1850 = vunpack.c.l.b16 %v1104
    %v1851 = vunpack.c.h.b16 %v1104
    %v1852 = vunpack.c.l.b16 %v1105
    %v1853 = vunpack.c.h.b16 %v1105
    %v1854 = vunpack.c.l.b16 %v1106
    %v1855 = vunpack.c.h.b16 %v1106
    %v1856 = vunpack.c.l.b16 %v1107
    %v1857 = vunpack.c.h.b16 %v1107
    %v1858 = vunpack.c.l.b16 %v1108
    %v1859 = vunpack.c.h.b16 %v1108
    %v1860 = vunpack.c.l.b16 %v1109
    %v1861 = vunpack.c.h.b16 %v1109
    %v1862 = vunpack.c.l.b16 %v1110
    %v1863 = vunpack.c.h.b16 %v1110
    %v1864 = vunpack.c.l.b16 %v1111
    %v1865 = vunpack.c.h.b16 %v1111
    %v1866 = vunpack.c.l.b16 %v1112
    %v1867 = vunpack.c.h.b16 %v1112
    %v1868 = vunpack.c.l.b16 %v1113
    %v1869 = vunpack.c.h.b16 %v1113
    %v1870 = vunpack.c.l.b16 %v1114
    %v1871 = vunpack.c.h.b16 %v1114
    %v1872 = vunpack.c.l.b16 %v1115
    %v1873 = vunpack.c.h.b16 %v1115
    %v1874 = vunpack.c.l.b16 %v1116
    %v1875 = vunpack.c.h.b16 %v1116
    %v1876 = vunpack.c.l.b16 %v1117
    %v1877 = vunpack.c.h.b16 %v1117
    %v1878 = vunpack.c.l.b16 %v1118
    %v1879 = vunpack.c.h.b16 %v1118
    %v1880 = vunpack.c.l.b16 %v1119
    %v1881 = vunpack.c.h.b16 %v1119
    %v1882 = vunpack.c.l.b16 %v1120
    %v1883 = vunpack.c.h.b16 %v1120
    %v1884 = vunpack.c.l.b16 %v1121
    %v1885 = vunpack.c.h.b16 %v1121
    %v1886 = vunpack.c.l.b16 %v1122
    %v1887 = vunpack.c.h.b16 %v1122
    %v1888 = vunpack.c.l.b16 %v1123
    %v1889 = vunpack.c.h.b16 %v1123
    %v1890 = vunpack.c.l.b16 %v1124
    %v1891 = vunpack.c.h.b16 %v1124
    %v1892 = vunpack.c.l.b16 %v1125
    %v1893 = vunpack.c.h.b16 %v1125
    %v1894 = vunpack.c.l.b16 %v1126
    %v1895 = vunpack.c.h.b16 %v1126
    %v1896 = vunpack.c.l.b16 %v1127
    %v1897 = vunpack.c.h.b16 %v1127
    %v1898 = vunpack.c.l.b16 %v1128
    %v1899 = vunpack.c.h.b16 %v1128
    %v1900 = vunpack.c.l.b16 %v1129
    %v1901 = vunpack.c.h.b16 %v1129
    %v1902 = vunpack.c.l.b16 %v1130
    %v1903 = vunpack.c.h.b16 %v1130
    %v1904 = vunpack.c.l.b16 %v1131
    %v1905 = vunpack.c.h.b16 %v1131
    %v1906 = vunpack.c.l.b16 %v1132
    %v1907 = vunpack.c.h.b16 %v1132
    %v1908 = vunpack.c.l.b16 %v1133
    %v1909 = vunpack.c.h.b16 %v1133
    %v1910 = vunpack.c.l.b16 %v1134
    %v1911 = vunpack.c.h.b16 %v1134
    %v1912 = vunpack.c.l.b16 %v1135
    %v1913 = vunpack.c.h.b16 %v1135
    %v1914 = vunpack.c.l.b16 %v1136
    %v1915 = vunpack.c.h.b16 %v1136
    %v1916 = vunpack.c.l.b16 %v1137
    %v1917 = vunpack.c.h.b16 %v1137
    %v1918 = vunpack.c.l.b16 %v1138
    %v1919 = vunpack.c.h.b16 %v1138
    %v1920 = vunpack.c.l.b16 %v1139
    %v1921 = vunpack.c.h.b16 %v1139
    %v1922 = vunpack.c.l.b16 %v1140
    %v1923 = vunpack.c.h.b16 %v1140
    %v1924 = vunpack.c.l.b16 %v1141
    %v1925 = vunpack.c.h.b16 %v1141
    %v1926 = vunpack.c.l.b16 %v1142
    %v1927 = vunpack.c.h.b16 %v1142
    %v1928 = vunpack.c.l.b16 %v1143
    %v1929 = vunpack.c.h.b16 %v1143
    %v1930 = vpack.c.b16 %v1426, %v1418
    %v1931 = vpack.c.b16 %v1427, %v1419
    %v1932 = vpack.c.b16 %v1428, %v1420
    %v1933 = vpack.c.b16 %v1429, %v1421
    %v1934 = vpack.c.b16 %v1430, %v1422
    %v1935 = vpack.c.b16 %v1431, %v1423
    %v1936 = vpack.c.b16 %v1432, %v1424
    %v1937 = vpack.c.b16 %v1433, %v1425
    %v1938 = vpack.c.b16 %v1442, %v1434
    %v1939 = vpack.c.b16 %v1443, %v1435
    %v1940 = vpack.c.b16 %v1444, %v1436
    %v1941 = vpack.c.b16 %v1445, %v1437
    %v1942 = vpack.c.b16 %v1446, %v1438
    %v1943 = vpack.c.b16 %v1447, %v1439
    %v1944 = vpack.c.b16 %v1448, %v1440
    %v1945 = vpack.c.b16 %v1449, %v1441
    %v1946 = vpack.c.b16 %v1458, %v1450
    %v1947 = vpack.c.b16 %v1459, %v1451
    %v1948 = vpack.c.b16 %v1460, %v1452
    %v1949 = vpack.c.b16 %v1461, %v1453
    %v1950 = vpack.c.b16 %v1462, %v1454
    %v1951 = vpack.c.b16 %v1463, %v1455
    %v1952 = vpack.c.b16 %v1464, %v1456
    %v1953 = vpack.c.b16 %v1465, %v1457
    %v1954 = vpack.c.b16 %v1474, %v1466
    %v1955 = vpack.c.b16 %v1475, %v1467
    %v1956 = vpack.c.b16 %v1476, %v1468
    %v1957 = vpack.c.b16 %v1477, %v1469
    %v1958 = vpack.c.b16 %v1478, %v1470
    %v1959 = vpack.c.b16 %v1479, %v1471
    %v1960 = vpack.c.b16 %v1480, %v1472
    %v1961 = vpack.c.b16 %v1481, %v1473
    %v1962 = vpack.c.b16 %v1490, %v1482
    %v1963 = vpack.c.b16 %v1491, %v1483
    %v1964 = vpack.c.b16 %v1492, %v1484
    %v1965 = vpack.c.b16 %v1493, %v1485
    %v1966 = vpack.c.b16 %v1494, %v1486
    %v1967 = vpack.c.b16 %v1495, %v1487
    %v1968 = vpack.c.b16 %v1496, %v1488
    %v1969 = vpack.c.b16 %v1497, %v1489
    %v1970 = vpack.c.b16 %v1506, %v1498
    %v1971 = vpack.c.b16 %v1507, %v1499
    %v1972 = vpack.c.b16 %v1508, %v1500
    %v1973 = vpack.c.b16 %v1509, %v1501
    %v1974 = vpack.c.b16 %v1510, %v1502
    %v1975 = vpack.c.b16 %v1511, %v1503
    %v1976 = vpack.c.b16 %v1512, %v1504
    %v1977 = vpack.c.b16 %v1513, %v1505
    %v1978 = vpack.c.b16 %v1522, %v1514
    %v1979 = vpack.c.b16 %v1523, %v1515
    %v1980 = vpack.c.b16 %v1524, %v1516
    %v1981 = vpack.c.b16 %v1525, %v1517
    %v1982 = vpack.c.b16 %v1526, %v1518
    %v1983 = vpack.c.b16 %v1527, %v1519
    %v1984 = vpack.c.b16 %v1528, %v1520
    %v1985 = vpack.c.b16 %v1529, %v1521
    %v1986 = vpack.c.b16 %v1538, %v1530
    %v1987 = vpack.c.b16 %v1539, %v1531
    %v1988 = vpack.c.b16 %v1540, %v1532
    %v1989 = vpack.c.b16 %v1541, %v1533
    %v1990 = vpack.c.b16 %v1542, %v1534
    %v1991 = vpack.c.b16 %v1543, %v1535
    %v1992 = vpack.c.b16 %v1544, %v1536
    %v1993 = vpack.c.b16 %v1545, %v1537
    %v1994 = vpack.c.b16 %v1554, %v1546
    %v1995 = vpack.c.b16 %v1555, %v1547
    %v1996 = vpack.c.b16 %v1556, %v1548
    %v1997 = vpack.c.b16 %v1557, %v1549
    %v1998 = vpack.c.b16 %v1558, %v1550
    %v1999 = vpack.c.b16 %v1559, %v1551
    %v2000 = vpack.c.b16 %v1560, %v1552
    %v2001 = vpack.c.b16 %v1561, %v1553
    %v2002 = vpack.c.b16 %v1570, %v1562
    %v2003 = vpack.c.b16 %v1571, %v1563
    %v2004 = vpack.c.b16 %v1572, %v1564
    %v2005 = vpack.c.b16 %v1573, %v1565
    %v2006 = vpack.c.b16 %v1574, %v1566
    %v2007 = vpack.c.b16 %v1575, %v1567
    %v2008 = vpack.c.b16 %v1576, %v1568
    %v2009 = vpack.c.b16 %v1577, %v1569
    %v2010 = vpack.c.b16 %v1586, %v1578
    %v2011 = vpack.c.b16 %v1587, %v1579
    %v2012 = vpack.c.b16 %v1588, %v1580
    %v2013 = vpack.c.b16 %v1589, %v1581
    %v2014 = vpack.c.b16 %v1590, %v1582
    %v2015 = vpack.c.b16 %v1591, %v1583
    %v2016 = vpack.c.b16 %v1592, %v1584
    %v2017 = vpack.c.b16 %v1593, %v1585
    %v2018 = vpack.c.b16 %v1602, %v1594
    %v2019 = vpack.c.b16 %v1603, %v1595
    %v2020 = vpack.c.b16 %v1604, %v1596
    %v2021 = vpack.c.b16 %v1605, %v1597
    %v2022 = vpack.c.b16 %v1606, %v1598
    %v2023 = vpack.c.b16 %v1607, %v1599
    %v2024 = vpack.c.b16 %v1608, %v1600
    %v2025 = vpack.c.b16 %v1609, %v1601
    %v2026 = vpack.c.b16 %v1618, %v1610
    %v2027 = vpack.c.b16 %v1619, %v1611
    %v2028 = vpack.c.b16 %v1620, %v1612
    %v2029 = vpack.c.b16 %v1621, %v1613
    %v2030 = vpack.c.b16 %v1622, %v1614
    %v2031 = vpack.c.b16 %v1623, %v1615
    %v2032 = vpack.c.b16 %v1624, %v1616
    %v2033 = vpack.c.b16 %v1625, %v1617
    %v2034 = vpack.c.b16 %v1634, %v1626
    %v2035 = vpack.c.b16 %v1635, %v1627
    %v2036 = vpack.c.b16 %v1636, %v1628
    %v2037 = vpack.c.b16 %v1637, %v1629
    %v2038 = vpack.c.b16 %v1638, %v1630
    %v2039 = vpack.c.b16 %v1639, %v1631
    %v2040 = vpack.c.b16 %v1640, %v1632
    %v2041 = vpack.c.b16 %v1641, %v1633
    %v2042 = vpack.c.b16 %v1650, %v1642
    %v2043 = vpack.c.b16 %v1651, %v1643
    %v2044 = vpack.c.b16 %v1652, %v1644
    %v2045 = vpack.c.b16 %v1653, %v1645
    %v2046 = vpack.c.b16 %v1654, %v1646
    %v2047 = vpack.c.b16 %v1655, %v1647
    %v2048 = vpack.c.b16 %v1656, %v1648
    %v2049 = vpack.c.b16 %v1657, %v1649
    %v2050 = vpack.c.b16 %v1666, %v1658
    %v2051 = vpack.c.b16 %v1667, %v1659
    %v2052 = vpack.c.b16 %v1668, %v1660
    %v2053 = vpack.c.b16 %v1669, %v1661
    %v2054 = vpack.c.b16 %v1670, %v1662
    %v2055 = vpack.c.b16 %v1671, %v1663
    %v2056 = vpack.c.b16 %v1672, %v1664
    %v2057 = vpack.c.b16 %v1673, %v1665
    %v2058 = vpack.c.b16 %v1682, %v1674
    %v2059 = vpack.c.b16 %v1683, %v1675
    %v2060 = vpack.c.b16 %v1684, %v1676
    %v2061 = vpack.c.b16 %v1685, %v1677
    %v2062 = vpack.c.b16 %v1686, %v1678
    %v2063 = vpack.c.b16 %v1687, %v1679
    %v2064 = vpack.c.b16 %v1688, %v1680
    %v2065 = vpack.c.b16 %v1689, %v1681
    %v2066 = vpack.c.b16 %v1698, %v1690
    %v2067 = vpack.c.b16 %v1699, %v1691
    %v2068 = vpack.c.b16 %v1700, %v1692
    %v2069 = vpack.c.b16 %v1701, %v1693
    %v2070 = vpack.c.b16 %v1702, %v1694
    %v2071 = vpack.c.b16 %v1703, %v1695
    %v2072 = vpack.c.b16 %v1704, %v1696
    %v2073 = vpack.c.b16 %v1705, %v1697
    %v2074 = vpack.c.b16 %v1714, %v1706
    %v2075 = vpack.c.b16 %v1715, %v1707
    %v2076 = vpack.c.b16 %v1716, %v1708
    %v2077 = vpack.c.b16 %v1717, %v1709
    %v2078 = vpack.c.b16 %v1718, %v1710
    %v2079 = vpack.c.b16 %v1719, %v1711
    %v2080 = vpack.c.b16 %v1720, %v1712
    %v2081 = vpack.c.b16 %v1721, %v1713
    %v2082 = vpack.c.b16 %v1730, %v1722
    %v2083 = vpack.c.b16 %v1731, %v1723
    %v2084 = vpack.c.b16 %v1732, %v1724
    %v2085 = vpack.c.b16 %v1733, %v1725
    %v2086 = vpack.c.b16 %v1734, %v1726
    %v2087 = vpack.c.b16 %v1735, %v1727
    %v2088 = vpack.c.b16 %v1736, %v1728
    %v2089 = vpack.c.b16 %v1737, %v1729
    %v2090 = vpack.c.b16 %v1746, %v1738
    %v2091 = vpack.c.b16 %v1747, %v1739
    %v2092 = vpack.c.b16 %v1748, %v1740
    %v2093 = vpack.c.b16 %v1749, %v1741
    %v2094 = vpack.c.b16 %v1750, %v1742
    %v2095 = vpack.c.b16 %v1751, %v1743
    %v2096 = vpack.c.b16 %v1752, %v1744
    %v2097 = vpack.c.b16 %v1753, %v1745
    %v2098 = vpack.c.b16 %v1762, %v1754
    %v2099 = vpack.c.b16 %v1763, %v1755
    %v2100 = vpack.c.b16 %v1764, %v1756
    %v2101 = vpack.c.b16 %v1765, %v1757
    %v2102 = vpack.c.b16 %v1766, %v1758
    %v2103 = vpack.c.b16 %v1767, %v1759
    %v2104 = vpack.c.b16 %v1768, %v1760
    %v2105 = vpack.c.b16 %v1769, %v1761
    %v2106 = vpack.c.b16 %v1778, %v1770
    %v2107 = vpack.c.b16 %v1779, %v1771
    %v2108 = vpack.c.b16 %v1780, %v1772
    %v2109 = vpack.c.b16 %v1781, %v1773
    %v2110 = vpack.c.b16 %v1782, %v1774
    %v2111 = vpack.c.b16 %v1783, %v1775
    %v2112 = vpack.c.b16 %v1784, %v1776
    %v2113 = vpack.c.b16 %v1785, %v1777
    %v2114 = vpack.c.b16 %v1794, %v1786
    %v2115 = vpack.c.b16 %v1795, %v1787
    %v2116 = vpack.c.b16 %v1796, %v1788
    %v2117 = vpack.c.b16 %v1797, %v1789
    %v2118 = vpack.c.b16 %v1798, %v1790
    %v2119 = vpack.c.b16 %v1799, %v1791
    %v2120 = vpack.c.b16 %v1800, %v1792
    %v2121 = vpack.c.b16 %v1801, %v1793
    %v2122 = vpack.c.b16 %v1810, %v1802
    %v2123 = vpack.c.b16 %v1811, %v1803
    %v2124 = vpack.c.b16 %v1812, %v1804
    %v2125 = vpack.c.b16 %v1813, %v1805
    %v2126 = vpack.c.b16 %v1814, %v1806
    %v2127 = vpack.c.b16 %v1815, %v1807
    %v2128 = vpack.c.b16 %v1816, %v1808
    %v2129 = vpack.c.b16 %v1817, %v1809
    %v2130 = vpack.c.b16 %v1826, %v1818
    %v2131 = vpack.c.b16 %v1827, %v1819
    %v2132 = vpack.c.b16 %v1828, %v1820
    %v2133 = vpack.c.b16 %v1829, %v1821
    %v2134 = vpack.c.b16 %v1830, %v1822
    %v2135 = vpack.c.b16 %v1831, %v1823
    %v2136 = vpack.c.b16 %v1832, %v1824
    %v2137 = vpack.c.b16 %v1833, %v1825
    %v2138 = vpack.c.b16 %v1842, %v1834
    %v2139 = vpack.c.b16 %v1843, %v1835
    %v2140 = vpack.c.b16 %v1844, %v1836
    %v2141 = vpack.c.b16 %v1845, %v1837
    %v2142 = vpack.c.b16 %v1846, %v1838
    %v2143 = vpack.c.b16 %v1847, %v1839
    %v2144 = vpack.c.b16 %v1848, %v1840
    %v2145 = vpack.c.b16 %v1849, %v1841
    %v2146 = vpack.c.b16 %v1858, %v1850
    %v2147 = vpack.c.b16 %v1859, %v1851
    %v2148 = vpack.c.b16 %v1860, %v1852
    %v2149 = vpack.c.b16 %v1861, %v1853
    %v2150 = vpack.c.b16 %v1862, %v1854
    %v2151 = vpack.c.b16 %v1863, %v1855
    %v2152 = vpack.c.b16 %v1864, %v1856
    %v2153 = vpack.c.b16 %v1865, %v1857
    %v2154 = vpack.c.b16 %v1874, %v1866
    %v2155 = vpack.c.b16 %v1875, %v1867
    %v2156 = vpack.c.b16 %v1876, %v1868
    %v2157 = vpack.c.b16 %v1877, %v1869
    %v2158 = vpack.c.b16 %v1878, %v1870
    %v2159 = vpack.c.b16 %v1879, %v1871
    %v2160 = vpack.c.b16 %v1880, %v1872
    %v2161 = vpack.c.b16 %v1881, %v1873
    %v2162 = vpack.c.b16 %v1890, %v1882
    %v2163 = vpack.c.b16 %v1891, %v1883
    %v2164 = vpack.c.b16 %v1892, %v1884
    %v2165 = vpack.c.b16 %v1893, %v1885
    %v2166 = vpack.c.b16 %v1894, %v1886
    %v2167 = vpack.c.b16 %v1895, %v1887
    %v2168 = vpack.c.b16 %v1896, %v1888
    %v2169 = vpack.c.b16 %v1897, %v1889
    %v2170 = vpack.c.b16 %v1906, %v1898
    %v2171 = vpack.c.b16 %v1907, %v1899
    %v2172 = vpack.c.b16 %v1908, %v1900
    %v2173 = vpack.c.b16 %v1909, %v1901
    %v2174 = vpack.c.b16 %v1910, %v1902
    %v2175 = vpack.c.b16 %v1911, %v1903
    %v2176 = vpack.c.b16 %v1912, %v1904
    %v2177 = vpack.c.b16 %v1913, %v1905
    %v2178 = vpack.c.b16 %v1922, %v1914
    %v2179 = vpack.c.b16 %v1923, %v1915
    %v2180 = vpack.c.b16 %v1924, %v1916
    %v2181 = vpack.c.b16 %v1925, %v1917
    %v2182 = vpack.c.b16 %v1926, %v1918
    %v2183 = vpack.c.b16 %v1927, %v1919
    %v2184 = vpack.c.b16 %v1928, %v1920
    %v2185 = vpack.c.b16 %v1929, %v1921
    %2442 = vmatpush.bf16.msra.mxu0 %v1986
    %2443 = vmatpush.bf16.msra.mxu0 %v1978
    %2444 = vmatpush.bf16.msra.mxu0 %v1970
    %2445 = vmatpush.bf16.msra.mxu0 %v1962
    %2446 = vmatpush.bf16.msra.mxu0 %v1954
    %2447 = vmatpush.bf16.msra.mxu0 %v1946
    %2448 = vmatpush.bf16.msra.mxu0 %v1938
    %2449 = vmatpush.bf16.msra.mxu0 %v1930
    %2450 = vmatmul.bf16.gmra.mxu0 %v880
    %v2451 = vpop.f32.mrf.mxu0
    %v2452 = vadd.f32 %v1146, %v2451
    %v2453 = vpop.f32.mrf.mxu0
    %v2454 = vadd.f32 %v1146, %v2453
    %2455 = vmatmul.bf16.gmra.mxu0 %v884
    %v2456 = vpop.f32.mrf.mxu0
    %v2457 = vadd.f32 %v1146, %v2456
    %v2458 = vpop.f32.mrf.mxu0
    %v2459 = vadd.f32 %v1146, %v2458
    %2460 = vdwg.mxu0
    %2461 = vmatpush.bf16.msra.mxu0 %v2050
    %2462 = vmatpush.bf16.msra.mxu0 %v2042
    %2463 = vmatpush.bf16.msra.mxu0 %v2034
    %2464 = vmatpush.bf16.msra.mxu0 %v2026
    %2465 = vmatpush.bf16.msra.mxu0 %v2018
    %2466 = vmatpush.bf16.msra.mxu0 %v2010
    %2467 = vmatpush.bf16.msra.mxu0 %v2002
    %2468 = vmatpush.bf16.msra.mxu0 %v1994
    %2469 = vmatmul.bf16.gmra.mxu0 %v881
    %v2470 = vpop.f32.mrf.mxu0
    %v2471 = vadd.f32 %v2452, %v2470
    %v2472 = vpop.f32.mrf.mxu0
    %v2473 = vadd.f32 %v2454, %v2472
    %2474 = vmatmul.bf16.gmra.mxu0 %v885
    %v2475 = vpop.f32.mrf.mxu0
    %v2476 = vadd.f32 %v2457, %v2475
    %v2477 = vpop.f32.mrf.mxu0
    %v2478 = vadd.f32 %v2459, %v2477
    %2479 = vdwg.mxu0
    %2480 = vmatpush.bf16.msra.mxu0 %v2114
    %2481 = vmatpush.bf16.msra.mxu0 %v2106
    %2482 = vmatpush.bf16.msra.mxu0 %v2098
    %2483 = vmatpush.bf16.msra.mxu0 %v2090
    %2484 = vmatpush.bf16.msra.mxu0 %v2082
    %2485 = vmatpush.bf16.msra.mxu0 %v2074
    %2486 = vmatpush.bf16.msra.mxu0 %v2066
    %2487 = vmatpush.bf16.msra.mxu0 %v2058
    %2488 = vmatmul.bf16.gmra.mxu0 %v882
    %v2489 = vpop.f32.mrf.mxu0
    %v2490 = vadd.f32 %v2471, %v2489
    %v2491 = vpop.f32.mrf.mxu0
    %v2492 = vadd.f32 %v2473, %v2491
    %2493 = vmatmul.bf16.gmra.mxu0 %v886
    %v2494 = vpop.f32.mrf.mxu0
    %v2495 = vadd.f32 %v2476, %v2494
    %v2496 = vpop.f32.mrf.mxu0
    %v2497 = vadd.f32 %v2478, %v2496
    %2498 = vdwg.mxu0
    %2499 = vmatpush.bf16.msra.mxu0 %v2178
    %2500 = vmatpush.bf16.msra.mxu0 %v2170
    %2501 = vmatpush.bf16.msra.mxu0 %v2162
    %2502 = vmatpush.bf16.msra.mxu0 %v2154
    %2503 = vmatpush.bf16.msra.mxu0 %v2146
    %2504 = vmatpush.bf16.msra.mxu0 %v2138
    %2505 = vmatpush.bf16.msra.mxu0 %v2130
    %2506 = vmatpush.bf16.msra.mxu0 %v2122
    %2507 = vmatmul.bf16.gmra.mxu0 %v883
    %v2508 = vpop.f32.mrf.mxu0
    %v2509 = vadd.f32 %v2490, %v2508
    %v2510 = vpop.f32.mrf.mxu0
    %v2511 = vadd.f32 %v2492, %v2510
    %2512 = vmatmul.bf16.gmra.mxu0 %v887
    %v2513 = vpop.f32.mrf.mxu0
    %v2514 = vadd.f32 %v2495, %v2513
    %v2515 = vpop.f32.mrf.mxu0
    %v2516 = vadd.f32 %v2497, %v2515
    %2517 = vdwg.mxu0
    %2518 = vmatpush.bf16.msra.mxu0 %v1987
    %2519 = vmatpush.bf16.msra.mxu0 %v1979
    %2520 = vmatpush.bf16.msra.mxu0 %v1971
    %2521 = vmatpush.bf16.msra.mxu0 %v1963
    %2522 = vmatpush.bf16.msra.mxu0 %v1955
    %2523 = vmatpush.bf16.msra.mxu0 %v1947
    %2524 = vmatpush.bf16.msra.mxu0 %v1939
    %2525 = vmatpush.bf16.msra.mxu0 %v1931
    %2526 = vmatmul.bf16.gmra.mxu0 %v880
    %v2527 = vpop.f32.mrf.mxu0
    %v2528 = vadd.f32 %v1147, %v2527
    %v2529 = vpop.f32.mrf.mxu0
    %v2530 = vadd.f32 %v1147, %v2529
    %2531 = vmatmul.bf16.gmra.mxu0 %v884
    %v2532 = vpop.f32.mrf.mxu0
    %v2533 = vadd.f32 %v1147, %v2532
    %v2534 = vpop.f32.mrf.mxu0
    %v2535 = vadd.f32 %v1147, %v2534
    %2536 = vdwg.mxu0
    %2537 = vmatpush.bf16.msra.mxu0 %v2051
    %2538 = vmatpush.bf16.msra.mxu0 %v2043
    %2539 = vmatpush.bf16.msra.mxu0 %v2035
    %2540 = vmatpush.bf16.msra.mxu0 %v2027
    %2541 = vmatpush.bf16.msra.mxu0 %v2019
    %2542 = vmatpush.bf16.msra.mxu0 %v2011
    %2543 = vmatpush.bf16.msra.mxu0 %v2003
    %2544 = vmatpush.bf16.msra.mxu0 %v1995
    %2545 = vmatmul.bf16.gmra.mxu0 %v881
    %v2546 = vpop.f32.mrf.mxu0
    %v2547 = vadd.f32 %v2528, %v2546
    %v2548 = vpop.f32.mrf.mxu0
    %v2549 = vadd.f32 %v2530, %v2548
    %2550 = vmatmul.bf16.gmra.mxu0 %v885
    %v2551 = vpop.f32.mrf.mxu0
    %v2552 = vadd.f32 %v2533, %v2551
    %v2553 = vpop.f32.mrf.mxu0
    %v2554 = vadd.f32 %v2535, %v2553
    %2555 = vdwg.mxu0
    %2556 = vmatpush.bf16.msra.mxu0 %v2115
    %2557 = vmatpush.bf16.msra.mxu0 %v2107
    %2558 = vmatpush.bf16.msra.mxu0 %v2099
    %2559 = vmatpush.bf16.msra.mxu0 %v2091
    %2560 = vmatpush.bf16.msra.mxu0 %v2083
    %2561 = vmatpush.bf16.msra.mxu0 %v2075
    %2562 = vmatpush.bf16.msra.mxu0 %v2067
    %2563 = vmatpush.bf16.msra.mxu0 %v2059
    %2564 = vmatmul.bf16.gmra.mxu0 %v882
    %v2565 = vpop.f32.mrf.mxu0
    %v2566 = vadd.f32 %v2547, %v2565
    %v2567 = vpop.f32.mrf.mxu0
    %v2568 = vadd.f32 %v2549, %v2567
    %2569 = vmatmul.bf16.gmra.mxu0 %v886
    %v2570 = vpop.f32.mrf.mxu0
    %v2571 = vadd.f32 %v2552, %v2570
    %v2572 = vpop.f32.mrf.mxu0
    %v2573 = vadd.f32 %v2554, %v2572
    %2574 = vdwg.mxu0
    %2575 = vmatpush.bf16.msra.mxu0 %v2179
    %2576 = vmatpush.bf16.msra.mxu0 %v2171
    %2577 = vmatpush.bf16.msra.mxu0 %v2163
    %2578 = vmatpush.bf16.msra.mxu0 %v2155
    %2579 = vmatpush.bf16.msra.mxu0 %v2147
    %2580 = vmatpush.bf16.msra.mxu0 %v2139
    %2581 = vmatpush.bf16.msra.mxu0 %v2131
    %2582 = vmatpush.bf16.msra.mxu0 %v2123
    %2583 = vmatmul.bf16.gmra.mxu0 %v883
    %v2584 = vpop.f32.mrf.mxu0
    %v2585 = vadd.f32 %v2566, %v2584
    %v2586 = vpop.f32.mrf.mxu0
    %v2587 = vadd.f32 %v2568, %v2586
    %2588 = vmatmul.bf16.gmra.mxu0 %v887
    %v2589 = vpop.f32.mrf.mxu0
    %v2590 = vadd.f32 %v2571, %v2589
    %v2591 = vpop.f32.mrf.mxu0
    %v2592 = vadd.f32 %v2573, %v2591
    %2593 = vdwg.mxu0
    %2594 = vmatpush.bf16.msra.mxu0 %v1988
    %2595 = vmatpush.bf16.msra.mxu0 %v1980
    %2596 = vmatpush.bf16.msra.mxu0 %v1972
    %2597 = vmatpush.bf16.msra.mxu0 %v1964
    %2598 = vmatpush.bf16.msra.mxu0 %v1956
    %2599 = vmatpush.bf16.msra.mxu0 %v1948
    %2600 = vmatpush.bf16.msra.mxu0 %v1940
    %2601 = vmatpush.bf16.msra.mxu0 %v1932
    %2602 = vmatmul.bf16.gmra.mxu0 %v880
    %v2603 = vpop.f32.mrf.mxu0
    %v2604 = vadd.f32 %v1148, %v2603
    %v2605 = vpop.f32.mrf.mxu0
    %v2606 = vadd.f32 %v1148, %v2605
    %2607 = vmatmul.bf16.gmra.mxu0 %v884
    %v2608 = vpop.f32.mrf.mxu0
    %v2609 = vadd.f32 %v1148, %v2608
    %v2610 = vpop.f32.mrf.mxu0
    %v2611 = vadd.f32 %v1148, %v2610
    %2612 = vdwg.mxu0
    %2613 = vmatpush.bf16.msra.mxu0 %v2052
    %2614 = vmatpush.bf16.msra.mxu0 %v2044
    %2615 = vmatpush.bf16.msra.mxu0 %v2036
    %2616 = vmatpush.bf16.msra.mxu0 %v2028
    %2617 = vmatpush.bf16.msra.mxu0 %v2020
    %2618 = vmatpush.bf16.msra.mxu0 %v2012
    %2619 = vmatpush.bf16.msra.mxu0 %v2004
    %2620 = vmatpush.bf16.msra.mxu0 %v1996
    %2621 = vmatmul.bf16.gmra.mxu0 %v881
    %v2622 = vpop.f32.mrf.mxu0
    %v2623 = vadd.f32 %v2604, %v2622
    %v2624 = vpop.f32.mrf.mxu0
    %v2625 = vadd.f32 %v2606, %v2624
    %2626 = vmatmul.bf16.gmra.mxu0 %v885
    %v2627 = vpop.f32.mrf.mxu0
    %v2628 = vadd.f32 %v2609, %v2627
    %v2629 = vpop.f32.mrf.mxu0
    %v2630 = vadd.f32 %v2611, %v2629
    %2631 = vdwg.mxu0
    %2632 = vmatpush.bf16.msra.mxu0 %v2116
    %2633 = vmatpush.bf16.msra.mxu0 %v2108
    %2634 = vmatpush.bf16.msra.mxu0 %v2100
    %2635 = vmatpush.bf16.msra.mxu0 %v2092
    %2636 = vmatpush.bf16.msra.mxu0 %v2084
    %2637 = vmatpush.bf16.msra.mxu0 %v2076
    %2638 = vmatpush.bf16.msra.mxu0 %v2068
    %2639 = vmatpush.bf16.msra.mxu0 %v2060
    %2640 = vmatmul.bf16.gmra.mxu0 %v882
    %v2641 = vpop.f32.mrf.mxu0
    %v2642 = vadd.f32 %v2623, %v2641
    %v2643 = vpop.f32.mrf.mxu0
    %v2644 = vadd.f32 %v2625, %v2643
    %2645 = vmatmul.bf16.gmra.mxu0 %v886
    %v2646 = vpop.f32.mrf.mxu0
    %v2647 = vadd.f32 %v2628, %v2646
    %v2648 = vpop.f32.mrf.mxu0
    %v2649 = vadd.f32 %v2630, %v2648
    %2650 = vdwg.mxu0
    %2651 = vmatpush.bf16.msra.mxu0 %v2180
    %2652 = vmatpush.bf16.msra.mxu0 %v2172
    %2653 = vmatpush.bf16.msra.mxu0 %v2164
    %2654 = vmatpush.bf16.msra.mxu0 %v2156
    %2655 = vmatpush.bf16.msra.mxu0 %v2148
    %2656 = vmatpush.bf16.msra.mxu0 %v2140
    %2657 = vmatpush.bf16.msra.mxu0 %v2132
    %2658 = vmatpush.bf16.msra.mxu0 %v2124
    %2659 = vmatmul.bf16.gmra.mxu0 %v883
    %v2660 = vpop.f32.mrf.mxu0
    %v2661 = vadd.f32 %v2642, %v2660
    %v2662 = vpop.f32.mrf.mxu0
    %v2663 = vadd.f32 %v2644, %v2662
    %2664 = vmatmul.bf16.gmra.mxu0 %v887
    %v2665 = vpop.f32.mrf.mxu0
    %v2666 = vadd.f32 %v2647, %v2665
    %v2667 = vpop.f32.mrf.mxu0
    %v2668 = vadd.f32 %v2649, %v2667
    %2669 = vdwg.mxu0
    %2670 = vmatpush.bf16.msra.mxu0 %v1989
    %2671 = vmatpush.bf16.msra.mxu0 %v1981
    %2672 = vmatpush.bf16.msra.mxu0 %v1973
    %2673 = vmatpush.bf16.msra.mxu0 %v1965
    %2674 = vmatpush.bf16.msra.mxu0 %v1957
    %2675 = vmatpush.bf16.msra.mxu0 %v1949
    %2676 = vmatpush.bf16.msra.mxu0 %v1941
    %2677 = vmatpush.bf16.msra.mxu0 %v1933
    %2678 = vmatmul.bf16.gmra.mxu0 %v880
    %v2679 = vpop.f32.mrf.mxu0
    %v2680 = vadd.f32 %v1149, %v2679
    %v2681 = vpop.f32.mrf.mxu0
    %v2682 = vadd.f32 %v1149, %v2681
    %2683 = vmatmul.bf16.gmra.mxu0 %v884
    %v2684 = vpop.f32.mrf.mxu0
    %v2685 = vadd.f32 %v1149, %v2684
    %v2686 = vpop.f32.mrf.mxu0
    %v2687 = vadd.f32 %v1149, %v2686
    %2688 = vdwg.mxu0
    %2689 = vmatpush.bf16.msra.mxu0 %v2053
    %2690 = vmatpush.bf16.msra.mxu0 %v2045
    %2691 = vmatpush.bf16.msra.mxu0 %v2037
    %2692 = vmatpush.bf16.msra.mxu0 %v2029
    %2693 = vmatpush.bf16.msra.mxu0 %v2021
    %2694 = vmatpush.bf16.msra.mxu0 %v2013
    %2695 = vmatpush.bf16.msra.mxu0 %v2005
    %2696 = vmatpush.bf16.msra.mxu0 %v1997
    %2697 = vmatmul.bf16.gmra.mxu0 %v881
    %v2698 = vpop.f32.mrf.mxu0
    %v2699 = vadd.f32 %v2680, %v2698
    %v2700 = vpop.f32.mrf.mxu0
    %v2701 = vadd.f32 %v2682, %v2700
    %2702 = vmatmul.bf16.gmra.mxu0 %v885
    %v2703 = vpop.f32.mrf.mxu0
    %v2704 = vadd.f32 %v2685, %v2703
    %v2705 = vpop.f32.mrf.mxu0
    %v2706 = vadd.f32 %v2687, %v2705
    %2707 = vdwg.mxu0
    %2708 = vmatpush.bf16.msra.mxu0 %v2117
    %2709 = vmatpush.bf16.msra.mxu0 %v2109
    %2710 = vmatpush.bf16.msra.mxu0 %v2101
    %2711 = vmatpush.bf16.msra.mxu0 %v2093
    %2712 = vmatpush.bf16.msra.mxu0 %v2085
    %2713 = vmatpush.bf16.msra.mxu0 %v2077
    %2714 = vmatpush.bf16.msra.mxu0 %v2069
    %2715 = vmatpush.bf16.msra.mxu0 %v2061
    %2716 = vmatmul.bf16.gmra.mxu0 %v882
    %v2717 = vpop.f32.mrf.mxu0
    %v2718 = vadd.f32 %v2699, %v2717
    %v2719 = vpop.f32.mrf.mxu0
    %v2720 = vadd.f32 %v2701, %v2719
    %2721 = vmatmul.bf16.gmra.mxu0 %v886
    %v2722 = vpop.f32.mrf.mxu0
    %v2723 = vadd.f32 %v2704, %v2722
    %v2724 = vpop.f32.mrf.mxu0
    %v2725 = vadd.f32 %v2706, %v2724
    %2726 = vdwg.mxu0
    %2727 = vmatpush.bf16.msra.mxu0 %v2181
    %2728 = vmatpush.bf16.msra.mxu0 %v2173
    %2729 = vmatpush.bf16.msra.mxu0 %v2165
    %2730 = vmatpush.bf16.msra.mxu0 %v2157
    %2731 = vmatpush.bf16.msra.mxu0 %v2149
    %2732 = vmatpush.bf16.msra.mxu0 %v2141
    %2733 = vmatpush.bf16.msra.mxu0 %v2133
    %2734 = vmatpush.bf16.msra.mxu0 %v2125
    %2735 = vmatmul.bf16.gmra.mxu0 %v883
    %v2736 = vpop.f32.mrf.mxu0
    %v2737 = vadd.f32 %v2718, %v2736
    %v2738 = vpop.f32.mrf.mxu0
    %v2739 = vadd.f32 %v2720, %v2738
    %2740 = vmatmul.bf16.gmra.mxu0 %v887
    %v2741 = vpop.f32.mrf.mxu0
    %v2742 = vadd.f32 %v2723, %v2741
    %v2743 = vpop.f32.mrf.mxu0
    %v2744 = vadd.f32 %v2725, %v2743
    %2745 = vdwg.mxu0
    %2746 = vmatpush.bf16.msra.mxu0 %v1990
    %2747 = vmatpush.bf16.msra.mxu0 %v1982
    %2748 = vmatpush.bf16.msra.mxu0 %v1974
    %2749 = vmatpush.bf16.msra.mxu0 %v1966
    %2750 = vmatpush.bf16.msra.mxu0 %v1958
    %2751 = vmatpush.bf16.msra.mxu0 %v1950
    %2752 = vmatpush.bf16.msra.mxu0 %v1942
    %2753 = vmatpush.bf16.msra.mxu0 %v1934
    %2754 = vmatmul.bf16.gmra.mxu0 %v880
    %v2755 = vpop.f32.mrf.mxu0
    %v2756 = vadd.f32 %v1150, %v2755
    %v2757 = vpop.f32.mrf.mxu0
    %v2758 = vadd.f32 %v1150, %v2757
    %2759 = vmatmul.bf16.gmra.mxu0 %v884
    %v2760 = vpop.f32.mrf.mxu0
    %v2761 = vadd.f32 %v1150, %v2760
    %v2762 = vpop.f32.mrf.mxu0
    %v2763 = vadd.f32 %v1150, %v2762
    %2764 = vdwg.mxu0
    %2765 = vmatpush.bf16.msra.mxu0 %v2054
    %2766 = vmatpush.bf16.msra.mxu0 %v2046
    %2767 = vmatpush.bf16.msra.mxu0 %v2038
    %2768 = vmatpush.bf16.msra.mxu0 %v2030
    %2769 = vmatpush.bf16.msra.mxu0 %v2022
    %2770 = vmatpush.bf16.msra.mxu0 %v2014
    %2771 = vmatpush.bf16.msra.mxu0 %v2006
    %2772 = vmatpush.bf16.msra.mxu0 %v1998
    %2773 = vmatmul.bf16.gmra.mxu0 %v881
    %v2774 = vpop.f32.mrf.mxu0
    %v2775 = vadd.f32 %v2756, %v2774
    %v2776 = vpop.f32.mrf.mxu0
    %v2777 = vadd.f32 %v2758, %v2776
    %2778 = vmatmul.bf16.gmra.mxu0 %v885
    %v2779 = vpop.f32.mrf.mxu0
    %v2780 = vadd.f32 %v2761, %v2779
    %v2781 = vpop.f32.mrf.mxu0
    %v2782 = vadd.f32 %v2763, %v2781
    %2783 = vdwg.mxu0
    %2784 = vmatpush.bf16.msra.mxu0 %v2118
    %2785 = vmatpush.bf16.msra.mxu0 %v2110
    %2786 = vmatpush.bf16.msra.mxu0 %v2102
    %2787 = vmatpush.bf16.msra.mxu0 %v2094
    %2788 = vmatpush.bf16.msra.mxu0 %v2086
    %2789 = vmatpush.bf16.msra.mxu0 %v2078
    %2790 = vmatpush.bf16.msra.mxu0 %v2070
    %2791 = vmatpush.bf16.msra.mxu0 %v2062
    %2792 = vmatmul.bf16.gmra.mxu0 %v882
    %v2793 = vpop.f32.mrf.mxu0
    %v2794 = vadd.f32 %v2775, %v2793
    %v2795 = vpop.f32.mrf.mxu0
    %v2796 = vadd.f32 %v2777, %v2795
    %2797 = vmatmul.bf16.gmra.mxu0 %v886
    %v2798 = vpop.f32.mrf.mxu0
    %v2799 = vadd.f32 %v2780, %v2798
    %v2800 = vpop.f32.mrf.mxu0
    %v2801 = vadd.f32 %v2782, %v2800
    %2802 = vdwg.mxu0
    %2803 = vmatpush.bf16.msra.mxu0 %v2182
    %2804 = vmatpush.bf16.msra.mxu0 %v2174
    %2805 = vmatpush.bf16.msra.mxu0 %v2166
    %2806 = vmatpush.bf16.msra.mxu0 %v2158
    %2807 = vmatpush.bf16.msra.mxu0 %v2150
    %2808 = vmatpush.bf16.msra.mxu0 %v2142
    %2809 = vmatpush.bf16.msra.mxu0 %v2134
    %2810 = vmatpush.bf16.msra.mxu0 %v2126
    %2811 = vmatmul.bf16.gmra.mxu0 %v883
    %v2812 = vpop.f32.mrf.mxu0
    %v2813 = vadd.f32 %v2794, %v2812
    %v2814 = vpop.f32.mrf.mxu0
    %v2815 = vadd.f32 %v2796, %v2814
    %2816 = vmatmul.bf16.gmra.mxu0 %v887
    %v2817 = vpop.f32.mrf.mxu0
    %v2818 = vadd.f32 %v2799, %v2817
    %v2819 = vpop.f32.mrf.mxu0
    %v2820 = vadd.f32 %v2801, %v2819
    %2821 = vdwg.mxu0
    %2822 = vmatpush.bf16.msra.mxu0 %v1991
    %2823 = vmatpush.bf16.msra.mxu0 %v1983
    %2824 = vmatpush.bf16.msra.mxu0 %v1975
    %2825 = vmatpush.bf16.msra.mxu0 %v1967
    %2826 = vmatpush.bf16.msra.mxu0 %v1959
    %2827 = vmatpush.bf16.msra.mxu0 %v1951
    %2828 = vmatpush.bf16.msra.mxu0 %v1943
    %2829 = vmatpush.bf16.msra.mxu0 %v1935
    %2830 = vmatmul.bf16.gmra.mxu0 %v880
    %v2831 = vpop.f32.mrf.mxu0
    %v2832 = vadd.f32 %v1151, %v2831
    %v2833 = vpop.f32.mrf.mxu0
    %v2834 = vadd.f32 %v1151, %v2833
    %2835 = vmatmul.bf16.gmra.mxu0 %v884
    %v2836 = vpop.f32.mrf.mxu0
    %v2837 = vadd.f32 %v1151, %v2836
    %v2838 = vpop.f32.mrf.mxu0
    %v2839 = vadd.f32 %v1151, %v2838
    %2840 = vdwg.mxu0
    %2841 = vmatpush.bf16.msra.mxu0 %v2055
    %2842 = vmatpush.bf16.msra.mxu0 %v2047
    %2843 = vmatpush.bf16.msra.mxu0 %v2039
    %2844 = vmatpush.bf16.msra.mxu0 %v2031
    %2845 = vmatpush.bf16.msra.mxu0 %v2023
    %2846 = vmatpush.bf16.msra.mxu0 %v2015
    %2847 = vmatpush.bf16.msra.mxu0 %v2007
    %2848 = vmatpush.bf16.msra.mxu0 %v1999
    %2849 = vmatmul.bf16.gmra.mxu0 %v881
    %v2850 = vpop.f32.mrf.mxu0
    %v2851 = vadd.f32 %v2832, %v2850
    %v2852 = vpop.f32.mrf.mxu0
    %v2853 = vadd.f32 %v2834, %v2852
    %2854 = vmatmul.bf16.gmra.mxu0 %v885
    %v2855 = vpop.f32.mrf.mxu0
    %v2856 = vadd.f32 %v2837, %v2855
    %v2857 = vpop.f32.mrf.mxu0
    %v2858 = vadd.f32 %v2839, %v2857
    %2859 = vdwg.mxu0
    %2860 = vmatpush.bf16.msra.mxu0 %v2119
    %2861 = vmatpush.bf16.msra.mxu0 %v2111
    %2862 = vmatpush.bf16.msra.mxu0 %v2103
    %2863 = vmatpush.bf16.msra.mxu0 %v2095
    %2864 = vmatpush.bf16.msra.mxu0 %v2087
    %2865 = vmatpush.bf16.msra.mxu0 %v2079
    %2866 = vmatpush.bf16.msra.mxu0 %v2071
    %2867 = vmatpush.bf16.msra.mxu0 %v2063
    %2868 = vmatmul.bf16.gmra.mxu0 %v882
    %v2869 = vpop.f32.mrf.mxu0
    %v2870 = vadd.f32 %v2851, %v2869
    %v2871 = vpop.f32.mrf.mxu0
    %v2872 = vadd.f32 %v2853, %v2871
    %2873 = vmatmul.bf16.gmra.mxu0 %v886
    %v2874 = vpop.f32.mrf.mxu0
    %v2875 = vadd.f32 %v2856, %v2874
    %v2876 = vpop.f32.mrf.mxu0
    %v2877 = vadd.f32 %v2858, %v2876
    %2878 = vdwg.mxu0
    %2879 = vmatpush.bf16.msra.mxu0 %v2183
    %2880 = vmatpush.bf16.msra.mxu0 %v2175
    %2881 = vmatpush.bf16.msra.mxu0 %v2167
    %2882 = vmatpush.bf16.msra.mxu0 %v2159
    %2883 = vmatpush.bf16.msra.mxu0 %v2151
    %2884 = vmatpush.bf16.msra.mxu0 %v2143
    %2885 = vmatpush.bf16.msra.mxu0 %v2135
    %2886 = vmatpush.bf16.msra.mxu0 %v2127
    %2887 = vmatmul.bf16.gmra.mxu0 %v883
    %v2888 = vpop.f32.mrf.mxu0
    %v2889 = vadd.f32 %v2870, %v2888
    %v2890 = vpop.f32.mrf.mxu0
    %v2891 = vadd.f32 %v2872, %v2890
    %2892 = vmatmul.bf16.gmra.mxu0 %v887
    %v2893 = vpop.f32.mrf.mxu0
    %v2894 = vadd.f32 %v2875, %v2893
    %v2895 = vpop.f32.mrf.mxu0
    %v2896 = vadd.f32 %v2877, %v2895
    %2897 = vdwg.mxu0
    %2898 = vmatpush.bf16.msra.mxu0 %v1992
    %2899 = vmatpush.bf16.msra.mxu0 %v1984
    %2900 = vmatpush.bf16.msra.mxu0 %v1976
    %2901 = vmatpush.bf16.msra.mxu0 %v1968
    %2902 = vmatpush.bf16.msra.mxu0 %v1960
    %2903 = vmatpush.bf16.msra.mxu0 %v1952
    %2904 = vmatpush.bf16.msra.mxu0 %v1944
    %2905 = vmatpush.bf16.msra.mxu0 %v1936
    %2906 = vmatmul.bf16.gmra.mxu0 %v880
    %v2907 = vpop.f32.mrf.mxu0
    %v2908 = vadd.f32 %v1152, %v2907
    %v2909 = vpop.f32.mrf.mxu0
    %v2910 = vadd.f32 %v1152, %v2909
    %2911 = vmatmul.bf16.gmra.mxu0 %v884
    %v2912 = vpop.f32.mrf.mxu0
    %v2913 = vadd.f32 %v1152, %v2912
    %v2914 = vpop.f32.mrf.mxu0
    %v2915 = vadd.f32 %v1152, %v2914
    %2916 = vdwg.mxu0
    %2917 = vmatpush.bf16.msra.mxu0 %v2056
    %2918 = vmatpush.bf16.msra.mxu0 %v2048
    %2919 = vmatpush.bf16.msra.mxu0 %v2040
    %2920 = vmatpush.bf16.msra.mxu0 %v2032
    %2921 = vmatpush.bf16.msra.mxu0 %v2024
    %2922 = vmatpush.bf16.msra.mxu0 %v2016
    %2923 = vmatpush.bf16.msra.mxu0 %v2008
    %2924 = vmatpush.bf16.msra.mxu0 %v2000
    %2925 = vmatmul.bf16.gmra.mxu0 %v881
    %v2926 = vpop.f32.mrf.mxu0
    %v2927 = vadd.f32 %v2908, %v2926
    %v2928 = vpop.f32.mrf.mxu0
    %v2929 = vadd.f32 %v2910, %v2928
    %2930 = vmatmul.bf16.gmra.mxu0 %v885
    %v2931 = vpop.f32.mrf.mxu0
    %v2932 = vadd.f32 %v2913, %v2931
    %v2933 = vpop.f32.mrf.mxu0
    %v2934 = vadd.f32 %v2915, %v2933
    %2935 = vdwg.mxu0
    %2936 = vmatpush.bf16.msra.mxu0 %v2120
    %2937 = vmatpush.bf16.msra.mxu0 %v2112
    %2938 = vmatpush.bf16.msra.mxu0 %v2104
    %2939 = vmatpush.bf16.msra.mxu0 %v2096
    %2940 = vmatpush.bf16.msra.mxu0 %v2088
    %2941 = vmatpush.bf16.msra.mxu0 %v2080
    %2942 = vmatpush.bf16.msra.mxu0 %v2072
    %2943 = vmatpush.bf16.msra.mxu0 %v2064
    %2944 = vmatmul.bf16.gmra.mxu0 %v882
    %v2945 = vpop.f32.mrf.mxu0
    %v2946 = vadd.f32 %v2927, %v2945
    %v2947 = vpop.f32.mrf.mxu0
    %v2948 = vadd.f32 %v2929, %v2947
    %2949 = vmatmul.bf16.gmra.mxu0 %v886
    %v2950 = vpop.f32.mrf.mxu0
    %v2951 = vadd.f32 %v2932, %v2950
    %v2952 = vpop.f32.mrf.mxu0
    %v2953 = vadd.f32 %v2934, %v2952
    %2954 = vdwg.mxu0
    %2955 = vmatpush.bf16.msra.mxu0 %v2184
    %2956 = vmatpush.bf16.msra.mxu0 %v2176
    %2957 = vmatpush.bf16.msra.mxu0 %v2168
    %2958 = vmatpush.bf16.msra.mxu0 %v2160
    %2959 = vmatpush.bf16.msra.mxu0 %v2152
    %2960 = vmatpush.bf16.msra.mxu0 %v2144
    %2961 = vmatpush.bf16.msra.mxu0 %v2136
    %2962 = vmatpush.bf16.msra.mxu0 %v2128
    %2963 = vmatmul.bf16.gmra.mxu0 %v883
    %v2964 = vpop.f32.mrf.mxu0
    %v2965 = vadd.f32 %v2946, %v2964
    %v2966 = vpop.f32.mrf.mxu0
    %v2967 = vadd.f32 %v2948, %v2966
    %2968 = vmatmul.bf16.gmra.mxu0 %v887
    %v2969 = vpop.f32.mrf.mxu0
    %v2970 = vadd.f32 %v2951, %v2969
    %v2971 = vpop.f32.mrf.mxu0
    %v2972 = vadd.f32 %v2953, %v2971
    %2973 = vdwg.mxu0
    %2974 = vmatpush.bf16.msra.mxu0 %v1993
    %2975 = vmatpush.bf16.msra.mxu0 %v1985
    %2976 = vmatpush.bf16.msra.mxu0 %v1977
    %2977 = vmatpush.bf16.msra.mxu0 %v1969
    %2978 = vmatpush.bf16.msra.mxu0 %v1961
    %2979 = vmatpush.bf16.msra.mxu0 %v1953
    %2980 = vmatpush.bf16.msra.mxu0 %v1945
    %2981 = vmatpush.bf16.msra.mxu0 %v1937
    %2982 = vmatmul.bf16.gmra.mxu0 %v880
    %v2983 = vpop.f32.mrf.mxu0
    %v2984 = vadd.f32 %v1153, %v2983
    %v2985 = vpop.f32.mrf.mxu0
    %v2986 = vadd.f32 %v1153, %v2985
    %2987 = vmatmul.bf16.gmra.mxu0 %v884
    %v2988 = vpop.f32.mrf.mxu0
    %v2989 = vadd.f32 %v1153, %v2988
    %v2990 = vpop.f32.mrf.mxu0
    %v2991 = vadd.f32 %v1153, %v2990
    %2992 = vdwg.mxu0
    %2993 = vmatpush.bf16.msra.mxu0 %v2057
    %2994 = vmatpush.bf16.msra.mxu0 %v2049
    %2995 = vmatpush.bf16.msra.mxu0 %v2041
    %2996 = vmatpush.bf16.msra.mxu0 %v2033
    %2997 = vmatpush.bf16.msra.mxu0 %v2025
    %2998 = vmatpush.bf16.msra.mxu0 %v2017
    %2999 = vmatpush.bf16.msra.mxu0 %v2009
    %3000 = vmatpush.bf16.msra.mxu0 %v2001
    %3001 = vmatmul.bf16.gmra.mxu0 %v881
    %v3002 = vpop.f32.mrf.mxu0
    %v3003 = vadd.f32 %v2984, %v3002
    %v3004 = vpop.f32.mrf.mxu0
    %v3005 = vadd.f32 %v2986, %v3004
    %3006 = vmatmul.bf16.gmra.mxu0 %v885
    %v3007 = vpop.f32.mrf.mxu0
    %v3008 = vadd.f32 %v2989, %v3007
    %v3009 = vpop.f32.mrf.mxu0
    %v3010 = vadd.f32 %v2991, %v3009
    %3011 = vdwg.mxu0
    %3012 = vmatpush.bf16.msra.mxu0 %v2121
    %3013 = vmatpush.bf16.msra.mxu0 %v2113
    %3014 = vmatpush.bf16.msra.mxu0 %v2105
    %3015 = vmatpush.bf16.msra.mxu0 %v2097
    %3016 = vmatpush.bf16.msra.mxu0 %v2089
    %3017 = vmatpush.bf16.msra.mxu0 %v2081
    %3018 = vmatpush.bf16.msra.mxu0 %v2073
    %3019 = vmatpush.bf16.msra.mxu0 %v2065
    %3020 = vmatmul.bf16.gmra.mxu0 %v882
    %v3021 = vpop.f32.mrf.mxu0
    %v3022 = vadd.f32 %v3003, %v3021
    %v3023 = vpop.f32.mrf.mxu0
    %v3024 = vadd.f32 %v3005, %v3023
    %3025 = vmatmul.bf16.gmra.mxu0 %v886
    %v3026 = vpop.f32.mrf.mxu0
    %v3027 = vadd.f32 %v3008, %v3026
    %v3028 = vpop.f32.mrf.mxu0
    %v3029 = vadd.f32 %v3010, %v3028
    %3030 = vdwg.mxu0
    %3031 = vmatpush.bf16.msra.mxu0 %v2185
    %3032 = vmatpush.bf16.msra.mxu0 %v2177
    %3033 = vmatpush.bf16.msra.mxu0 %v2169
    %3034 = vmatpush.bf16.msra.mxu0 %v2161
    %3035 = vmatpush.bf16.msra.mxu0 %v2153
    %3036 = vmatpush.bf16.msra.mxu0 %v2145
    %3037 = vmatpush.bf16.msra.mxu0 %v2137
    %3038 = vmatpush.bf16.msra.mxu0 %v2129
    %3039 = vmatmul.bf16.gmra.mxu0 %v883
    %v3040 = vpop.f32.mrf.mxu0
    %v3041 = vadd.f32 %v3022, %v3040
    %v3042 = vpop.f32.mrf.mxu0
    %v3043 = vadd.f32 %v3024, %v3042
    %3044 = vmatmul.bf16.gmra.mxu0 %v887
    %v3045 = vpop.f32.mrf.mxu0
    %v3046 = vadd.f32 %v3027, %v3045
    %v3047 = vpop.f32.mrf.mxu0
    %v3048 = vadd.f32 %v3029, %v3047
    %3049 = vdwg.mxu0
    %vm3050 = vcmp.gt.f32.partialorder %v2509, 0.0
    %vm3051 = vcmp.gt.f32.partialorder %v2585, 0.0
    %vm3052 = vcmp.gt.f32.partialorder %v2661, 0.0
    %vm3053 = vcmp.gt.f32.partialorder %v2737, 0.0
    %vm3054 = vcmp.gt.f32.partialorder %v2813, 0.0
    %vm3055 = vcmp.gt.f32.partialorder %v2889, 0.0
    %vm3056 = vcmp.gt.f32.partialorder %v2965, 0.0
    %vm3057 = vcmp.gt.f32.partialorder %v3041, 0.0
    %vm3058 = vcmp.gt.f32.partialorder %v2511, 0.0
    %vm3059 = vcmp.gt.f32.partialorder %v2587, 0.0
    %vm3060 = vcmp.gt.f32.partialorder %v2663, 0.0
    %vm3061 = vcmp.gt.f32.partialorder %v2739, 0.0
    %vm3062 = vcmp.gt.f32.partialorder %v2815, 0.0
    %vm3063 = vcmp.gt.f32.partialorder %v2891, 0.0
    %vm3064 = vcmp.gt.f32.partialorder %v2967, 0.0
    %vm3065 = vcmp.gt.f32.partialorder %v3043, 0.0
    %vm3066 = vcmp.gt.f32.partialorder %v2514, 0.0
    %vm3067 = vcmp.gt.f32.partialorder %v2590, 0.0
    %vm3068 = vcmp.gt.f32.partialorder %v2666, 0.0
    %vm3069 = vcmp.gt.f32.partialorder %v2742, 0.0
    %vm3070 = vcmp.gt.f32.partialorder %v2818, 0.0
    %vm3071 = vcmp.gt.f32.partialorder %v2894, 0.0
    %vm3072 = vcmp.gt.f32.partialorder %v2970, 0.0
    %vm3073 = vcmp.gt.f32.partialorder %v3046, 0.0
    %vm3074 = vcmp.gt.f32.partialorder %v2516, 0.0
    %vm3075 = vcmp.gt.f32.partialorder %v2592, 0.0
    %vm3076 = vcmp.gt.f32.partialorder %v2668, 0.0
    %vm3077 = vcmp.gt.f32.partialorder %v2744, 0.0
    %vm3078 = vcmp.gt.f32.partialorder %v2820, 0.0
    %vm3079 = vcmp.gt.f32.partialorder %v2896, 0.0
    %vm3080 = vcmp.gt.f32.partialorder %v2972, 0.0
    %vm3081 = vcmp.gt.f32.partialorder %v3048, 0.0
    %v3082 = vmul.f32 %v2509, 0.2
    %v3083 = vmul.f32 %v2585, 0.2
    %v3084 = vmul.f32 %v2661, 0.2
    %v3085 = vmul.f32 %v2737, 0.2
    %v3086 = vmul.f32 %v2813, 0.2
    %v3087 = vmul.f32 %v2889, 0.2
    %v3088 = vmul.f32 %v2965, 0.2
    %v3089 = vmul.f32 %v3041, 0.2
    %v3090 = vmul.f32 %v2511, 0.2
    %v3091 = vmul.f32 %v2587, 0.2
    %v3092 = vmul.f32 %v2663, 0.2
    %v3093 = vmul.f32 %v2739, 0.2
    %v3094 = vmul.f32 %v2815, 0.2
    %v3095 = vmul.f32 %v2891, 0.2
    %v3096 = vmul.f32 %v2967, 0.2
    %v3097 = vmul.f32 %v3043, 0.2
    %v3098 = vmul.f32 %v2514, 0.2
    %v3099 = vmul.f32 %v2590, 0.2
    %v3100 = vmul.f32 %v2666, 0.2
    %v3101 = vmul.f32 %v2742, 0.2
    %v3102 = vmul.f32 %v2818, 0.2
    %v3103 = vmul.f32 %v2894, 0.2
    %v3104 = vmul.f32 %v2970, 0.2
    %v3105 = vmul.f32 %v3046, 0.2
    %v3106 = vmul.f32 %v2516, 0.2
    %v3107 = vmul.f32 %v2592, 0.2
    %v3108 = vmul.f32 %v2668, 0.2
    %v3109 = vmul.f32 %v2744, 0.2
    %v3110 = vmul.f32 %v2820, 0.2
    %v3111 = vmul.f32 %v2896, 0.2
    %v3112 = vmul.f32 %v2972, 0.2
    %v3113 = vmul.f32 %v3048, 0.2
    %v3114 = vsel %vm3050, %v2509, %v3082
    %v3115 = vsel %vm3051, %v2585, %v3083
    %v3116 = vsel %vm3052, %v2661, %v3084
    %v3117 = vsel %vm3053, %v2737, %v3085
    %v3118 = vsel %vm3054, %v2813, %v3086
    %v3119 = vsel %vm3055, %v2889, %v3087
    %v3120 = vsel %vm3056, %v2965, %v3088
    %v3121 = vsel %vm3057, %v3041, %v3089
    %v3122 = vsel %vm3058, %v2511, %v3090
    %v3123 = vsel %vm3059, %v2587, %v3091
    %v3124 = vsel %vm3060, %v2663, %v3092
    %v3125 = vsel %vm3061, %v2739, %v3093
    %v3126 = vsel %vm3062, %v2815, %v3094
    %v3127 = vsel %vm3063, %v2891, %v3095
    %v3128 = vsel %vm3064, %v2967, %v3096
    %v3129 = vsel %vm3065, %v3043, %v3097
    %v3130 = vsel %vm3066, %v2514, %v3098
    %v3131 = vsel %vm3067, %v2590, %v3099
    %v3132 = vsel %vm3068, %v2666, %v3100
    %v3133 = vsel %vm3069, %v2742, %v3101
    %v3134 = vsel %vm3070, %v2818, %v3102
    %v3135 = vsel %vm3071, %v2894, %v3103
    %v3136 = vsel %vm3072, %v2970, %v3104
    %v3137 = vsel %vm3073, %v3046, %v3105
    %v3138 = vsel %vm3074, %v2516, %v3106
    %v3139 = vsel %vm3075, %v2592, %v3107
    %v3140 = vsel %vm3076, %v2668, %v3108
    %v3141 = vsel %vm3077, %v2744, %v3109
    %v3142 = vsel %vm3078, %v2820, %v3110
    %v3143 = vsel %vm3079, %v2896, %v3111
    %v3144 = vsel %vm3080, %v2972, %v3112
    %v3145 = vsel %vm3081, %v3048, %v3113
    %v3146 = vpack.c.bf16 %v3122, %v3114
    %v3147 = vpack.c.bf16 %v3123, %v3115
    %v3148 = vpack.c.bf16 %v3124, %v3116
    %v3149 = vpack.c.bf16 %v3125, %v3117
    %v3150 = vpack.c.bf16 %v3126, %v3118
    %v3151 = vpack.c.bf16 %v3127, %v3119
    %v3152 = vpack.c.bf16 %v3128, %v3120
    %v3153 = vpack.c.bf16 %v3129, %v3121
    %v3154 = vpack.c.bf16 %v3138, %v3130
    %v3155 = vpack.c.bf16 %v3139, %v3131
    %v3156 = vpack.c.bf16 %v3140, %v3132
    %v3157 = vpack.c.bf16 %v3141, %v3133
    %v3158 = vpack.c.bf16 %v3142, %v3134
    %v3159 = vpack.c.bf16 %v3143, %v3135
    %v3160 = vpack.c.bf16 %v3144, %v3136
    %v3161 = vpack.c.bf16 %v3145, %v3137
    %v3162 = vld [vmem:[#allocation14] sm:$0xf]
    %v3163 = vld [vmem:[#allocation14 + $0x4] sm:$0xf]
    %v3164 = vld [vmem:[#allocation14 + $0x8] sm:$0xf]
    %v3165 = vld [vmem:[#allocation14 + $0xc] sm:$0xf]
    %v3166 = vld [vmem:[#allocation14 + $0x10] sm:$0xf]
    %v3167 = vld [vmem:[#allocation14 + $0x14] sm:$0xf]
    %v3168 = vld [vmem:[#allocation14 + $0x18] sm:$0xf]
    %v3169 = vld [vmem:[#allocation14 + $0x1c] sm:$0xf]
    %v3170 = vld [vmem:[#allocation14 + $0x20] sm:$0xf]
    %v3171 = vld [vmem:[#allocation14 + $0x24] sm:$0xf]
    %v3172 = vld [vmem:[#allocation14 + $0x28] sm:$0xf]
    %v3173 = vld [vmem:[#allocation14 + $0x2c] sm:$0xf]
    %v3174 = vld [vmem:[#allocation14 + $0x30] sm:$0xf]
    %v3175 = vld [vmem:[#allocation14 + $0x34] sm:$0xf]
    %v3176 = vld [vmem:[#allocation14 + $0x38] sm:$0xf]
    %v3177 = vld [vmem:[#allocation14 + $0x3c] sm:$0xf]
    %v3178 = vld [vmem:[#allocation14 + $0x40] sm:$0xf]
    %v3179 = vld [vmem:[#allocation14 + $0x44] sm:$0xf]
    %v3180 = vld [vmem:[#allocation14 + $0x48] sm:$0xf]
    %v3181 = vld [vmem:[#allocation14 + $0x4c] sm:$0xf]
    %v3182 = vld [vmem:[#allocation14 + $0x50] sm:$0xf]
    %v3183 = vld [vmem:[#allocation14 + $0x54] sm:$0xf]
    %v3184 = vld [vmem:[#allocation14 + $0x58] sm:$0xf]
    %v3185 = vld [vmem:[#allocation14 + $0x5c] sm:$0xf]
    %v3186 = vld [vmem:[#allocation14 + $0x60] sm:$0xf]
    %v3187 = vld [vmem:[#allocation14 + $0x64] sm:$0xf]
    %v3188 = vld [vmem:[#allocation14 + $0x68] sm:$0xf]
    %v3189 = vld [vmem:[#allocation14 + $0x6c] sm:$0xf]
    %v3190 = vld [vmem:[#allocation14 + $0x70] sm:$0xf]
    %v3191 = vld [vmem:[#allocation14 + $0x74] sm:$0xf]
    %v3192 = vld [vmem:[#allocation14 + $0x78] sm:$0xf]
    %v3193 = vld [vmem:[#allocation14 + $0x7c] sm:$0xf]
    %v3194 = vld [vmem:[#allocation14 + $0x80] sm:$0xf]
    %v3195 = vld [vmem:[#allocation14 + $0x84] sm:$0xf]
    %v3196 = vld [vmem:[#allocation14 + $0x88] sm:$0xf]
    %v3197 = vld [vmem:[#allocation14 + $0x8c] sm:$0xf]
    %v3198 = vld [vmem:[#allocation14 + $0x90] sm:$0xf]
    %v3199 = vld [vmem:[#allocation14 + $0x94] sm:$0xf]
    %v3200 = vld [vmem:[#allocation14 + $0x98] sm:$0xf]
    %v3201 = vld [vmem:[#allocation14 + $0x9c] sm:$0xf]
    %v3202 = vld [vmem:[#allocation14 + $0xa0] sm:$0xf]
    %v3203 = vld [vmem:[#allocation14 + $0xa4] sm:$0xf]
    %v3204 = vld [vmem:[#allocation14 + $0xa8] sm:$0xf]
    %v3205 = vld [vmem:[#allocation14 + $0xac] sm:$0xf]
    %v3206 = vld [vmem:[#allocation14 + $0xb0] sm:$0xf]
    %v3207 = vld [vmem:[#allocation14 + $0xb4] sm:$0xf]
    %v3208 = vld [vmem:[#allocation14 + $0xb8] sm:$0xf]
    %v3209 = vld [vmem:[#allocation14 + $0xbc] sm:$0xf]
    %v3210 = vld [vmem:[#allocation14 + $0xc0] sm:$0xf]
    %v3211 = vld [vmem:[#allocation14 + $0xc4] sm:$0xf]
    %v3212 = vld [vmem:[#allocation14 + $0xc8] sm:$0xf]
    %v3213 = vld [vmem:[#allocation14 + $0xcc] sm:$0xf]
    %v3214 = vld [vmem:[#allocation14 + $0xd0] sm:$0xf]
    %v3215 = vld [vmem:[#allocation14 + $0xd4] sm:$0xf]
    %v3216 = vld [vmem:[#allocation14 + $0xd8] sm:$0xf]
    %v3217 = vld [vmem:[#allocation14 + $0xdc] sm:$0xf]
    %v3218 = vld [vmem:[#allocation14 + $0xe0] sm:$0xf]
    %v3219 = vld [vmem:[#allocation14 + $0xe4] sm:$0xf]
    %v3220 = vld [vmem:[#allocation14 + $0xe8] sm:$0xf]
    %v3221 = vld [vmem:[#allocation14 + $0xec] sm:$0xf]
    %v3222 = vld [vmem:[#allocation14 + $0xf0] sm:$0xf]
    %v3223 = vld [vmem:[#allocation14 + $0xf4] sm:$0xf]
    %v3224 = vld [vmem:[#allocation14 + $0xf8] sm:$0xf]
    %v3225 = vld [vmem:[#allocation14 + $0xfc] sm:$0xf]
    %v3226 = vld [vmem:[#allocation14 + $0x100] sm:$0xf]
    %v3227 = vld [vmem:[#allocation14 + $0x104] sm:$0xf]
    %v3228 = vld [vmem:[#allocation14 + $0x108] sm:$0xf]
    %v3229 = vld [vmem:[#allocation14 + $0x10c] sm:$0xf]
    %v3230 = vld [vmem:[#allocation14 + $0x110] sm:$0xf]
    %v3231 = vld [vmem:[#allocation14 + $0x114] sm:$0xf]
    %v3232 = vld [vmem:[#allocation14 + $0x118] sm:$0xf]
    %v3233 = vld [vmem:[#allocation14 + $0x11c] sm:$0xf]
    %v3234 = vld [vmem:[#allocation14 + $0x120] sm:$0xf]
    %v3235 = vld [vmem:[#allocation14 + $0x124] sm:$0xf]
    %v3236 = vld [vmem:[#allocation14 + $0x128] sm:$0xf]
    %v3237 = vld [vmem:[#allocation14 + $0x12c] sm:$0xf]
    %v3238 = vld [vmem:[#allocation14 + $0x130] sm:$0xf]
    %v3239 = vld [vmem:[#allocation14 + $0x134] sm:$0xf]
    %v3240 = vld [vmem:[#allocation14 + $0x138] sm:$0xf]
    %v3241 = vld [vmem:[#allocation14 + $0x13c] sm:$0xf]
    %v3242 = vld [vmem:[#allocation14 + $0x140] sm:$0xf]
    %v3243 = vld [vmem:[#allocation14 + $0x144] sm:$0xf]
    %v3244 = vld [vmem:[#allocation14 + $0x148] sm:$0xf]
    %v3245 = vld [vmem:[#allocation14 + $0x14c] sm:$0xf]
    %v3246 = vld [vmem:[#allocation14 + $0x150] sm:$0xf]
    %v3247 = vld [vmem:[#allocation14 + $0x154] sm:$0xf]
    %v3248 = vld [vmem:[#allocation14 + $0x158] sm:$0xf]
    %v3249 = vld [vmem:[#allocation14 + $0x15c] sm:$0xf]
    %v3250 = vld [vmem:[#allocation14 + $0x160] sm:$0xf]
    %v3251 = vld [vmem:[#allocation14 + $0x164] sm:$0xf]
    %v3252 = vld [vmem:[#allocation14 + $0x168] sm:$0xf]
    %v3253 = vld [vmem:[#allocation14 + $0x16c] sm:$0xf]
    %v3254 = vld [vmem:[#allocation14 + $0x170] sm:$0xf]
    %v3255 = vld [vmem:[#allocation14 + $0x174] sm:$0xf]
    %v3256 = vld [vmem:[#allocation14 + $0x178] sm:$0xf]
    %v3257 = vld [vmem:[#allocation14 + $0x17c] sm:$0xf]
    %v3258 = vld [vmem:[#allocation14 + $0x180] sm:$0xf]
    %v3259 = vld [vmem:[#allocation14 + $0x184] sm:$0xf]
    %v3260 = vld [vmem:[#allocation14 + $0x188] sm:$0xf]
    %v3261 = vld [vmem:[#allocation14 + $0x18c] sm:$0xf]
    %v3262 = vld [vmem:[#allocation14 + $0x190] sm:$0xf]
    %v3263 = vld [vmem:[#allocation14 + $0x194] sm:$0xf]
    %v3264 = vld [vmem:[#allocation14 + $0x198] sm:$0xf]
    %v3265 = vld [vmem:[#allocation14 + $0x19c] sm:$0xf]
    %v3266 = vld [vmem:[#allocation14 + $0x1a0] sm:$0xf]
    %v3267 = vld [vmem:[#allocation14 + $0x1a4] sm:$0xf]
    %v3268 = vld [vmem:[#allocation14 + $0x1a8] sm:$0xf]
    %v3269 = vld [vmem:[#allocation14 + $0x1ac] sm:$0xf]
    %v3270 = vld [vmem:[#allocation14 + $0x1b0] sm:$0xf]
    %v3271 = vld [vmem:[#allocation14 + $0x1b4] sm:$0xf]
    %v3272 = vld [vmem:[#allocation14 + $0x1b8] sm:$0xf]
    %v3273 = vld [vmem:[#allocation14 + $0x1bc] sm:$0xf]
    %v3274 = vld [vmem:[#allocation14 + $0x1c0] sm:$0xf]
    %v3275 = vld [vmem:[#allocation14 + $0x1c4] sm:$0xf]
    %v3276 = vld [vmem:[#allocation14 + $0x1c8] sm:$0xf]
    %v3277 = vld [vmem:[#allocation14 + $0x1cc] sm:$0xf]
    %v3278 = vld [vmem:[#allocation14 + $0x1d0] sm:$0xf]
    %v3279 = vld [vmem:[#allocation14 + $0x1d4] sm:$0xf]
    %v3280 = vld [vmem:[#allocation14 + $0x1d8] sm:$0xf]
    %v3281 = vld [vmem:[#allocation14 + $0x1dc] sm:$0xf]
    %v3282 = vld [vmem:[#allocation14 + $0x1e0] sm:$0xf]
    %v3283 = vld [vmem:[#allocation14 + $0x1e4] sm:$0xf]
    %v3284 = vld [vmem:[#allocation14 + $0x1e8] sm:$0xf]
    %v3285 = vld [vmem:[#allocation14 + $0x1ec] sm:$0xf]
    %v3286 = vld [vmem:[#allocation14 + $0x1f0] sm:$0xf]
    %v3287 = vld [vmem:[#allocation14 + $0x1f4] sm:$0xf]
    %v3288 = vld [vmem:[#allocation14 + $0x1f8] sm:$0xf]
    %v3289 = vld [vmem:[#allocation14 + $0x1fc] sm:$0xf]
    %v3290 = vld [vmem:[%s8] sm:$0x1]
    %v3292 = vperm.slane %v3290, 0
    %v3422 = vunpack.c.l.b16 %v3162
    %v3423 = vunpack.c.l.b16 %v3163
    %v3424 = vunpack.c.l.b16 %v3164
    %v3425 = vunpack.c.l.b16 %v3165
    %v3426 = vunpack.c.l.b16 %v3166
    %v3427 = vunpack.c.l.b16 %v3167
    %v3428 = vunpack.c.l.b16 %v3168
    %v3429 = vunpack.c.l.b16 %v3169
    %v3430 = vunpack.c.l.b16 %v3170
    %v3431 = vunpack.c.l.b16 %v3171
    %v3432 = vunpack.c.l.b16 %v3172
    %v3433 = vunpack.c.l.b16 %v3173
    %v3434 = vunpack.c.l.b16 %v3174
    %v3435 = vunpack.c.l.b16 %v3175
    %v3436 = vunpack.c.l.b16 %v3176
    %v3437 = vunpack.c.l.b16 %v3177
    %v3438 = vunpack.c.l.b16 %v3178
    %v3439 = vunpack.c.l.b16 %v3179
    %v3440 = vunpack.c.l.b16 %v3180
    %v3441 = vunpack.c.l.b16 %v3181
    %v3442 = vunpack.c.l.b16 %v3182
    %v3443 = vunpack.c.l.b16 %v3183
    %v3444 = vunpack.c.l.b16 %v3184
    %v3445 = vunpack.c.l.b16 %v3185
    %v3446 = vunpack.c.l.b16 %v3186
    %v3447 = vunpack.c.l.b16 %v3187
    %v3448 = vunpack.c.l.b16 %v3188
    %v3449 = vunpack.c.l.b16 %v3189
    %v3450 = vunpack.c.l.b16 %v3190
    %v3451 = vunpack.c.l.b16 %v3191
    %v3452 = vunpack.c.l.b16 %v3192
    %v3453 = vunpack.c.l.b16 %v3193
    %v3454 = vunpack.c.l.b16 %v3194
    %v3455 = vunpack.c.l.b16 %v3195
    %v3456 = vunpack.c.l.b16 %v3196
    %v3457 = vunpack.c.l.b16 %v3197
    %v3458 = vunpack.c.l.b16 %v3198
    %v3459 = vunpack.c.l.b16 %v3199
    %v3460 = vunpack.c.l.b16 %v3200
    %v3461 = vunpack.c.l.b16 %v3201
    %v3462 = vunpack.c.l.b16 %v3202
    %v3463 = vunpack.c.l.b16 %v3203
    %v3464 = vunpack.c.l.b16 %v3204
    %v3465 = vunpack.c.l.b16 %v3205
    %v3466 = vunpack.c.l.b16 %v3206
    %v3467 = vunpack.c.l.b16 %v3207
    %v3468 = vunpack.c.l.b16 %v3208
    %v3469 = vunpack.c.l.b16 %v3209
    %v3470 = vunpack.c.l.b16 %v3210
    %v3471 = vunpack.c.l.b16 %v3211
    %v3472 = vunpack.c.l.b16 %v3212
    %v3473 = vunpack.c.l.b16 %v3213
    %v3474 = vunpack.c.l.b16 %v3214
    %v3475 = vunpack.c.l.b16 %v3215
    %v3476 = vunpack.c.l.b16 %v3216
    %v3477 = vunpack.c.l.b16 %v3217
    %v3478 = vunpack.c.l.b16 %v3218
    %v3479 = vunpack.c.l.b16 %v3219
    %v3480 = vunpack.c.l.b16 %v3220
    %v3481 = vunpack.c.l.b16 %v3221
    %v3482 = vunpack.c.l.b16 %v3222
    %v3483 = vunpack.c.l.b16 %v3223
    %v3484 = vunpack.c.l.b16 %v3224
    %v3485 = vunpack.c.l.b16 %v3225
    %v3486 = vunpack.c.l.b16 %v3226
    %v3487 = vunpack.c.l.b16 %v3227
    %v3488 = vunpack.c.l.b16 %v3228
    %v3489 = vunpack.c.l.b16 %v3229
    %v3490 = vunpack.c.l.b16 %v3230
    %v3491 = vunpack.c.l.b16 %v3231
    %v3492 = vunpack.c.l.b16 %v3232
    %v3493 = vunpack.c.l.b16 %v3233
    %v3494 = vunpack.c.l.b16 %v3234
    %v3495 = vunpack.c.l.b16 %v3235
    %v3496 = vunpack.c.l.b16 %v3236
    %v3497 = vunpack.c.l.b16 %v3237
    %v3498 = vunpack.c.l.b16 %v3238
    %v3499 = vunpack.c.l.b16 %v3239
    %v3500 = vunpack.c.l.b16 %v3240
    %v3501 = vunpack.c.l.b16 %v3241
    %v3502 = vunpack.c.l.b16 %v3242
    %v3503 = vunpack.c.l.b16 %v3243
    %v3504 = vunpack.c.l.b16 %v3244
    %v3505 = vunpack.c.l.b16 %v3245
    %v3506 = vunpack.c.l.b16 %v3246
    %v3507 = vunpack.c.l.b16 %v3247
    %v3508 = vunpack.c.l.b16 %v3248
    %v3509 = vunpack.c.l.b16 %v3249
    %v3510 = vunpack.c.l.b16 %v3250
    %v3511 = vunpack.c.l.b16 %v3251
    %v3512 = vunpack.c.l.b16 %v3252
    %v3513 = vunpack.c.l.b16 %v3253
    %v3514 = vunpack.c.l.b16 %v3254
    %v3515 = vunpack.c.l.b16 %v3255
    %v3516 = vunpack.c.l.b16 %v3256
    %v3517 = vunpack.c.l.b16 %v3257
    %v3518 = vunpack.c.l.b16 %v3258
    %v3519 = vunpack.c.l.b16 %v3259
    %v3520 = vunpack.c.l.b16 %v3260
    %v3521 = vunpack.c.l.b16 %v3261
    %v3522 = vunpack.c.l.b16 %v3262
    %v3523 = vunpack.c.l.b16 %v3263
    %v3524 = vunpack.c.l.b16 %v3264
    %v3525 = vunpack.c.l.b16 %v3265
    %v3526 = vunpack.c.l.b16 %v3266
    %v3527 = vunpack.c.l.b16 %v3267
    %v3528 = vunpack.c.l.b16 %v3268
    %v3529 = vunpack.c.l.b16 %v3269
    %v3530 = vunpack.c.l.b16 %v3270
    %v3531 = vunpack.c.l.b16 %v3271
    %v3532 = vunpack.c.l.b16 %v3272
    %v3533 = vunpack.c.l.b16 %v3273
    %v3534 = vunpack.c.l.b16 %v3274
    %v3535 = vunpack.c.l.b16 %v3275
    %v3536 = vunpack.c.l.b16 %v3276
    %v3537 = vunpack.c.l.b16 %v3277
    %v3538 = vunpack.c.l.b16 %v3278
    %v3539 = vunpack.c.l.b16 %v3279
    %v3540 = vunpack.c.l.b16 %v3280
    %v3541 = vunpack.c.l.b16 %v3281
    %v3542 = vunpack.c.l.b16 %v3282
    %v3543 = vunpack.c.l.b16 %v3283
    %v3544 = vunpack.c.l.b16 %v3284
    %v3545 = vunpack.c.l.b16 %v3285
    %v3546 = vunpack.c.l.b16 %v3286
    %v3547 = vunpack.c.l.b16 %v3287
    %v3548 = vunpack.c.l.b16 %v3288
    %v3549 = vunpack.c.l.b16 %v3289
    %v3550 = vpack.c.b16 %v3423, %v3422
    %v3551 = vpack.c.b16 %v3425, %v3424
    %v3552 = vpack.c.b16 %v3427, %v3426
    %v3553 = vpack.c.b16 %v3429, %v3428
    %v3554 = vpack.c.b16 %v3431, %v3430
    %v3555 = vpack.c.b16 %v3433, %v3432
    %v3556 = vpack.c.b16 %v3435, %v3434
    %v3557 = vpack.c.b16 %v3437, %v3436
    %v3558 = vpack.c.b16 %v3439, %v3438
    %v3559 = vpack.c.b16 %v3441, %v3440
    %v3560 = vpack.c.b16 %v3443, %v3442
    %v3561 = vpack.c.b16 %v3445, %v3444
    %v3562 = vpack.c.b16 %v3447, %v3446
    %v3563 = vpack.c.b16 %v3449, %v3448
    %v3564 = vpack.c.b16 %v3451, %v3450
    %v3565 = vpack.c.b16 %v3453, %v3452
    %v3566 = vpack.c.b16 %v3455, %v3454
    %v3567 = vpack.c.b16 %v3457, %v3456
    %v3568 = vpack.c.b16 %v3459, %v3458
    %v3569 = vpack.c.b16 %v3461, %v3460
    %v3570 = vpack.c.b16 %v3463, %v3462
    %v3571 = vpack.c.b16 %v3465, %v3464
    %v3572 = vpack.c.b16 %v3467, %v3466
    %v3573 = vpack.c.b16 %v3469, %v3468
    %v3574 = vpack.c.b16 %v3471, %v3470
    %v3575 = vpack.c.b16 %v3473, %v3472
    %v3576 = vpack.c.b16 %v3475, %v3474
    %v3577 = vpack.c.b16 %v3477, %v3476
    %v3578 = vpack.c.b16 %v3479, %v3478
    %v3579 = vpack.c.b16 %v3481, %v3480
    %v3580 = vpack.c.b16 %v3483, %v3482
    %v3581 = vpack.c.b16 %v3485, %v3484
    %v3582 = vpack.c.b16 %v3487, %v3486
    %v3583 = vpack.c.b16 %v3489, %v3488
    %v3584 = vpack.c.b16 %v3491, %v3490
    %v3585 = vpack.c.b16 %v3493, %v3492
    %v3586 = vpack.c.b16 %v3495, %v3494
    %v3587 = vpack.c.b16 %v3497, %v3496
    %v3588 = vpack.c.b16 %v3499, %v3498
    %v3589 = vpack.c.b16 %v3501, %v3500
    %v3590 = vpack.c.b16 %v3503, %v3502
    %v3591 = vpack.c.b16 %v3505, %v3504
    %v3592 = vpack.c.b16 %v3507, %v3506
    %v3593 = vpack.c.b16 %v3509, %v3508
    %v3594 = vpack.c.b16 %v3511, %v3510
    %v3595 = vpack.c.b16 %v3513, %v3512
    %v3596 = vpack.c.b16 %v3515, %v3514
    %v3597 = vpack.c.b16 %v3517, %v3516
    %v3598 = vpack.c.b16 %v3519, %v3518
    %v3599 = vpack.c.b16 %v3521, %v3520
    %v3600 = vpack.c.b16 %v3523, %v3522
    %v3601 = vpack.c.b16 %v3525, %v3524
    %v3602 = vpack.c.b16 %v3527, %v3526
    %v3603 = vpack.c.b16 %v3529, %v3528
    %v3604 = vpack.c.b16 %v3531, %v3530
    %v3605 = vpack.c.b16 %v3533, %v3532
    %v3606 = vpack.c.b16 %v3535, %v3534
    %v3607 = vpack.c.b16 %v3537, %v3536
    %v3608 = vpack.c.b16 %v3539, %v3538
    %v3609 = vpack.c.b16 %v3541, %v3540
    %v3610 = vpack.c.b16 %v3543, %v3542
    %v3611 = vpack.c.b16 %v3545, %v3544
    %v3612 = vpack.c.b16 %v3547, %v3546
    %v3613 = vpack.c.b16 %v3549, %v3548
    %3678 = vmatpush.bf16.msra.mxu0 %v3557
    %3679 = vmatpush.bf16.msra.mxu0 %v3556
    %3680 = vmatpush.bf16.msra.mxu0 %v3555
    %3681 = vmatpush.bf16.msra.mxu0 %v3554
    %3682 = vmatpush.bf16.msra.mxu0 %v3553
    %3683 = vmatpush.bf16.msra.mxu0 %v3552
    %3684 = vmatpush.bf16.msra.mxu0 %v3551
    %3685 = vmatpush.bf16.msra.mxu0 %v3550
    %3686 = vmatmul.bf16.gmra.mxu0 %v3146
    %v3687 = vpop.f32.mrf.mxu0
    %v3688 = vadd.f32 %v3292, %v3687
    %v3689 = vpop.f32.mrf.mxu0
    %v3690 = vadd.f32 %v3292, %v3689
    %3691 = vmatmul.bf16.gmra.mxu0 %v3154
    %v3692 = vpop.f32.mrf.mxu0
    %v3693 = vadd.f32 %v3292, %v3692
    %v3694 = vpop.f32.mrf.mxu0
    %v3695 = vadd.f32 %v3292, %v3694
    %3696 = vdwg.mxu0
    %3697 = vmatpush.bf16.msra.mxu0 %v3565
    %3698 = vmatpush.bf16.msra.mxu0 %v3564
    %3699 = vmatpush.bf16.msra.mxu0 %v3563
    %3700 = vmatpush.bf16.msra.mxu0 %v3562
    %3701 = vmatpush.bf16.msra.mxu0 %v3561
    %3702 = vmatpush.bf16.msra.mxu0 %v3560
    %3703 = vmatpush.bf16.msra.mxu0 %v3559
    %3704 = vmatpush.bf16.msra.mxu0 %v3558
    %3705 = vmatmul.bf16.gmra.mxu0 %v3147
    %v3706 = vpop.f32.mrf.mxu0
    %v3707 = vadd.f32 %v3688, %v3706
    %v3708 = vpop.f32.mrf.mxu0
    %v3709 = vadd.f32 %v3690, %v3708
    %3710 = vmatmul.bf16.gmra.mxu0 %v3155
    %v3711 = vpop.f32.mrf.mxu0
    %v3712 = vadd.f32 %v3693, %v3711
    %v3713 = vpop.f32.mrf.mxu0
    %v3714 = vadd.f32 %v3695, %v3713
    %3715 = vdwg.mxu0
    %3716 = vmatpush.bf16.msra.mxu0 %v3573
    %3717 = vmatpush.bf16.msra.mxu0 %v3572
    %3718 = vmatpush.bf16.msra.mxu0 %v3571
    %3719 = vmatpush.bf16.msra.mxu0 %v3570
    %3720 = vmatpush.bf16.msra.mxu0 %v3569
    %3721 = vmatpush.bf16.msra.mxu0 %v3568
    %3722 = vmatpush.bf16.msra.mxu0 %v3567
    %3723 = vmatpush.bf16.msra.mxu0 %v3566
    %3724 = vmatmul.bf16.gmra.mxu0 %v3148
    %v3725 = vpop.f32.mrf.mxu0
    %v3726 = vadd.f32 %v3707, %v3725
    %v3727 = vpop.f32.mrf.mxu0
    %v3728 = vadd.f32 %v3709, %v3727
    %3729 = vmatmul.bf16.gmra.mxu0 %v3156
    %v3730 = vpop.f32.mrf.mxu0
    %v3731 = vadd.f32 %v3712, %v3730
    %v3732 = vpop.f32.mrf.mxu0
    %v3733 = vadd.f32 %v3714, %v3732
    %3734 = vdwg.mxu0
    %3735 = vmatpush.bf16.msra.mxu0 %v3581
    %3736 = vmatpush.bf16.msra.mxu0 %v3580
    %3737 = vmatpush.bf16.msra.mxu0 %v3579
    %3738 = vmatpush.bf16.msra.mxu0 %v3578
    %3739 = vmatpush.bf16.msra.mxu0 %v3577
    %3740 = vmatpush.bf16.msra.mxu0 %v3576
    %3741 = vmatpush.bf16.msra.mxu0 %v3575
    %3742 = vmatpush.bf16.msra.mxu0 %v3574
    %3743 = vmatmul.bf16.gmra.mxu0 %v3149
    %v3744 = vpop.f32.mrf.mxu0
    %v3745 = vadd.f32 %v3726, %v3744
    %v3746 = vpop.f32.mrf.mxu0
    %v3747 = vadd.f32 %v3728, %v3746
    %3748 = vmatmul.bf16.gmra.mxu0 %v3157
    %v3749 = vpop.f32.mrf.mxu0
    %v3750 = vadd.f32 %v3731, %v3749
    %v3751 = vpop.f32.mrf.mxu0
    %v3752 = vadd.f32 %v3733, %v3751
    %3753 = vdwg.mxu0
    %3754 = vmatpush.bf16.msra.mxu0 %v3589
    %3755 = vmatpush.bf16.msra.mxu0 %v3588
    %3756 = vmatpush.bf16.msra.mxu0 %v3587
    %3757 = vmatpush.bf16.msra.mxu0 %v3586
    %3758 = vmatpush.bf16.msra.mxu0 %v3585
    %3759 = vmatpush.bf16.msra.mxu0 %v3584
    %3760 = vmatpush.bf16.msra.mxu0 %v3583
    %3761 = vmatpush.bf16.msra.mxu0 %v3582
    %3762 = vmatmul.bf16.gmra.mxu0 %v3150
    %v3763 = vpop.f32.mrf.mxu0
    %v3764 = vadd.f32 %v3745, %v3763
    %v3765 = vpop.f32.mrf.mxu0
    %v3766 = vadd.f32 %v3747, %v3765
    %3767 = vmatmul.bf16.gmra.mxu0 %v3158
    %v3768 = vpop.f32.mrf.mxu0
    %v3769 = vadd.f32 %v3750, %v3768
    %v3770 = vpop.f32.mrf.mxu0
    %v3771 = vadd.f32 %v3752, %v3770
    %3772 = vdwg.mxu0
    %3773 = vmatpush.bf16.msra.mxu0 %v3597
    %3774 = vmatpush.bf16.msra.mxu0 %v3596
    %3775 = vmatpush.bf16.msra.mxu0 %v3595
    %3776 = vmatpush.bf16.msra.mxu0 %v3594
    %3777 = vmatpush.bf16.msra.mxu0 %v3593
    %3778 = vmatpush.bf16.msra.mxu0 %v3592
    %3779 = vmatpush.bf16.msra.mxu0 %v3591
    %3780 = vmatpush.bf16.msra.mxu0 %v3590
    %3781 = vmatmul.bf16.gmra.mxu0 %v3151
    %v3782 = vpop.f32.mrf.mxu0
    %v3783 = vadd.f32 %v3764, %v3782
    %v3784 = vpop.f32.mrf.mxu0
    %v3785 = vadd.f32 %v3766, %v3784
    %3786 = vmatmul.bf16.gmra.mxu0 %v3159
    %v3787 = vpop.f32.mrf.mxu0
    %v3788 = vadd.f32 %v3769, %v3787
    %v3789 = vpop.f32.mrf.mxu0
    %v3790 = vadd.f32 %v3771, %v3789
    %3791 = vdwg.mxu0
    %3792 = vmatpush.bf16.msra.mxu0 %v3605
    %3793 = vmatpush.bf16.msra.mxu0 %v3604
    %3794 = vmatpush.bf16.msra.mxu0 %v3603
    %3795 = vmatpush.bf16.msra.mxu0 %v3602
    %3796 = vmatpush.bf16.msra.mxu0 %v3601
    %3797 = vmatpush.bf16.msra.mxu0 %v3600
    %3798 = vmatpush.bf16.msra.mxu0 %v3599
    %3799 = vmatpush.bf16.msra.mxu0 %v3598
    %3800 = vmatmul.bf16.gmra.mxu0 %v3152
    %v3801 = vpop.f32.mrf.mxu0
    %v3802 = vadd.f32 %v3783, %v3801
    %v3803 = vpop.f32.mrf.mxu0
    %v3804 = vadd.f32 %v3785, %v3803
    %3805 = vmatmul.bf16.gmra.mxu0 %v3160
    %v3806 = vpop.f32.mrf.mxu0
    %v3807 = vadd.f32 %v3788, %v3806
    %v3808 = vpop.f32.mrf.mxu0
    %v3809 = vadd.f32 %v3790, %v3808
    %3810 = vdwg.mxu0
    %3811 = vmatpush.bf16.msra.mxu0 %v3613
    %3812 = vmatpush.bf16.msra.mxu0 %v3612
    %3813 = vmatpush.bf16.msra.mxu0 %v3611
    %3814 = vmatpush.bf16.msra.mxu0 %v3610
    %3815 = vmatpush.bf16.msra.mxu0 %v3609
    %3816 = vmatpush.bf16.msra.mxu0 %v3608
    %3817 = vmatpush.bf16.msra.mxu0 %v3607
    %3818 = vmatpush.bf16.msra.mxu0 %v3606
    %3819 = vmatmul.bf16.gmra.mxu0 %v3153
    %v3820 = vpop.f32.mrf.mxu0
    %v3821 = vadd.f32 %v3802, %v3820
    %v3822 = vpop.f32.mrf.mxu0
    %v3823 = vadd.f32 %v3804, %v3822
    %3824 = vmatmul.bf16.gmra.mxu0 %v3161
    %v3825 = vpop.f32.mrf.mxu0
    %v3826 = vadd.f32 %v3807, %v3825
    %v3827 = vpop.f32.mrf.mxu0
    %v3828 = vadd.f32 %v3809, %v3827
    %3829 = vdwg.mxu0
    %v3830 = vtanh.pop %v3821
    %v3831 = vtanh.pop %v3823
    %v3832 = vtanh.pop %v3826
    %v3833 = vtanh.pop %v3828
    %3834 = vst [vmem:[#allocation16] sm:$0xff] %v3830
    %3835 = vst [vmem:[#allocation16 + $0x8] sm:$0xff] %v3831
    %3836 = vst [vmem:[#allocation16 + $0x10] sm:$0xff] %v3832
    %3837 = vst [vmem:[#allocation16 + $0x18] sm:$0xff] %v3833
    // Predicated region
    $region70: #{tpu_custom_call.1} parent=1 // pred_check
      _
    $region71: #{tpu_custom_call.1} parent=1 // pred_check_branch
      %3839 = sbr.rel (0) target = $region73
    $region72: #{tpu_custom_call.1} parent=1 // pred_region
      %3841 = vsyncadd [#allocation4], 0
      %s3842 = sshll.u32 [#allocation16], 4
      %s3843 = int_to_ptr.vmem [resolvable:$true] %s3842
      %s3844 = sshll.u32 %s9, 4
      %s3845 = int_to_ptr.hbm [resolvable:$true] %s3844
      %3850 = dma.vmem_to_hbm [thread:$0]  %s3843, 512, %s3845, [#allocation4], 128, 128, 8
    $region73: #{tpu_custom_call.1} parent=1 // pred_fallthru
      _
    // Predicated region
    $region74: #{tpu_custom_call.1} parent=1 // pred_check
      _
    $region75: #{tpu_custom_call.1} parent=1 // pred_check_branch
      %3852 = sbr.rel (0) target = $region77
    $region76: #{tpu_custom_call.1} parent=1 // pred_region
      %3854 = dma.done [#allocation4], 512
    $region77: #{tpu_custom_call.1} parent=1 // pred_fallthru
      _
    %3855 = vsyncpa [#allocation3], 1
    %3856 = vsyncpa [#allocation6], 1
    %3857 = vsyncpa [#allocation9], 1
    %3858 = vsyncpa [#allocation12], 1
    %3859 = vsyncpa [#allocation15], 1
    %3860 = vsyncpa [#allocation4], 1

// kernel: tpu_custom_call.1
$region0: #{tpu_custom_call.1}
  #allocation0 [shape = 'u32[]', space=smem, size = 0x4, offset = 0x4, fixed_abs, tag = 'smem constant byte address 0x4 - core index']
  #allocation1 [shape = 'u32[72,128]{1,0:T(1,128)}', space=vmem, size = 0x9000, scoped, tag = 'internal scratch']
  %s0 = inlined_call_operand.hbm [shape: f32[32,64], index: 0, kind: input, shape index: {}]
  %s1 = inlined_call_operand.hbm [shape: bf16[64,256], index: 1, kind: input, shape index: {}]
  %s2 = inlined_call_operand.hbm [shape: f32[1,256], index: 2, kind: input, shape index: {}]
  %s3 = inlined_call_operand.hbm [shape: bf16[256,512], index: 3, kind: input, shape index: {}]
  %s4 = inlined_call_operand.hbm [shape: f32[1,512], index: 4, kind: input, shape index: {}]
  %s5 = inlined_call_operand.hbm [shape: bf16[512,1024], index: 5, kind: input, shape index: {}]
  %s6 = inlined_call_operand.hbm [shape: f32[1,1024], index: 6, kind: input, shape index: {}]
  %s7 = inlined_call_operand.hbm [shape: bf16[1024,128], index: 7, kind: input, shape index: {}]
  %s8 = inlined_call_operand.vmem [shape: f32[1,128], index: 8, kind: input, shape index: {}]
  %s9 = inlined_call_operand.hbm [shape: f32[32,128], index: 9, kind: output, shape index: {}]
  %s10 = sld [smem:[#allocation0]]
  $region78: #{tpu_custom_call.1} parent=0
    _
  %s12 = ssub.s32 1, %s10
  %s13 = scalar_select 0, %s12, %s10
  $region1: #{tpu_custom_call.1} parent=0
    #allocation2 [shape = 'u8[16384]{0}', space=vmem, size = 0x4000, scoped, tag = 'input window, operand 0, single buffered']
    #allocation3 [shape = 's32[1]{0}', space=sflag, size = 0x4, scoped, tag = 'scoped memory for tpu_custom_call.1']
    #allocation4 [shape = 's32[1]{0}', space=sflag, size = 0x4, scoped, tag = 'scoped memory for tpu_custom_call.1']
    #allocation5 [shape = 'u8[32768]{0}', space=vmem, size = 0x8000, scoped, tag = 'input window, operand 1, single buffered']
    #allocation6 [shape = 's32[1]{0}', space=sflag, size = 0x4, scoped, tag = 'scoped memory for tpu_custom_call.1']
    #allocation7 [shape = 'u8[1024]{0}', space=vmem, size = 0x400, scoped, tag = 'input window, operand 2, single buffered']
    #allocation8 [shape = 'u8[262144]{0}', space=vmem, size = 0x40000, scoped, tag = 'input window, operand 3, single buffered']
    #allocation9 [shape = 's32[1]{0}', space=sflag, size = 0x4, scoped, tag = 'scoped memory for tpu_custom_call.1']
    #allocation10 [shape = 'u8[2048]{0}', space=vmem, size = 0x800, scoped, tag = 'input window, operand 4, single buffered']
    #allocation11 [shape = 'u8[1048576]{0}', space=vmem, size = 0x100000, scoped, tag = 'input window, operand 5, single buffered']
    #allocation12 [shape = 's32[1]{0}', space=sflag, size = 0x4, scoped, tag = 'scoped memory for tpu_custom_call.1']
    #allocation13 [shape = 'u8[4096]{0}', space=vmem, size = 0x1000, scoped, tag = 'input window, operand 6, single buffered']
    #allocation14 [shape = 'u8[262144]{0}', space=vmem, size = 0x40000, scoped, tag = 'input window, operand 7, single buffered']
    #allocation15 [shape = 's32[1]{0}', space=sflag, size = 0x4, scoped, tag = 'scoped memory for tpu_custom_call.1']
    #allocation16 [shape = 'u8[16384]{0}', space=vmem, size = 0x4000, scoped, tag = 'output window, operand 0, single buffered']
    %14 = vsyncpa [#allocation3], 0
    %15 = vsyncpa [#allocation6], 0
    %16 = vsyncpa [#allocation9], 0
    %17 = vsyncpa [#allocation12], 0
    %18 = vsyncpa [#allocation15], 0
    %19 = vsyncpa [#allocation4], 0
    // Predicated region
    $region2: #{tpu_custom_call.1} parent=1 // pred_check
      _
    $region3: #{tpu_custom_call.1} parent=1 // pred_check_branch
      %21 = sbr.rel (0) target = $region5
    $region4: #{tpu_custom_call.1} parent=1 // pred_region
      %23 = vsyncadd [#allocation3], 0
      %s24 = sshll.u32 %s0, 4
      %s25 = int_to_ptr.hbm [resolvable:$true] %s24
      %s26 = sshll.u32 [#allocation2], 4
      %s27 = int_to_ptr.vmem [resolvable:$true] %s26
      %32 = dma.hbm_to_vmem [thread:$0]  %s25, 512, %s27, [#allocation3], 128, 128, 8
    $region5: #{tpu_custom_call.1} parent=1 // pred_fallthru
      _
    // Predicated region
    $region6: #{tpu_custom_call.1} parent=1 // pred_check
      _
    $region7: #{tpu_custom_call.1} parent=1 // pred_check_branch
      %34 = sbr.rel (0) target = $region9
    $region8: #{tpu_custom_call.1} parent=1 // pred_region
      %36 = vsyncadd [#allocation6], 0
      %s37 = sshll.u32 %s1, 4
      %s38 = int_to_ptr.hbm [resolvable:$true] %s37
      %s39 = sshll.u32 [#allocation5], 4
      %s40 = int_to_ptr.vmem [resolvable:$true] %s39
      %45 = dma.hbm_to_vmem [thread:$0]  %s38, 1024, %s40, [#allocation6], 128, 128, 8
    $region9: #{tpu_custom_call.1} parent=1 // pred_fallthru
      _
    // Predicated region
    $region10: #{tpu_custom_call.1} parent=1 // pred_check
      _
    $region11: #{tpu_custom_call.1} parent=1 // pred_check_branch
      %47 = sbr.rel (0) target = $region13
    $region12: #{tpu_custom_call.1} parent=1 // pred_region
      %49 = vsyncadd [#allocation6], 0
      %s51 = sshll.u32 %s2, 4
      %s52 = int_to_ptr.hbm [resolvable:$true] %s51
      %s53 = sshll.u32 [#allocation7], 4
      %s54 = int_to_ptr.vmem [resolvable:$true] %s53
      %56 = dma.hbm_to_vmem [thread:$0]  %s52, 32, %s54, [#allocation6]
    $region13: #{tpu_custom_call.1} parent=1 // pred_fallthru
      _
    // Predicated region
    $region14: #{tpu_custom_call.1} parent=1 // pred_check
      _
    $region15: #{tpu_custom_call.1} parent=1 // pred_check_branch
      %58 = sbr.rel (0) target = $region17
    $region16: #{tpu_custom_call.1} parent=1 // pred_region
      %60 = vsyncadd [#allocation9], 0
      %s61 = sshll.u32 %s3, 4
      %s62 = int_to_ptr.hbm [resolvable:$true] %s61
      %s63 = sshll.u32 [#allocation8], 4
      %s64 = int_to_ptr.vmem [resolvable:$true] %s63
      %69 = dma.hbm_to_vmem [thread:$0]  %s62, 8192, %s64, [#allocation9], 256, 256, 16
    $region17: #{tpu_custom_call.1} parent=1 // pred_fallthru
      _
    // Predicated region
    $region18: #{tpu_custom_call.1} parent=1 // pred_check
      _
    $region19: #{tpu_custom_call.1} parent=1 // pred_check_branch
      %71 = sbr.rel (0) target = $region21
    $region20: #{tpu_custom_call.1} parent=1 // pred_region
      %73 = vsyncadd [#allocation9], 0
      %s75 = sshll.u32 %s4, 4
      %s76 = int_to_ptr.hbm [resolvable:$true] %s75
      %s77 = sshll.u32 [#allocation10], 4
      %s78 = int_to_ptr.vmem [resolvable:$true] %s77
      %80 = dma.hbm_to_vmem [thread:$0]  %s76, 64, %s78, [#allocation9]
    $region21: #{tpu_custom_call.1} parent=1 // pred_fallthru
      _
    // Predicated region
    $region22: #{tpu_custom_call.1} parent=1 // pred_check
      _
    $region23: #{tpu_custom_call.1} parent=1 // pred_check_branch
      %82 = sbr.rel (0) target = $region25
    $region24: #{tpu_custom_call.1} parent=1 // pred_region
      %84 = vsyncadd [#allocation12], 0
      %s85 = sshll.u32 %s5, 4
      %s86 = int_to_ptr.hbm [resolvable:$true] %s85
      %s87 = sshll.u32 [#allocation11], 4
      %s88 = int_to_ptr.vmem [resolvable:$true] %s87
      %93 = dma.hbm_to_vmem [thread:$0]  %s86, 32768, %s88, [#allocation12], 512, 512, 32
    $region25: #{tpu_custom_call.1} parent=1 // pred_fallthru
      _
    // Predicated region
    $region26: #{tpu_custom_call.1} parent=1 // pred_check
      _
    $region27: #{tpu_custom_call.1} parent=1 // pred_check_branch
      %95 = sbr.rel (0) target = $region29
    $region28: #{tpu_custom_call.1} parent=1 // pred_region
      %97 = vsyncadd [#allocation12], 0
      %s99 = sshll.u32 %s6, 4
      %s100 = int_to_ptr.hbm [resolvable:$true] %s99
      %s101 = sshll.u32 [#allocation13], 4
      %s102 = int_to_ptr.vmem [resolvable:$true] %s101
      %104 = dma.hbm_to_vmem [thread:$0]  %s100, 128, %s102, [#allocation12]
    $region29: #{tpu_custom_call.1} parent=1 // pred_fallthru
      _
    // Predicated region
    $region30: #{tpu_custom_call.1} parent=1 // pred_check
      _
    $region31: #{tpu_custom_call.1} parent=1 // pred_check_branch
      %106 = sbr.rel (0) target = $region33
    $region32: #{tpu_custom_call.1} parent=1 // pred_region
      %108 = vsyncadd [#allocation15], 0
      %s109 = sshll.u32 %s7, 4
      %s110 = int_to_ptr.hbm [resolvable:$true] %s109
      %s111 = sshll.u32 [#allocation14], 4
      %s112 = int_to_ptr.vmem [resolvable:$true] %s111
      %117 = dma.hbm_to_vmem [thread:$0]  %s110, 8192, %s112, [#allocation15], 64, 64, 4
    $region33: #{tpu_custom_call.1} parent=1 // pred_fallthru
      _
    // Predicated region
    $region34: #{tpu_custom_call.1} parent=1 // pred_check
      _
    $region35: #{tpu_custom_call.1} parent=1 // pred_check_branch
      %119 = sbr.rel (0) target = $region37
    $region36: #{tpu_custom_call.1} parent=1 // pred_region
      _
    $region37: #{tpu_custom_call.1} parent=1 // pred_fallthru
      _
    // Predicated region
    $region38: #{tpu_custom_call.1} parent=1 // pred_check
      _
    $region39: #{tpu_custom_call.1} parent=1 // pred_check_branch
      %121 = sbr.rel (0) target = $region41
    $region40: #{tpu_custom_call.1} parent=1 // pred_region
      %123 = dma.done [#allocation3], 512
    $region41: #{tpu_custom_call.1} parent=1 // pred_fallthru
      _
    // Predicated region
    $region42: #{tpu_custom_call.1} parent=1 // pred_check
      _
    $region43: #{tpu_custom_call.1} parent=1 // pred_check_branch
      %125 = sbr.rel (0) target = $region45
    $region44: #{tpu_custom_call.1} parent=1 // pred_region
      %127 = dma.done [#allocation6], 1024
    $region45: #{tpu_custom_call.1} parent=1 // pred_fallthru
      _
    // Predicated region
    $region46: #{tpu_custom_call.1} parent=1 // pred_check
      _
    $region47: #{tpu_custom_call.1} parent=1 // pred_check_branch
      %129 = sbr.rel (0) target = $region49
    $region48: #{tpu_custom_call.1} parent=1 // pred_region
      %131 = dma.done [#allocation6], 32
    $region49: #{tpu_custom_call.1} parent=1 // pred_fallthru
      _
    // Predicated region
    $region50: #{tpu_custom_call.1} parent=1 // pred_check
      _
    $region51: #{tpu_custom_call.1} parent=1 // pred_check_branch
      %133 = sbr.rel (0) target = $region53
    $region52: #{tpu_custom_call.1} parent=1 // pred_region
      %135 = dma.done [#allocation9], 8192
    $region53: #{tpu_custom_call.1} parent=1 // pred_fallthru
      _
    // Predicated region
    $region54: #{tpu_custom_call.1} parent=1 // pred_check
      _
    $region55: #{tpu_custom_call.1} parent=1 // pred_check_branch
      %137 = sbr.rel (0) target = $region57
    $region56: #{tpu_custom_call.1} parent=1 // pred_region
      %139 = dma.done [#allocation9], 64
    $region57: #{tpu_custom_call.1} parent=1 // pred_fallthru
      _
    // Predicated region
    $region58: #{tpu_custom_call.1} parent=1 // pred_check
      _
    $region59: #{tpu_custom_call.1} parent=1 // pred_check_branch
      %141 = sbr.rel (0) target = $region61
    $region60: #{tpu_custom_call.1} parent=1 // pred_region
      %143 = dma.done [#allocation12], 32768
    $region61: #{tpu_custom_call.1} parent=1 // pred_fallthru
      _
    // Predicated region
    $region62: #{tpu_custom_call.1} parent=1 // pred_check
      _
    $region63: #{tpu_custom_call.1} parent=1 // pred_check_branch
      %145 = sbr.rel (0) target = $region65
    $region64: #{tpu_custom_call.1} parent=1 // pred_region
      %147 = dma.done [#allocation12], 128
    $region65: #{tpu_custom_call.1} parent=1 // pred_fallthru
      _
    // Predicated region
    $region66: #{tpu_custom_call.1} parent=1 // pred_check
      _
    $region67: #{tpu_custom_call.1} parent=1 // pred_check_branch
      %149 = sbr.rel (0) target = $region69
    $region68: #{tpu_custom_call.1} parent=1 // pred_region
      %151 = dma.done [#allocation15], 8192
    $region69: #{tpu_custom_call.1} parent=1 // pred_fallthru
      _
    %v153 = vld [vmem:[#allocation2] sm:$0xff]
    %v154 = vld [vmem:[#allocation2 + $0x8] sm:$0xff]
    %v155 = vld [vmem:[#allocation2 + $0x10] sm:$0xff]
    %v156 = vld [vmem:[#allocation2 + $0x18] sm:$0xff]
    %v157 = vpack.c.bf16 %v154, %v153
    %v158 = vpack.c.bf16 %v156, %v155
    %v159 = vld [vmem:[#allocation5] sm:$0xff]
    %v160 = vld [vmem:[#allocation5 + $0x8] sm:$0xff]
    %v161 = vld [vmem:[#allocation5 + $0x10] sm:$0xff]
    %v162 = vld [vmem:[#allocation5 + $0x18] sm:$0xff]
    %v163 = vld [vmem:[#allocation5 + $0x20] sm:$0xff]
    %v164 = vld [vmem:[#allocation5 + $0x28] sm:$0xff]
    %v165 = vld [vmem:[#allocation5 + $0x30] sm:$0xff]
    %v166 = vld [vmem:[#allocation5 + $0x38] sm:$0xff]
    %v167 = vld [vmem:[#allocation7] sm:$0x3]
    %v169 = vperm.slane %v167, 0
    %v170 = vperm.slane %v167, 1
    %v181 = vunpack.c.l.b16 %v159
    %v182 = vunpack.c.h.b16 %v159
    %v183 = vunpack.c.l.b16 %v160
    %v184 = vunpack.c.h.b16 %v160
    %v185 = vunpack.c.l.b16 %v161
    %v186 = vunpack.c.h.b16 %v161
    %v187 = vunpack.c.l.b16 %v162
    %v188 = vunpack.c.h.b16 %v162
    %v189 = vunpack.c.l.b16 %v163
    %v190 = vunpack.c.h.b16 %v163
    %v191 = vunpack.c.l.b16 %v164
    %v192 = vunpack.c.h.b16 %v164
    %v193 = vunpack.c.l.b16 %v165
    %v194 = vunpack.c.h.b16 %v165
    %v195 = vunpack.c.l.b16 %v166
    %v196 = vunpack.c.h.b16 %v166
    %v197 = vpack.c.b16 %v183, %v181
    %v198 = vpack.c.b16 %v184, %v182
    %v199 = vpack.c.b16 %v187, %v185
    %v200 = vpack.c.b16 %v188, %v186
    %v201 = vpack.c.b16 %v191, %v189
    %v202 = vpack.c.b16 %v192, %v190
    %v203 = vpack.c.b16 %v195, %v193
    %v204 = vpack.c.b16 %v196, %v194
    %vm213 = vcmask 523264
    %v215 = vsel %vm213, %v157, 0
    %v218 = vsel %vm213, %v158, 0
    %220 = vmatpush.bf16.msra.mxu0 0
    %221 = vmatpush.bf16.msra.mxu0 0
    %222 = vmatpush.bf16.msra.mxu0 0
    %223 = vmatpush.bf16.msra.mxu0 0
    %224 = vmatpush.bf16.msra.mxu0 %v203
    %225 = vmatpush.bf16.msra.mxu0 %v201
    %226 = vmatpush.bf16.msra.mxu0 %v199
    %227 = vmatpush.bf16.msra.mxu0 %v197
    %228 = vmatmul.bf16.gmra.mxu0 %v215
    %v229 = vpop.f32.mrf.mxu0
    %v230 = vadd.f32 %v169, %v229
    %v231 = vpop.f32.mrf.mxu0
    %v232 = vadd.f32 %v169, %v231
    %233 = vmatmul.bf16.gmra.mxu0 %v218
    %v234 = vpop.f32.mrf.mxu0
    %v235 = vadd.f32 %v169, %v234
    %v236 = vpop.f32.mrf.mxu0
    %v237 = vadd.f32 %v169, %v236
    %238 = vdwg.mxu0
    %239 = vmatpush.bf16.msra.mxu0 0
    %240 = vmatpush.bf16.msra.mxu0 0
    %241 = vmatpush.bf16.msra.mxu0 0
    %242 = vmatpush.bf16.msra.mxu0 0
    %243 = vmatpush.bf16.msra.mxu0 %v204
    %244 = vmatpush.bf16.msra.mxu0 %v202
    %245 = vmatpush.bf16.msra.mxu0 %v200
    %246 = vmatpush.bf16.msra.mxu0 %v198
    %247 = vmatmul.bf16.gmra.mxu0 %v215
    %v248 = vpop.f32.mrf.mxu0
    %v249 = vadd.f32 %v170, %v248
    %v250 = vpop.f32.mrf.mxu0
    %v251 = vadd.f32 %v170, %v250
    %252 = vmatmul.bf16.gmra.mxu0 %v218
    %v253 = vpop.f32.mrf.mxu0
    %v254 = vadd.f32 %v170, %v253
    %v255 = vpop.f32.mrf.mxu0
    %v256 = vadd.f32 %v170, %v255
    %257 = vdwg.mxu0
    %vm258 = vcmp.gt.f32.partialorder %v230, 0.0
    %vm259 = vcmp.gt.f32.partialorder %v249, 0.0
    %vm260 = vcmp.gt.f32.partialorder %v232, 0.0
    %vm261 = vcmp.gt.f32.partialorder %v251, 0.0
    %vm262 = vcmp.gt.f32.partialorder %v235, 0.0
    %vm263 = vcmp.gt.f32.partialorder %v254, 0.0
    %vm264 = vcmp.gt.f32.partialorder %v237, 0.0
    %vm265 = vcmp.gt.f32.partialorder %v256, 0.0
    %v266 = vmul.f32 %v230, 0.2
    %v267 = vmul.f32 %v249, 0.2
    %v268 = vmul.f32 %v232, 0.2
    %v269 = vmul.f32 %v251, 0.2
    %v270 = vmul.f32 %v235, 0.2
    %v271 = vmul.f32 %v254, 0.2
    %v272 = vmul.f32 %v237, 0.2
    %v273 = vmul.f32 %v256, 0.2
    %v274 = vsel %vm258, %v230, %v266
    %v275 = vsel %vm259, %v249, %v267
    %v276 = vsel %vm260, %v232, %v268
    %v277 = vsel %vm261, %v251, %v269
    %v278 = vsel %vm262, %v235, %v270
    %v279 = vsel %vm263, %v254, %v271
    %v280 = vsel %vm264, %v237, %v272
    %v281 = vsel %vm265, %v256, %v273
    %v282 = vpack.c.bf16 %v276, %v274
    %v283 = vpack.c.bf16 %v277, %v275
    %v284 = vpack.c.bf16 %v280, %v278
    %v285 = vpack.c.bf16 %v281, %v279
    %v286 = vld [vmem:[#allocation8] sm:$0xff]
    %v287 = vld [vmem:[#allocation8 + $0x8] sm:$0xff]
    %v288 = vld [vmem:[#allocation8 + $0x10] sm:$0xff]
    %v289 = vld [vmem:[#allocation8 + $0x18] sm:$0xff]
    %v290 = vld [vmem:[#allocation8 + $0x20] sm:$0xff]
    %v291 = vld [vmem:[#allocation8 + $0x28] sm:$0xff]
    %v292 = vld [vmem:[#allocation8 + $0x30] sm:$0xff]
    %v293 = vld [vmem:[#allocation8 + $0x38] sm:$0xff]
    %v294 = vld [vmem:[#allocation8 + $0x40] sm:$0xff]
    %v295 = vld [vmem:[#allocation8 + $0x48] sm:$0xff]
    %v296 = vld [vmem:[#allocation8 + $0x50] sm:$0xff]
    %v297 = vld [vmem:[#allocation8 + $0x58] sm:$0xff]
    %v298 = vld [vmem:[#allocation8 + $0x60] sm:$0xff]
    %v299 = vld [vmem:[#allocation8 + $0x68] sm:$0xff]
    %v300 = vld [vmem:[#allocation8 + $0x70] sm:$0xff]
    %v301 = vld [vmem:[#allocation8 + $0x78] sm:$0xff]
    %v302 = vld [vmem:[#allocation8 + $0x80] sm:$0xff]
    %v303 = vld [vmem:[#allocation8 + $0x88] sm:$0xff]
    %v304 = vld [vmem:[#allocation8 + $0x90] sm:$0xff]
    %v305 = vld [vmem:[#allocation8 + $0x98] sm:$0xff]
    %v306 = vld [vmem:[#allocation8 + $0xa0] sm:$0xff]
    %v307 = vld [vmem:[#allocation8 + $0xa8] sm:$0xff]
    %v308 = vld [vmem:[#allocation8 + $0xb0] sm:$0xff]
    %v309 = vld [vmem:[#allocation8 + $0xb8] sm:$0xff]
    %v310 = vld [vmem:[#allocation8 + $0xc0] sm:$0xff]
    %v311 = vld [vmem:[#allocation8 + $0xc8] sm:$0xff]
    %v312 = vld [vmem:[#allocation8 + $0xd0] sm:$0xff]
    %v313 = vld [vmem:[#allocation8 + $0xd8] sm:$0xff]
    %v314 = vld [vmem:[#allocation8 + $0xe0] sm:$0xff]
    %v315 = vld [vmem:[#allocation8 + $0xe8] sm:$0xff]
    %v316 = vld [vmem:[#allocation8 + $0xf0] sm:$0xff]
    %v317 = vld [vmem:[#allocation8 + $0xf8] sm:$0xff]
    %v318 = vld [vmem:[#allocation8 + $0x100] sm:$0xff]
    %v319 = vld [vmem:[#allocation8 + $0x108] sm:$0xff]
    %v320 = vld [vmem:[#allocation8 + $0x110] sm:$0xff]
    %v321 = vld [vmem:[#allocation8 + $0x118] sm:$0xff]
    %v322 = vld [vmem:[#allocation8 + $0x120] sm:$0xff]
    %v323 = vld [vmem:[#allocation8 + $0x128] sm:$0xff]
    %v324 = vld [vmem:[#allocation8 + $0x130] sm:$0xff]
    %v325 = vld [vmem:[#allocation8 + $0x138] sm:$0xff]
    %v326 = vld [vmem:[#allocation8 + $0x140] sm:$0xff]
    %v327 = vld [vmem:[#allocation8 + $0x148] sm:$0xff]
    %v328 = vld [vmem:[#allocation8 + $0x150] sm:$0xff]
    %v329 = vld [vmem:[#allocation8 + $0x158] sm:$0xff]
    %v330 = vld [vmem:[#allocation8 + $0x160] sm:$0xff]
    %v331 = vld [vmem:[#allocation8 + $0x168] sm:$0xff]
    %v332 = vld [vmem:[#allocation8 + $0x170] sm:$0xff]
    %v333 = vld [vmem:[#allocation8 + $0x178] sm:$0xff]
    %v334 = vld [vmem:[#allocation8 + $0x180] sm:$0xff]
    %v335 = vld [vmem:[#allocation8 + $0x188] sm:$0xff]
    %v336 = vld [vmem:[#allocation8 + $0x190] sm:$0xff]
    %v337 = vld [vmem:[#allocation8 + $0x198] sm:$0xff]
    %v338 = vld [vmem:[#allocation8 + $0x1a0] sm:$0xff]
    %v339 = vld [vmem:[#allocation8 + $0x1a8] sm:$0xff]
    %v340 = vld [vmem:[#allocation8 + $0x1b0] sm:$0xff]
    %v341 = vld [vmem:[#allocation8 + $0x1b8] sm:$0xff]
    %v342 = vld [vmem:[#allocation8 + $0x1c0] sm:$0xff]
    %v343 = vld [vmem:[#allocation8 + $0x1c8] sm:$0xff]
    %v344 = vld [vmem:[#allocation8 + $0x1d0] sm:$0xff]
    %v345 = vld [vmem:[#allocation8 + $0x1d8] sm:$0xff]
    %v346 = vld [vmem:[#allocation8 + $0x1e0] sm:$0xff]
    %v347 = vld [vmem:[#allocation8 + $0x1e8] sm:$0xff]
    %v348 = vld [vmem:[#allocation8 + $0x1f0] sm:$0xff]
    %v349 = vld [vmem:[#allocation8 + $0x1f8] sm:$0xff]
    %v350 = vld [vmem:[#allocation10] sm:$0xf]
    %v352 = vperm.slane %v350, 0
    %v353 = vperm.slane %v350, 1
    %v354 = vperm.slane %v350, 2
    %v355 = vperm.slane %v350, 3
    %v424 = vunpack.c.l.b16 %v286
    %v425 = vunpack.c.h.b16 %v286
    %v426 = vunpack.c.l.b16 %v287
    %v427 = vunpack.c.h.b16 %v287
    %v428 = vunpack.c.l.b16 %v288
    %v429 = vunpack.c.h.b16 %v288
    %v430 = vunpack.c.l.b16 %v289
    %v431 = vunpack.c.h.b16 %v289
    %v432 = vunpack.c.l.b16 %v290
    %v433 = vunpack.c.h.b16 %v290
    %v434 = vunpack.c.l.b16 %v291
    %v435 = vunpack.c.h.b16 %v291
    %v436 = vunpack.c.l.b16 %v292
    %v437 = vunpack.c.h.b16 %v292
    %v438 = vunpack.c.l.b16 %v293
    %v439 = vunpack.c.h.b16 %v293
    %v440 = vunpack.c.l.b16 %v294
    %v441 = vunpack.c.h.b16 %v294
    %v442 = vunpack.c.l.b16 %v295
    %v443 = vunpack.c.h.b16 %v295
    %v444 = vunpack.c.l.b16 %v296
    %v445 = vunpack.c.h.b16 %v296
    %v446 = vunpack.c.l.b16 %v297
    %v447 = vunpack.c.h.b16 %v297
    %v448 = vunpack.c.l.b16 %v298
    %v449 = vunpack.c.h.b16 %v298
    %v450 = vunpack.c.l.b16 %v299
    %v451 = vunpack.c.h.b16 %v299
    %v452 = vunpack.c.l.b16 %v300
    %v453 = vunpack.c.h.b16 %v300
    %v454 = vunpack.c.l.b16 %v301
    %v455 = vunpack.c.h.b16 %v301
    %v456 = vunpack.c.l.b16 %v302
    %v457 = vunpack.c.h.b16 %v302
    %v458 = vunpack.c.l.b16 %v303
    %v459 = vunpack.c.h.b16 %v303
    %v460 = vunpack.c.l.b16 %v304
    %v461 = vunpack.c.h.b16 %v304
    %v462 = vunpack.c.l.b16 %v305
    %v463 = vunpack.c.h.b16 %v305
    %v464 = vunpack.c.l.b16 %v306
    %v465 = vunpack.c.h.b16 %v306
    %v466 = vunpack.c.l.b16 %v307
    %v467 = vunpack.c.h.b16 %v307
    %v468 = vunpack.c.l.b16 %v308
    %v469 = vunpack.c.h.b16 %v308
    %v470 = vunpack.c.l.b16 %v309
    %v471 = vunpack.c.h.b16 %v309
    %v472 = vunpack.c.l.b16 %v310
    %v473 = vunpack.c.h.b16 %v310
    %v474 = vunpack.c.l.b16 %v311
    %v475 = vunpack.c.h.b16 %v311
    %v476 = vunpack.c.l.b16 %v312
    %v477 = vunpack.c.h.b16 %v312
    %v478 = vunpack.c.l.b16 %v313
    %v479 = vunpack.c.h.b16 %v313
    %v480 = vunpack.c.l.b16 %v314
    %v481 = vunpack.c.h.b16 %v314
    %v482 = vunpack.c.l.b16 %v315
    %v483 = vunpack.c.h.b16 %v315
    %v484 = vunpack.c.l.b16 %v316
    %v485 = vunpack.c.h.b16 %v316
    %v486 = vunpack.c.l.b16 %v317
    %v487 = vunpack.c.h.b16 %v317
    %v488 = vunpack.c.l.b16 %v318
    %v489 = vunpack.c.h.b16 %v318
    %v490 = vunpack.c.l.b16 %v319
    %v491 = vunpack.c.h.b16 %v319
    %v492 = vunpack.c.l.b16 %v320
    %v493 = vunpack.c.h.b16 %v320
    %v494 = vunpack.c.l.b16 %v321
    %v495 = vunpack.c.h.b16 %v321
    %v496 = vunpack.c.l.b16 %v322
    %v497 = vunpack.c.h.b16 %v322
    %v498 = vunpack.c.l.b16 %v323
    %v499 = vunpack.c.h.b16 %v323
    %v500 = vunpack.c.l.b16 %v324
    %v501 = vunpack.c.h.b16 %v324
    %v502 = vunpack.c.l.b16 %v325
    %v503 = vunpack.c.h.b16 %v325
    %v504 = vunpack.c.l.b16 %v326
    %v505 = vunpack.c.h.b16 %v326
    %v506 = vunpack.c.l.b16 %v327
    %v507 = vunpack.c.h.b16 %v327
    %v508 = vunpack.c.l.b16 %v328
    %v509 = vunpack.c.h.b16 %v328
    %v510 = vunpack.c.l.b16 %v329
    %v511 = vunpack.c.h.b16 %v329
    %v512 = vunpack.c.l.b16 %v330
    %v513 = vunpack.c.h.b16 %v330
    %v514 = vunpack.c.l.b16 %v331
    %v515 = vunpack.c.h.b16 %v331
    %v516 = vunpack.c.l.b16 %v332
    %v517 = vunpack.c.h.b16 %v332
    %v518 = vunpack.c.l.b16 %v333
    %v519 = vunpack.c.h.b16 %v333
    %v520 = vunpack.c.l.b16 %v334
    %v521 = vunpack.c.h.b16 %v334
    %v522 = vunpack.c.l.b16 %v335
    %v523 = vunpack.c.h.b16 %v335
    %v524 = vunpack.c.l.b16 %v336
    %v525 = vunpack.c.h.b16 %v336
    %v526 = vunpack.c.l.b16 %v337
    %v527 = vunpack.c.h.b16 %v337
    %v528 = vunpack.c.l.b16 %v338
    %v529 = vunpack.c.h.b16 %v338
    %v530 = vunpack.c.l.b16 %v339
    %v531 = vunpack.c.h.b16 %v339
    %v532 = vunpack.c.l.b16 %v340
    %v533 = vunpack.c.h.b16 %v340
    %v534 = vunpack.c.l.b16 %v341
    %v535 = vunpack.c.h.b16 %v341
    %v536 = vunpack.c.l.b16 %v342
    %v537 = vunpack.c.h.b16 %v342
    %v538 = vunpack.c.l.b16 %v343
    %v539 = vunpack.c.h.b16 %v343
    %v540 = vunpack.c.l.b16 %v344
    %v541 = vunpack.c.h.b16 %v344
    %v542 = vunpack.c.l.b16 %v345
    %v543 = vunpack.c.h.b16 %v345
    %v544 = vunpack.c.l.b16 %v346
    %v545 = vunpack.c.h.b16 %v346
    %v546 = vunpack.c.l.b16 %v347
    %v547 = vunpack.c.h.b16 %v347
    %v548 = vunpack.c.l.b16 %v348
    %v549 = vunpack.c.h.b16 %v348
    %v550 = vunpack.c.l.b16 %v349
    %v551 = vunpack.c.h.b16 %v349
    %v552 = vpack.c.b16 %v428, %v424
    %v553 = vpack.c.b16 %v429, %v425
    %v554 = vpack.c.b16 %v430, %v426
    %v555 = vpack.c.b16 %v431, %v427
    %v556 = vpack.c.b16 %v436, %v432
    %v557 = vpack.c.b16 %v437, %v433
    %v558 = vpack.c.b16 %v438, %v434
    %v559 = vpack.c.b16 %v439, %v435
    %v560 = vpack.c.b16 %v444, %v440
    %v561 = vpack.c.b16 %v445, %v441
    %v562 = vpack.c.b16 %v446, %v442
    %v563 = vpack.c.b16 %v447, %v443
    %v564 = vpack.c.b16 %v452, %v448
    %v565 = vpack.c.b16 %v453, %v449
    %v566 = vpack.c.b16 %v454, %v450
    %v567 = vpack.c.b16 %v455, %v451
    %v568 = vpack.c.b16 %v460, %v456
    %v569 = vpack.c.b16 %v461, %v457
    %v570 = vpack.c.b16 %v462, %v458
    %v571 = vpack.c.b16 %v463, %v459
    %v572 = vpack.c.b16 %v468, %v464
    %v573 = vpack.c.b16 %v469, %v465
    %v574 = vpack.c.b16 %v470, %v466
    %v575 = vpack.c.b16 %v471, %v467
    %v576 = vpack.c.b16 %v476, %v472
    %v577 = vpack.c.b16 %v477, %v473
    %v578 = vpack.c.b16 %v478, %v474
    %v579 = vpack.c.b16 %v479, %v475
    %v580 = vpack.c.b16 %v484, %v480
    %v581 = vpack.c.b16 %v485, %v481
    %v582 = vpack.c.b16 %v486, %v482
    %v583 = vpack.c.b16 %v487, %v483
    %v584 = vpack.c.b16 %v492, %v488
    %v585 = vpack.c.b16 %v493, %v489
    %v586 = vpack.c.b16 %v494, %v490
    %v587 = vpack.c.b16 %v495, %v491
    %v588 = vpack.c.b16 %v500, %v496
    %v589 = vpack.c.b16 %v501, %v497
    %v590 = vpack.c.b16 %v502, %v498
    %v591 = vpack.c.b16 %v503, %v499
    %v592 = vpack.c.b16 %v508, %v504
    %v593 = vpack.c.b16 %v509, %v505
    %v594 = vpack.c.b16 %v510, %v506
    %v595 = vpack.c.b16 %v511, %v507
    %v596 = vpack.c.b16 %v516, %v512
    %v597 = vpack.c.b16 %v517, %v513
    %v598 = vpack.c.b16 %v518, %v514
    %v599 = vpack.c.b16 %v519, %v515
    %v600 = vpack.c.b16 %v524, %v520
    %v601 = vpack.c.b16 %v525, %v521
    %v602 = vpack.c.b16 %v526, %v522
    %v603 = vpack.c.b16 %v527, %v523
    %v604 = vpack.c.b16 %v532, %v528
    %v605 = vpack.c.b16 %v533, %v529
    %v606 = vpack.c.b16 %v534, %v530
    %v607 = vpack.c.b16 %v535, %v531
    %v608 = vpack.c.b16 %v540, %v536
    %v609 = vpack.c.b16 %v541, %v537
    %v610 = vpack.c.b16 %v542, %v538
    %v611 = vpack.c.b16 %v543, %v539
    %v612 = vpack.c.b16 %v548, %v544
    %v613 = vpack.c.b16 %v549, %v545
    %v614 = vpack.c.b16 %v550, %v546
    %v615 = vpack.c.b16 %v551, %v547
    %680 = vmatpush.bf16.msra.mxu0 %v580
    %681 = vmatpush.bf16.msra.mxu0 %v576
    %682 = vmatpush.bf16.msra.mxu0 %v572
    %683 = vmatpush.bf16.msra.mxu0 %v568
    %684 = vmatpush.bf16.msra.mxu0 %v564
    %685 = vmatpush.bf16.msra.mxu0 %v560
    %686 = vmatpush.bf16.msra.mxu0 %v556
    %687 = vmatpush.bf16.msra.mxu0 %v552
    %688 = vmatmul.bf16.gmra.mxu0 %v282
    %v689 = vpop.f32.mrf.mxu0
    %v690 = vadd.f32 %v352, %v689
    %v691 = vpop.f32.mrf.mxu0
    %v692 = vadd.f32 %v352, %v691
    %693 = vmatmul.bf16.gmra.mxu0 %v284
    %v694 = vpop.f32.mrf.mxu0
    %v695 = vadd.f32 %v352, %v694
    %v696 = vpop.f32.mrf.mxu0
    %v697 = vadd.f32 %v352, %v696
    %698 = vdwg.mxu0
    %699 = vmatpush.bf16.msra.mxu0 %v612
    %700 = vmatpush.bf16.msra.mxu0 %v608
    %701 = vmatpush.bf16.msra.mxu0 %v604
    %702 = vmatpush.bf16.msra.mxu0 %v600
    %703 = vmatpush.bf16.msra.mxu0 %v596
    %704 = vmatpush.bf16.msra.mxu0 %v592
    %705 = vmatpush.bf16.msra.mxu0 %v588
    %706 = vmatpush.bf16.msra.mxu0 %v584
    %707 = vmatmul.bf16.gmra.mxu0 %v283
    %v708 = vpop.f32.mrf.mxu0
    %v709 = vadd.f32 %v690, %v708
    %v710 = vpop.f32.mrf.mxu0
    %v711 = vadd.f32 %v692, %v710
    %712 = vmatmul.bf16.gmra.mxu0 %v285
    %v713 = vpop.f32.mrf.mxu0
    %v714 = vadd.f32 %v695, %v713
    %v715 = vpop.f32.mrf.mxu0
    %v716 = vadd.f32 %v697, %v715
    %717 = vdwg.mxu0
    %718 = vmatpush.bf16.msra.mxu0 %v581
    %719 = vmatpush.bf16.msra.mxu0 %v577
    %720 = vmatpush.bf16.msra.mxu0 %v573
    %721 = vmatpush.bf16.msra.mxu0 %v569
    %722 = vmatpush.bf16.msra.mxu0 %v565
    %723 = vmatpush.bf16.msra.mxu0 %v561
    %724 = vmatpush.bf16.msra.mxu0 %v557
    %725 = vmatpush.bf16.msra.mxu0 %v553
    %726 = vmatmul.bf16.gmra.mxu0 %v282
    %v727 = vpop.f32.mrf.mxu0
    %v728 = vadd.f32 %v353, %v727
    %v729 = vpop.f32.mrf.mxu0
    %v730 = vadd.f32 %v353, %v729
    %731 = vmatmul.bf16.gmra.mxu0 %v284
    %v732 = vpop.f32.mrf.mxu0
    %v733 = vadd.f32 %v353, %v732
    %v734 = vpop.f32.mrf.mxu0
    %v735 = vadd.f32 %v353, %v734
    %736 = vdwg.mxu0
    %737 = vmatpush.bf16.msra.mxu0 %v613
    %738 = vmatpush.bf16.msra.mxu0 %v609
    %739 = vmatpush.bf16.msra.mxu0 %v605
    %740 = vmatpush.bf16.msra.mxu0 %v601
    %741 = vmatpush.bf16.msra.mxu0 %v597
    %742 = vmatpush.bf16.msra.mxu0 %v593
    %743 = vmatpush.bf16.msra.mxu0 %v589
    %744 = vmatpush.bf16.msra.mxu0 %v585
    %745 = vmatmul.bf16.gmra.mxu0 %v283
    %v746 = vpop.f32.mrf.mxu0
    %v747 = vadd.f32 %v728, %v746
    %v748 = vpop.f32.mrf.mxu0
    %v749 = vadd.f32 %v730, %v748
    %750 = vmatmul.bf16.gmra.mxu0 %v285
    %v751 = vpop.f32.mrf.mxu0
    %v752 = vadd.f32 %v733, %v751
    %v753 = vpop.f32.mrf.mxu0
    %v754 = vadd.f32 %v735, %v753
    %755 = vdwg.mxu0
    %756 = vmatpush.bf16.msra.mxu0 %v582
    %757 = vmatpush.bf16.msra.mxu0 %v578
    %758 = vmatpush.bf16.msra.mxu0 %v574
    %759 = vmatpush.bf16.msra.mxu0 %v570
    %760 = vmatpush.bf16.msra.mxu0 %v566
    %761 = vmatpush.bf16.msra.mxu0 %v562
    %762 = vmatpush.bf16.msra.mxu0 %v558
    %763 = vmatpush.bf16.msra.mxu0 %v554
    %764 = vmatmul.bf16.gmra.mxu0 %v282
    %v765 = vpop.f32.mrf.mxu0
    %v766 = vadd.f32 %v354, %v765
    %v767 = vpop.f32.mrf.mxu0
    %v768 = vadd.f32 %v354, %v767
    %769 = vmatmul.bf16.gmra.mxu0 %v284
    %v770 = vpop.f32.mrf.mxu0
    %v771 = vadd.f32 %v354, %v770
    %v772 = vpop.f32.mrf.mxu0
    %v773 = vadd.f32 %v354, %v772
    %774 = vdwg.mxu0
    %775 = vmatpush.bf16.msra.mxu0 %v614
    %776 = vmatpush.bf16.msra.mxu0 %v610
    %777 = vmatpush.bf16.msra.mxu0 %v606
    %778 = vmatpush.bf16.msra.mxu0 %v602
    %779 = vmatpush.bf16.msra.mxu0 %v598
    %780 = vmatpush.bf16.msra.mxu0 %v594
    %781 = vmatpush.bf16.msra.mxu0 %v590
    %782 = vmatpush.bf16.msra.mxu0 %v586
    %783 = vmatmul.bf16.gmra.mxu0 %v283
    %v784 = vpop.f32.mrf.mxu0
    %v785 = vadd.f32 %v766, %v784
    %v786 = vpop.f32.mrf.mxu0
    %v787 = vadd.f32 %v768, %v786
    %788 = vmatmul.bf16.gmra.mxu0 %v285
    %v789 = vpop.f32.mrf.mxu0
    %v790 = vadd.f32 %v771, %v789
    %v791 = vpop.f32.mrf.mxu0
    %v792 = vadd.f32 %v773, %v791
    %793 = vdwg.mxu0
    %794 = vmatpush.bf16.msra.mxu0 %v583
    %795 = vmatpush.bf16.msra.mxu0 %v579
    %796 = vmatpush.bf16.msra.mxu0 %v575
    %797 = vmatpush.bf16.msra.mxu0 %v571
    %798 = vmatpush.bf16.msra.mxu0 %v567
    %799 = vmatpush.bf16.msra.mxu0 %v563
    %800 = vmatpush.bf16.msra.mxu0 %v559
    %801 = vmatpush.bf16.msra.mxu0 %v555
    %802 = vmatmul.bf16.gmra.mxu0 %v282
    %v803 = vpop.f32.mrf.mxu0
    %v804 = vadd.f32 %v355, %v803
    %v805 = vpop.f32.mrf.mxu0
    %v806 = vadd.f32 %v355, %v805
    %807 = vmatmul.bf16.gmra.mxu0 %v284
    %v808 = vpop.f32.mrf.mxu0
    %v809 = vadd.f32 %v355, %v808
    %v810 = vpop.f32.mrf.mxu0
    %v811 = vadd.f32 %v355, %v810
    %812 = vdwg.mxu0
    %813 = vmatpush.bf16.msra.mxu0 %v615
    %814 = vmatpush.bf16.msra.mxu0 %v611
    %815 = vmatpush.bf16.msra.mxu0 %v607
    %816 = vmatpush.bf16.msra.mxu0 %v603
    %817 = vmatpush.bf16.msra.mxu0 %v599
    %818 = vmatpush.bf16.msra.mxu0 %v595
    %819 = vmatpush.bf16.msra.mxu0 %v591
    %820 = vmatpush.bf16.msra.mxu0 %v587
    %821 = vmatmul.bf16.gmra.mxu0 %v283
    %v822 = vpop.f32.mrf.mxu0
    %v823 = vadd.f32 %v804, %v822
    %v824 = vpop.f32.mrf.mxu0
    %v825 = vadd.f32 %v806, %v824
    %826 = vmatmul.bf16.gmra.mxu0 %v285
    %v827 = vpop.f32.mrf.mxu0
    %v828 = vadd.f32 %v809, %v827
    %v829 = vpop.f32.mrf.mxu0
    %v830 = vadd.f32 %v811, %v829
    %831 = vdwg.mxu0
    %vm832 = vcmp.gt.f32.partialorder %v709, 0.0
    %vm833 = vcmp.gt.f32.partialorder %v747, 0.0
    %vm834 = vcmp.gt.f32.partialorder %v785, 0.0
    %vm835 = vcmp.gt.f32.partialorder %v823, 0.0
    %vm836 = vcmp.gt.f32.partialorder %v711, 0.0
    %vm837 = vcmp.gt.f32.partialorder %v749, 0.0
    %vm838 = vcmp.gt.f32.partialorder %v787, 0.0
    %vm839 = vcmp.gt.f32.partialorder %v825, 0.0
    %vm840 = vcmp.gt.f32.partialorder %v714, 0.0
    %vm841 = vcmp.gt.f32.partialorder %v752, 0.0
    %vm842 = vcmp.gt.f32.partialorder %v790, 0.0
    %vm843 = vcmp.gt.f32.partialorder %v828, 0.0
    %vm844 = vcmp.gt.f32.partialorder %v716, 0.0
    %vm845 = vcmp.gt.f32.partialorder %v754, 0.0
    %vm846 = vcmp.gt.f32.partialorder %v792, 0.0
    %vm847 = vcmp.gt.f32.partialorder %v830, 0.0
    %v848 = vmul.f32 %v709, 0.2
    %v849 = vmul.f32 %v747, 0.2
    %v850 = vmul.f32 %v785, 0.2
    %v851 = vmul.f32 %v823, 0.2
    %v852 = vmul.f32 %v711, 0.2
    %v853 = vmul.f32 %v749, 0.2
    %v854 = vmul.f32 %v787, 0.2
    %v855 = vmul.f32 %v825, 0.2
    %v856 = vmul.f32 %v714, 0.2
    %v857 = vmul.f32 %v752, 0.2
    %v858 = vmul.f32 %v790, 0.2
    %v859 = vmul.f32 %v828, 0.2
    %v860 = vmul.f32 %v716, 0.2
    %v861 = vmul.f32 %v754, 0.2
    %v862 = vmul.f32 %v792, 0.2
    %v863 = vmul.f32 %v830, 0.2
    %v864 = vsel %vm832, %v709, %v848
    %v865 = vsel %vm833, %v747, %v849
    %v866 = vsel %vm834, %v785, %v850
    %v867 = vsel %vm835, %v823, %v851
    %v868 = vsel %vm836, %v711, %v852
    %v869 = vsel %vm837, %v749, %v853
    %v870 = vsel %vm838, %v787, %v854
    %v871 = vsel %vm839, %v825, %v855
    %v872 = vsel %vm840, %v714, %v856
    %v873 = vsel %vm841, %v752, %v857
    %v874 = vsel %vm842, %v790, %v858
    %v875 = vsel %vm843, %v828, %v859
    %v876 = vsel %vm844, %v716, %v860
    %v877 = vsel %vm845, %v754, %v861
    %v878 = vsel %vm846, %v792, %v862
    %v879 = vsel %vm847, %v830, %v863
    %v880 = vpack.c.bf16 %v868, %v864
    %v881 = vpack.c.bf16 %v869, %v865
    %v882 = vpack.c.bf16 %v870, %v866
    %v883 = vpack.c.bf16 %v871, %v867
    %v884 = vpack.c.bf16 %v876, %v872
    %v885 = vpack.c.bf16 %v877, %v873
    %v886 = vpack.c.bf16 %v878, %v874
    %v887 = vpack.c.bf16 %v879, %v875
    %v888 = vld [vmem:[#allocation11] sm:$0xff]
    %v889 = vld [vmem:[#allocation11 + $0x8] sm:$0xff]
    %v890 = vld [vmem:[#allocation11 + $0x10] sm:$0xff]
    %v891 = vld [vmem:[#allocation11 + $0x18] sm:$0xff]
    %v892 = vld [vmem:[#allocation11 + $0x20] sm:$0xff]
    %v893 = vld [vmem:[#allocation11 + $0x28] sm:$0xff]
    %v894 = vld [vmem:[#allocation11 + $0x30] sm:$0xff]
    %v895 = vld [vmem:[#allocation11 + $0x38] sm:$0xff]
    %v896 = vld [vmem:[#allocation11 + $0x40] sm:$0xff]
    %v897 = vld [vmem:[#allocation11 + $0x48] sm:$0xff]
    %v898 = vld [vmem:[#allocation11 + $0x50] sm:$0xff]
    %v899 = vld [vmem:[#allocation11 + $0x58] sm:$0xff]
    %v900 = vld [vmem:[#allocation11 + $0x60] sm:$0xff]
    %v901 = vld [vmem:[#allocation11 + $0x68] sm:$0xff]
    %v902 = vld [vmem:[#allocation11 + $0x70] sm:$0xff]
    %v903 = vld [vmem:[#allocation11 + $0x78] sm:$0xff]
    %v904 = vld [vmem:[#allocation11 + $0x80] sm:$0xff]
    %v905 = vld [vmem:[#allocation11 + $0x88] sm:$0xff]
    %v906 = vld [vmem:[#allocation11 + $0x90] sm:$0xff]
    %v907 = vld [vmem:[#allocation11 + $0x98] sm:$0xff]
    %v908 = vld [vmem:[#allocation11 + $0xa0] sm:$0xff]
    %v909 = vld [vmem:[#allocation11 + $0xa8] sm:$0xff]
    %v910 = vld [vmem:[#allocation11 + $0xb0] sm:$0xff]
    %v911 = vld [vmem:[#allocation11 + $0xb8] sm:$0xff]
    %v912 = vld [vmem:[#allocation11 + $0xc0] sm:$0xff]
    %v913 = vld [vmem:[#allocation11 + $0xc8] sm:$0xff]
    %v914 = vld [vmem:[#allocation11 + $0xd0] sm:$0xff]
    %v915 = vld [vmem:[#allocation11 + $0xd8] sm:$0xff]
    %v916 = vld [vmem:[#allocation11 + $0xe0] sm:$0xff]
    %v917 = vld [vmem:[#allocation11 + $0xe8] sm:$0xff]
    %v918 = vld [vmem:[#allocation11 + $0xf0] sm:$0xff]
    %v919 = vld [vmem:[#allocation11 + $0xf8] sm:$0xff]
    %v920 = vld [vmem:[#allocation11 + $0x100] sm:$0xff]
    %v921 = vld [vmem:[#allocation11 + $0x108] sm:$0xff]
    %v922 = vld [vmem:[#allocation11 + $0x110] sm:$0xff]
    %v923 = vld [vmem:[#allocation11 + $0x118] sm:$0xff]
    %v924 = vld [vmem:[#allocation11 + $0x120] sm:$0xff]
    %v925 = vld [vmem:[#allocation11 + $0x128] sm:$0xff]
    %v926 = vld [vmem:[#allocation11 + $0x130] sm:$0xff]
    %v927 = vld [vmem:[#allocation11 + $0x138] sm:$0xff]
    %v928 = vld [vmem:[#allocation11 + $0x140] sm:$0xff]
    %v929 = vld [vmem:[#allocation11 + $0x148] sm:$0xff]
    %v930 = vld [vmem:[#allocation11 + $0x150] sm:$0xff]
    %v931 = vld [vmem:[#allocation11 + $0x158] sm:$0xff]
    %v932 = vld [vmem:[#allocation11 + $0x160] sm:$0xff]
    %v933 = vld [vmem:[#allocation11 + $0x168] sm:$0xff]
    %v934 = vld [vmem:[#allocation11 + $0x170] sm:$0xff]
    %v935 = vld [vmem:[#allocation11 + $0x178] sm:$0xff]
    %v936 = vld [vmem:[#allocation11 + $0x180] sm:$0xff]
    %v937 = vld [vmem:[#allocation11 + $0x188] sm:$0xff]
    %v938 = vld [vmem:[#allocation11 + $0x190] sm:$0xff]
    %v939 = vld [vmem:[#allocation11 + $0x198] sm:$0xff]
    %v940 = vld [vmem:[#allocation11 + $0x1a0] sm:$0xff]
    %v941 = vld [vmem:[#allocation11 + $0x1a8] sm:$0xff]
    %v942 = vld [vmem:[#allocation11 + $0x1b0] sm:$0xff]
    %v943 = vld [vmem:[#allocation11 + $0x1b8] sm:$0xff]
    %v944 = vld [vmem:[#allocation11 + $0x1c0] sm:$0xff]
    %v945 = vld [vmem:[#allocation11 + $0x1c8] sm:$0xff]
    %v946 = vld [vmem:[#allocation11 + $0x1d0] sm:$0xff]
    %v947 = vld [vmem:[#allocation11 + $0x1d8] sm:$0xff]
    %v948 = vld [vmem:[#allocation11 + $0x1e0] sm:$0xff]
    %v949 = vld [vmem:[#allocation11 + $0x1e8] sm:$0xff]
    %v950 = vld [vmem:[#allocation11 + $0x1f0] sm:$0xff]
    %v951 = vld [vmem:[#allocation11 + $0x1f8] sm:$0xff]
    %v952 = vld [vmem:[#allocation11 + $0x200] sm:$0xff]
    %v953 = vld [vmem:[#allocation11 + $0x208] sm:$0xff]
    %v954 = vld [vmem:[#allocation11 + $0x210] sm:$0xff]
    %v955 = vld [vmem:[#allocation11 + $0x218] sm:$0xff]
    %v956 = vld [vmem:[#allocation11 + $0x220] sm:$0xff]
    %v957 = vld [vmem:[#allocation11 + $0x228] sm:$0xff]
    %v958 = vld [vmem:[#allocation11 + $0x230] sm:$0xff]
    %v959 = vld [vmem:[#allocation11 + $0x238] sm:$0xff]
    %v960 = vld [vmem:[#allocation11 + $0x240] sm:$0xff]
    %v961 = vld [vmem:[#allocation11 + $0x248] sm:$0xff]
    %v962 = vld [vmem:[#allocation11 + $0x250] sm:$0xff]
    %v963 = vld [vmem:[#allocation11 + $0x258] sm:$0xff]
    %v964 = vld [vmem:[#allocation11 + $0x260] sm:$0xff]
    %v965 = vld [vmem:[#allocation11 + $0x268] sm:$0xff]
    %v966 = vld [vmem:[#allocation11 + $0x270] sm:$0xff]
    %v967 = vld [vmem:[#allocation11 + $0x278] sm:$0xff]
    %v968 = vld [vmem:[#allocation11 + $0x280] sm:$0xff]
    %v969 = vld [vmem:[#allocation11 + $0x288] sm:$0xff]
    %v970 = vld [vmem:[#allocation11 + $0x290] sm:$0xff]
    %v971 = vld [vmem:[#allocation11 + $0x298] sm:$0xff]
    %v972 = vld [vmem:[#allocation11 + $0x2a0] sm:$0xff]
    %v973 = vld [vmem:[#allocation11 + $0x2a8] sm:$0xff]
    %v974 = vld [vmem:[#allocation11 + $0x2b0] sm:$0xff]
    %v975 = vld [vmem:[#allocation11 + $0x2b8] sm:$0xff]
    %v976 = vld [vmem:[#allocation11 + $0x2c0] sm:$0xff]
    %v977 = vld [vmem:[#allocation11 + $0x2c8] sm:$0xff]
    %v978 = vld [vmem:[#allocation11 + $0x2d0] sm:$0xff]
    %v979 = vld [vmem:[#allocation11 + $0x2d8] sm:$0xff]
    %v980 = vld [vmem:[#allocation11 + $0x2e0] sm:$0xff]
    %v981 = vld [vmem:[#allocation11 + $0x2e8] sm:$0xff]
    %v982 = vld [vmem:[#allocation11 + $0x2f0] sm:$0xff]
    %v983 = vld [vmem:[#allocation11 + $0x2f8] sm:$0xff]
    %v984 = vld [vmem:[#allocation11 + $0x300] sm:$0xff]
    %v985 = vld [vmem:[#allocation11 + $0x308] sm:$0xff]
    %v986 = vld [vmem:[#allocation11 + $0x310] sm:$0xff]
    %v987 = vld [vmem:[#allocation11 + $0x318] sm:$0xff]
    %v988 = vld [vmem:[#allocation11 + $0x320] sm:$0xff]
    %v989 = vld [vmem:[#allocation11 + $0x328] sm:$0xff]
    %v990 = vld [vmem:[#allocation11 + $0x330] sm:$0xff]
    %v991 = vld [vmem:[#allocation11 + $0x338] sm:$0xff]
    %v992 = vld [vmem:[#allocation11 + $0x340] sm:$0xff]
    %v993 = vld [vmem:[#allocation11 + $0x348] sm:$0xff]
    %v994 = vld [vmem:[#allocation11 + $0x350] sm:$0xff]
    %v995 = vld [vmem:[#allocation11 + $0x358] sm:$0xff]
    %v996 = vld [vmem:[#allocation11 + $0x360] sm:$0xff]
    %v997 = vld [vmem:[#allocation11 + $0x368] sm:$0xff]
    %v998 = vld [vmem:[#allocation11 + $0x370] sm:$0xff]
    %v999 = vld [vmem:[#allocation11 + $0x378] sm:$0xff]
    %v1000 = vld [vmem:[#allocation11 + $0x380] sm:$0xff]
    %v1001 = vld [vmem:[#allocation11 + $0x388] sm:$0xff]
    %v1002 = vld [vmem:[#allocation11 + $0x390] sm:$0xff]
    %v1003 = vld [vmem:[#allocation11 + $0x398] sm:$0xff]
    %v1004 = vld [vmem:[#allocation11 + $0x3a0] sm:$0xff]
    %v1005 = vld [vmem:[#allocation11 + $0x3a8] sm:$0xff]
    %v1006 = vld [vmem:[#allocation11 + $0x3b0] sm:$0xff]
    %v1007 = vld [vmem:[#allocation11 + $0x3b8] sm:$0xff]
    %v1008 = vld [vmem:[#allocation11 + $0x3c0] sm:$0xff]
    %v1009 = vld [vmem:[#allocation11 + $0x3c8] sm:$0xff]
    %v1010 = vld [vmem:[#allocation11 + $0x3d0] sm:$0xff]
    %v1011 = vld [vmem:[#allocation11 + $0x3d8] sm:$0xff]
    %v1012 = vld [vmem:[#allocation11 + $0x3e0] sm:$0xff]
    %v1013 = vld [vmem:[#allocation11 + $0x3e8] sm:$0xff]
    %v1014 = vld [vmem:[#allocation11 + $0x3f0] sm:$0xff]
    %v1015 = vld [vmem:[#allocation11 + $0x3f8] sm:$0xff]
    %v1016 = vld [vmem:[#allocation11 + $0x400] sm:$0xff]
    %v1017 = vld [vmem:[#allocation11 + $0x408] sm:$0xff]
    %v1018 = vld [vmem:[#allocation11 + $0x410] sm:$0xff]
    %v1019 = vld [vmem:[#allocation11 + $0x418] sm:$0xff]
    %v1020 = vld [vmem:[#allocation11 + $0x420] sm:$0xff]
    %v1021 = vld [vmem:[#allocation11 + $0x428] sm:$0xff]
    %v1022 = vld [vmem:[#allocation11 + $0x430] sm:$0xff]
    %v1023 = vld [vmem:[#allocation11 + $0x438] sm:$0xff]
    %v1024 = vld [vmem:[#allocation11 + $0x440] sm:$0xff]
    %v1025 = vld [vmem:[#allocation11 + $0x448] sm:$0xff]
    %v1026 = vld [vmem:[#allocation11 + $0x450] sm:$0xff]
    %v1027 = vld [vmem:[#allocation11 + $0x458] sm:$0xff]
    %v1028 = vld [vmem:[#allocation11 + $0x460] sm:$0xff]
    %v1029 = vld [vmem:[#allocation11 + $0x468] sm:$0xff]
    %v1030 = vld [vmem:[#allocation11 + $0x470] sm:$0xff]
    %v1031 = vld [vmem:[#allocation11 + $0x478] sm:$0xff]
    %v1032 = vld [vmem:[#allocation11 + $0x480] sm:$0xff]
    %v1033 = vld [vmem:[#allocation11 + $0x488] sm:$0xff]
    %v1034 = vld [vmem:[#allocation11 + $0x490] sm:$0xff]
    %v1035 = vld [vmem:[#allocation11 + $0x498] sm:$0xff]
    %v1036 = vld [vmem:[#allocation11 + $0x4a0] sm:$0xff]
    %v1037 = vld [vmem:[#allocation11 + $0x4a8] sm:$0xff]
    %v1038 = vld [vmem:[#allocation11 + $0x4b0] sm:$0xff]
    %v1039 = vld [vmem:[#allocation11 + $0x4b8] sm:$0xff]
    %v1040 = vld [vmem:[#allocation11 + $0x4c0] sm:$0xff]
    %v1041 = vld [vmem:[#allocation11 + $0x4c8] sm:$0xff]
    %v1042 = vld [vmem:[#allocation11 + $0x4d0] sm:$0xff]
    %v1043 = vld [vmem:[#allocation11 + $0x4d8] sm:$0xff]
    %v1044 = vld [vmem:[#allocation11 + $0x4e0] sm:$0xff]
    %v1045 = vld [vmem:[#allocation11 + $0x4e8] sm:$0xff]
    %v1046 = vld [vmem:[#allocation11 + $0x4f0] sm:$0xff]
    %v1047 = vld [vmem:[#allocation11 + $0x4f8] sm:$0xff]
    %v1048 = vld [vmem:[#allocation11 + $0x500] sm:$0xff]
    %v1049 = vld [vmem:[#allocation11 + $0x508] sm:$0xff]
    %v1050 = vld [vmem:[#allocation11 + $0x510] sm:$0xff]
    %v1051 = vld [vmem:[#allocation11 + $0x518] sm:$0xff]
    %v1052 = vld [vmem:[#allocation11 + $0x520] sm:$0xff]
    %v1053 = vld [vmem:[#allocation11 + $0x528] sm:$0xff]
    %v1054 = vld [vmem:[#allocation11 + $0x530] sm:$0xff]
    %v1055 = vld [vmem:[#allocation11 + $0x538] sm:$0xff]
    %v1056 = vld [vmem:[#allocation11 + $0x540] sm:$0xff]
    %v1057 = vld [vmem:[#allocation11 + $0x548] sm:$0xff]
    %v1058 = vld [vmem:[#allocation11 + $0x550] sm:$0xff]
    %v1059 = vld [vmem:[#allocation11 + $0x558] sm:$0xff]
    %v1060 = vld [vmem:[#allocation11 + $0x560] sm:$0xff]
    %v1061 = vld [vmem:[#allocation11 + $0x568] sm:$0xff]
    %v1062 = vld [vmem:[#allocation11 + $0x570] sm:$0xff]
    %v1063 = vld [vmem:[#allocation11 + $0x578] sm:$0xff]
    %v1064 = vld [vmem:[#allocation11 + $0x580] sm:$0xff]
    %v1065 = vld [vmem:[#allocation11 + $0x588] sm:$0xff]
    %v1066 = vld [vmem:[#allocation11 + $0x590] sm:$0xff]
    %v1067 = vld [vmem:[#allocation11 + $0x598] sm:$0xff]
    %v1068 = vld [vmem:[#allocation11 + $0x5a0] sm:$0xff]
    %v1069 = vld [vmem:[#allocation11 + $0x5a8] sm:$0xff]
    %v1070 = vld [vmem:[#allocation11 + $0x5b0] sm:$0xff]
    %v1071 = vld [vmem:[#allocation11 + $0x5b8] sm:$0xff]
    %v1072 = vld [vmem:[#allocation11 + $0x5c0] sm:$0xff]
    %v1073 = vld [vmem:[#allocation11 + $0x5c8] sm:$0xff]
    %v1074 = vld [vmem:[#allocation11 + $0x5d0] sm:$0xff]
    %v1075 = vld [vmem:[#allocation11 + $0x5d8] sm:$0xff]
    %v1076 = vld [vmem:[#allocation11 + $0x5e0] sm:$0xff]
    %v1077 = vld [vmem:[#allocation11 + $0x5e8] sm:$0xff]
    %v1078 = vld [vmem:[#allocation11 + $0x5f0] sm:$0xff]
    %v1079 = vld [vmem:[#allocation11 + $0x5f8] sm:$0xff]
    %v1080 = vld [vmem:[#allocation11 + $0x600] sm:$0xff]
    %v1081 = vld [vmem:[#allocation11 + $0x608] sm:$0xff]
    %v1082 = vld [vmem:[#allocation11 + $0x610] sm:$0xff]
    %v1083 = vld [vmem:[#allocation11 + $0x618] sm:$0xff]
    %v1084 = vld [vmem:[#allocation11 + $0x620] sm:$0xff]
    %v1085 = vld [vmem:[#allocation11 + $0x628] sm:$0xff]
    %v1086 = vld [vmem:[#allocation11 + $0x630] sm:$0xff]
    %v1087 = vld [vmem:[#allocation11 + $0x638] sm:$0xff]
    %v1088 = vld [vmem:[#allocation11 + $0x640] sm:$0xff]
    %v1089 = vld [vmem:[#allocation11 + $0x648] sm:$0xff]
    %v1090 = vld [vmem:[#allocation11 + $0x650] sm:$0xff]
    %v1091 = vld [vmem:[#allocation11 + $0x658] sm:$0xff]
    %v1092 = vld [vmem:[#allocation11 + $0x660] sm:$0xff]
    %v1093 = vld [vmem:[#allocation11 + $0x668] sm:$0xff]
    %v1094 = vld [vmem:[#allocation11 + $0x670] sm:$0xff]
    %v1095 = vld [vmem:[#allocation11 + $0x678] sm:$0xff]
    %v1096 = vld [vmem:[#allocation11 + $0x680] sm:$0xff]
    %v1097 = vld [vmem:[#allocation11 + $0x688] sm:$0xff]
    %v1098 = vld [vmem:[#allocation11 + $0x690] sm:$0xff]
    %v1099 = vld [vmem:[#allocation11 + $0x698] sm:$0xff]
    %v1100 = vld [vmem:[#allocation11 + $0x6a0] sm:$0xff]
    %v1101 = vld [vmem:[#allocation11 + $0x6a8] sm:$0xff]
    %v1102 = vld [vmem:[#allocation11 + $0x6b0] sm:$0xff]
    %v1103 = vld [vmem:[#allocation11 + $0x6b8] sm:$0xff]
    %v1104 = vld [vmem:[#allocation11 + $0x6c0] sm:$0xff]
    %v1105 = vld [vmem:[#allocation11 + $0x6c8] sm:$0xff]
    %v1106 = vld [vmem:[#allocation11 + $0x6d0] sm:$0xff]
    %v1107 = vld [vmem:[#allocation11 + $0x6d8] sm:$0xff]
    %v1108 = vld [vmem:[#allocation11 + $0x6e0] sm:$0xff]
    %v1109 = vld [vmem:[#allocation11 + $0x6e8] sm:$0xff]
    %v1110 = vld [vmem:[#allocation11 + $0x6f0] sm:$0xff]
    %v1111 = vld [vmem:[#allocation11 + $0x6f8] sm:$0xff]
    %v1112 = vld [vmem:[#allocation11 + $0x700] sm:$0xff]
    %v1113 = vld [vmem:[#allocation11 + $0x708] sm:$0xff]
    %v1114 = vld [vmem:[#allocation11 + $0x710] sm:$0xff]
    %v1115 = vld [vmem:[#allocation11 + $0x718] sm:$0xff]
    %v1116 = vld [vmem:[#allocation11 + $0x720] sm:$0xff]
    %v1117 = vld [vmem:[#allocation11 + $0x728] sm:$0xff]
    %v1118 = vld [vmem:[#allocation11 + $0x730] sm:$0xff]
    %v1119 = vld [vmem:[#allocation11 + $0x738] sm:$0xff]
    %v1120 = vld [vmem:[#allocation11 + $0x740] sm:$0xff]
    %v1121 = vld [vmem:[#allocation11 + $0x748] sm:$0xff]
    %v1122 = vld [vmem:[#allocation11 + $0x750] sm:$0xff]
    %v1123 = vld [vmem:[#allocation11 + $0x758] sm:$0xff]
    %v1124 = vld [vmem:[#allocation11 + $0x760] sm:$0xff]
    %v1125 = vld [vmem:[#allocation11 + $0x768] sm:$0xff]
    %v1126 = vld [vmem:[#allocation11 + $0x770] sm:$0xff]
    %v1127 = vld [vmem:[#allocation11 + $0x778] sm:$0xff]
    %v1128 = vld [vmem:[#allocation11 + $0x780] sm:$0xff]
    %v1129 = vld [vmem:[#allocation11 + $0x788] sm:$0xff]
    %v1130 = vld [vmem:[#allocation11 + $0x790] sm:$0xff]
    %v1131 = vld [vmem:[#allocation11 + $0x798] sm:$0xff]
    %v1132 = vld [vmem:[#allocation11 + $0x7a0] sm:$0xff]
    %v1133 = vld [vmem:[#allocation11 + $0x7a8] sm:$0xff]
    %v1134 = vld [vmem:[#allocation11 + $0x7b0] sm:$0xff]
    %v1135 = vld [vmem:[#allocation11 + $0x7b8] sm:$0xff]
    %v1136 = vld [vmem:[#allocation11 + $0x7c0] sm:$0xff]
    %v1137 = vld [vmem:[#allocation11 + $0x7c8] sm:$0xff]
    %v1138 = vld [vmem:[#allocation11 + $0x7d0] sm:$0xff]
    %v1139 = vld [vmem:[#allocation11 + $0x7d8] sm:$0xff]
    %v1140 = vld [vmem:[#allocation11 + $0x7e0] sm:$0xff]
    %v1141 = vld [vmem:[#allocation11 + $0x7e8] sm:$0xff]
    %v1142 = vld [vmem:[#allocation11 + $0x7f0] sm:$0xff]
    %v1143 = vld [vmem:[#allocation11 + $0x7f8] sm:$0xff]
    %v1144 = vld [vmem:[#allocation13] sm:$0xff]
    %v1146 = vperm.slane %v1144, 0
    %v1147 = vperm.slane %v1144, 1
    %v1148 = vperm.slane %v1144, 2
    %v1149 = vperm.slane %v1144, 3
    %v1150 = vperm.slane %v1144, 4
    %v1151 = vperm.slane %v1144, 5
    %v1152 = vperm.slane %v1144, 6
    %v1153 = vperm.slane %v1144, 7
    %v1418 = vunpack.c.l.b16 %v888
    %v1419 = vunpack.c.h.b16 %v888
    %v1420 = vunpack.c.l.b16 %v889
    %v1421 = vunpack.c.h.b16 %v889
    %v1422 = vunpack.c.l.b16 %v890
    %v1423 = vunpack.c.h.b16 %v890
    %v1424 = vunpack.c.l.b16 %v891
    %v1425 = vunpack.c.h.b16 %v891
    %v1426 = vunpack.c.l.b16 %v892
    %v1427 = vunpack.c.h.b16 %v892
    %v1428 = vunpack.c.l.b16 %v893
    %v1429 = vunpack.c.h.b16 %v893
    %v1430 = vunpack.c.l.b16 %v894
    %v1431 = vunpack.c.h.b16 %v894
    %v1432 = vunpack.c.l.b16 %v895
    %v1433 = vunpack.c.h.b16 %v895
    %v1434 = vunpack.c.l.b16 %v896
    %v1435 = vunpack.c.h.b16 %v896
    %v1436 = vunpack.c.l.b16 %v897
    %v1437 = vunpack.c.h.b16 %v897
    %v1438 = vunpack.c.l.b16 %v898
    %v1439 = vunpack.c.h.b16 %v898
    %v1440 = vunpack.c.l.b16 %v899
    %v1441 = vunpack.c.h.b16 %v899
    %v1442 = vunpack.c.l.b16 %v900
    %v1443 = vunpack.c.h.b16 %v900
    %v1444 = vunpack.c.l.b16 %v901
    %v1445 = vunpack.c.h.b16 %v901
    %v1446 = vunpack.c.l.b16 %v902
    %v1447 = vunpack.c.h.b16 %v902
    %v1448 = vunpack.c.l.b16 %v903
    %v1449 = vunpack.c.h.b16 %v903
    %v1450 = vunpack.c.l.b16 %v904
    %v1451 = vunpack.c.h.b16 %v904
    %v1452 = vunpack.c.l.b16 %v905
    %v1453 = vunpack.c.h.b16 %v905
    %v1454 = vunpack.c.l.b16 %v906
    %v1455 = vunpack.c.h.b16 %v906
    %v1456 = vunpack.c.l.b16 %v907
    %v1457 = vunpack.c.h.b16 %v907
    %v1458 = vunpack.c.l.b16 %v908
    %v1459 = vunpack.c.h.b16 %v908
    %v1460 = vunpack.c.l.b16 %v909
    %v1461 = vunpack.c.h.b16 %v909
    %v1462 = vunpack.c.l.b16 %v910
    %v1463 = vunpack.c.h.b16 %v910
    %v1464 = vunpack.c.l.b16 %v911
    %v1465 = vunpack.c.h.b16 %v911
    %v1466 = vunpack.c.l.b16 %v912
    %v1467 = vunpack.c.h.b16 %v912
    %v1468 = vunpack.c.l.b16 %v913
    %v1469 = vunpack.c.h.b16 %v913
    %v1470 = vunpack.c.l.b16 %v914
    %v1471 = vunpack.c.h.b16 %v914
    %v1472 = vunpack.c.l.b16 %v915
    %v1473 = vunpack.c.h.b16 %v915
    %v1474 = vunpack.c.l.b16 %v916
    %v1475 = vunpack.c.h.b16 %v916
    %v1476 = vunpack.c.l.b16 %v917
    %v1477 = vunpack.c.h.b16 %v917
    %v1478 = vunpack.c.l.b16 %v918
    %v1479 = vunpack.c.h.b16 %v918
    %v1480 = vunpack.c.l.b16 %v919
    %v1481 = vunpack.c.h.b16 %v919
    %v1482 = vunpack.c.l.b16 %v920
    %v1483 = vunpack.c.h.b16 %v920
    %v1484 = vunpack.c.l.b16 %v921
    %v1485 = vunpack.c.h.b16 %v921
    %v1486 = vunpack.c.l.b16 %v922
    %v1487 = vunpack.c.h.b16 %v922
    %v1488 = vunpack.c.l.b16 %v923
    %v1489 = vunpack.c.h.b16 %v923
    %v1490 = vunpack.c.l.b16 %v924
    %v1491 = vunpack.c.h.b16 %v924
    %v1492 = vunpack.c.l.b16 %v925
    %v1493 = vunpack.c.h.b16 %v925
    %v1494 = vunpack.c.l.b16 %v926
    %v1495 = vunpack.c.h.b16 %v926
    %v1496 = vunpack.c.l.b16 %v927
    %v1497 = vunpack.c.h.b16 %v927
    %v1498 = vunpack.c.l.b16 %v928
    %v1499 = vunpack.c.h.b16 %v928
    %v1500 = vunpack.c.l.b16 %v929
    %v1501 = vunpack.c.h.b16 %v929
    %v1502 = vunpack.c.l.b16 %v930
    %v1503 = vunpack.c.h.b16 %v930
    %v1504 = vunpack.c.l.b16 %v931
    %v1505 = vunpack.c.h.b16 %v931
    %v1506 = vunpack.c.l.b16 %v932
    %v1507 = vunpack.c.h.b16 %v932
    %v1508 = vunpack.c.l.b16 %v933
    %v1509 = vunpack.c.h.b16 %v933
    %v1510 = vunpack.c.l.b16 %v934
    %v1511 = vunpack.c.h.b16 %v934
    %v1512 = vunpack.c.l.b16 %v935
    %v1513 = vunpack.c.h.b16 %v935
    %v1514 = vunpack.c.l.b16 %v936
    %v1515 = vunpack.c.h.b16 %v936
    %v1516 = vunpack.c.l.b16 %v937
    %v1517 = vunpack.c.h.b16 %v937
    %v1518 = vunpack.c.l.b16 %v938
    %v1519 = vunpack.c.h.b16 %v938
    %v1520 = vunpack.c.l.b16 %v939
    %v1521 = vunpack.c.h.b16 %v939
    %v1522 = vunpack.c.l.b16 %v940
    %v1523 = vunpack.c.h.b16 %v940
    %v1524 = vunpack.c.l.b16 %v941
    %v1525 = vunpack.c.h.b16 %v941
    %v1526 = vunpack.c.l.b16 %v942
    %v1527 = vunpack.c.h.b16 %v942
    %v1528 = vunpack.c.l.b16 %v943
    %v1529 = vunpack.c.h.b16 %v943
    %v1530 = vunpack.c.l.b16 %v944
    %v1531 = vunpack.c.h.b16 %v944
    %v1532 = vunpack.c.l.b16 %v945
    %v1533 = vunpack.c.h.b16 %v945
    %v1534 = vunpack.c.l.b16 %v946
    %v1535 = vunpack.c.h.b16 %v946
    %v1536 = vunpack.c.l.b16 %v947
    %v1537 = vunpack.c.h.b16 %v947
    %v1538 = vunpack.c.l.b16 %v948
    %v1539 = vunpack.c.h.b16 %v948
    %v1540 = vunpack.c.l.b16 %v949
    %v1541 = vunpack.c.h.b16 %v949
    %v1542 = vunpack.c.l.b16 %v950
    %v1543 = vunpack.c.h.b16 %v950
    %v1544 = vunpack.c.l.b16 %v951
    %v1545 = vunpack.c.h.b16 %v951
    %v1546 = vunpack.c.l.b16 %v952
    %v1547 = vunpack.c.h.b16 %v952
    %v1548 = vunpack.c.l.b16 %v953
    %v1549 = vunpack.c.h.b16 %v953
    %v1550 = vunpack.c.l.b16 %v954
    %v1551 = vunpack.c.h.b16 %v954
    %v1552 = vunpack.c.l.b16 %v955
    %v1553 = vunpack.c.h.b16 %v955
    %v1554 = vunpack.c.l.b16 %v956
    %v1555 = vunpack.c.h.b16 %v956
    %v1556 = vunpack.c.l.b16 %v957
    %v1557 = vunpack.c.h.b16 %v957
    %v1558 = vunpack.c.l.b16 %v958
    %v1559 = vunpack.c.h.b16 %v958
    %v1560 = vunpack.c.l.b16 %v959
    %v1561 = vunpack.c.h.b16 %v959
    %v1562 = vunpack.c.l.b16 %v960
    %v1563 = vunpack.c.h.b16 %v960
    %v1564 = vunpack.c.l.b16 %v961
    %v1565 = vunpack.c.h.b16 %v961
    %v1566 = vunpack.c.l.b16 %v962
    %v1567 = vunpack.c.h.b16 %v962
    %v1568 = vunpack.c.l.b16 %v963
    %v1569 = vunpack.c.h.b16 %v963
    %v1570 = vunpack.c.l.b16 %v964
    %v1571 = vunpack.c.h.b16 %v964
    %v1572 = vunpack.c.l.b16 %v965
    %v1573 = vunpack.c.h.b16 %v965
    %v1574 = vunpack.c.l.b16 %v966
    %v1575 = vunpack.c.h.b16 %v966
    %v1576 = vunpack.c.l.b16 %v967
    %v1577 = vunpack.c.h.b16 %v967
    %v1578 = vunpack.c.l.b16 %v968
    %v1579 = vunpack.c.h.b16 %v968
    %v1580 = vunpack.c.l.b16 %v969
    %v1581 = vunpack.c.h.b16 %v969
    %v1582 = vunpack.c.l.b16 %v970
    %v1583 = vunpack.c.h.b16 %v970
    %v1584 = vunpack.c.l.b16 %v971
    %v1585 = vunpack.c.h.b16 %v971
    %v1586 = vunpack.c.l.b16 %v972
    %v1587 = vunpack.c.h.b16 %v972
    %v1588 = vunpack.c.l.b16 %v973
    %v1589 = vunpack.c.h.b16 %v973
    %v1590 = vunpack.c.l.b16 %v974
    %v1591 = vunpack.c.h.b16 %v974
    %v1592 = vunpack.c.l.b16 %v975
    %v1593 = vunpack.c.h.b16 %v975
    %v1594 = vunpack.c.l.b16 %v976
    %v1595 = vunpack.c.h.b16 %v976
    %v1596 = vunpack.c.l.b16 %v977
    %v1597 = vunpack.c.h.b16 %v977
    %v1598 = vunpack.c.l.b16 %v978
    %v1599 = vunpack.c.h.b16 %v978
    %v1600 = vunpack.c.l.b16 %v979
    %v1601 = vunpack.c.h.b16 %v979
    %v1602 = vunpack.c.l.b16 %v980
    %v1603 = vunpack.c.h.b16 %v980
    %v1604 = vunpack.c.l.b16 %v981
    %v1605 = vunpack.c.h.b16 %v981
    %v1606 = vunpack.c.l.b16 %v982
    %v1607 = vunpack.c.h.b16 %v982
    %v1608 = vunpack.c.l.b16 %v983
    %v1609 = vunpack.c.h.b16 %v983
    %v1610 = vunpack.c.l.b16 %v984
    %v1611 = vunpack.c.h.b16 %v984
    %v1612 = vunpack.c.l.b16 %v985
    %v1613 = vunpack.c.h.b16 %v985
    %v1614 = vunpack.c.l.b16 %v986
    %v1615 = vunpack.c.h.b16 %v986
    %v1616 = vunpack.c.l.b16 %v987
    %v1617 = vunpack.c.h.b16 %v987
    %v1618 = vunpack.c.l.b16 %v988
    %v1619 = vunpack.c.h.b16 %v988
    %v1620 = vunpack.c.l.b16 %v989
    %v1621 = vunpack.c.h.b16 %v989
    %v1622 = vunpack.c.l.b16 %v990
    %v1623 = vunpack.c.h.b16 %v990
    %v1624 = vunpack.c.l.b16 %v991
    %v1625 = vunpack.c.h.b16 %v991
    %v1626 = vunpack.c.l.b16 %v992
    %v1627 = vunpack.c.h.b16 %v992
    %v1628 = vunpack.c.l.b16 %v993
    %v1629 = vunpack.c.h.b16 %v993
    %v1630 = vunpack.c.l.b16 %v994
    %v1631 = vunpack.c.h.b16 %v994
    %v1632 = vunpack.c.l.b16 %v995
    %v1633 = vunpack.c.h.b16 %v995
    %v1634 = vunpack.c.l.b16 %v996
    %v1635 = vunpack.c.h.b16 %v996
    %v1636 = vunpack.c.l.b16 %v997
    %v1637 = vunpack.c.h.b16 %v997
    %v1638 = vunpack.c.l.b16 %v998
    %v1639 = vunpack.c.h.b16 %v998
    %v1640 = vunpack.c.l.b16 %v999
    %v1641 = vunpack.c.h.b16 %v999
    %v1642 = vunpack.c.l.b16 %v1000
    %v1643 = vunpack.c.h.b16 %v1000
    %v1644 = vunpack.c.l.b16 %v1001
    %v1645 = vunpack.c.h.b16 %v1001
    %v1646 = vunpack.c.l.b16 %v1002
    %v1647 = vunpack.c.h.b16 %v1002
    %v1648 = vunpack.c.l.b16 %v1003
    %v1649 = vunpack.c.h.b16 %v1003
    %v1650 = vunpack.c.l.b16 %v1004
    %v1651 = vunpack.c.h.b16 %v1004
    %v1652 = vunpack.c.l.b16 %v1005
    %v1653 = vunpack.c.h.b16 %v1005
    %v1654 = vunpack.c.l.b16 %v1006
    %v1655 = vunpack.c.h.b16 %v1006
    %v1656 = vunpack.c.l.b16 %v1007
    %v1657 = vunpack.c.h.b16 %v1007
    %v1658 = vunpack.c.l.b16 %v1008
    %v1659 = vunpack.c.h.b16 %v1008
    %v1660 = vunpack.c.l.b16 %v1009
    %v1661 = vunpack.c.h.b16 %v1009
    %v1662 = vunpack.c.l.b16 %v1010
    %v1663 = vunpack.c.h.b16 %v1010
    %v1664 = vunpack.c.l.b16 %v1011
    %v1665 = vunpack.c.h.b16 %v1011
    %v1666 = vunpack.c.l.b16 %v1012
    %v1667 = vunpack.c.h.b16 %v1012
    %v1668 = vunpack.c.l.b16 %v1013
    %v1669 = vunpack.c.h.b16 %v1013
    %v1670 = vunpack.c.l.b16 %v1014
    %v1671 = vunpack.c.h.b16 %v1014
    %v1672 = vunpack.c.l.b16 %v1015
    %v1673 = vunpack.c.h.b16 %v1015
    %v1674 = vunpack.c.l.b16 %v1016
    %v1675 = vunpack.c.h.b16 %v1016
    %v1676 = vunpack.c.l.b16 %v1017
    %v1677 = vunpack.c.h.b16 %v1017
    %v1678 = vunpack.c.l.b16 %v1018
    %v1679 = vunpack.c.h.b16 %v1018
    %v1680 = vunpack.c.l.b16 %v1019
    %v1681 = vunpack.c.h.b16 %v1019
    %v1682 = vunpack.c.l.b16 %v1020
    %v1683 = vunpack.c.h.b16 %v1020
    %v1684 = vunpack.c.l.b16 %v1021
    %v1685 = vunpack.c.h.b16 %v1021
    %v1686 = vunpack.c.l.b16 %v1022
    %v1687 = vunpack.c.h.b16 %v1022
    %v1688 = vunpack.c.l.b16 %v1023
    %v1689 = vunpack.c.h.b16 %v1023
    %v1690 = vunpack.c.l.b16 %v1024
    %v1691 = vunpack.c.h.b16 %v1024
    %v1692 = vunpack.c.l.b16 %v1025
    %v1693 = vunpack.c.h.b16 %v1025
    %v1694 = vunpack.c.l.b16 %v1026
    %v1695 = vunpack.c.h.b16 %v1026
    %v1696 = vunpack.c.l.b16 %v1027
    %v1697 = vunpack.c.h.b16 %v1027
    %v1698 = vunpack.c.l.b16 %v1028
    %v1699 = vunpack.c.h.b16 %v1028
    %v1700 = vunpack.c.l.b16 %v1029
    %v1701 = vunpack.c.h.b16 %v1029
    %v1702 = vunpack.c.l.b16 %v1030
    %v1703 = vunpack.c.h.b16 %v1030
    %v1704 = vunpack.c.l.b16 %v1031
    %v1705 = vunpack.c.h.b16 %v1031
    %v1706 = vunpack.c.l.b16 %v1032
    %v1707 = vunpack.c.h.b16 %v1032
    %v1708 = vunpack.c.l.b16 %v1033
    %v1709 = vunpack.c.h.b16 %v1033
    %v1710 = vunpack.c.l.b16 %v1034
    %v1711 = vunpack.c.h.b16 %v1034
    %v1712 = vunpack.c.l.b16 %v1035
    %v1713 = vunpack.c.h.b16 %v1035
    %v1714 = vunpack.c.l.b16 %v1036
    %v1715 = vunpack.c.h.b16 %v1036
    %v1716 = vunpack.c.l.b16 %v1037
    %v1717 = vunpack.c.h.b16 %v1037
    %v1718 = vunpack.c.l.b16 %v1038
    %v1719 = vunpack.c.h.b16 %v1038
    %v1720 = vunpack.c.l.b16 %v1039
    %v1721 = vunpack.c.h.b16 %v1039
    %v1722 = vunpack.c.l.b16 %v1040
    %v1723 = vunpack.c.h.b16 %v1040
    %v1724 = vunpack.c.l.b16 %v1041
    %v1725 = vunpack.c.h.b16 %v1041
    %v1726 = vunpack.c.l.b16 %v1042
    %v1727 = vunpack.c.h.b16 %v1042
    %v1728 = vunpack.c.l.b16 %v1043
    %v1729 = vunpack.c.h.b16 %v1043
    %v1730 = vunpack.c.l.b16 %v1044
    %v1731 = vunpack.c.h.b16 %v1044
    %v1732 = vunpack.c.l.b16 %v1045
    %v1733 = vunpack.c.h.b16 %v1045
    %v1734 = vunpack.c.l.b16 %v1046
    %v1735 = vunpack.c.h.b16 %v1046
    %v1736 = vunpack.c.l.b16 %v1047
    %v1737 = vunpack.c.h.b16 %v1047
    %v1738 = vunpack.c.l.b16 %v1048
    %v1739 = vunpack.c.h.b16 %v1048
    %v1740 = vunpack.c.l.b16 %v1049
    %v1741 = vunpack.c.h.b16 %v1049
    %v1742 = vunpack.c.l.b16 %v1050
    %v1743 = vunpack.c.h.b16 %v1050
    %v1744 = vunpack.c.l.b16 %v1051
    %v1745 = vunpack.c.h.b16 %v1051
    %v1746 = vunpack.c.l.b16 %v1052
    %v1747 = vunpack.c.h.b16 %v1052
    %v1748 = vunpack.c.l.b16 %v1053
    %v1749 = vunpack.c.h.b16 %v1053
    %v1750 = vunpack.c.l.b16 %v1054
    %v1751 = vunpack.c.h.b16 %v1054
    %v1752 = vunpack.c.l.b16 %v1055
    %v1753 = vunpack.c.h.b16 %v1055
    %v1754 = vunpack.c.l.b16 %v1056
    %v1755 = vunpack.c.h.b16 %v1056
    %v1756 = vunpack.c.l.b16 %v1057
    %v1757 = vunpack.c.h.b16 %v1057
    %v1758 = vunpack.c.l.b16 %v1058
    %v1759 = vunpack.c.h.b16 %v1058
    %v1760 = vunpack.c.l.b16 %v1059
    %v1761 = vunpack.c.h.b16 %v1059
    %v1762 = vunpack.c.l.b16 %v1060
    %v1763 = vunpack.c.h.b16 %v1060
    %v1764 = vunpack.c.l.b16 %v1061
    %v1765 = vunpack.c.h.b16 %v1061
    %v1766 = vunpack.c.l.b16 %v1062
    %v1767 = vunpack.c.h.b16 %v1062
    %v1768 = vunpack.c.l.b16 %v1063
    %v1769 = vunpack.c.h.b16 %v1063
    %v1770 = vunpack.c.l.b16 %v1064
    %v1771 = vunpack.c.h.b16 %v1064
    %v1772 = vunpack.c.l.b16 %v1065
    %v1773 = vunpack.c.h.b16 %v1065
    %v1774 = vunpack.c.l.b16 %v1066
    %v1775 = vunpack.c.h.b16 %v1066
    %v1776 = vunpack.c.l.b16 %v1067
    %v1777 = vunpack.c.h.b16 %v1067
    %v1778 = vunpack.c.l.b16 %v1068
    %v1779 = vunpack.c.h.b16 %v1068
    %v1780 = vunpack.c.l.b16 %v1069
    %v1781 = vunpack.c.h.b16 %v1069
    %v1782 = vunpack.c.l.b16 %v1070
    %v1783 = vunpack.c.h.b16 %v1070
    %v1784 = vunpack.c.l.b16 %v1071
    %v1785 = vunpack.c.h.b16 %v1071
    %v1786 = vunpack.c.l.b16 %v1072
    %v1787 = vunpack.c.h.b16 %v1072
    %v1788 = vunpack.c.l.b16 %v1073
    %v1789 = vunpack.c.h.b16 %v1073
    %v1790 = vunpack.c.l.b16 %v1074
    %v1791 = vunpack.c.h.b16 %v1074
    %v1792 = vunpack.c.l.b16 %v1075
    %v1793 = vunpack.c.h.b16 %v1075
    %v1794 = vunpack.c.l.b16 %v1076
    %v1795 = vunpack.c.h.b16 %v1076
    %v1796 = vunpack.c.l.b16 %v1077
    %v1797 = vunpack.c.h.b16 %v1077
    %v1798 = vunpack.c.l.b16 %v1078
    %v1799 = vunpack.c.h.b16 %v1078
    %v1800 = vunpack.c.l.b16 %v1079
    %v1801 = vunpack.c.h.b16 %v1079
    %v1802 = vunpack.c.l.b16 %v1080
    %v1803 = vunpack.c.h.b16 %v1080
    %v1804 = vunpack.c.l.b16 %v1081
    %v1805 = vunpack.c.h.b16 %v1081
    %v1806 = vunpack.c.l.b16 %v1082
    %v1807 = vunpack.c.h.b16 %v1082
    %v1808 = vunpack.c.l.b16 %v1083
    %v1809 = vunpack.c.h.b16 %v1083
    %v1810 = vunpack.c.l.b16 %v1084
    %v1811 = vunpack.c.h.b16 %v1084
    %v1812 = vunpack.c.l.b16 %v1085
    %v1813 = vunpack.c.h.b16 %v1085
    %v1814 = vunpack.c.l.b16 %v1086
    %v1815 = vunpack.c.h.b16 %v1086
    %v1816 = vunpack.c.l.b16 %v1087
    %v1817 = vunpack.c.h.b16 %v1087
    %v1818 = vunpack.c.l.b16 %v1088
    %v1819 = vunpack.c.h.b16 %v1088
    %v1820 = vunpack.c.l.b16 %v1089
    %v1821 = vunpack.c.h.b16 %v1089
    %v1822 = vunpack.c.l.b16 %v1090
    %v1823 = vunpack.c.h.b16 %v1090
    %v1824 = vunpack.c.l.b16 %v1091
    %v1825 = vunpack.c.h.b16 %v1091
    %v1826 = vunpack.c.l.b16 %v1092
    %v1827 = vunpack.c.h.b16 %v1092
    %v1828 = vunpack.c.l.b16 %v1093
    %v1829 = vunpack.c.h.b16 %v1093
    %v1830 = vunpack.c.l.b16 %v1094
    %v1831 = vunpack.c.h.b16 %v1094
    %v1832 = vunpack.c.l.b16 %v1095
    %v1833 = vunpack.c.h.b16 %v1095
    %v1834 = vunpack.c.l.b16 %v1096
    %v1835 = vunpack.c.h.b16 %v1096
    %v1836 = vunpack.c.l.b16 %v1097
    %v1837 = vunpack.c.h.b16 %v1097
    %v1838 = vunpack.c.l.b16 %v1098
    %v1839 = vunpack.c.h.b16 %v1098
    %v1840 = vunpack.c.l.b16 %v1099
    %v1841 = vunpack.c.h.b16 %v1099
    %v1842 = vunpack.c.l.b16 %v1100
    %v1843 = vunpack.c.h.b16 %v1100
    %v1844 = vunpack.c.l.b16 %v1101
    %v1845 = vunpack.c.h.b16 %v1101
    %v1846 = vunpack.c.l.b16 %v1102
    %v1847 = vunpack.c.h.b16 %v1102
    %v1848 = vunpack.c.l.b16 %v1103
    %v1849 = vunpack.c.h.b16 %v1103
    %v1850 = vunpack.c.l.b16 %v1104
    %v1851 = vunpack.c.h.b16 %v1104
    %v1852 = vunpack.c.l.b16 %v1105
    %v1853 = vunpack.c.h.b16 %v1105
    %v1854 = vunpack.c.l.b16 %v1106
    %v1855 = vunpack.c.h.b16 %v1106
    %v1856 = vunpack.c.l.b16 %v1107
    %v1857 = vunpack.c.h.b16 %v1107
    %v1858 = vunpack.c.l.b16 %v1108
    %v1859 = vunpack.c.h.b16 %v1108
    %v1860 = vunpack.c.l.b16 %v1109
    %v1861 = vunpack.c.h.b16 %v1109
    %v1862 = vunpack.c.l.b16 %v1110
    %v1863 = vunpack.c.h.b16 %v1110
    %v1864 = vunpack.c.l.b16 %v1111
    %v1865 = vunpack.c.h.b16 %v1111
    %v1866 = vunpack.c.l.b16 %v1112
    %v1867 = vunpack.c.h.b16 %v1112
    %v1868 = vunpack.c.l.b16 %v1113
    %v1869 = vunpack.c.h.b16 %v1113
    %v1870 = vunpack.c.l.b16 %v1114
    %v1871 = vunpack.c.h.b16 %v1114
    %v1872 = vunpack.c.l.b16 %v1115
    %v1873 = vunpack.c.h.b16 %v1115
    %v1874 = vunpack.c.l.b16 %v1116
    %v1875 = vunpack.c.h.b16 %v1116
    %v1876 = vunpack.c.l.b16 %v1117
    %v1877 = vunpack.c.h.b16 %v1117
    %v1878 = vunpack.c.l.b16 %v1118
    %v1879 = vunpack.c.h.b16 %v1118
    %v1880 = vunpack.c.l.b16 %v1119
    %v1881 = vunpack.c.h.b16 %v1119
    %v1882 = vunpack.c.l.b16 %v1120
    %v1883 = vunpack.c.h.b16 %v1120
    %v1884 = vunpack.c.l.b16 %v1121
    %v1885 = vunpack.c.h.b16 %v1121
    %v1886 = vunpack.c.l.b16 %v1122
    %v1887 = vunpack.c.h.b16 %v1122
    %v1888 = vunpack.c.l.b16 %v1123
    %v1889 = vunpack.c.h.b16 %v1123
    %v1890 = vunpack.c.l.b16 %v1124
    %v1891 = vunpack.c.h.b16 %v1124
    %v1892 = vunpack.c.l.b16 %v1125
    %v1893 = vunpack.c.h.b16 %v1125
    %v1894 = vunpack.c.l.b16 %v1126
    %v1895 = vunpack.c.h.b16 %v1126
    %v1896 = vunpack.c.l.b16 %v1127
    %v1897 = vunpack.c.h.b16 %v1127
    %v1898 = vunpack.c.l.b16 %v1128
    %v1899 = vunpack.c.h.b16 %v1128
    %v1900 = vunpack.c.l.b16 %v1129
    %v1901 = vunpack.c.h.b16 %v1129
    %v1902 = vunpack.c.l.b16 %v1130
    %v1903 = vunpack.c.h.b16 %v1130
    %v1904 = vunpack.c.l.b16 %v1131
    %v1905 = vunpack.c.h.b16 %v1131
    %v1906 = vunpack.c.l.b16 %v1132
    %v1907 = vunpack.c.h.b16 %v1132
    %v1908 = vunpack.c.l.b16 %v1133
    %v1909 = vunpack.c.h.b16 %v1133
    %v1910 = vunpack.c.l.b16 %v1134
    %v1911 = vunpack.c.h.b16 %v1134
    %v1912 = vunpack.c.l.b16 %v1135
    %v1913 = vunpack.c.h.b16 %v1135
    %v1914 = vunpack.c.l.b16 %v1136
    %v1915 = vunpack.c.h.b16 %v1136
    %v1916 = vunpack.c.l.b16 %v1137
    %v1917 = vunpack.c.h.b16 %v1137
    %v1918 = vunpack.c.l.b16 %v1138
    %v1919 = vunpack.c.h.b16 %v1138
    %v1920 = vunpack.c.l.b16 %v1139
    %v1921 = vunpack.c.h.b16 %v1139
    %v1922 = vunpack.c.l.b16 %v1140
    %v1923 = vunpack.c.h.b16 %v1140
    %v1924 = vunpack.c.l.b16 %v1141
    %v1925 = vunpack.c.h.b16 %v1141
    %v1926 = vunpack.c.l.b16 %v1142
    %v1927 = vunpack.c.h.b16 %v1142
    %v1928 = vunpack.c.l.b16 %v1143
    %v1929 = vunpack.c.h.b16 %v1143
    %v1930 = vpack.c.b16 %v1426, %v1418
    %v1931 = vpack.c.b16 %v1427, %v1419
    %v1932 = vpack.c.b16 %v1428, %v1420
    %v1933 = vpack.c.b16 %v1429, %v1421
    %v1934 = vpack.c.b16 %v1430, %v1422
    %v1935 = vpack.c.b16 %v1431, %v1423
    %v1936 = vpack.c.b16 %v1432, %v1424
    %v1937 = vpack.c.b16 %v1433, %v1425
    %v1938 = vpack.c.b16 %v1442, %v1434
    %v1939 = vpack.c.b16 %v1443, %v1435
    %v1940 = vpack.c.b16 %v1444, %v1436
    %v1941 = vpack.c.b16 %v1445, %v1437
    %v1942 = vpack.c.b16 %v1446, %v1438
    %v1943 = vpack.c.b16 %v1447, %v1439
    %v1944 = vpack.c.b16 %v1448, %v1440
    %v1945 = vpack.c.b16 %v1449, %v1441
    %v1946 = vpack.c.b16 %v1458, %v1450
    %v1947 = vpack.c.b16 %v1459, %v1451
    %v1948 = vpack.c.b16 %v1460, %v1452
    %v1949 = vpack.c.b16 %v1461, %v1453
    %v1950 = vpack.c.b16 %v1462, %v1454
    %v1951 = vpack.c.b16 %v1463, %v1455
    %v1952 = vpack.c.b16 %v1464, %v1456
    %v1953 = vpack.c.b16 %v1465, %v1457
    %v1954 = vpack.c.b16 %v1474, %v1466
    %v1955 = vpack.c.b16 %v1475, %v1467
    %v1956 = vpack.c.b16 %v1476, %v1468
    %v1957 = vpack.c.b16 %v1477, %v1469
    %v1958 = vpack.c.b16 %v1478, %v1470
    %v1959 = vpack.c.b16 %v1479, %v1471
    %v1960 = vpack.c.b16 %v1480, %v1472
    %v1961 = vpack.c.b16 %v1481, %v1473
    %v1962 = vpack.c.b16 %v1490, %v1482
    %v1963 = vpack.c.b16 %v1491, %v1483
    %v1964 = vpack.c.b16 %v1492, %v1484
    %v1965 = vpack.c.b16 %v1493, %v1485
    %v1966 = vpack.c.b16 %v1494, %v1486
    %v1967 = vpack.c.b16 %v1495, %v1487
    %v1968 = vpack.c.b16 %v1496, %v1488
    %v1969 = vpack.c.b16 %v1497, %v1489
    %v1970 = vpack.c.b16 %v1506, %v1498
    %v1971 = vpack.c.b16 %v1507, %v1499
    %v1972 = vpack.c.b16 %v1508, %v1500
    %v1973 = vpack.c.b16 %v1509, %v1501
    %v1974 = vpack.c.b16 %v1510, %v1502
    %v1975 = vpack.c.b16 %v1511, %v1503
    %v1976 = vpack.c.b16 %v1512, %v1504
    %v1977 = vpack.c.b16 %v1513, %v1505
    %v1978 = vpack.c.b16 %v1522, %v1514
    %v1979 = vpack.c.b16 %v1523, %v1515
    %v1980 = vpack.c.b16 %v1524, %v1516
    %v1981 = vpack.c.b16 %v1525, %v1517
    %v1982 = vpack.c.b16 %v1526, %v1518
    %v1983 = vpack.c.b16 %v1527, %v1519
    %v1984 = vpack.c.b16 %v1528, %v1520
    %v1985 = vpack.c.b16 %v1529, %v1521
    %v1986 = vpack.c.b16 %v1538, %v1530
    %v1987 = vpack.c.b16 %v1539, %v1531
    %v1988 = vpack.c.b16 %v1540, %v1532
    %v1989 = vpack.c.b16 %v1541, %v1533
    %v1990 = vpack.c.b16 %v1542, %v1534
    %v1991 = vpack.c.b16 %v1543, %v1535
    %v1992 = vpack.c.b16 %v1544, %v1536
    %v1993 = vpack.c.b16 %v1545, %v1537
    %v1994 = vpack.c.b16 %v1554, %v1546
    %v1995 = vpack.c.b16 %v1555, %v1547
    %v1996 = vpack.c.b16 %v1556, %v1548
    %v1997 = vpack.c.b16 %v1557, %v1549
    %v1998 = vpack.c.b16 %v1558, %v1550
    %v1999 = vpack.c.b16 %v1559, %v1551
    %v2000 = vpack.c.b16 %v1560, %v1552
    %v2001 = vpack.c.b16 %v1561, %v1553
    %v2002 = vpack.c.b16 %v1570, %v1562
    %v2003 = vpack.c.b16 %v1571, %v1563
    %v2004 = vpack.c.b16 %v1572, %v1564
    %v2005 = vpack.c.b16 %v1573, %v1565
    %v2006 = vpack.c.b16 %v1574, %v1566
    %v2007 = vpack.c.b16 %v1575, %v1567
    %v2008 = vpack.c.b16 %v1576, %v1568
    %v2009 = vpack.c.b16 %v1577, %v1569
    %v2010 = vpack.c.b16 %v1586, %v1578
    %v2011 = vpack.c.b16 %v1587, %v1579
    %v2012 = vpack.c.b16 %v1588, %v1580
    %v2013 = vpack.c.b16 %v1589, %v1581
    %v2014 = vpack.c.b16 %v1590, %v1582
    %v2015 = vpack.c.b16 %v1591, %v1583
    %v2016 = vpack.c.b16 %v1592, %v1584
    %v2017 = vpack.c.b16 %v1593, %v1585
    %v2018 = vpack.c.b16 %v1602, %v1594
    %v2019 = vpack.c.b16 %v1603, %v1595
    %v2020 = vpack.c.b16 %v1604, %v1596
    %v2021 = vpack.c.b16 %v1605, %v1597
    %v2022 = vpack.c.b16 %v1606, %v1598
    %v2023 = vpack.c.b16 %v1607, %v1599
    %v2024 = vpack.c.b16 %v1608, %v1600
    %v2025 = vpack.c.b16 %v1609, %v1601
    %v2026 = vpack.c.b16 %v1618, %v1610
    %v2027 = vpack.c.b16 %v1619, %v1611
    %v2028 = vpack.c.b16 %v1620, %v1612
    %v2029 = vpack.c.b16 %v1621, %v1613
    %v2030 = vpack.c.b16 %v1622, %v1614
    %v2031 = vpack.c.b16 %v1623, %v1615
    %v2032 = vpack.c.b16 %v1624, %v1616
    %v2033 = vpack.c.b16 %v1625, %v1617
    %v2034 = vpack.c.b16 %v1634, %v1626
    %v2035 = vpack.c.b16 %v1635, %v1627
    %v2036 = vpack.c.b16 %v1636, %v1628
    %v2037 = vpack.c.b16 %v1637, %v1629
    %v2038 = vpack.c.b16 %v1638, %v1630
    %v2039 = vpack.c.b16 %v1639, %v1631
    %v2040 = vpack.c.b16 %v1640, %v1632
    %v2041 = vpack.c.b16 %v1641, %v1633
    %v2042 = vpack.c.b16 %v1650, %v1642
    %v2043 = vpack.c.b16 %v1651, %v1643
    %v2044 = vpack.c.b16 %v1652, %v1644
    %v2045 = vpack.c.b16 %v1653, %v1645
    %v2046 = vpack.c.b16 %v1654, %v1646
    %v2047 = vpack.c.b16 %v1655, %v1647
    %v2048 = vpack.c.b16 %v1656, %v1648
    %v2049 = vpack.c.b16 %v1657, %v1649
    %v2050 = vpack.c.b16 %v1666, %v1658
    %v2051 = vpack.c.b16 %v1667, %v1659
    %v2052 = vpack.c.b16 %v1668, %v1660
    %v2053 = vpack.c.b16 %v1669, %v1661
    %v2054 = vpack.c.b16 %v1670, %v1662
    %v2055 = vpack.c.b16 %v1671, %v1663
    %v2056 = vpack.c.b16 %v1672, %v1664
    %v2057 = vpack.c.b16 %v1673, %v1665
    %v2058 = vpack.c.b16 %v1682, %v1674
    %v2059 = vpack.c.b16 %v1683, %v1675
    %v2060 = vpack.c.b16 %v1684, %v1676
    %v2061 = vpack.c.b16 %v1685, %v1677
    %v2062 = vpack.c.b16 %v1686, %v1678
    %v2063 = vpack.c.b16 %v1687, %v1679
    %v2064 = vpack.c.b16 %v1688, %v1680
    %v2065 = vpack.c.b16 %v1689, %v1681
    %v2066 = vpack.c.b16 %v1698, %v1690
    %v2067 = vpack.c.b16 %v1699, %v1691
    %v2068 = vpack.c.b16 %v1700, %v1692
    %v2069 = vpack.c.b16 %v1701, %v1693
    %v2070 = vpack.c.b16 %v1702, %v1694
    %v2071 = vpack.c.b16 %v1703, %v1695
    %v2072 = vpack.c.b16 %v1704, %v1696
    %v2073 = vpack.c.b16 %v1705, %v1697
    %v2074 = vpack.c.b16 %v1714, %v1706
    %v2075 = vpack.c.b16 %v1715, %v1707
    %v2076 = vpack.c.b16 %v1716, %v1708
    %v2077 = vpack.c.b16 %v1717, %v1709
    %v2078 = vpack.c.b16 %v1718, %v1710
    %v2079 = vpack.c.b16 %v1719, %v1711
    %v2080 = vpack.c.b16 %v1720, %v1712
    %v2081 = vpack.c.b16 %v1721, %v1713
    %v2082 = vpack.c.b16 %v1730, %v1722
    %v2083 = vpack.c.b16 %v1731, %v1723
    %v2084 = vpack.c.b16 %v1732, %v1724
    %v2085 = vpack.c.b16 %v1733, %v1725
    %v2086 = vpack.c.b16 %v1734, %v1726
    %v2087 = vpack.c.b16 %v1735, %v1727
    %v2088 = vpack.c.b16 %v1736, %v1728
    %v2089 = vpack.c.b16 %v1737, %v1729
    %v2090 = vpack.c.b16 %v1746, %v1738
    %v2091 = vpack.c.b16 %v1747, %v1739
    %v2092 = vpack.c.b16 %v1748, %v1740
    %v2093 = vpack.c.b16 %v1749, %v1741
    %v2094 = vpack.c.b16 %v1750, %v1742
    %v2095 = vpack.c.b16 %v1751, %v1743
    %v2096 = vpack.c.b16 %v1752, %v1744
    %v2097 = vpack.c.b16 %v1753, %v1745
    %v2098 = vpack.c.b16 %v1762, %v1754
    %v2099 = vpack.c.b16 %v1763, %v1755
    %v2100 = vpack.c.b16 %v1764, %v1756
    %v2101 = vpack.c.b16 %v1765, %v1757
    %v2102 = vpack.c.b16 %v1766, %v1758
    %v2103 = vpack.c.b16 %v1767, %v1759
    %v2104 = vpack.c.b16 %v1768, %v1760
    %v2105 = vpack.c.b16 %v1769, %v1761
    %v2106 = vpack.c.b16 %v1778, %v1770
    %v2107 = vpack.c.b16 %v1779, %v1771
    %v2108 = vpack.c.b16 %v1780, %v1772
    %v2109 = vpack.c.b16 %v1781, %v1773
    %v2110 = vpack.c.b16 %v1782, %v1774
    %v2111 = vpack.c.b16 %v1783, %v1775
    %v2112 = vpack.c.b16 %v1784, %v1776
    %v2113 = vpack.c.b16 %v1785, %v1777
    %v2114 = vpack.c.b16 %v1794, %v1786
    %v2115 = vpack.c.b16 %v1795, %v1787
    %v2116 = vpack.c.b16 %v1796, %v1788
    %v2117 = vpack.c.b16 %v1797, %v1789
    %v2118 = vpack.c.b16 %v1798, %v1790
    %v2119 = vpack.c.b16 %v1799, %v1791
    %v2120 = vpack.c.b16 %v1800, %v1792
    %v2121 = vpack.c.b16 %v1801, %v1793
    %v2122 = vpack.c.b16 %v1810, %v1802
    %v2123 = vpack.c.b16 %v1811, %v1803
    %v2124 = vpack.c.b16 %v1812, %v1804
    %v2125 = vpack.c.b16 %v1813, %v1805
    %v2126 = vpack.c.b16 %v1814, %v1806
    %v2127 = vpack.c.b16 %v1815, %v1807
    %v2128 = vpack.c.b16 %v1816, %v1808
    %v2129 = vpack.c.b16 %v1817, %v1809
    %v2130 = vpack.c.b16 %v1826, %v1818
    %v2131 = vpack.c.b16 %v1827, %v1819
    %v2132 = vpack.c.b16 %v1828, %v1820
    %v2133 = vpack.c.b16 %v1829, %v1821
    %v2134 = vpack.c.b16 %v1830, %v1822
    %v2135 = vpack.c.b16 %v1831, %v1823
    %v2136 = vpack.c.b16 %v1832, %v1824
    %v2137 = vpack.c.b16 %v1833, %v1825
    %v2138 = vpack.c.b16 %v1842, %v1834
    %v2139 = vpack.c.b16 %v1843, %v1835
    %v2140 = vpack.c.b16 %v1844, %v1836
    %v2141 = vpack.c.b16 %v1845, %v1837
    %v2142 = vpack.c.b16 %v1846, %v1838
    %v2143 = vpack.c.b16 %v1847, %v1839
    %v2144 = vpack.c.b16 %v1848, %v1840
    %v2145 = vpack.c.b16 %v1849, %v1841
    %v2146 = vpack.c.b16 %v1858, %v1850
    %v2147 = vpack.c.b16 %v1859, %v1851
    %v2148 = vpack.c.b16 %v1860, %v1852
    %v2149 = vpack.c.b16 %v1861, %v1853
    %v2150 = vpack.c.b16 %v1862, %v1854
    %v2151 = vpack.c.b16 %v1863, %v1855
    %v2152 = vpack.c.b16 %v1864, %v1856
    %v2153 = vpack.c.b16 %v1865, %v1857
    %v2154 = vpack.c.b16 %v1874, %v1866
    %v2155 = vpack.c.b16 %v1875, %v1867
    %v2156 = vpack.c.b16 %v1876, %v1868
    %v2157 = vpack.c.b16 %v1877, %v1869
    %v2158 = vpack.c.b16 %v1878, %v1870
    %v2159 = vpack.c.b16 %v1879, %v1871
    %v2160 = vpack.c.b16 %v1880, %v1872
    %v2161 = vpack.c.b16 %v1881, %v1873
    %v2162 = vpack.c.b16 %v1890, %v1882
    %v2163 = vpack.c.b16 %v1891, %v1883
    %v2164 = vpack.c.b16 %v1892, %v1884
    %v2165 = vpack.c.b16 %v1893, %v1885
    %v2166 = vpack.c.b16 %v1894, %v1886
    %v2167 = vpack.c.b16 %v1895, %v1887
    %v2168 = vpack.c.b16 %v1896, %v1888
    %v2169 = vpack.c.b16 %v1897, %v1889
    %v2170 = vpack.c.b16 %v1906, %v1898
    %v2171 = vpack.c.b16 %v1907, %v1899
    %v2172 = vpack.c.b16 %v1908, %v1900
    %v2173 = vpack.c.b16 %v1909, %v1901
    %v2174 = vpack.c.b16 %v1910, %v1902
    %v2175 = vpack.c.b16 %v1911, %v1903
    %v2176 = vpack.c.b16 %v1912, %v1904
    %v2177 = vpack.c.b16 %v1913, %v1905
    %v2178 = vpack.c.b16 %v1922, %v1914
    %v2179 = vpack.c.b16 %v1923, %v1915
    %v2180 = vpack.c.b16 %v1924, %v1916
    %v2181 = vpack.c.b16 %v1925, %v1917
    %v2182 = vpack.c.b16 %v1926, %v1918
    %v2183 = vpack.c.b16 %v1927, %v1919
    %v2184 = vpack.c.b16 %v1928, %v1920
    %v2185 = vpack.c.b16 %v1929, %v1921
    %2442 = vmatpush.bf16.msra.mxu0 %v1986
    %2443 = vmatpush.bf16.msra.mxu0 %v1978
    %2444 = vmatpush.bf16.msra.mxu0 %v1970
    %2445 = vmatpush.bf16.msra.mxu0 %v1962
    %2446 = vmatpush.bf16.msra.mxu0 %v1954
    %2447 = vmatpush.bf16.msra.mxu0 %v1946
    %2448 = vmatpush.bf16.msra.mxu0 %v1938
    %2449 = vmatpush.bf16.msra.mxu0 %v1930
    %2450 = vmatmul.bf16.gmra.mxu0 %v880
    %v2451 = vpop.f32.mrf.mxu0
    %v2452 = vadd.f32 %v1146, %v2451
    %v2453 = vpop.f32.mrf.mxu0
    %v2454 = vadd.f32 %v1146, %v2453
    %2455 = vmatmul.bf16.gmra.mxu0 %v884
    %v2456 = vpop.f32.mrf.mxu0
    %v2457 = vadd.f32 %v1146, %v2456
    %v2458 = vpop.f32.mrf.mxu0
    %v2459 = vadd.f32 %v1146, %v2458
    %2460 = vdwg.mxu0
    %2461 = vmatpush.bf16.msra.mxu0 %v2050
    %2462 = vmatpush.bf16.msra.mxu0 %v2042
    %2463 = vmatpush.bf16.msra.mxu0 %v2034
    %2464 = vmatpush.bf16.msra.mxu0 %v2026
    %2465 = vmatpush.bf16.msra.mxu0 %v2018
    %2466 = vmatpush.bf16.msra.mxu0 %v2010
    %2467 = vmatpush.bf16.msra.mxu0 %v2002
    %2468 = vmatpush.bf16.msra.mxu0 %v1994
    %2469 = vmatmul.bf16.gmra.mxu0 %v881
    %v2470 = vpop.f32.mrf.mxu0
    %v2471 = vadd.f32 %v2452, %v2470
    %v2472 = vpop.f32.mrf.mxu0
    %v2473 = vadd.f32 %v2454, %v2472
    %2474 = vmatmul.bf16.gmra.mxu0 %v885
    %v2475 = vpop.f32.mrf.mxu0
    %v2476 = vadd.f32 %v2457, %v2475
    %v2477 = vpop.f32.mrf.mxu0
    %v2478 = vadd.f32 %v2459, %v2477
    %2479 = vdwg.mxu0
    %2480 = vmatpush.bf16.msra.mxu0 %v2114
    %2481 = vmatpush.bf16.msra.mxu0 %v2106
    %2482 = vmatpush.bf16.msra.mxu0 %v2098
    %2483 = vmatpush.bf16.msra.mxu0 %v2090
    %2484 = vmatpush.bf16.msra.mxu0 %v2082
    %2485 = vmatpush.bf16.msra.mxu0 %v2074
    %2486 = vmatpush.bf16.msra.mxu0 %v2066
    %2487 = vmatpush.bf16.msra.mxu0 %v2058
    %2488 = vmatmul.bf16.gmra.mxu0 %v882
    %v2489 = vpop.f32.mrf.mxu0
    %v2490 = vadd.f32 %v2471, %v2489
    %v2491 = vpop.f32.mrf.mxu0
    %v2492 = vadd.f32 %v2473, %v2491
    %2493 = vmatmul.bf16.gmra.mxu0 %v886
    %v2494 = vpop.f32.mrf.mxu0
    %v2495 = vadd.f32 %v2476, %v2494
    %v2496 = vpop.f32.mrf.mxu0
    %v2497 = vadd.f32 %v2478, %v2496
    %2498 = vdwg.mxu0
    %2499 = vmatpush.bf16.msra.mxu0 %v2178
    %2500 = vmatpush.bf16.msra.mxu0 %v2170
    %2501 = vmatpush.bf16.msra.mxu0 %v2162
    %2502 = vmatpush.bf16.msra.mxu0 %v2154
    %2503 = vmatpush.bf16.msra.mxu0 %v2146
    %2504 = vmatpush.bf16.msra.mxu0 %v2138
    %2505 = vmatpush.bf16.msra.mxu0 %v2130
    %2506 = vmatpush.bf16.msra.mxu0 %v2122
    %2507 = vmatmul.bf16.gmra.mxu0 %v883
    %v2508 = vpop.f32.mrf.mxu0
    %v2509 = vadd.f32 %v2490, %v2508
    %v2510 = vpop.f32.mrf.mxu0
    %v2511 = vadd.f32 %v2492, %v2510
    %2512 = vmatmul.bf16.gmra.mxu0 %v887
    %v2513 = vpop.f32.mrf.mxu0
    %v2514 = vadd.f32 %v2495, %v2513
    %v2515 = vpop.f32.mrf.mxu0
    %v2516 = vadd.f32 %v2497, %v2515
    %2517 = vdwg.mxu0
    %2518 = vmatpush.bf16.msra.mxu0 %v1987
    %2519 = vmatpush.bf16.msra.mxu0 %v1979
    %2520 = vmatpush.bf16.msra.mxu0 %v1971
    %2521 = vmatpush.bf16.msra.mxu0 %v1963
    %2522 = vmatpush.bf16.msra.mxu0 %v1955
    %2523 = vmatpush.bf16.msra.mxu0 %v1947
    %2524 = vmatpush.bf16.msra.mxu0 %v1939
    %2525 = vmatpush.bf16.msra.mxu0 %v1931
    %2526 = vmatmul.bf16.gmra.mxu0 %v880
    %v2527 = vpop.f32.mrf.mxu0
    %v2528 = vadd.f32 %v1147, %v2527
    %v2529 = vpop.f32.mrf.mxu0
    %v2530 = vadd.f32 %v1147, %v2529
    %2531 = vmatmul.bf16.gmra.mxu0 %v884
    %v2532 = vpop.f32.mrf.mxu0
    %v2533 = vadd.f32 %v1147, %v2532
    %v2534 = vpop.f32.mrf.mxu0
    %v2535 = vadd.f32 %v1147, %v2534
    %2536 = vdwg.mxu0
    %2537 = vmatpush.bf16.msra.mxu0 %v2051
    %2538 = vmatpush.bf16.msra.mxu0 %v2043
    %2539 = vmatpush.bf16.msra.mxu0 %v2035
    %2540 = vmatpush.bf16.msra.mxu0 %v2027
    %2541 = vmatpush.bf16.msra.mxu0 %v2019
    %2542 = vmatpush.bf16.msra.mxu0 %v2011
    %2543 = vmatpush.bf16.msra.mxu0 %v2003
    %2544 = vmatpush.bf16.msra.mxu0 %v1995
    %2545 = vmatmul.bf16.gmra.mxu0 %v881
    %v2546 = vpop.f32.mrf.mxu0
    %v2547 = vadd.f32 %v2528, %v2546
    %v2548 = vpop.f32.mrf.mxu0
    %v2549 = vadd.f32 %v2530, %v2548
    %2550 = vmatmul.bf16.gmra.mxu0 %v885
    %v2551 = vpop.f32.mrf.mxu0
    %v2552 = vadd.f32 %v2533, %v2551
    %v2553 = vpop.f32.mrf.mxu0
    %v2554 = vadd.f32 %v2535, %v2553
    %2555 = vdwg.mxu0
    %2556 = vmatpush.bf16.msra.mxu0 %v2115
    %2557 = vmatpush.bf16.msra.mxu0 %v2107
    %2558 = vmatpush.bf16.msra.mxu0 %v2099
    %2559 = vmatpush.bf16.msra.mxu0 %v2091
    %2560 = vmatpush.bf16.msra.mxu0 %v2083
    %2561 = vmatpush.bf16.msra.mxu0 %v2075
    %2562 = vmatpush.bf16.msra.mxu0 %v2067
    %2563 = vmatpush.bf16.msra.mxu0 %v2059
    %2564 = vmatmul.bf16.gmra.mxu0 %v882
    %v2565 = vpop.f32.mrf.mxu0
    %v2566 = vadd.f32 %v2547, %v2565
    %v2567 = vpop.f32.mrf.mxu0
    %v2568 = vadd.f32 %v2549, %v2567
    %2569 = vmatmul.bf16.gmra.mxu0 %v886
    %v2570 = vpop.f32.mrf.mxu0
    %v2571 = vadd.f32 %v2552, %v2570
    %v2572 = vpop.f32.mrf.mxu0
    %v2573 = vadd.f32 %v2554, %v2572
    %2574 = vdwg.mxu0
    %2575 = vmatpush.bf16.msra.mxu0 %v2179
    %2576 = vmatpush.bf16.msra.mxu0 %v2171
    %2577 = vmatpush.bf16.msra.mxu0 %v2163
    %2578 = vmatpush.bf16.msra.mxu0 %v2155
    %2579 = vmatpush.bf16.msra.mxu0 %v2147
    %2580 = vmatpush.bf16.msra.mxu0 %v2139
    %2581 = vmatpush.bf16.msra.mxu0 %v2131
    %2582 = vmatpush.bf16.msra.mxu0 %v2123
    %2583 = vmatmul.bf16.gmra.mxu0 %v883
    %v2584 = vpop.f32.mrf.mxu0
    %v2585 = vadd.f32 %v2566, %v2584
    %v2586 = vpop.f32.mrf.mxu0
    %v2587 = vadd.f32 %v2568, %v2586
    %2588 = vmatmul.bf16.gmra.mxu0 %v887
    %v2589 = vpop.f32.mrf.mxu0
    %v2590 = vadd.f32 %v2571, %v2589
    %v2591 = vpop.f32.mrf.mxu0
    %v2592 = vadd.f32 %v2573, %v2591
    %2593 = vdwg.mxu0
    %2594 = vmatpush.bf16.msra.mxu0 %v1988
    %2595 = vmatpush.bf16.msra.mxu0 %v1980
    %2596 = vmatpush.bf16.msra.mxu0 %v1972
    %2597 = vmatpush.bf16.msra.mxu0 %v1964
    %2598 = vmatpush.bf16.msra.mxu0 %v1956
    %2599 = vmatpush.bf16.msra.mxu0 %v1948
    %2600 = vmatpush.bf16.msra.mxu0 %v1940
    %2601 = vmatpush.bf16.msra.mxu0 %v1932
    %2602 = vmatmul.bf16.gmra.mxu0 %v880
    %v2603 = vpop.f32.mrf.mxu0
    %v2604 = vadd.f32 %v1148, %v2603
    %v2605 = vpop.f32.mrf.mxu0
    %v2606 = vadd.f32 %v1148, %v2605
    %2607 = vmatmul.bf16.gmra.mxu0 %v884
    %v2608 = vpop.f32.mrf.mxu0
    %v2609 = vadd.f32 %v1148, %v2608
    %v2610 = vpop.f32.mrf.mxu0
    %v2611 = vadd.f32 %v1148, %v2610
    %2612 = vdwg.mxu0
    %2613 = vmatpush.bf16.msra.mxu0 %v2052
    %2614 = vmatpush.bf16.msra.mxu0 %v2044
    %2615 = vmatpush.bf16.msra.mxu0 %v2036
    %2616 = vmatpush.bf16.msra.mxu0 %v2028
    %2617 = vmatpush.bf16.msra.mxu0 %v2020
    %2618 = vmatpush.bf16.msra.mxu0 %v2012
    %2619 = vmatpush.bf16.msra.mxu0 %v2004
    %2620 = vmatpush.bf16.msra.mxu0 %v1996
    %2621 = vmatmul.bf16.gmra.mxu0 %v881
    %v2622 = vpop.f32.mrf.mxu0
    %v2623 = vadd.f32 %v2604, %v2622
    %v2624 = vpop.f32.mrf.mxu0
    %v2625 = vadd.f32 %v2606, %v2624
    %2626 = vmatmul.bf16.gmra.mxu0 %v885
    %v2627 = vpop.f32.mrf.mxu0
    %v2628 = vadd.f32 %v2609, %v2627
    %v2629 = vpop.f32.mrf.mxu0
    %v2630 = vadd.f32 %v2611, %v2629
    %2631 = vdwg.mxu0
    %2632 = vmatpush.bf16.msra.mxu0 %v2116
    %2633 = vmatpush.bf16.msra.mxu0 %v2108
    %2634 = vmatpush.bf16.msra.mxu0 %v2100
    %2635 = vmatpush.bf16.msra.mxu0 %v2092
    %2636 = vmatpush.bf16.msra.mxu0 %v2084
    %2637 = vmatpush.bf16.msra.mxu0 %v2076
    %2638 = vmatpush.bf16.msra.mxu0 %v2068
    %2639 = vmatpush.bf16.msra.mxu0 %v2060
    %2640 = vmatmul.bf16.gmra.mxu0 %v882
    %v2641 = vpop.f32.mrf.mxu0
    %v2642 = vadd.f32 %v2623, %v2641
    %v2643 = vpop.f32.mrf.mxu0
    %v2644 = vadd.f32 %v2625, %v2643
    %2645 = vmatmul.bf16.gmra.mxu0 %v886
    %v2646 = vpop.f32.mrf.mxu0
    %v2647 = vadd.f32 %v2628, %v2646
    %v2648 = vpop.f32.mrf.mxu0
    %v2649 = vadd.f32 %v2630, %v2648
    %2650 = vdwg.mxu0
    %2651 = vmatpush.bf16.msra.mxu0 %v2180
    %2652 = vmatpush.bf16.msra.mxu0 %v2172
    %2653 = vmatpush.bf16.msra.mxu0 %v2164
    %2654 = vmatpush.bf16.msra.mxu0 %v2156
    %2655 = vmatpush.bf16.msra.mxu0 %v2148
    %2656 = vmatpush.bf16.msra.mxu0 %v2140
    %2657 = vmatpush.bf16.msra.mxu0 %v2132
    %2658 = vmatpush.bf16.msra.mxu0 %v2124
    %2659 = vmatmul.bf16.gmra.mxu0 %v883
    %v2660 = vpop.f32.mrf.mxu0
    %v2661 = vadd.f32 %v2642, %v2660
    %v2662 = vpop.f32.mrf.mxu0
    %v2663 = vadd.f32 %v2644, %v2662
    %2664 = vmatmul.bf16.gmra.mxu0 %v887
    %v2665 = vpop.f32.mrf.mxu0
    %v2666 = vadd.f32 %v2647, %v2665
    %v2667 = vpop.f32.mrf.mxu0
    %v2668 = vadd.f32 %v2649, %v2667
    %2669 = vdwg.mxu0
    %2670 = vmatpush.bf16.msra.mxu0 %v1989
    %2671 = vmatpush.bf16.msra.mxu0 %v1981
    %2672 = vmatpush.bf16.msra.mxu0 %v1973
    %2673 = vmatpush.bf16.msra.mxu0 %v1965
    %2674 = vmatpush.bf16.msra.mxu0 %v1957
    %2675 = vmatpush.bf16.msra.mxu0 %v1949
    %2676 = vmatpush.bf16.msra.mxu0 %v1941
    %2677 = vmatpush.bf16.msra.mxu0 %v1933
    %2678 = vmatmul.bf16.gmra.mxu0 %v880
    %v2679 = vpop.f32.mrf.mxu0
    %v2680 = vadd.f32 %v1149, %v2679
    %v2681 = vpop.f32.mrf.mxu0
    %v2682 = vadd.f32 %v1149, %v2681
    %2683 = vmatmul.bf16.gmra.mxu0 %v884
    %v2684 = vpop.f32.mrf.mxu0
    %v2685 = vadd.f32 %v1149, %v2684
    %v2686 = vpop.f32.mrf.mxu0
    %v2687 = vadd.f32 %v1149, %v2686
    %2688 = vdwg.mxu0
    %2689 = vmatpush.bf16.msra.mxu0 %v2053
    %2690 = vmatpush.bf16.msra.mxu0 %v2045
    %2691 = vmatpush.bf16.msra.mxu0 %v2037
    %2692 = vmatpush.bf16.msra.mxu0 %v2029
    %2693 = vmatpush.bf16.msra.mxu0 %v2021
    %2694 = vmatpush.bf16.msra.mxu0 %v2013
    %2695 = vmatpush.bf16.msra.mxu0 %v2005
    %2696 = vmatpush.bf16.msra.mxu0 %v1997
    %2697 = vmatmul.bf16.gmra.mxu0 %v881
    %v2698 = vpop.f32.mrf.mxu0
    %v2699 = vadd.f32 %v2680, %v2698
    %v2700 = vpop.f32.mrf.mxu0
    %v2701 = vadd.f32 %v2682, %v2700
    %2702 = vmatmul.bf16.gmra.mxu0 %v885
    %v2703 = vpop.f32.mrf.mxu0
    %v2704 = vadd.f32 %v2685, %v2703
    %v2705 = vpop.f32.mrf.mxu0
    %v2706 = vadd.f32 %v2687, %v2705
    %2707 = vdwg.mxu0
    %2708 = vmatpush.bf16.msra.mxu0 %v2117
    %2709 = vmatpush.bf16.msra.mxu0 %v2109
    %2710 = vmatpush.bf16.msra.mxu0 %v2101
    %2711 = vmatpush.bf16.msra.mxu0 %v2093
    %2712 = vmatpush.bf16.msra.mxu0 %v2085
    %2713 = vmatpush.bf16.msra.mxu0 %v2077
    %2714 = vmatpush.bf16.msra.mxu0 %v2069
    %2715 = vmatpush.bf16.msra.mxu0 %v2061
    %2716 = vmatmul.bf16.gmra.mxu0 %v882
    %v2717 = vpop.f32.mrf.mxu0
    %v2718 = vadd.f32 %v2699, %v2717
    %v2719 = vpop.f32.mrf.mxu0
    %v2720 = vadd.f32 %v2701, %v2719
    %2721 = vmatmul.bf16.gmra.mxu0 %v886
    %v2722 = vpop.f32.mrf.mxu0
    %v2723 = vadd.f32 %v2704, %v2722
    %v2724 = vpop.f32.mrf.mxu0
    %v2725 = vadd.f32 %v2706, %v2724
    %2726 = vdwg.mxu0
    %2727 = vmatpush.bf16.msra.mxu0 %v2181
    %2728 = vmatpush.bf16.msra.mxu0 %v2173
    %2729 = vmatpush.bf16.msra.mxu0 %v2165
    %2730 = vmatpush.bf16.msra.mxu0 %v2157
    %2731 = vmatpush.bf16.msra.mxu0 %v2149
    %2732 = vmatpush.bf16.msra.mxu0 %v2141
    %2733 = vmatpush.bf16.msra.mxu0 %v2133
    %2734 = vmatpush.bf16.msra.mxu0 %v2125
    %2735 = vmatmul.bf16.gmra.mxu0 %v883
    %v2736 = vpop.f32.mrf.mxu0
    %v2737 = vadd.f32 %v2718, %v2736
    %v2738 = vpop.f32.mrf.mxu0
    %v2739 = vadd.f32 %v2720, %v2738
    %2740 = vmatmul.bf16.gmra.mxu0 %v887
    %v2741 = vpop.f32.mrf.mxu0
    %v2742 = vadd.f32 %v2723, %v2741
    %v2743 = vpop.f32.mrf.mxu0
    %v2744 = vadd.f32 %v2725, %v2743
    %2745 = vdwg.mxu0
    %2746 = vmatpush.bf16.msra.mxu0 %v1990
    %2747 = vmatpush.bf16.msra.mxu0 %v1982
    %2748 = vmatpush.bf16.msra.mxu0 %v1974
    %2749 = vmatpush.bf16.msra.mxu0 %v1966
    %2750 = vmatpush.bf16.msra.mxu0 %v1958
    %2751 = vmatpush.bf16.msra.mxu0 %v1950
    %2752 = vmatpush.bf16.msra.mxu0 %v1942
    %2753 = vmatpush.bf16.msra.mxu0 %v1934
    %2754 = vmatmul.bf16.gmra.mxu0 %v880
    %v2755 = vpop.f32.mrf.mxu0
    %v2756 = vadd.f32 %v1150, %v2755
    %v2757 = vpop.f32.mrf.mxu0
    %v2758 = vadd.f32 %v1150, %v2757
    %2759 = vmatmul.bf16.gmra.mxu0 %v884
    %v2760 = vpop.f32.mrf.mxu0
    %v2761 = vadd.f32 %v1150, %v2760
    %v2762 = vpop.f32.mrf.mxu0
    %v2763 = vadd.f32 %v1150, %v2762
    %2764 = vdwg.mxu0
    %2765 = vmatpush.bf16.msra.mxu0 %v2054
    %2766 = vmatpush.bf16.msra.mxu0 %v2046
    %2767 = vmatpush.bf16.msra.mxu0 %v2038
    %2768 = vmatpush.bf16.msra.mxu0 %v2030
    %2769 = vmatpush.bf16.msra.mxu0 %v2022
    %2770 = vmatpush.bf16.msra.mxu0 %v2014
    %2771 = vmatpush.bf16.msra.mxu0 %v2006
    %2772 = vmatpush.bf16.msra.mxu0 %v1998
    %2773 = vmatmul.bf16.gmra.mxu0 %v881
    %v2774 = vpop.f32.mrf.mxu0
    %v2775 = vadd.f32 %v2756, %v2774
    %v2776 = vpop.f32.mrf.mxu0
    %v2777 = vadd.f32 %v2758, %v2776
    %2778 = vmatmul.bf16.gmra.mxu0 %v885
    %v2779 = vpop.f32.mrf.mxu0
    %v2780 = vadd.f32 %v2761, %v2779
    %v2781 = vpop.f32.mrf.mxu0
    %v2782 = vadd.f32 %v2763, %v2781
    %2783 = vdwg.mxu0
    %2784 = vmatpush.bf16.msra.mxu0 %v2118
    %2785 = vmatpush.bf16.msra.mxu0 %v2110
    %2786 = vmatpush.bf16.msra.mxu0 %v2102
    %2787 = vmatpush.bf16.msra.mxu0 %v2094
    %2788 = vmatpush.bf16.msra.mxu0 %v2086
    %2789 = vmatpush.bf16.msra.mxu0 %v2078
    %2790 = vmatpush.bf16.msra.mxu0 %v2070
    %2791 = vmatpush.bf16.msra.mxu0 %v2062
    %2792 = vmatmul.bf16.gmra.mxu0 %v882
    %v2793 = vpop.f32.mrf.mxu0
    %v2794 = vadd.f32 %v2775, %v2793
    %v2795 = vpop.f32.mrf.mxu0
    %v2796 = vadd.f32 %v2777, %v2795
    %2797 = vmatmul.bf16.gmra.mxu0 %v886
    %v2798 = vpop.f32.mrf.mxu0
    %v2799 = vadd.f32 %v2780, %v2798
    %v2800 = vpop.f32.mrf.mxu0
    %v2801 = vadd.f32 %v2782, %v2800
    %2802 = vdwg.mxu0
    %2803 = vmatpush.bf16.msra.mxu0 %v2182
    %2804 = vmatpush.bf16.msra.mxu0 %v2174
    %2805 = vmatpush.bf16.msra.mxu0 %v2166
    %2806 = vmatpush.bf16.msra.mxu0 %v2158
    %2807 = vmatpush.bf16.msra.mxu0 %v2150
    %2808 = vmatpush.bf16.msra.mxu0 %v2142
    %2809 = vmatpush.bf16.msra.mxu0 %v2134
    %2810 = vmatpush.bf16.msra.mxu0 %v2126
    %2811 = vmatmul.bf16.gmra.mxu0 %v883
    %v2812 = vpop.f32.mrf.mxu0
    %v2813 = vadd.f32 %v2794, %v2812
    %v2814 = vpop.f32.mrf.mxu0
    %v2815 = vadd.f32 %v2796, %v2814
    %2816 = vmatmul.bf16.gmra.mxu0 %v887
    %v2817 = vpop.f32.mrf.mxu0
    %v2818 = vadd.f32 %v2799, %v2817
    %v2819 = vpop.f32.mrf.mxu0
    %v2820 = vadd.f32 %v2801, %v2819
    %2821 = vdwg.mxu0
    %2822 = vmatpush.bf16.msra.mxu0 %v1991
    %2823 = vmatpush.bf16.msra.mxu0 %v1983
    %2824 = vmatpush.bf16.msra.mxu0 %v1975
    %2825 = vmatpush.bf16.msra.mxu0 %v1967
    %2826 = vmatpush.bf16.msra.mxu0 %v1959
    %2827 = vmatpush.bf16.msra.mxu0 %v1951
    %2828 = vmatpush.bf16.msra.mxu0 %v1943
    %2829 = vmatpush.bf16.msra.mxu0 %v1935
    %2830 = vmatmul.bf16.gmra.mxu0 %v880
    %v2831 = vpop.f32.mrf.mxu0
    %v2832 = vadd.f32 %v1151, %v2831
    %v2833 = vpop.f32.mrf.mxu0
    %v2834 = vadd.f32 %v1151, %v2833
    %2835 = vmatmul.bf16.gmra.mxu0 %v884
    %v2836 = vpop.f32.mrf.mxu0
    %v2837 = vadd.f32 %v1151, %v2836
    %v2838 = vpop.f32.mrf.mxu0
    %v2839 = vadd.f32 %v1151, %v2838
    %2840 = vdwg.mxu0
    %2841 = vmatpush.bf16.msra.mxu0 %v2055
    %2842 = vmatpush.bf16.msra.mxu0 %v2047
    %2843 = vmatpush.bf16.msra.mxu0 %v2039
    %2844 = vmatpush.bf16.msra.mxu0 %v2031
    %2845 = vmatpush.bf16.msra.mxu0 %v2023
    %2846 = vmatpush.bf16.msra.mxu0 %v2015
    %2847 = vmatpush.bf16.msra.mxu0 %v2007
    %2848 = vmatpush.bf16.msra.mxu0 %v1999
    %2849 = vmatmul.bf16.gmra.mxu0 %v881
    %v2850 = vpop.f32.mrf.mxu0
    %v2851 = vadd.f32 %v2832, %v2850
    %v2852 = vpop.f32.mrf.mxu0
    %v2853 = vadd.f32 %v2834, %v2852
    %2854 = vmatmul.bf16.gmra.mxu0 %v885
    %v2855 = vpop.f32.mrf.mxu0
    %v2856 = vadd.f32 %v2837, %v2855
    %v2857 = vpop.f32.mrf.mxu0
    %v2858 = vadd.f32 %v2839, %v2857
    %2859 = vdwg.mxu0
    %2860 = vmatpush.bf16.msra.mxu0 %v2119
    %2861 = vmatpush.bf16.msra.mxu0 %v2111
    %2862 = vmatpush.bf16.msra.mxu0 %v2103
    %2863 = vmatpush.bf16.msra.mxu0 %v2095
    %2864 = vmatpush.bf16.msra.mxu0 %v2087
    %2865 = vmatpush.bf16.msra.mxu0 %v2079
    %2866 = vmatpush.bf16.msra.mxu0 %v2071
    %2867 = vmatpush.bf16.msra.mxu0 %v2063
    %2868 = vmatmul.bf16.gmra.mxu0 %v882
    %v2869 = vpop.f32.mrf.mxu0
    %v2870 = vadd.f32 %v2851, %v2869
    %v2871 = vpop.f32.mrf.mxu0
    %v2872 = vadd.f32 %v2853, %v2871
    %2873 = vmatmul.bf16.gmra.mxu0 %v886
    %v2874 = vpop.f32.mrf.mxu0
    %v2875 = vadd.f32 %v2856, %v2874
    %v2876 = vpop.f32.mrf.mxu0
    %v2877 = vadd.f32 %v2858, %v2876
    %2878 = vdwg.mxu0
    %2879 = vmatpush.bf16.msra.mxu0 %v2183
    %2880 = vmatpush.bf16.msra.mxu0 %v2175
    %2881 = vmatpush.bf16.msra.mxu0 %v2167
    %2882 = vmatpush.bf16.msra.mxu0 %v2159
    %2883 = vmatpush.bf16.msra.mxu0 %v2151
    %2884 = vmatpush.bf16.msra.mxu0 %v2143
    %2885 = vmatpush.bf16.msra.mxu0 %v2135
    %2886 = vmatpush.bf16.msra.mxu0 %v2127
    %2887 = vmatmul.bf16.gmra.mxu0 %v883
    %v2888 = vpop.f32.mrf.mxu0
    %v2889 = vadd.f32 %v2870, %v2888
    %v2890 = vpop.f32.mrf.mxu0
    %v2891 = vadd.f32 %v2872, %v2890
    %2892 = vmatmul.bf16.gmra.mxu0 %v887
    %v2893 = vpop.f32.mrf.mxu0
    %v2894 = vadd.f32 %v2875, %v2893
    %v2895 = vpop.f32.mrf.mxu0
    %v2896 = vadd.f32 %v2877, %v2895
    %2897 = vdwg.mxu0
    %2898 = vmatpush.bf16.msra.mxu0 %v1992
    %2899 = vmatpush.bf16.msra.mxu0 %v1984
    %2900 = vmatpush.bf16.msra.mxu0 %v1976
    %2901 = vmatpush.bf16.msra.mxu0 %v1968
    %2902 = vmatpush.bf16.msra.mxu0 %v1960
    %2903 = vmatpush.bf16.msra.mxu0 %v1952
    %2904 = vmatpush.bf16.msra.mxu0 %v1944
    %2905 = vmatpush.bf16.msra.mxu0 %v1936
    %2906 = vmatmul.bf16.gmra.mxu0 %v880
    %v2907 = vpop.f32.mrf.mxu0
    %v2908 = vadd.f32 %v1152, %v2907
    %v2909 = vpop.f32.mrf.mxu0
    %v2910 = vadd.f32 %v1152, %v2909
    %2911 = vmatmul.bf16.gmra.mxu0 %v884
    %v2912 = vpop.f32.mrf.mxu0
    %v2913 = vadd.f32 %v1152, %v2912
    %v2914 = vpop.f32.mrf.mxu0
    %v2915 = vadd.f32 %v1152, %v2914
    %2916 = vdwg.mxu0
    %2917 = vmatpush.bf16.msra.mxu0 %v2056
    %2918 = vmatpush.bf16.msra.mxu0 %v2048
    %2919 = vmatpush.bf16.msra.mxu0 %v2040
    %2920 = vmatpush.bf16.msra.mxu0 %v2032
    %2921 = vmatpush.bf16.msra.mxu0 %v2024
    %2922 = vmatpush.bf16.msra.mxu0 %v2016
    %2923 = vmatpush.bf16.msra.mxu0 %v2008
    %2924 = vmatpush.bf16.msra.mxu0 %v2000
    %2925 = vmatmul.bf16.gmra.mxu0 %v881
    %v2926 = vpop.f32.mrf.mxu0
    %v2927 = vadd.f32 %v2908, %v2926
    %v2928 = vpop.f32.mrf.mxu0
    %v2929 = vadd.f32 %v2910, %v2928
    %2930 = vmatmul.bf16.gmra.mxu0 %v885
    %v2931 = vpop.f32.mrf.mxu0
    %v2932 = vadd.f32 %v2913, %v2931
    %v2933 = vpop.f32.mrf.mxu0
    %v2934 = vadd.f32 %v2915, %v2933
    %2935 = vdwg.mxu0
    %2936 = vmatpush.bf16.msra.mxu0 %v2120
    %2937 = vmatpush.bf16.msra.mxu0 %v2112
    %2938 = vmatpush.bf16.msra.mxu0 %v2104
    %2939 = vmatpush.bf16.msra.mxu0 %v2096
    %2940 = vmatpush.bf16.msra.mxu0 %v2088
    %2941 = vmatpush.bf16.msra.mxu0 %v2080
    %2942 = vmatpush.bf16.msra.mxu0 %v2072
    %2943 = vmatpush.bf16.msra.mxu0 %v2064
    %2944 = vmatmul.bf16.gmra.mxu0 %v882
    %v2945 = vpop.f32.mrf.mxu0
    %v2946 = vadd.f32 %v2927, %v2945
    %v2947 = vpop.f32.mrf.mxu0
    %v2948 = vadd.f32 %v2929, %v2947
    %2949 = vmatmul.bf16.gmra.mxu0 %v886
    %v2950 = vpop.f32.mrf.mxu0
    %v2951 = vadd.f32 %v2932, %v2950
    %v2952 = vpop.f32.mrf.mxu0
    %v2953 = vadd.f32 %v2934, %v2952
    %2954 = vdwg.mxu0
    %2955 = vmatpush.bf16.msra.mxu0 %v2184
    %2956 = vmatpush.bf16.msra.mxu0 %v2176
    %2957 = vmatpush.bf16.msra.mxu0 %v2168
    %2958 = vmatpush.bf16.msra.mxu0 %v2160
    %2959 = vmatpush.bf16.msra.mxu0 %v2152
    %2960 = vmatpush.bf16.msra.mxu0 %v2144
    %2961 = vmatpush.bf16.msra.mxu0 %v2136
    %2962 = vmatpush.bf16.msra.mxu0 %v2128
    %2963 = vmatmul.bf16.gmra.mxu0 %v883
    %v2964 = vpop.f32.mrf.mxu0
    %v2965 = vadd.f32 %v2946, %v2964
    %v2966 = vpop.f32.mrf.mxu0
    %v2967 = vadd.f32 %v2948, %v2966
    %2968 = vmatmul.bf16.gmra.mxu0 %v887
    %v2969 = vpop.f32.mrf.mxu0
    %v2970 = vadd.f32 %v2951, %v2969
    %v2971 = vpop.f32.mrf.mxu0
    %v2972 = vadd.f32 %v2953, %v2971
    %2973 = vdwg.mxu0
    %2974 = vmatpush.bf16.msra.mxu0 %v1993
    %2975 = vmatpush.bf16.msra.mxu0 %v1985
    %2976 = vmatpush.bf16.msra.mxu0 %v1977
    %2977 = vmatpush.bf16.msra.mxu0 %v1969
    %2978 = vmatpush.bf16.msra.mxu0 %v1961
    %2979 = vmatpush.bf16.msra.mxu0 %v1953
    %2980 = vmatpush.bf16.msra.mxu0 %v1945
    %2981 = vmatpush.bf16.msra.mxu0 %v1937
    %2982 = vmatmul.bf16.gmra.mxu0 %v880
    %v2983 = vpop.f32.mrf.mxu0
    %v2984 = vadd.f32 %v1153, %v2983
    %v2985 = vpop.f32.mrf.mxu0
    %v2986 = vadd.f32 %v1153, %v2985
    %2987 = vmatmul.bf16.gmra.mxu0 %v884
    %v2988 = vpop.f32.mrf.mxu0
    %v2989 = vadd.f32 %v1153, %v2988
    %v2990 = vpop.f32.mrf.mxu0
    %v2991 = vadd.f32 %v1153, %v2990
    %2992 = vdwg.mxu0
    %2993 = vmatpush.bf16.msra.mxu0 %v2057
    %2994 = vmatpush.bf16.msra.mxu0 %v2049
    %2995 = vmatpush.bf16.msra.mxu0 %v2041
    %2996 = vmatpush.bf16.msra.mxu0 %v2033
    %2997 = vmatpush.bf16.msra.mxu0 %v2025
    %2998 = vmatpush.bf16.msra.mxu0 %v2017
    %2999 = vmatpush.bf16.msra.mxu0 %v2009
    %3000 = vmatpush.bf16.msra.mxu0 %v2001
    %3001 = vmatmul.bf16.gmra.mxu0 %v881
    %v3002 = vpop.f32.mrf.mxu0
    %v3003 = vadd.f32 %v2984, %v3002
    %v3004 = vpop.f32.mrf.mxu0
    %v3005 = vadd.f32 %v2986, %v3004
    %3006 = vmatmul.bf16.gmra.mxu0 %v885
    %v3007 = vpop.f32.mrf.mxu0
    %v3008 = vadd.f32 %v2989, %v3007
    %v3009 = vpop.f32.mrf.mxu0
    %v3010 = vadd.f32 %v2991, %v3009
    %3011 = vdwg.mxu0
    %3012 = vmatpush.bf16.msra.mxu0 %v2121
    %3013 = vmatpush.bf16.msra.mxu0 %v2113
    %3014 = vmatpush.bf16.msra.mxu0 %v2105
    %3015 = vmatpush.bf16.msra.mxu0 %v2097
    %3016 = vmatpush.bf16.msra.mxu0 %v2089
    %3017 = vmatpush.bf16.msra.mxu0 %v2081
    %3018 = vmatpush.bf16.msra.mxu0 %v2073
    %3019 = vmatpush.bf16.msra.mxu0 %v2065
    %3020 = vmatmul.bf16.gmra.mxu0 %v882
    %v3021 = vpop.f32.mrf.mxu0
    %v3022 = vadd.f32 %v3003, %v3021
    %v3023 = vpop.f32.mrf.mxu0
    %v3024 = vadd.f32 %v3005, %v3023
    %3025 = vmatmul.bf16.gmra.mxu0 %v886
    %v3026 = vpop.f32.mrf.mxu0
    %v3027 = vadd.f32 %v3008, %v3026
    %v3028 = vpop.f32.mrf.mxu0
    %v3029 = vadd.f32 %v3010, %v3028
    %3030 = vdwg.mxu0
    %3031 = vmatpush.bf16.msra.mxu0 %v2185
    %3032 = vmatpush.bf16.msra.mxu0 %v2177
    %3033 = vmatpush.bf16.msra.mxu0 %v2169
    %3034 = vmatpush.bf16.msra.mxu0 %v2161
    %3035 = vmatpush.bf16.msra.mxu0 %v2153
    %3036 = vmatpush.bf16.msra.mxu0 %v2145
    %3037 = vmatpush.bf16.msra.mxu0 %v2137
    %3038 = vmatpush.bf16.msra.mxu0 %v2129
    %3039 = vmatmul.bf16.gmra.mxu0 %v883
    %v3040 = vpop.f32.mrf.mxu0
    %v3041 = vadd.f32 %v3022, %v3040
    %v3042 = vpop.f32.mrf.mxu0
    %v3043 = vadd.f32 %v3024, %v3042
    %3044 = vmatmul.bf16.gmra.mxu0 %v887
    %v3045 = vpop.f32.mrf.mxu0
    %v3046 = vadd.f32 %v3027, %v3045
    %v3047 = vpop.f32.mrf.mxu0
    %v3048 = vadd.f32 %v3029, %v3047
    %3049 = vdwg.mxu0
    %vm3050 = vcmp.gt.f32.partialorder %v2509, 0.0
    %vm3051 = vcmp.gt.f32.partialorder %v2585, 0.0
    %vm3052 = vcmp.gt.f32.partialorder %v2661, 0.0
    %vm3053 = vcmp.gt.f32.partialorder %v2737, 0.0
    %vm3054 = vcmp.gt.f32.partialorder %v2813, 0.0
    %vm3055 = vcmp.gt.f32.partialorder %v2889, 0.0
    %vm3056 = vcmp.gt.f32.partialorder %v2965, 0.0
    %vm3057 = vcmp.gt.f32.partialorder %v3041, 0.0
    %vm3058 = vcmp.gt.f32.partialorder %v2511, 0.0
    %vm3059 = vcmp.gt.f32.partialorder %v2587, 0.0
    %vm3060 = vcmp.gt.f32.partialorder %v2663, 0.0
    %vm3061 = vcmp.gt.f32.partialorder %v2739, 0.0
    %vm3062 = vcmp.gt.f32.partialorder %v2815, 0.0
    %vm3063 = vcmp.gt.f32.partialorder %v2891, 0.0
    %vm3064 = vcmp.gt.f32.partialorder %v2967, 0.0
    %vm3065 = vcmp.gt.f32.partialorder %v3043, 0.0
    %vm3066 = vcmp.gt.f32.partialorder %v2514, 0.0
    %vm3067 = vcmp.gt.f32.partialorder %v2590, 0.0
    %vm3068 = vcmp.gt.f32.partialorder %v2666, 0.0
    %vm3069 = vcmp.gt.f32.partialorder %v2742, 0.0
    %vm3070 = vcmp.gt.f32.partialorder %v2818, 0.0
    %vm3071 = vcmp.gt.f32.partialorder %v2894, 0.0
    %vm3072 = vcmp.gt.f32.partialorder %v2970, 0.0
    %vm3073 = vcmp.gt.f32.partialorder %v3046, 0.0
    %vm3074 = vcmp.gt.f32.partialorder %v2516, 0.0
    %vm3075 = vcmp.gt.f32.partialorder %v2592, 0.0
    %vm3076 = vcmp.gt.f32.partialorder %v2668, 0.0
    %vm3077 = vcmp.gt.f32.partialorder %v2744, 0.0
    %vm3078 = vcmp.gt.f32.partialorder %v2820, 0.0
    %vm3079 = vcmp.gt.f32.partialorder %v2896, 0.0
    %vm3080 = vcmp.gt.f32.partialorder %v2972, 0.0
    %vm3081 = vcmp.gt.f32.partialorder %v3048, 0.0
    %v3082 = vmul.f32 %v2509, 0.2
    %v3083 = vmul.f32 %v2585, 0.2
    %v3084 = vmul.f32 %v2661, 0.2
    %v3085 = vmul.f32 %v2737, 0.2
    %v3086 = vmul.f32 %v2813, 0.2
    %v3087 = vmul.f32 %v2889, 0.2
    %v3088 = vmul.f32 %v2965, 0.2
    %v3089 = vmul.f32 %v3041, 0.2
    %v3090 = vmul.f32 %v2511, 0.2
    %v3091 = vmul.f32 %v2587, 0.2
    %v3092 = vmul.f32 %v2663, 0.2
    %v3093 = vmul.f32 %v2739, 0.2
    %v3094 = vmul.f32 %v2815, 0.2
    %v3095 = vmul.f32 %v2891, 0.2
    %v3096 = vmul.f32 %v2967, 0.2
    %v3097 = vmul.f32 %v3043, 0.2
    %v3098 = vmul.f32 %v2514, 0.2
    %v3099 = vmul.f32 %v2590, 0.2
    %v3100 = vmul.f32 %v2666, 0.2
    %v3101 = vmul.f32 %v2742, 0.2
    %v3102 = vmul.f32 %v2818, 0.2
    %v3103 = vmul.f32 %v2894, 0.2
    %v3104 = vmul.f32 %v2970, 0.2
    %v3105 = vmul.f32 %v3046, 0.2
    %v3106 = vmul.f32 %v2516, 0.2
    %v3107 = vmul.f32 %v2592, 0.2
    %v3108 = vmul.f32 %v2668, 0.2
    %v3109 = vmul.f32 %v2744, 0.2
    %v3110 = vmul.f32 %v2820, 0.2
    %v3111 = vmul.f32 %v2896, 0.2
    %v3112 = vmul.f32 %v2972, 0.2
    %v3113 = vmul.f32 %v3048, 0.2
    %v3114 = vsel %vm3050, %v2509, %v3082
    %v3115 = vsel %vm3051, %v2585, %v3083
    %v3116 = vsel %vm3052, %v2661, %v3084
    %v3117 = vsel %vm3053, %v2737, %v3085
    %v3118 = vsel %vm3054, %v2813, %v3086
    %v3119 = vsel %vm3055, %v2889, %v3087
    %v3120 = vsel %vm3056, %v2965, %v3088
    %v3121 = vsel %vm3057, %v3041, %v3089
    %v3122 = vsel %vm3058, %v2511, %v3090
    %v3123 = vsel %vm3059, %v2587, %v3091
    %v3124 = vsel %vm3060, %v2663, %v3092
    %v3125 = vsel %vm3061, %v2739, %v3093
    %v3126 = vsel %vm3062, %v2815, %v3094
    %v3127 = vsel %vm3063, %v2891, %v3095
    %v3128 = vsel %vm3064, %v2967, %v3096
    %v3129 = vsel %vm3065, %v3043, %v3097
    %v3130 = vsel %vm3066, %v2514, %v3098
    %v3131 = vsel %vm3067, %v2590, %v3099
    %v3132 = vsel %vm3068, %v2666, %v3100
    %v3133 = vsel %vm3069, %v2742, %v3101
    %v3134 = vsel %vm3070, %v2818, %v3102
    %v3135 = vsel %vm3071, %v2894, %v3103
    %v3136 = vsel %vm3072, %v2970, %v3104
    %v3137 = vsel %vm3073, %v3046, %v3105
    %v3138 = vsel %vm3074, %v2516, %v3106
    %v3139 = vsel %vm3075, %v2592, %v3107
    %v3140 = vsel %vm3076, %v2668, %v3108
    %v3141 = vsel %vm3077, %v2744, %v3109
    %v3142 = vsel %vm3078, %v2820, %v3110
    %v3143 = vsel %vm3079, %v2896, %v3111
    %v3144 = vsel %vm3080, %v2972, %v3112
    %v3145 = vsel %vm3081, %v3048, %v3113
    %v3146 = vpack.c.bf16 %v3122, %v3114
    %v3147 = vpack.c.bf16 %v3123, %v3115
    %v3148 = vpack.c.bf16 %v3124, %v3116
    %v3149 = vpack.c.bf16 %v3125, %v3117
    %v3150 = vpack.c.bf16 %v3126, %v3118
    %v3151 = vpack.c.bf16 %v3127, %v3119
    %v3152 = vpack.c.bf16 %v3128, %v3120
    %v3153 = vpack.c.bf16 %v3129, %v3121
    %v3154 = vpack.c.bf16 %v3138, %v3130
    %v3155 = vpack.c.bf16 %v3139, %v3131
    %v3156 = vpack.c.bf16 %v3140, %v3132
    %v3157 = vpack.c.bf16 %v3141, %v3133
    %v3158 = vpack.c.bf16 %v3142, %v3134
    %v3159 = vpack.c.bf16 %v3143, %v3135
    %v3160 = vpack.c.bf16 %v3144, %v3136
    %v3161 = vpack.c.bf16 %v3145, %v3137
    %v3162 = vld [vmem:[#allocation14] sm:$0xf]
    %v3163 = vld [vmem:[#allocation14 + $0x4] sm:$0xf]
    %v3164 = vld [vmem:[#allocation14 + $0x8] sm:$0xf]
    %v3165 = vld [vmem:[#allocation14 + $0xc] sm:$0xf]
    %v3166 = vld [vmem:[#allocation14 + $0x10] sm:$0xf]
    %v3167 = vld [vmem:[#allocation14 + $0x14] sm:$0xf]
    %v3168 = vld [vmem:[#allocation14 + $0x18] sm:$0xf]
    %v3169 = vld [vmem:[#allocation14 + $0x1c] sm:$0xf]
    %v3170 = vld [vmem:[#allocation14 + $0x20] sm:$0xf]
    %v3171 = vld [vmem:[#allocation14 + $0x24] sm:$0xf]
    %v3172 = vld [vmem:[#allocation14 + $0x28] sm:$0xf]
    %v3173 = vld [vmem:[#allocation14 + $0x2c] sm:$0xf]
    %v3174 = vld [vmem:[#allocation14 + $0x30] sm:$0xf]
    %v3175 = vld [vmem:[#allocation14 + $0x34] sm:$0xf]
    %v3176 = vld [vmem:[#allocation14 + $0x38] sm:$0xf]
    %v3177 = vld [vmem:[#allocation14 + $0x3c] sm:$0xf]
    %v3178 = vld [vmem:[#allocation14 + $0x40] sm:$0xf]
    %v3179 = vld [vmem:[#allocation14 + $0x44] sm:$0xf]
    %v3180 = vld [vmem:[#allocation14 + $0x48] sm:$0xf]
    %v3181 = vld [vmem:[#allocation14 + $0x4c] sm:$0xf]
    %v3182 = vld [vmem:[#allocation14 + $0x50] sm:$0xf]
    %v3183 = vld [vmem:[#allocation14 + $0x54] sm:$0xf]
    %v3184 = vld [vmem:[#allocation14 + $0x58] sm:$0xf]
    %v3185 = vld [vmem:[#allocation14 + $0x5c] sm:$0xf]
    %v3186 = vld [vmem:[#allocation14 + $0x60] sm:$0xf]
    %v3187 = vld [vmem:[#allocation14 + $0x64] sm:$0xf]
    %v3188 = vld [vmem:[#allocation14 + $0x68] sm:$0xf]
    %v3189 = vld [vmem:[#allocation14 + $0x6c] sm:$0xf]
    %v3190 = vld [vmem:[#allocation14 + $0x70] sm:$0xf]
    %v3191 = vld [vmem:[#allocation14 + $0x74] sm:$0xf]
    %v3192 = vld [vmem:[#allocation14 + $0x78] sm:$0xf]
    %v3193 = vld [vmem:[#allocation14 + $0x7c] sm:$0xf]
    %v3194 = vld [vmem:[#allocation14 + $0x80] sm:$0xf]
    %v3195 = vld [vmem:[#allocation14 + $0x84] sm:$0xf]
    %v3196 = vld [vmem:[#allocation14 + $0x88] sm:$0xf]
    %v3197 = vld [vmem:[#allocation14 + $0x8c] sm:$0xf]
    %v3198 = vld [vmem:[#allocation14 + $0x90] sm:$0xf]
    %v3199 = vld [vmem:[#allocation14 + $0x94] sm:$0xf]
    %v3200 = vld [vmem:[#allocation14 + $0x98] sm:$0xf]
    %v3201 = vld [vmem:[#allocation14 + $0x9c] sm:$0xf]
    %v3202 = vld [vmem:[#allocation14 + $0xa0] sm:$0xf]
    %v3203 = vld [vmem:[#allocation14 + $0xa4] sm:$0xf]
    %v3204 = vld [vmem:[#allocation14 + $0xa8] sm:$0xf]
    %v3205 = vld [vmem:[#allocation14 + $0xac] sm:$0xf]
    %v3206 = vld [vmem:[#allocation14 + $0xb0] sm:$0xf]
    %v3207 = vld [vmem:[#allocation14 + $0xb4] sm:$0xf]
    %v3208 = vld [vmem:[#allocation14 + $0xb8] sm:$0xf]
    %v3209 = vld [vmem:[#allocation14 + $0xbc] sm:$0xf]
    %v3210 = vld [vmem:[#allocation14 + $0xc0] sm:$0xf]
    %v3211 = vld [vmem:[#allocation14 + $0xc4] sm:$0xf]
    %v3212 = vld [vmem:[#allocation14 + $0xc8] sm:$0xf]
    %v3213 = vld [vmem:[#allocation14 + $0xcc] sm:$0xf]
    %v3214 = vld [vmem:[#allocation14 + $0xd0] sm:$0xf]
    %v3215 = vld [vmem:[#allocation14 + $0xd4] sm:$0xf]
    %v3216 = vld [vmem:[#allocation14 + $0xd8] sm:$0xf]
    %v3217 = vld [vmem:[#allocation14 + $0xdc] sm:$0xf]
    %v3218 = vld [vmem:[#allocation14 + $0xe0] sm:$0xf]
    %v3219 = vld [vmem:[#allocation14 + $0xe4] sm:$0xf]
    %v3220 = vld [vmem:[#allocation14 + $0xe8] sm:$0xf]
    %v3221 = vld [vmem:[#allocation14 + $0xec] sm:$0xf]
    %v3222 = vld [vmem:[#allocation14 + $0xf0] sm:$0xf]
    %v3223 = vld [vmem:[#allocation14 + $0xf4] sm:$0xf]
    %v3224 = vld [vmem:[#allocation14 + $0xf8] sm:$0xf]
    %v3225 = vld [vmem:[#allocation14 + $0xfc] sm:$0xf]
    %v3226 = vld [vmem:[#allocation14 + $0x100] sm:$0xf]
    %v3227 = vld [vmem:[#allocation14 + $0x104] sm:$0xf]
    %v3228 = vld [vmem:[#allocation14 + $0x108] sm:$0xf]
    %v3229 = vld [vmem:[#allocation14 + $0x10c] sm:$0xf]
    %v3230 = vld [vmem:[#allocation14 + $0x110] sm:$0xf]
    %v3231 = vld [vmem:[#allocation14 + $0x114] sm:$0xf]
    %v3232 = vld [vmem:[#allocation14 + $0x118] sm:$0xf]
    %v3233 = vld [vmem:[#allocation14 + $0x11c] sm:$0xf]
    %v3234 = vld [vmem:[#allocation14 + $0x120] sm:$0xf]
    %v3235 = vld [vmem:[#allocation14 + $0x124] sm:$0xf]
    %v3236 = vld [vmem:[#allocation14 + $0x128] sm:$0xf]
    %v3237 = vld [vmem:[#allocation14 + $0x12c] sm:$0xf]
    %v3238 = vld [vmem:[#allocation14 + $0x130] sm:$0xf]
    %v3239 = vld [vmem:[#allocation14 + $0x134] sm:$0xf]
    %v3240 = vld [vmem:[#allocation14 + $0x138] sm:$0xf]
    %v3241 = vld [vmem:[#allocation14 + $0x13c] sm:$0xf]
    %v3242 = vld [vmem:[#allocation14 + $0x140] sm:$0xf]
    %v3243 = vld [vmem:[#allocation14 + $0x144] sm:$0xf]
    %v3244 = vld [vmem:[#allocation14 + $0x148] sm:$0xf]
    %v3245 = vld [vmem:[#allocation14 + $0x14c] sm:$0xf]
    %v3246 = vld [vmem:[#allocation14 + $0x150] sm:$0xf]
    %v3247 = vld [vmem:[#allocation14 + $0x154] sm:$0xf]
    %v3248 = vld [vmem:[#allocation14 + $0x158] sm:$0xf]
    %v3249 = vld [vmem:[#allocation14 + $0x15c] sm:$0xf]
    %v3250 = vld [vmem:[#allocation14 + $0x160] sm:$0xf]
    %v3251 = vld [vmem:[#allocation14 + $0x164] sm:$0xf]
    %v3252 = vld [vmem:[#allocation14 + $0x168] sm:$0xf]
    %v3253 = vld [vmem:[#allocation14 + $0x16c] sm:$0xf]
    %v3254 = vld [vmem:[#allocation14 + $0x170] sm:$0xf]
    %v3255 = vld [vmem:[#allocation14 + $0x174] sm:$0xf]
    %v3256 = vld [vmem:[#allocation14 + $0x178] sm:$0xf]
    %v3257 = vld [vmem:[#allocation14 + $0x17c] sm:$0xf]
    %v3258 = vld [vmem:[#allocation14 + $0x180] sm:$0xf]
    %v3259 = vld [vmem:[#allocation14 + $0x184] sm:$0xf]
    %v3260 = vld [vmem:[#allocation14 + $0x188] sm:$0xf]
    %v3261 = vld [vmem:[#allocation14 + $0x18c] sm:$0xf]
    %v3262 = vld [vmem:[#allocation14 + $0x190] sm:$0xf]
    %v3263 = vld [vmem:[#allocation14 + $0x194] sm:$0xf]
    %v3264 = vld [vmem:[#allocation14 + $0x198] sm:$0xf]
    %v3265 = vld [vmem:[#allocation14 + $0x19c] sm:$0xf]
    %v3266 = vld [vmem:[#allocation14 + $0x1a0] sm:$0xf]
    %v3267 = vld [vmem:[#allocation14 + $0x1a4] sm:$0xf]
    %v3268 = vld [vmem:[#allocation14 + $0x1a8] sm:$0xf]
    %v3269 = vld [vmem:[#allocation14 + $0x1ac] sm:$0xf]
    %v3270 = vld [vmem:[#allocation14 + $0x1b0] sm:$0xf]
    %v3271 = vld [vmem:[#allocation14 + $0x1b4] sm:$0xf]
    %v3272 = vld [vmem:[#allocation14 + $0x1b8] sm:$0xf]
    %v3273 = vld [vmem:[#allocation14 + $0x1bc] sm:$0xf]
    %v3274 = vld [vmem:[#allocation14 + $0x1c0] sm:$0xf]
    %v3275 = vld [vmem:[#allocation14 + $0x1c4] sm:$0xf]
    %v3276 = vld [vmem:[#allocation14 + $0x1c8] sm:$0xf]
    %v3277 = vld [vmem:[#allocation14 + $0x1cc] sm:$0xf]
    %v3278 = vld [vmem:[#allocation14 + $0x1d0] sm:$0xf]
    %v3279 = vld [vmem:[#allocation14 + $0x1d4] sm:$0xf]
    %v3280 = vld [vmem:[#allocation14 + $0x1d8] sm:$0xf]
    %v3281 = vld [vmem:[#allocation14 + $0x1dc] sm:$0xf]
    %v3282 = vld [vmem:[#allocation14 + $0x1e0] sm:$0xf]
    %v3283 = vld [vmem:[#allocation14 + $0x1e4] sm:$0xf]
    %v3284 = vld [vmem:[#allocation14 + $0x1e8] sm:$0xf]
    %v3285 = vld [vmem:[#allocation14 + $0x1ec] sm:$0xf]
    %v3286 = vld [vmem:[#allocation14 + $0x1f0] sm:$0xf]
    %v3287 = vld [vmem:[#allocation14 + $0x1f4] sm:$0xf]
    %v3288 = vld [vmem:[#allocation14 + $0x1f8] sm:$0xf]
    %v3289 = vld [vmem:[#allocation14 + $0x1fc] sm:$0xf]
    %v3290 = vld [vmem:[%s8] sm:$0x1]
    %v3292 = vperm.slane %v3290, 0
    %v3422 = vunpack.c.l.b16 %v3162
    %v3423 = vunpack.c.l.b16 %v3163
    %v3424 = vunpack.c.l.b16 %v3164
    %v3425 = vunpack.c.l.b16 %v3165
    %v3426 = vunpack.c.l.b16 %v3166
    %v3427 = vunpack.c.l.b16 %v3167
    %v3428 = vunpack.c.l.b16 %v3168
    %v3429 = vunpack.c.l.b16 %v3169
    %v3430 = vunpack.c.l.b16 %v3170
    %v3431 = vunpack.c.l.b16 %v3171
    %v3432 = vunpack.c.l.b16 %v3172
    %v3433 = vunpack.c.l.b16 %v3173
    %v3434 = vunpack.c.l.b16 %v3174
    %v3435 = vunpack.c.l.b16 %v3175
    %v3436 = vunpack.c.l.b16 %v3176
    %v3437 = vunpack.c.l.b16 %v3177
    %v3438 = vunpack.c.l.b16 %v3178
    %v3439 = vunpack.c.l.b16 %v3179
    %v3440 = vunpack.c.l.b16 %v3180
    %v3441 = vunpack.c.l.b16 %v3181
    %v3442 = vunpack.c.l.b16 %v3182
    %v3443 = vunpack.c.l.b16 %v3183
    %v3444 = vunpack.c.l.b16 %v3184
    %v3445 = vunpack.c.l.b16 %v3185
    %v3446 = vunpack.c.l.b16 %v3186
    %v3447 = vunpack.c.l.b16 %v3187
    %v3448 = vunpack.c.l.b16 %v3188
    %v3449 = vunpack.c.l.b16 %v3189
    %v3450 = vunpack.c.l.b16 %v3190
    %v3451 = vunpack.c.l.b16 %v3191
    %v3452 = vunpack.c.l.b16 %v3192
    %v3453 = vunpack.c.l.b16 %v3193
    %v3454 = vunpack.c.l.b16 %v3194
    %v3455 = vunpack.c.l.b16 %v3195
    %v3456 = vunpack.c.l.b16 %v3196
    %v3457 = vunpack.c.l.b16 %v3197
    %v3458 = vunpack.c.l.b16 %v3198
    %v3459 = vunpack.c.l.b16 %v3199
    %v3460 = vunpack.c.l.b16 %v3200
    %v3461 = vunpack.c.l.b16 %v3201
    %v3462 = vunpack.c.l.b16 %v3202
    %v3463 = vunpack.c.l.b16 %v3203
    %v3464 = vunpack.c.l.b16 %v3204
    %v3465 = vunpack.c.l.b16 %v3205
    %v3466 = vunpack.c.l.b16 %v3206
    %v3467 = vunpack.c.l.b16 %v3207
    %v3468 = vunpack.c.l.b16 %v3208
    %v3469 = vunpack.c.l.b16 %v3209
    %v3470 = vunpack.c.l.b16 %v3210
    %v3471 = vunpack.c.l.b16 %v3211
    %v3472 = vunpack.c.l.b16 %v3212
    %v3473 = vunpack.c.l.b16 %v3213
    %v3474 = vunpack.c.l.b16 %v3214
    %v3475 = vunpack.c.l.b16 %v3215
    %v3476 = vunpack.c.l.b16 %v3216
    %v3477 = vunpack.c.l.b16 %v3217
    %v3478 = vunpack.c.l.b16 %v3218
    %v3479 = vunpack.c.l.b16 %v3219
    %v3480 = vunpack.c.l.b16 %v3220
    %v3481 = vunpack.c.l.b16 %v3221
    %v3482 = vunpack.c.l.b16 %v3222
    %v3483 = vunpack.c.l.b16 %v3223
    %v3484 = vunpack.c.l.b16 %v3224
    %v3485 = vunpack.c.l.b16 %v3225
    %v3486 = vunpack.c.l.b16 %v3226
    %v3487 = vunpack.c.l.b16 %v3227
    %v3488 = vunpack.c.l.b16 %v3228
    %v3489 = vunpack.c.l.b16 %v3229
    %v3490 = vunpack.c.l.b16 %v3230
    %v3491 = vunpack.c.l.b16 %v3231
    %v3492 = vunpack.c.l.b16 %v3232
    %v3493 = vunpack.c.l.b16 %v3233
    %v3494 = vunpack.c.l.b16 %v3234
    %v3495 = vunpack.c.l.b16 %v3235
    %v3496 = vunpack.c.l.b16 %v3236
    %v3497 = vunpack.c.l.b16 %v3237
    %v3498 = vunpack.c.l.b16 %v3238
    %v3499 = vunpack.c.l.b16 %v3239
    %v3500 = vunpack.c.l.b16 %v3240
    %v3501 = vunpack.c.l.b16 %v3241
    %v3502 = vunpack.c.l.b16 %v3242
    %v3503 = vunpack.c.l.b16 %v3243
    %v3504 = vunpack.c.l.b16 %v3244
    %v3505 = vunpack.c.l.b16 %v3245
    %v3506 = vunpack.c.l.b16 %v3246
    %v3507 = vunpack.c.l.b16 %v3247
    %v3508 = vunpack.c.l.b16 %v3248
    %v3509 = vunpack.c.l.b16 %v3249
    %v3510 = vunpack.c.l.b16 %v3250
    %v3511 = vunpack.c.l.b16 %v3251
    %v3512 = vunpack.c.l.b16 %v3252
    %v3513 = vunpack.c.l.b16 %v3253
    %v3514 = vunpack.c.l.b16 %v3254
    %v3515 = vunpack.c.l.b16 %v3255
    %v3516 = vunpack.c.l.b16 %v3256
    %v3517 = vunpack.c.l.b16 %v3257
    %v3518 = vunpack.c.l.b16 %v3258
    %v3519 = vunpack.c.l.b16 %v3259
    %v3520 = vunpack.c.l.b16 %v3260
    %v3521 = vunpack.c.l.b16 %v3261
    %v3522 = vunpack.c.l.b16 %v3262
    %v3523 = vunpack.c.l.b16 %v3263
    %v3524 = vunpack.c.l.b16 %v3264
    %v3525 = vunpack.c.l.b16 %v3265
    %v3526 = vunpack.c.l.b16 %v3266
    %v3527 = vunpack.c.l.b16 %v3267
    %v3528 = vunpack.c.l.b16 %v3268
    %v3529 = vunpack.c.l.b16 %v3269
    %v3530 = vunpack.c.l.b16 %v3270
    %v3531 = vunpack.c.l.b16 %v3271
    %v3532 = vunpack.c.l.b16 %v3272
    %v3533 = vunpack.c.l.b16 %v3273
    %v3534 = vunpack.c.l.b16 %v3274
    %v3535 = vunpack.c.l.b16 %v3275
    %v3536 = vunpack.c.l.b16 %v3276
    %v3537 = vunpack.c.l.b16 %v3277
    %v3538 = vunpack.c.l.b16 %v3278
    %v3539 = vunpack.c.l.b16 %v3279
    %v3540 = vunpack.c.l.b16 %v3280
    %v3541 = vunpack.c.l.b16 %v3281
    %v3542 = vunpack.c.l.b16 %v3282
    %v3543 = vunpack.c.l.b16 %v3283
    %v3544 = vunpack.c.l.b16 %v3284
    %v3545 = vunpack.c.l.b16 %v3285
    %v3546 = vunpack.c.l.b16 %v3286
    %v3547 = vunpack.c.l.b16 %v3287
    %v3548 = vunpack.c.l.b16 %v3288
    %v3549 = vunpack.c.l.b16 %v3289
    %v3550 = vpack.c.b16 %v3423, %v3422
    %v3551 = vpack.c.b16 %v3425, %v3424
    %v3552 = vpack.c.b16 %v3427, %v3426
    %v3553 = vpack.c.b16 %v3429, %v3428
    %v3554 = vpack.c.b16 %v3431, %v3430
    %v3555 = vpack.c.b16 %v3433, %v3432
    %v3556 = vpack.c.b16 %v3435, %v3434
    %v3557 = vpack.c.b16 %v3437, %v3436
    %v3558 = vpack.c.b16 %v3439, %v3438
    %v3559 = vpack.c.b16 %v3441, %v3440
    %v3560 = vpack.c.b16 %v3443, %v3442
    %v3561 = vpack.c.b16 %v3445, %v3444
    %v3562 = vpack.c.b16 %v3447, %v3446
    %v3563 = vpack.c.b16 %v3449, %v3448
    %v3564 = vpack.c.b16 %v3451, %v3450
    %v3565 = vpack.c.b16 %v3453, %v3452
    %v3566 = vpack.c.b16 %v3455, %v3454
    %v3567 = vpack.c.b16 %v3457, %v3456
    %v3568 = vpack.c.b16 %v3459, %v3458
    %v3569 = vpack.c.b16 %v3461, %v3460
    %v3570 = vpack.c.b16 %v3463, %v3462
    %v3571 = vpack.c.b16 %v3465, %v3464
    %v3572 = vpack.c.b16 %v3467, %v3466
    %v3573 = vpack.c.b16 %v3469, %v3468
    %v3574 = vpack.c.b16 %v3471, %v3470
    %v3575 = vpack.c.b16 %v3473, %v3472
    %v3576 = vpack.c.b16 %v3475, %v3474
    %v3577 = vpack.c.b16 %v3477, %v3476
    %v3578 = vpack.c.b16 %v3479, %v3478
    %v3579 = vpack.c.b16 %v3481, %v3480
    %v3580 = vpack.c.b16 %v3483, %v3482
    %v3581 = vpack.c.b16 %v3485, %v3484
    %v3582 = vpack.c.b16 %v3487, %v3486
    %v3583 = vpack.c.b16 %v3489, %v3488
    %v3584 = vpack.c.b16 %v3491, %v3490
    %v3585 = vpack.c.b16 %v3493, %v3492
    %v3586 = vpack.c.b16 %v3495, %v3494
    %v3587 = vpack.c.b16 %v3497, %v3496
    %v3588 = vpack.c.b16 %v3499, %v3498
    %v3589 = vpack.c.b16 %v3501, %v3500
    %v3590 = vpack.c.b16 %v3503, %v3502
    %v3591 = vpack.c.b16 %v3505, %v3504
    %v3592 = vpack.c.b16 %v3507, %v3506
    %v3593 = vpack.c.b16 %v3509, %v3508
    %v3594 = vpack.c.b16 %v3511, %v3510
    %v3595 = vpack.c.b16 %v3513, %v3512
    %v3596 = vpack.c.b16 %v3515, %v3514
    %v3597 = vpack.c.b16 %v3517, %v3516
    %v3598 = vpack.c.b16 %v3519, %v3518
    %v3599 = vpack.c.b16 %v3521, %v3520
    %v3600 = vpack.c.b16 %v3523, %v3522
    %v3601 = vpack.c.b16 %v3525, %v3524
    %v3602 = vpack.c.b16 %v3527, %v3526
    %v3603 = vpack.c.b16 %v3529, %v3528
    %v3604 = vpack.c.b16 %v3531, %v3530
    %v3605 = vpack.c.b16 %v3533, %v3532
    %v3606 = vpack.c.b16 %v3535, %v3534
    %v3607 = vpack.c.b16 %v3537, %v3536
    %v3608 = vpack.c.b16 %v3539, %v3538
    %v3609 = vpack.c.b16 %v3541, %v3540
    %v3610 = vpack.c.b16 %v3543, %v3542
    %v3611 = vpack.c.b16 %v3545, %v3544
    %v3612 = vpack.c.b16 %v3547, %v3546
    %v3613 = vpack.c.b16 %v3549, %v3548
    %3678 = vmatpush.bf16.msra.mxu0 %v3557
    %3679 = vmatpush.bf16.msra.mxu0 %v3556
    %3680 = vmatpush.bf16.msra.mxu0 %v3555
    %3681 = vmatpush.bf16.msra.mxu0 %v3554
    %3682 = vmatpush.bf16.msra.mxu0 %v3553
    %3683 = vmatpush.bf16.msra.mxu0 %v3552
    %3684 = vmatpush.bf16.msra.mxu0 %v3551
    %3685 = vmatpush.bf16.msra.mxu0 %v3550
    %3686 = vmatmul.bf16.gmra.mxu0 %v3146
    %v3687 = vpop.f32.mrf.mxu0
    %v3688 = vadd.f32 %v3292, %v3687
    %v3689 = vpop.f32.mrf.mxu0
    %v3690 = vadd.f32 %v3292, %v3689
    %3691 = vmatmul.bf16.gmra.mxu0 %v3154
    %v3692 = vpop.f32.mrf.mxu0
    %v3693 = vadd.f32 %v3292, %v3692
    %v3694 = vpop.f32.mrf.mxu0
    %v3695 = vadd.f32 %v3292, %v3694
    %3696 = vdwg.mxu0
    %3697 = vmatpush.bf16.msra.mxu0 %v3565
    %3698 = vmatpush.bf16.msra.mxu0 %v3564
    %3699 = vmatpush.bf16.msra.mxu0 %v3563
    %3700 = vmatpush.bf16.msra.mxu0 %v3562
    %3701 = vmatpush.bf16.msra.mxu0 %v3561
    %3702 = vmatpush.bf16.msra.mxu0 %v3560
    %3703 = vmatpush.bf16.msra.mxu0 %v3559
    %3704 = vmatpush.bf16.msra.mxu0 %v3558
    %3705 = vmatmul.bf16.gmra.mxu0 %v3147
    %v3706 = vpop.f32.mrf.mxu0
    %v3707 = vadd.f32 %v3688, %v3706
    %v3708 = vpop.f32.mrf.mxu0
    %v3709 = vadd.f32 %v3690, %v3708
    %3710 = vmatmul.bf16.gmra.mxu0 %v3155
    %v3711 = vpop.f32.mrf.mxu0
    %v3712 = vadd.f32 %v3693, %v3711
    %v3713 = vpop.f32.mrf.mxu0
    %v3714 = vadd.f32 %v3695, %v3713
    %3715 = vdwg.mxu0
    %3716 = vmatpush.bf16.msra.mxu0 %v3573
    %3717 = vmatpush.bf16.msra.mxu0 %v3572
    %3718 = vmatpush.bf16.msra.mxu0 %v3571
    %3719 = vmatpush.bf16.msra.mxu0 %v3570
    %3720 = vmatpush.bf16.msra.mxu0 %v3569
    %3721 = vmatpush.bf16.msra.mxu0 %v3568
    %3722 = vmatpush.bf16.msra.mxu0 %v3567
    %3723 = vmatpush.bf16.msra.mxu0 %v3566
    %3724 = vmatmul.bf16.gmra.mxu0 %v3148
    %v3725 = vpop.f32.mrf.mxu0
    %v3726 = vadd.f32 %v3707, %v3725
    %v3727 = vpop.f32.mrf.mxu0
    %v3728 = vadd.f32 %v3709, %v3727
    %3729 = vmatmul.bf16.gmra.mxu0 %v3156
    %v3730 = vpop.f32.mrf.mxu0
    %v3731 = vadd.f32 %v3712, %v3730
    %v3732 = vpop.f32.mrf.mxu0
    %v3733 = vadd.f32 %v3714, %v3732
    %3734 = vdwg.mxu0
    %3735 = vmatpush.bf16.msra.mxu0 %v3581
    %3736 = vmatpush.bf16.msra.mxu0 %v3580
    %3737 = vmatpush.bf16.msra.mxu0 %v3579
    %3738 = vmatpush.bf16.msra.mxu0 %v3578
    %3739 = vmatpush.bf16.msra.mxu0 %v3577
    %3740 = vmatpush.bf16.msra.mxu0 %v3576
    %3741 = vmatpush.bf16.msra.mxu0 %v3575
    %3742 = vmatpush.bf16.msra.mxu0 %v3574
    %3743 = vmatmul.bf16.gmra.mxu0 %v3149
    %v3744 = vpop.f32.mrf.mxu0
    %v3745 = vadd.f32 %v3726, %v3744
    %v3746 = vpop.f32.mrf.mxu0
    %v3747 = vadd.f32 %v3728, %v3746
    %3748 = vmatmul.bf16.gmra.mxu0 %v3157
    %v3749 = vpop.f32.mrf.mxu0
    %v3750 = vadd.f32 %v3731, %v3749
    %v3751 = vpop.f32.mrf.mxu0
    %v3752 = vadd.f32 %v3733, %v3751
    %3753 = vdwg.mxu0
    %3754 = vmatpush.bf16.msra.mxu0 %v3589
    %3755 = vmatpush.bf16.msra.mxu0 %v3588
    %3756 = vmatpush.bf16.msra.mxu0 %v3587
    %3757 = vmatpush.bf16.msra.mxu0 %v3586
    %3758 = vmatpush.bf16.msra.mxu0 %v3585
    %3759 = vmatpush.bf16.msra.mxu0 %v3584
    %3760 = vmatpush.bf16.msra.mxu0 %v3583
    %3761 = vmatpush.bf16.msra.mxu0 %v3582
    %3762 = vmatmul.bf16.gmra.mxu0 %v3150
    %v3763 = vpop.f32.mrf.mxu0
    %v3764 = vadd.f32 %v3745, %v3763
    %v3765 = vpop.f32.mrf.mxu0
    %v3766 = vadd.f32 %v3747, %v3765
    %3767 = vmatmul.bf16.gmra.mxu0 %v3158
    %v3768 = vpop.f32.mrf.mxu0
    %v3769 = vadd.f32 %v3750, %v3768
    %v3770 = vpop.f32.mrf.mxu0
    %v3771 = vadd.f32 %v3752, %v3770
    %3772 = vdwg.mxu0
    %3773 = vmatpush.bf16.msra.mxu0 %v3597
    %3774 = vmatpush.bf16.msra.mxu0 %v3596
    %3775 = vmatpush.bf16.msra.mxu0 %v3595
    %3776 = vmatpush.bf16.msra.mxu0 %v3594
    %3777 = vmatpush.bf16.msra.mxu0 %v3593
    %3778 = vmatpush.bf16.msra.mxu0 %v3592
    %3779 = vmatpush.bf16.msra.mxu0 %v3591
    %3780 = vmatpush.bf16.msra.mxu0 %v3590
    %3781 = vmatmul.bf16.gmra.mxu0 %v3151
    %v3782 = vpop.f32.mrf.mxu0
    %v3783 = vadd.f32 %v3764, %v3782
    %v3784 = vpop.f32.mrf.mxu0
    %v3785 = vadd.f32 %v3766, %v3784
    %3786 = vmatmul.bf16.gmra.mxu0 %v3159
    %v3787 = vpop.f32.mrf.mxu0
    %v3788 = vadd.f32 %v3769, %v3787
    %v3789 = vpop.f32.mrf.mxu0
    %v3790 = vadd.f32 %v3771, %v3789
    %3791 = vdwg.mxu0
    %3792 = vmatpush.bf16.msra.mxu0 %v3605
    %3793 = vmatpush.bf16.msra.mxu0 %v3604
    %3794 = vmatpush.bf16.msra.mxu0 %v3603
    %3795 = vmatpush.bf16.msra.mxu0 %v3602
    %3796 = vmatpush.bf16.msra.mxu0 %v3601
    %3797 = vmatpush.bf16.msra.mxu0 %v3600
    %3798 = vmatpush.bf16.msra.mxu0 %v3599
    %3799 = vmatpush.bf16.msra.mxu0 %v3598
    %3800 = vmatmul.bf16.gmra.mxu0 %v3152
    %v3801 = vpop.f32.mrf.mxu0
    %v3802 = vadd.f32 %v3783, %v3801
    %v3803 = vpop.f32.mrf.mxu0
    %v3804 = vadd.f32 %v3785, %v3803
    %3805 = vmatmul.bf16.gmra.mxu0 %v3160
    %v3806 = vpop.f32.mrf.mxu0
    %v3807 = vadd.f32 %v3788, %v3806
    %v3808 = vpop.f32.mrf.mxu0
    %v3809 = vadd.f32 %v3790, %v3808
    %3810 = vdwg.mxu0
    %3811 = vmatpush.bf16.msra.mxu0 %v3613
    %3812 = vmatpush.bf16.msra.mxu0 %v3612
    %3813 = vmatpush.bf16.msra.mxu0 %v3611
    %3814 = vmatpush.bf16.msra.mxu0 %v3610
    %3815 = vmatpush.bf16.msra.mxu0 %v3609
    %3816 = vmatpush.bf16.msra.mxu0 %v3608
    %3817 = vmatpush.bf16.msra.mxu0 %v3607
    %3818 = vmatpush.bf16.msra.mxu0 %v3606
    %3819 = vmatmul.bf16.gmra.mxu0 %v3153
    %v3820 = vpop.f32.mrf.mxu0
    %v3821 = vadd.f32 %v3802, %v3820
    %v3822 = vpop.f32.mrf.mxu0
    %v3823 = vadd.f32 %v3804, %v3822
    %3824 = vmatmul.bf16.gmra.mxu0 %v3161
    %v3825 = vpop.f32.mrf.mxu0
    %v3826 = vadd.f32 %v3807, %v3825
    %v3827 = vpop.f32.mrf.mxu0
    %v3828 = vadd.f32 %v3809, %v3827
    %3829 = vdwg.mxu0
    %v3830 = vtanh.pop %v3821
    %v3831 = vtanh.pop %v3823
    %v3832 = vtanh.pop %v3826
    %v3833 = vtanh.pop %v3828
    %3834 = vst [vmem:[#allocation16] sm:$0xff] %v3830
    %3835 = vst [vmem:[#allocation16 + $0x8] sm:$0xff] %v3831
    %3836 = vst [vmem:[#allocation16 + $0x10] sm:$0xff] %v3832
    %3837 = vst [vmem:[#allocation16 + $0x18] sm:$0xff] %v3833
    // Predicated region
    $region70: #{tpu_custom_call.1} parent=1 // pred_check
      _
    $region71: #{tpu_custom_call.1} parent=1 // pred_check_branch
      %3839 = sbr.rel (0) target = $region73
    $region72: #{tpu_custom_call.1} parent=1 // pred_region
      %3841 = vsyncadd [#allocation4], 0
      %s3842 = sshll.u32 [#allocation16], 4
      %s3843 = int_to_ptr.vmem [resolvable:$true] %s3842
      %s3844 = sshll.u32 %s9, 4
      %s3845 = int_to_ptr.hbm [resolvable:$true] %s3844
      %3850 = dma.vmem_to_hbm [thread:$0]  %s3843, 512, %s3845, [#allocation4], 128, 128, 8
    $region73: #{tpu_custom_call.1} parent=1 // pred_fallthru
      _
    // Predicated region
    $region74: #{tpu_custom_call.1} parent=1 // pred_check
      _
    $region75: #{tpu_custom_call.1} parent=1 // pred_check_branch
      %3852 = sbr.rel (0) target = $region77
    $region76: #{tpu_custom_call.1} parent=1 // pred_region
      %3854 = dma.done [#allocation4], 512
    $region77: #{tpu_custom_call.1} parent=1 // pred_fallthru
      _
    %3855 = vsyncpa [#allocation3], 1
    %3856 = vsyncpa [#allocation6], 1
    %3857 = vsyncpa [#allocation9], 1
    %3858 = vsyncpa [#allocation12], 1
    %3859 = vsyncpa [#allocation15], 1
    %3860 = vsyncpa [#allocation4], 1

</llo_original>
